<compile_context>
chip_gen: v7x
topology: tpu7x:2x2x1
jax: 0.10.0
libtpu: 0.0.40
codegen_flags: <defaults>
</compile_context>

<pallas_src>
import numpy as np

import jax
import jax.numpy as jnp
from jax.experimental import pallas as pl
from jax.experimental.pallas import tpu as pltpu

# ----------------------------- configuration ---------------------------------
DIM_FLOW = 2            # dconf.dim_flow
DIM_H = 8               # dconf.dim_h
DIM_W = 8               # dconf.dim_w
LEN_SEQ = 4             # dconf.len_seq
EXT_DIM = 8             # dconf.ext_dim
RES_NBFILTER = 8        # mconf.res_nbfilter
INTER_EXTNN_CH = 16     # mconf.inter_extnn_inter_channels
LAST_EXTNN_CH = 16      # mconf.last_extnn_inter_channels
D_MODEL = 32            # mconf.transformer_dmodel
N_HEAD = 4              # mconf.transformer_nhead
N_LAYERS = 2            # mconf.transformer_nlayers
D_FF = 64               # transformer feed-forward width (mconf not provided)
K_EXPERTS = 3           # experts in the synthesized MoKLayer
BATCH = 2

HW = DIM_H * DIM_W                # 64
TB = LEN_SEQ * BATCH              # 8
SEQ = LEN_SEQ + 1                 # 5
SB = SEQ * BATCH                  # 10
DH = D_MODEL // N_HEAD            # 8
FHW = DIM_FLOW * HW               # 128

SELU_ALPHA = 1.6732632423543772
SELU_SCALE = 1.0507009873554805

# spatial 3x3 'same' conv taps: col[p] = act[p + off], off = (kh-1)*W + (kw-1)
# jnp.roll semantics (result[p] = x[(p - shift) % n])  =>  shift = (-off) % HW
_SHIFTS = tuple((-((kh - 1) * DIM_W + (kw - 1))) % HW
                for kh in range(3) for kw in range(3))

_ARG_ORDER = (
    "x_flow", "x_ext", "y_ext",
    "ilw", "ilb", "igw", "igb", "iew", "ieb",
    "cmask", "c1w", "c1b", "raw", "rab", "rbw", "rbb", "c2w", "c2b",
    "pw", "tsel", "place", "x0b",
    "amask", "wqkv", "bqkv", "wo", "bo", "g1", "b1",
    "wf1", "bf1", "wf2", "bf2", "g2", "b2",
    "fcw", "ssel", "bsel", "fcb",
    "llw", "llb", "lgw", "lgb", "lew", "leb",
)


# ----------------------------- in-kernel helpers ------------------------------
def dotb(a, b):
    """MXU matmul: bf16 operands, f32 accumulation."""
    return jnp.dot(a.astype(jnp.bfloat16), b.astype(jnp.bfloat16),
                   preferred_element_type=jnp.float32)


def dotb_nt(a, b):
    """a @ b.T with bf16 operands, f32 accumulation (no explicit transpose)."""
    return jax.lax.dot_general(a.astype(jnp.bfloat16), b.astype(jnp.bfloat16),
                               (((1,), (1,)), ((), ())),
                               preferred_element_type=jnp.float32)


def selu(x):
    neg = SELU_ALPHA * (jnp.exp(jnp.minimum(x, 0.0)) - 1.0)
    return SELU_SCALE * jnp.where(x > 0.0, x, neg)


def layer_norm(x, g, b, eps=1e-5):
    mu = jnp.mean(x, axis=-1, keepdims=True)
    var = jnp.mean((x - mu) ** 2, axis=-1, keepdims=True)
    return (x - mu) * jax.lax.rsqrt(var + eps) * g + b


def extnn_block(x, lw, lb, gw, gb, ew, eb, dout):
    """Linear -> SELU -> MoK (softmax-gated experts) -> SELU, fused.

    TODO(synk): MoKLayer definition not provided; synthesized as a softmax-
    gated mixture of K_EXPERTS linear experts (all experts in one wide matmul).
    """
    h = selu(dotb(x, lw) + lb)
    g = dotb(h, gw) + gb
    g = jnp.exp(g - jnp.max(g, axis=-1, keepdims=True))
    g = g / jnp.sum(g, axis=-1, keepdims=True)          # exact softmax
    e = dotb(h, ew) + eb
    out = g[:, 0:1] * e[:, 0:dout]
    for k in range(1, K_EXPERTS):
        out = out + g[:, k:k + 1] * e[:, k * dout:(k + 1) * dout]
    return selu(out)


# ----------------------------- the fused kernel -------------------------------
def _stgsp_kernel(*refs):
    assert len(refs) == len(_ARG_ORDER) + 1
    r = dict(zip(_ARG_ORDER, refs))
    o_ref = refs[-1]

    # 1) extnn_inter over all (t, b) rows at once -> (T*B, C*HW)
    ei = extnn_block(r["x_ext"][...], r["ilw"][...], r["ilb"][...],
                     r["igw"][...], r["igb"][...], r["iew"][...], r["ieb"][...],
                     RES_NBFILTER * HW)

    # 2) conv1 -> res-unit -> conv2 chain on one (C*T*B, HW) slab.
    #    One block-diagonal channel-mix matmul per conv; spatial shifts via
    #    pltpu.roll + precomputed boundary masks (no shift matmuls).
    # TODO(synk): Conv1ResUnitsConv2 definition not provided; synthesized as
    # conv3x3 -> residual unit (2x conv3x3) -> conv3x3 -> +ext -> relu -> linear.
    cmask = r["cmask"][...]

    def conv3x3(act, w_ref, b_ref):
        rows_out = b_ref.shape[0]
        mixed = dotb(w_ref[...], act)                  # (9*rows_out, HW)
        acc = b_ref[...]                               # (rows_out, 1), broadcasts
        for s in range(9):
            blk = mixed[s * rows_out:(s + 1) * rows_out, :]
            if _SHIFTS[s]:
                blk = pltpu.roll(blk, _SHIFTS[s], axis=1)
            acc = acc + blk * cmask[s]
        return acc

    x = r["x_flow"][...]                               # rows (c_in, t, b)
    h = conv3x3(x, r["c1w"], r["c1b"])
    u = conv3x3(jnp.maximum(h, 0.0), r["raw"], r["rab"])
    u = conv3x3(jnp.maximum(u, 0.0), r["rbw"], r["rbb"])
    h = h + u
    h = conv3x3(jnp.maximum(h, 0.0), r["c2w"], r["c2b"])   # rows (c, t, b)

    # 3) + external embedding, relu, per-timestep projection to D_MODEL tokens.
    #    Per channel-block c: (T*B, HW) @ (HW, T*D); diagonal-t selection via
    #    precomputed row masks (no relayout / unaligned slicing needed).
    R = None
    for c in range(RES_NBFILTER):
        a_c = jnp.maximum(h[c * TB:(c + 1) * TB, :] + ei[:, c * HW:(c + 1) * HW], 0.0)
        p_c = dotb(a_c, r["pw"][c])                    # (T*B, T*D)
        R = p_c if R is None else R + p_c
    tok = None
    for t in range(LEN_SEQ):
        z = r["tsel"][t] * R[:, t * D_MODEL:(t + 1) * D_MODEL]
        tok = z if tok is None else tok + z            # (T*B, D), rows (t, b)

    # 4) transformer encoder on rows ordered (s, b); pre-token placed at s = 0
    #    via a 0/1 placement matmul; batch isolation via additive block mask.
    xb = r["x0b"][...] + dotb(r["place"][...], tok)    # (S*B, D)
    amask = r["amask"][...]
    scale = 1.0 / float(DH) ** 0.5
    for l in range(N_LAYERS):
        qkv = dotb(xb, r["wqkv"][l]) + r["bqkv"][l]    # fused QKV: (S*B, 3D)
        ctx = []
        for hh in range(N_HEAD):
            q = qkv[:, hh * DH:(hh + 1) * DH]
            k = qkv[:, D_MODEL + hh * DH:D_MODEL + (hh + 1) * DH]
            v = qkv[:, 2 * D_MODEL + hh * DH:2 * D_MODEL + (hh + 1) * DH]
            sc = dotb_nt(q, k) * scale + amask         # (S*B, S*B), block-diag
            p = jnp.exp(sc - jnp.max(sc, axis=-1, keepdims=True))
            p = p / jnp.sum(p, axis=-1, keepdims=True)  # exact softmax
            ctx.append(dotb(p, v))                     # (S*B, DH)
        attn = dotb(jnp.concatenate(ctx, axis=1), r["wo"][l]) + r["bo"][l]
        xb = layer_norm(xb + attn, r["g1"][l], r["b1"][l])
        ff = jnp.maximum(dotb(xb, r["wf1"][l]) + r["bf1"][l], 0.0)
        ff = dotb(ff, r["wf2"][l]) + r["bf2"][l]
        xb = layer_norm(xb + ff, r["g2"][l], r["b2"][l])

    # 5) FC over the flattened (s, d) features + extnn_last + tanh.
    #    One wide matmul + per-s lane-block selection + a (B, S*B) reduction
    #    matmul (avoids any rows->lanes relayout of the encoder output).
    g = dotb(xb, r["fcw"][...])                        # (S*B, S*F*HW)
    z = None
    for s in range(SEQ):
        zs = r["ssel"][s] * g[:, s * FHW:(s + 1) * FHW]
        z = zs if z is None else z + zs                # (S*B, F*HW)
    fc = dotb(r["bsel"][...], z) + r["fcb"][...]       # (B, F*HW)

    e_last = extnn_block(r["y_ext"][...], r["llw"][...], r["llb"][...],
                         r["lgw"][...], r["lgb"][...], r["lew"][...], r["leb"][...],
                         FHW)
    o_ref[...] = jnp.tanh(fc + e_last)                 # (B, 128): lane-dense


# ----------------------------- forward wrapper --------------------------------
def stgsp_forward(packed, X, X_ext, Y_ext):
    """X: (B, dim_flow*len_seq, H, W), X_ext: (B, len_seq, ext_dim),
    Y_ext: (B, ext_dim). Dropout layers are identity (inference)."""
    # flow maps -> rows ordered (c_in, t, b), lanes = H*W
    x_flow = (X.reshape(BATCH, LEN_SEQ, DIM_FLOW, HW)
                .transpose(2, 1, 0, 3).reshape(DIM_FLOW * LEN_SEQ * BATCH, HW))
    # external features -> rows ordered (t, b)
    x_ext = X_ext.transpose(1, 0, 2).reshape(TB, EXT_DIM)

    args = [x_flow, x_ext, Y_ext] + [packed[k] for k in _ARG_ORDER[3:]]
    out = pl.pallas_call(
        _stgsp_kernel,
        out_shape=jax.ShapeDtypeStruct((BATCH, FHW), jnp.float32),
    )(*args)
    return out.reshape(BATCH, DIM_FLOW, DIM_H, DIM_W)


# ----------------------------- parameter packing ------------------------------
def build_packed_params(seed=0):
    """Build canonical (synthesized) STGSP parameters and repack them once
    into the kernel-friendly layouts (bf16 matmul weights, f32 everything else)."""
    rng = np.random.default_rng(seed)

    def rand(*shape, scale=0.05):
        return rng.normal(0.0, scale, size=shape).astype(np.float32)

    def bf16(x):
        return jnp.asarray(x, dtype=jnp.bfloat16)

    def f32(x):
        return jnp.asarray(x, dtype=jnp.float32)

    p = {}

    # ---- extnn blocks: Linear -> SELU -> MoK -> SELU --------------------------
    def extnn(prefix, inter_ch, dout):
        ew = rand(K_EXPERTS, inter_ch, dout)
        eb = rand(K_EXPERTS, dout, scale=0.01)
        p[prefix + "lw"] = bf16(rand(EXT_DIM, inter_ch))
        p[prefix + "lb"] = f32(rand(1, inter_ch, scale=0.01))
        p[prefix + "gw"] = bf16(rand(inter_ch, K_EXPERTS))
        p[prefix + "gb"] = f32(rand(1, K_EXPERTS, scale=0.01))
        p[prefix + "ew"] = bf16(ew.transpose(1, 0, 2).reshape(inter_ch, K_EXPERTS * dout))
        p[prefix + "eb"] = f32(eb.reshape(1, K_EXPERTS * dout))

    extnn("i", INTER_EXTNN_CH, RES_NBFILTER * HW)     # extnn_inter
    extnn("l", LAST_EXTNN_CH, FHW)                    # extnn_last

    # ---- conv stacks, packed as (t, b)-block-diagonal channel mixers ----------
    def conv_pack(w_list, b_list, cin, cout):
        rin, rout = cin * TB, cout * TB
        wk = np.zeros((9, rout, rin), np.float32)
        bias = np.zeros((rout, 1), np.float32)
        for t in range(LEN_SEQ):
            wt, bt = w_list[t], b_list[t]
            for kh in range(3):
                for kw in range(3):
                    s = kh * 3 + kw
                    for co in range(cout):
                        for ci in range(cin):
                            for b in range(BATCH):
                                ro = co * TB + t * BATCH + b
                                ri = ci * TB + t * BATCH + b
                                wk[s, ro, ri] = wt[co, ci, kh, kw]
            for co in range(cout):
                for b in range(BATCH):
                    bias[co * TB + t * BATCH + b, 0] = bt[co]
        return bf16(wk.reshape(9 * rout, rin)), f32(bias)

    for name, cin, cout in (("c1", DIM_FLOW, RES_NBFILTER),
                            ("ra", RES_NBFILTER, RES_NBFILTER),
                            ("rb", RES_NBFILTER, RES_NBFILTER),
                            ("c2", RES_NBFILTER, RES_NBFILTER)):
        ws = [rand(cout, cin, 3, 3, scale=0.1) for _ in range(LEN_SEQ)]
        bs = [rand(cout, scale=0.01) for _ in range(LEN_SEQ)]
        p[name + "w"], p[name + "b"] = conv_pack(ws, bs, cin, cout)

    # boundary masks for the 9 rolled taps (output-position validity)
    cmask = np.zeros((9, 1, HW), np.float32)
    for kh in range(3):
        for kw in range(3):
            s = kh * 3 + kw
            for hh in range(DIM_H):
                for ww in range(DIM_W):
                    if 0 <= hh + kh - 1 < DIM_H and 0 <= ww + kw - 1 < DIM_W:
                        cmask[s, 0, hh * DIM_W + ww] = 1.0
    p["cmask"] = f32(cmask)

    # ---- per-timestep token projection (part of synthesized Conv1ResUnitsConv2)
    proj_w = [rand(RES_NBFILTER * HW, D_MODEL) for _ in range(LEN_SEQ)]
    proj_b = [rand(D_MODEL, scale=0.01) for _ in range(LEN_SEQ)]
    pw = np.zeros((RES_NBFILTER, HW, LEN_SEQ * D_MODEL), np.float32)
    for t in range(LEN_SEQ):
        pw[:, :, t * D_MODEL:(t + 1) * D_MODEL] = proj_w[t].reshape(RES_NBFILTER, HW, D_MODEL)
    p["pw"] = bf16(pw)

    tsel = np.zeros((LEN_SEQ, TB, 1), np.float32)
    for t in range(LEN_SEQ):
        tsel[t, t * BATCH:(t + 1) * BATCH, 0] = 1.0
    p["tsel"] = f32(tsel)

    # pre_token + projection biases + token placement (rows ordered (s, b))
    pre_token = rand(1, D_MODEL, scale=1.0)
    place = np.zeros((SB, TB), np.float32)
    x0b = np.zeros((SB, D_MODEL), np.float32)
    x0b[0:BATCH, :] = pre_token
    for t in range(LEN_SEQ):
        for b in range(BATCH):
            place[(t + 1) * BATCH + b, t * BATCH + b] = 1.0
            x0b[(t + 1) * BATCH + b, :] = proj_b[t]
    p["place"] = f32(place)
    p["x0b"] = f32(x0b)

    # ---- transformer encoder ---------------------------------------------------
    amask = np.zeros((SB, SB), np.float32)
    for i in range(SB):
        for j in range(SB):
            if i % BATCH != j % BATCH:
                amask[i, j] = -1e9
    p["amask"] = f32(amask)

    def stack(fn):
        return np.stack([fn() for _ in range(N_LAYERS)], axis=0)

    p["wqkv"] = bf16(stack(lambda: rand(D_MODEL, 3 * D_MODEL)))
    p["bqkv"] = f32(stack(lambda: rand(1, 3 * D_MODEL, scale=0.01)))
    p["wo"] = bf16(stack(lambda: rand(D_MODEL, D_MODEL)))
    p["bo"] = f32(stack(lambda: rand(1, D_MODEL, scale=0.01)))
    p["g1"] = f32(np.ones((N_LAYERS, 1, D_MODEL), np.float32))
    p["b1"] = f32(np.zeros((N_LAYERS, 1, D_MODEL), np.float32))
    p["wf1"] = bf16(stack(lambda: rand(D_MODEL, D_FF)))
    p["bf1"] = f32(stack(lambda: rand(1, D_FF, scale=0.01)))
    p["wf2"] = bf16(stack(lambda: rand(D_FF, D_MODEL)))
    p["bf2"] = f32(stack(lambda: rand(1, D_MODEL, scale=0.01)))
    p["g2"] = f32(np.ones((N_LAYERS, 1, D_MODEL), np.float32))
    p["b2"] = f32(np.zeros((N_LAYERS, 1, D_MODEL), np.float32))

    # ---- final FC (weights rearranged into lane-blocks per sequence position) --
    fc_w = rand(SEQ * D_MODEL, FHW)
    fc_b = rand(1, FHW, scale=0.01)
    fcw_wide = np.zeros((D_MODEL, SEQ * FHW), np.float32)
    for s in range(SEQ):
        fcw_wide[:, s * FHW:(s + 1) * FHW] = fc_w[s * D_MODEL:(s + 1) * D_MODEL, :]
    p["fcw"] = bf16(fcw_wide)
    p["fcb"] = f32(fc_b)

    ssel = np.zeros((SEQ, SB, 1), np.float32)
    for s in range(SEQ):
        ssel[s, s * BATCH:(s + 1) * BATCH, 0] = 1.0
    p["ssel"] = f32(ssel)

    bsel = np.zeros((BATCH, SB), np.float32)
    for b in range(BATCH):
        for s in range(SEQ):
            bsel[b, s * BATCH + b] = 1.0
    p["bsel"] = f32(bsel)

    return p


# ----------------------------- main --------------------------------------------
if __name__ == "__main__":
    packed = build_packed_params(seed=0)

    key = jax.random.PRNGKey(0)
    kx, ke, ky = jax.random.split(key, 3)
    X = jax.random.normal(kx, (BATCH, DIM_FLOW * LEN_SEQ, DIM_H, DIM_W), jnp.float32)
    X_ext = jax.random.normal(ke, (BATCH, LEN_SEQ, EXT_DIM), jnp.float32)
    Y_ext = jax.random.normal(ky, (BATCH, EXT_DIM), jnp.float32)

    fwd = jax.jit(stgsp_forward)
    out = fwd(packed, X, X_ext, Y_ext)
    jax.block_until_ready(out)

    assert out.shape == (BATCH, DIM_FLOW, DIM_H, DIM_W)
    assert bool(jnp.all(jnp.isfinite(out)))
    print("KERNEL_OK")
</pallas_src>

<mosaic_0001>
module attributes {stable_mosaic.version = 11 : i64} {
  func.func @_stgsp_kernel(%arg0: memref<16x64xf32, #tpu.memory_space<vmem>>, %arg1: memref<8x8xf32, #tpu.memory_space<vmem>>, %arg2: memref<2x8xf32, #tpu.memory_space<vmem>>, %arg3: memref<8x16xbf16, #tpu.memory_space<vmem>>, %arg4: memref<1x16xf32, #tpu.memory_space<vmem>>, %arg5: memref<16x3xbf16, #tpu.memory_space<vmem>>, %arg6: memref<1x3xf32, #tpu.memory_space<vmem>>, %arg7: memref<16x1536xbf16, #tpu.memory_space<vmem>>, %arg8: memref<1x1536xf32, #tpu.memory_space<vmem>>, %arg9: memref<9x1x64xf32, #tpu.memory_space<vmem>>, %arg10: memref<576x16xbf16, #tpu.memory_space<vmem>>, %arg11: memref<64x1xf32, #tpu.memory_space<vmem>>, %arg12: memref<576x64xbf16, #tpu.memory_space<vmem>>, %arg13: memref<64x1xf32, #tpu.memory_space<vmem>>, %arg14: memref<576x64xbf16, #tpu.memory_space<vmem>>, %arg15: memref<64x1xf32, #tpu.memory_space<vmem>>, %arg16: memref<576x64xbf16, #tpu.memory_space<vmem>>, %arg17: memref<64x1xf32, #tpu.memory_space<vmem>>, %arg18: memref<8x64x128xbf16, #tpu.memory_space<vmem>>, %arg19: memref<4x8x1xf32, #tpu.memory_space<vmem>>, %arg20: memref<10x8xf32, #tpu.memory_space<vmem>>, %arg21: memref<10x32xf32, #tpu.memory_space<vmem>>, %arg22: memref<10x10xf32, #tpu.memory_space<vmem>>, %arg23: memref<2x32x96xbf16, #tpu.memory_space<vmem>>, %arg24: memref<2x1x96xf32, #tpu.memory_space<vmem>>, %arg25: memref<2x32x32xbf16, #tpu.memory_space<vmem>>, %arg26: memref<2x1x32xf32, #tpu.memory_space<vmem>>, %arg27: memref<2x1x32xf32, #tpu.memory_space<vmem>>, %arg28: memref<2x1x32xf32, #tpu.memory_space<vmem>>, %arg29: memref<2x32x64xbf16, #tpu.memory_space<vmem>>, %arg30: memref<2x1x64xf32, #tpu.memory_space<vmem>>, %arg31: memref<2x64x32xbf16, #tpu.memory_space<vmem>>, %arg32: memref<2x1x32xf32, #tpu.memory_space<vmem>>, %arg33: memref<2x1x32xf32, #tpu.memory_space<vmem>>, %arg34: memref<2x1x32xf32, #tpu.memory_space<vmem>>, %arg35: memref<32x640xbf16, #tpu.memory_space<vmem>>, %arg36: memref<5x10x1xf32, #tpu.memory_space<vmem>>, %arg37: memref<2x10xf32, #tpu.memory_space<vmem>>, %arg38: memref<1x128xf32, #tpu.memory_space<vmem>>, %arg39: memref<8x16xbf16, #tpu.memory_space<vmem>>, %arg40: memref<1x16xf32, #tpu.memory_space<vmem>>, %arg41: memref<16x3xbf16, #tpu.memory_space<vmem>>, %arg42: memref<1x3xf32, #tpu.memory_space<vmem>>, %arg43: memref<16x384xbf16, #tpu.memory_space<vmem>>, %arg44: memref<1x384xf32, #tpu.memory_space<vmem>>, %arg45: memref<2x128xf32, #tpu.memory_space<vmem>>) attributes {dimension_semantics = [], scalar_prefetch = 0 : i64, scratch_operands = 0 : i64, tpu.core_type = #tpu.core_type<tc>} {
    %c0 = arith.constant 0 : index
    %c0_0 = arith.constant 0 : index
    %0 = vector.load %arg1[%c0, %c0_0] : memref<8x8xf32, #tpu.memory_space<vmem>>, vector<8x8xf32>
    %c0_1 = arith.constant 0 : index
    %c0_2 = arith.constant 0 : index
    %1 = vector.load %arg3[%c0_1, %c0_2] : memref<8x16xbf16, #tpu.memory_space<vmem>>, vector<8x16xbf16>
    %c0_3 = arith.constant 0 : index
    %c0_4 = arith.constant 0 : index
    %2 = vector.load %arg4[%c0_3, %c0_4] : memref<1x16xf32, #tpu.memory_space<vmem>>, vector<1x16xf32>
    %c0_5 = arith.constant 0 : index
    %c0_6 = arith.constant 0 : index
    %3 = vector.load %arg5[%c0_5, %c0_6] : memref<16x3xbf16, #tpu.memory_space<vmem>>, vector<16x3xbf16>
    %c0_7 = arith.constant 0 : index
    %c0_8 = arith.constant 0 : index
    %4 = vector.load %arg6[%c0_7, %c0_8] : memref<1x3xf32, #tpu.memory_space<vmem>>, vector<1x3xf32>
    %c0_9 = arith.constant 0 : index
    %c0_10 = arith.constant 0 : index
    %5 = vector.load %arg7[%c0_9, %c0_10] : memref<16x1536xbf16, #tpu.memory_space<vmem>>, vector<16x1536xbf16>
    %c0_11 = arith.constant 0 : index
    %c0_12 = arith.constant 0 : index
    %6 = vector.load %arg8[%c0_11, %c0_12] : memref<1x1536xf32, #tpu.memory_space<vmem>>, vector<1x1536xf32>
    %7 = arith.truncf %0 : vector<8x8xf32> to vector<8x8xbf16>
    %cst = arith.constant dense<0.000000e+00> : vector<8x16xf32>
    %8 = tpu.matmul %7, %1, %cst {dimension_numbers = #tpu.dot_dimension_numbers<[1], [0], [0], [1], [0, 0, 1, 1], [], []>} : vector<8x8xbf16>, vector<8x16xbf16>, vector<8x16xf32> -> vector<8x16xf32>
    %9 = vector.broadcast %2 : vector<1x16xf32> to vector<8x16xf32>
    %10 = arith.addf %8, %9 : vector<8x16xf32>
    %cst_13 = arith.constant 0.000000e+00 : f32
    %11 = vector.broadcast %cst_13 : f32 to vector<8x16xf32>
    %12 = arith.minimumf %10, %11 : vector<8x16xf32>
    %13 = math.exp %12 : vector<8x16xf32>
    %cst_14 = arith.constant 1.000000e+00 : f32
    %14 = vector.broadcast %cst_14 : f32 to vector<8x16xf32>
    %15 = arith.subf %13, %14 : vector<8x16xf32>
    %cst_15 = arith.constant 1.67326319 : f32
    %16 = vector.broadcast %cst_15 : f32 to vector<8x16xf32>
    %17 = arith.mulf %16, %15 : vector<8x16xf32>
    %cst_16 = arith.constant 0.000000e+00 : f32
    %18 = vector.broadcast %cst_16 : f32 to vector<8x16xf32>
    %19 = arith.cmpf ogt, %10, %18 : vector<8x16xf32>
    %20 = arith.select %19, %10, %17 : vector<8x16xi1>, vector<8x16xf32>
    %cst_17 = arith.constant 1.05070102 : f32
    %21 = vector.broadcast %cst_17 : f32 to vector<8x16xf32>
    %22 = arith.mulf %21, %20 : vector<8x16xf32>
    %23 = arith.truncf %22 : vector<8x16xf32> to vector<8x16xbf16>
    %cst_18 = arith.constant dense<0.000000e+00> : vector<8x3xf32>
    %24 = tpu.matmul %23, %3, %cst_18 {dimension_numbers = #tpu.dot_dimension_numbers<[1], [0], [0], [1], [0, 0, 1, 1], [], []>} : vector<8x16xbf16>, vector<16x3xbf16>, vector<8x3xf32> -> vector<8x3xf32>
    %25 = vector.broadcast %4 : vector<1x3xf32> to vector<8x3xf32>
    %26 = arith.addf %24, %25 : vector<8x3xf32>
    %cst_19 = arith.constant dense<0xFF800000> : vector<8xf32>
    %27 = vector.multi_reduction <maximumf>, %26, %cst_19 [1] : vector<8x3xf32> to vector<8xf32>
    %28 = vector.shape_cast %27 : vector<8xf32> to vector<8x1xf32>
    %29 = vector.broadcast %28 : vector<8x1xf32> to vector<8x3xf32>
    %30 = arith.subf %26, %29 : vector<8x3xf32>
    %31 = math.exp %30 : vector<8x3xf32>
    %cst_20 = arith.constant dense<0.000000e+00> : vector<8xf32>
    %32 = vector.multi_reduction <add>, %31, %cst_20 [1] : vector<8x3xf32> to vector<8xf32>
    %33 = vector.shape_cast %32 : vector<8xf32> to vector<8x1xf32>
    %34 = vector.broadcast %33 : vector<8x1xf32> to vector<8x3xf32>
    %35 = arith.divf %31, %34 : vector<8x3xf32>
    %36 = arith.truncf %22 : vector<8x16xf32> to vector<8x16xbf16>
    %cst_21 = arith.constant dense<0.000000e+00> : vector<8x1536xf32>
    %37 = tpu.matmul %36, %5, %cst_21 {dimension_numbers = #tpu.dot_dimension_numbers<[1], [0], [0], [1], [0, 0, 1, 1], [], []>} : vector<8x16xbf16>, vector<16x1536xbf16>, vector<8x1536xf32> -> vector<8x1536xf32>
    %38 = vector.broadcast %6 : vector<1x1536xf32> to vector<8x1536xf32>
    %39 = arith.addf %37, %38 : vector<8x1536xf32>
    %40 = vector.extract_strided_slice %35 {offsets = [0, 0], sizes = [8, 1], strides = [1, 1]} : vector<8x3xf32> to vector<8x1xf32>
    %41 = vector.extract_strided_slice %39 {offsets = [0, 0], sizes = [8, 512], strides = [1, 1]} : vector<8x1536xf32> to vector<8x512xf32>
    %42 = vector.broadcast %40 : vector<8x1xf32> to vector<8x512xf32>
    %43 = arith.mulf %42, %41 : vector<8x512xf32>
    %44 = vector.extract_strided_slice %35 {offsets = [0, 1], sizes = [8, 1], strides = [1, 1]} : vector<8x3xf32> to vector<8x1xf32>
    %45 = vector.extract_strided_slice %39 {offsets = [0, 512], sizes = [8, 512], strides = [1, 1]} : vector<8x1536xf32> to vector<8x512xf32>
    %46 = vector.broadcast %44 : vector<8x1xf32> to vector<8x512xf32>
    %47 = arith.mulf %46, %45 : vector<8x512xf32>
    %48 = arith.addf %43, %47 : vector<8x512xf32>
    %49 = vector.extract_strided_slice %35 {offsets = [0, 2], sizes = [8, 1], strides = [1, 1]} : vector<8x3xf32> to vector<8x1xf32>
    %50 = vector.extract_strided_slice %39 {offsets = [0, 1024], sizes = [8, 512], strides = [1, 1]} : vector<8x1536xf32> to vector<8x512xf32>
    %51 = vector.broadcast %49 : vector<8x1xf32> to vector<8x512xf32>
    %52 = arith.mulf %51, %50 : vector<8x512xf32>
    %53 = arith.addf %48, %52 : vector<8x512xf32>
    %cst_22 = arith.constant 0.000000e+00 : f32
    %54 = vector.broadcast %cst_22 : f32 to vector<8x512xf32>
    %55 = arith.minimumf %53, %54 : vector<8x512xf32>
    %56 = math.exp %55 : vector<8x512xf32>
    %cst_23 = arith.constant 1.000000e+00 : f32
    %57 = vector.broadcast %cst_23 : f32 to vector<8x512xf32>
    %58 = arith.subf %56, %57 : vector<8x512xf32>
    %cst_24 = arith.constant 1.67326319 : f32
    %59 = vector.broadcast %cst_24 : f32 to vector<8x512xf32>
    %60 = arith.mulf %59, %58 : vector<8x512xf32>
    %cst_25 = arith.constant 0.000000e+00 : f32
    %61 = vector.broadcast %cst_25 : f32 to vector<8x512xf32>
    %62 = arith.cmpf ogt, %53, %61 : vector<8x512xf32>
    %63 = arith.select %62, %53, %60 : vector<8x512xi1>, vector<8x512xf32>
    %cst_26 = arith.constant 1.05070102 : f32
    %64 = vector.broadcast %cst_26 : f32 to vector<8x512xf32>
    %65 = arith.mulf %64, %63 : vector<8x512xf32>
    %c0_27 = arith.constant 0 : index
    %c0_28 = arith.constant 0 : index
    %c0_29 = arith.constant 0 : index
    %66 = vector.load %arg9[%c0_27, %c0_28, %c0_29] : memref<9x1x64xf32, #tpu.memory_space<vmem>>, vector<9x1x64xf32>
    %c0_30 = arith.constant 0 : index
    %c0_31 = arith.constant 0 : index
    %67 = vector.load %arg0[%c0_30, %c0_31] : memref<16x64xf32, #tpu.memory_space<vmem>>, vector<16x64xf32>
    %c0_32 = arith.constant 0 : index
    %c0_33 = arith.constant 0 : index
    %68 = vector.load %arg10[%c0_32, %c0_33] : memref<576x16xbf16, #tpu.memory_space<vmem>>, vector<576x16xbf16>
    %69 = arith.truncf %67 : vector<16x64xf32> to vector<16x64xbf16>
    %cst_34 = arith.constant dense<0.000000e+00> : vector<576x64xf32>
    %70 = tpu.matmul %68, %69, %cst_34 {dimension_numbers = #tpu.dot_dimension_numbers<[1], [0], [0], [1], [0, 0, 1, 1], [], []>} : vector<576x16xbf16>, vector<16x64xbf16>, vector<576x64xf32> -> vector<576x64xf32>
    %c0_35 = arith.constant 0 : index
    %c0_36 = arith.constant 0 : index
    %71 = vector.load %arg11[%c0_35, %c0_36] : memref<64x1xf32, #tpu.memory_space<vmem>>, vector<64x1xf32>
    %72 = vector.extract_strided_slice %70 {offsets = [0, 0], sizes = [64, 64], strides = [1, 1]} : vector<576x64xf32> to vector<64x64xf32>
    %c9_i32 = arith.constant 9 : i32
    %73 = tpu.dynamic_rotate %72 by %c9_i32 dim 1 : vector<64x64xf32>, i32 -> vector<64x64xf32>
    %74 = vector.extract_strided_slice %66 {offsets = [0, 0, 0], sizes = [1, 1, 64], strides = [1, 1, 1]} : vector<9x1x64xf32> to vector<1x1x64xf32>
    %75 = vector.shape_cast %74 : vector<1x1x64xf32> to vector<1x64xf32>
    %76 = vector.broadcast %75 : vector<1x64xf32> to vector<64x64xf32>
    %77 = arith.mulf %73, %76 : vector<64x64xf32>
    %78 = vector.broadcast %71 : vector<64x1xf32> to vector<64x64xf32>
    %79 = arith.addf %78, %77 : vector<64x64xf32>
    %80 = vector.extract_strided_slice %70 {offsets = [64, 0], sizes = [64, 64], strides = [1, 1]} : vector<576x64xf32> to vector<64x64xf32>
    %c8_i32 = arith.constant 8 : i32
    %81 = tpu.dynamic_rotate %80 by %c8_i32 dim 1 : vector<64x64xf32>, i32 -> vector<64x64xf32>
    %82 = vector.extract_strided_slice %66 {offsets = [1, 0, 0], sizes = [1, 1, 64], strides = [1, 1, 1]} : vector<9x1x64xf32> to vector<1x1x64xf32>
    %83 = vector.shape_cast %82 : vector<1x1x64xf32> to vector<1x64xf32>
    %84 = vector.broadcast %83 : vector<1x64xf32> to vector<64x64xf32>
    %85 = arith.mulf %81, %84 : vector<64x64xf32>
    %86 = arith.addf %79, %85 : vector<64x64xf32>
    %87 = vector.extract_strided_slice %70 {offsets = [128, 0], sizes = [64, 64], strides = [1, 1]} : vector<576x64xf32> to vector<64x64xf32>
    %c7_i32 = arith.constant 7 : i32
    %88 = tpu.dynamic_rotate %87 by %c7_i32 dim 1 : vector<64x64xf32>, i32 -> vector<64x64xf32>
    %89 = vector.extract_strided_slice %66 {offsets = [2, 0, 0], sizes = [1, 1, 64], strides = [1, 1, 1]} : vector<9x1x64xf32> to vector<1x1x64xf32>
    %90 = vector.shape_cast %89 : vector<1x1x64xf32> to vector<1x64xf32>
    %91 = vector.broadcast %90 : vector<1x64xf32> to vector<64x64xf32>
    %92 = arith.mulf %88, %91 : vector<64x64xf32>
    %93 = arith.addf %86, %92 : vector<64x64xf32>
    %94 = vector.extract_strided_slice %70 {offsets = [192, 0], sizes = [64, 64], strides = [1, 1]} : vector<576x64xf32> to vector<64x64xf32>
    %c1_i32 = arith.constant 1 : i32
    %95 = tpu.dynamic_rotate %94 by %c1_i32 dim 1 : vector<64x64xf32>, i32 -> vector<64x64xf32>
    %96 = vector.extract_strided_slice %66 {offsets = [3, 0, 0], sizes = [1, 1, 64], strides = [1, 1, 1]} : vector<9x1x64xf32> to vector<1x1x64xf32>
    %97 = vector.shape_cast %96 : vector<1x1x64xf32> to vector<1x64xf32>
    %98 = vector.broadcast %97 : vector<1x64xf32> to vector<64x64xf32>
    %99 = arith.mulf %95, %98 : vector<64x64xf32>
    %100 = arith.addf %93, %99 : vector<64x64xf32>
    %101 = vector.extract_strided_slice %70 {offsets = [256, 0], sizes = [64, 64], strides = [1, 1]} : vector<576x64xf32> to vector<64x64xf32>
    %102 = vector.extract_strided_slice %66 {offsets = [4, 0, 0], sizes = [1, 1, 64], strides = [1, 1, 1]} : vector<9x1x64xf32> to vector<1x1x64xf32>
    %103 = vector.shape_cast %102 : vector<1x1x64xf32> to vector<1x64xf32>
    %104 = vector.broadcast %103 : vector<1x64xf32> to vector<64x64xf32>
    %105 = arith.mulf %101, %104 : vector<64x64xf32>
    %106 = arith.addf %100, %105 : vector<64x64xf32>
    %107 = vector.extract_strided_slice %70 {offsets = [320, 0], sizes = [64, 64], strides = [1, 1]} : vector<576x64xf32> to vector<64x64xf32>
    %c63_i32 = arith.constant 63 : i32
    %108 = tpu.dynamic_rotate %107 by %c63_i32 dim 1 : vector<64x64xf32>, i32 -> vector<64x64xf32>
    %109 = vector.extract_strided_slice %66 {offsets = [5, 0, 0], sizes = [1, 1, 64], strides = [1, 1, 1]} : vector<9x1x64xf32> to vector<1x1x64xf32>
    %110 = vector.shape_cast %109 : vector<1x1x64xf32> to vector<1x64xf32>
    %111 = vector.broadcast %110 : vector<1x64xf32> to vector<64x64xf32>
    %112 = arith.mulf %108, %111 : vector<64x64xf32>
    %113 = arith.addf %106, %112 : vector<64x64xf32>
    %114 = vector.extract_strided_slice %70 {offsets = [384, 0], sizes = [64, 64], strides = [1, 1]} : vector<576x64xf32> to vector<64x64xf32>
    %c57_i32 = arith.constant 57 : i32
    %115 = tpu.dynamic_rotate %114 by %c57_i32 dim 1 : vector<64x64xf32>, i32 -> vector<64x64xf32>
    %116 = vector.extract_strided_slice %66 {offsets = [6, 0, 0], sizes = [1, 1, 64], strides = [1, 1, 1]} : vector<9x1x64xf32> to vector<1x1x64xf32>
    %117 = vector.shape_cast %116 : vector<1x1x64xf32> to vector<1x64xf32>
    %118 = vector.broadcast %117 : vector<1x64xf32> to vector<64x64xf32>
    %119 = arith.mulf %115, %118 : vector<64x64xf32>
    %120 = arith.addf %113, %119 : vector<64x64xf32>
    %121 = vector.extract_strided_slice %70 {offsets = [448, 0], sizes = [64, 64], strides = [1, 1]} : vector<576x64xf32> to vector<64x64xf32>
    %c56_i32 = arith.constant 56 : i32
    %122 = tpu.dynamic_rotate %121 by %c56_i32 dim 1 : vector<64x64xf32>, i32 -> vector<64x64xf32>
    %123 = vector.extract_strided_slice %66 {offsets = [7, 0, 0], sizes = [1, 1, 64], strides = [1, 1, 1]} : vector<9x1x64xf32> to vector<1x1x64xf32>
    %124 = vector.shape_cast %123 : vector<1x1x64xf32> to vector<1x64xf32>
    %125 = vector.broadcast %124 : vector<1x64xf32> to vector<64x64xf32>
    %126 = arith.mulf %122, %125 : vector<64x64xf32>
    %127 = arith.addf %120, %126 : vector<64x64xf32>
    %128 = vector.extract_strided_slice %70 {offsets = [512, 0], sizes = [64, 64], strides = [1, 1]} : vector<576x64xf32> to vector<64x64xf32>
    %c55_i32 = arith.constant 55 : i32
    %129 = tpu.dynamic_rotate %128 by %c55_i32 dim 1 : vector<64x64xf32>, i32 -> vector<64x64xf32>
    %130 = vector.extract_strided_slice %66 {offsets = [8, 0, 0], sizes = [1, 1, 64], strides = [1, 1, 1]} : vector<9x1x64xf32> to vector<1x1x64xf32>
    %131 = vector.shape_cast %130 : vector<1x1x64xf32> to vector<1x64xf32>
    %132 = vector.broadcast %131 : vector<1x64xf32> to vector<64x64xf32>
    %133 = arith.mulf %129, %132 : vector<64x64xf32>
    %134 = arith.addf %127, %133 : vector<64x64xf32>
    %cst_37 = arith.constant 0.000000e+00 : f32
    %135 = vector.broadcast %cst_37 : f32 to vector<64x64xf32>
    %136 = arith.maximumf %134, %135 : vector<64x64xf32>
    %c0_38 = arith.constant 0 : index
    %c0_39 = arith.constant 0 : index
    %137 = vector.load %arg12[%c0_38, %c0_39] : memref<576x64xbf16, #tpu.memory_space<vmem>>, vector<576x64xbf16>
    %138 = arith.truncf %136 : vector<64x64xf32> to vector<64x64xbf16>
    %cst_40 = arith.constant dense<0.000000e+00> : vector<576x64xf32>
    %139 = tpu.matmul %137, %138, %cst_40 {dimension_numbers = #tpu.dot_dimension_numbers<[1], [0], [0], [1], [0, 0, 1, 1], [], []>} : vector<576x64xbf16>, vector<64x64xbf16>, vector<576x64xf32> -> vector<576x64xf32>
    %c0_41 = arith.constant 0 : index
    %c0_42 = arith.constant 0 : index
    %140 = vector.load %arg13[%c0_41, %c0_42] : memref<64x1xf32, #tpu.memory_space<vmem>>, vector<64x1xf32>
    %141 = vector.extract_strided_slice %139 {offsets = [0, 0], sizes = [64, 64], strides = [1, 1]} : vector<576x64xf32> to vector<64x64xf32>
    %c9_i32_43 = arith.constant 9 : i32
    %142 = tpu.dynamic_rotate %141 by %c9_i32_43 dim 1 : vector<64x64xf32>, i32 -> vector<64x64xf32>
    %143 = vector.extract_strided_slice %66 {offsets = [0, 0, 0], sizes = [1, 1, 64], strides = [1, 1, 1]} : vector<9x1x64xf32> to vector<1x1x64xf32>
    %144 = vector.shape_cast %143 : vector<1x1x64xf32> to vector<1x64xf32>
    %145 = vector.broadcast %144 : vector<1x64xf32> to vector<64x64xf32>
    %146 = arith.mulf %142, %145 : vector<64x64xf32>
    %147 = vector.broadcast %140 : vector<64x1xf32> to vector<64x64xf32>
    %148 = arith.addf %147, %146 : vector<64x64xf32>
    %149 = vector.extract_strided_slice %139 {offsets = [64, 0], sizes = [64, 64], strides = [1, 1]} : vector<576x64xf32> to vector<64x64xf32>
    %c8_i32_44 = arith.constant 8 : i32
    %150 = tpu.dynamic_rotate %149 by %c8_i32_44 dim 1 : vector<64x64xf32>, i32 -> vector<64x64xf32>
    %151 = vector.extract_strided_slice %66 {offsets = [1, 0, 0], sizes = [1, 1, 64], strides = [1, 1, 1]} : vector<9x1x64xf32> to vector<1x1x64xf32>
    %152 = vector.shape_cast %151 : vector<1x1x64xf32> to vector<1x64xf32>
    %153 = vector.broadcast %152 : vector<1x64xf32> to vector<64x64xf32>
    %154 = arith.mulf %150, %153 : vector<64x64xf32>
    %155 = arith.addf %148, %154 : vector<64x64xf32>
    %156 = vector.extract_strided_slice %139 {offsets = [128, 0], sizes = [64, 64], strides = [1, 1]} : vector<576x64xf32> to vector<64x64xf32>
    %c7_i32_45 = arith.constant 7 : i32
    %157 = tpu.dynamic_rotate %156 by %c7_i32_45 dim 1 : vector<64x64xf32>, i32 -> vector<64x64xf32>
    %158 = vector.extract_strided_slice %66 {offsets = [2, 0, 0], sizes = [1, 1, 64], strides = [1, 1, 1]} : vector<9x1x64xf32> to vector<1x1x64xf32>
    %159 = vector.shape_cast %158 : vector<1x1x64xf32> to vector<1x64xf32>
    %160 = vector.broadcast %159 : vector<1x64xf32> to vector<64x64xf32>
    %161 = arith.mulf %157, %160 : vector<64x64xf32>
    %162 = arith.addf %155, %161 : vector<64x64xf32>
    %163 = vector.extract_strided_slice %139 {offsets = [192, 0], sizes = [64, 64], strides = [1, 1]} : vector<576x64xf32> to vector<64x64xf32>
    %c1_i32_46 = arith.constant 1 : i32
    %164 = tpu.dynamic_rotate %163 by %c1_i32_46 dim 1 : vector<64x64xf32>, i32 -> vector<64x64xf32>
    %165 = vector.extract_strided_slice %66 {offsets = [3, 0, 0], sizes = [1, 1, 64], strides = [1, 1, 1]} : vector<9x1x64xf32> to vector<1x1x64xf32>
    %166 = vector.shape_cast %165 : vector<1x1x64xf32> to vector<1x64xf32>
    %167 = vector.broadcast %166 : vector<1x64xf32> to vector<64x64xf32>
    %168 = arith.mulf %164, %167 : vector<64x64xf32>
    %169 = arith.addf %162, %168 : vector<64x64xf32>
    %170 = vector.extract_strided_slice %139 {offsets = [256, 0], sizes = [64, 64], strides = [1, 1]} : vector<576x64xf32> to vector<64x64xf32>
    %171 = vector.extract_strided_slice %66 {offsets = [4, 0, 0], sizes = [1, 1, 64], strides = [1, 1, 1]} : vector<9x1x64xf32> to vector<1x1x64xf32>
    %172 = vector.shape_cast %171 : vector<1x1x64xf32> to vector<1x64xf32>
    %173 = vector.broadcast %172 : vector<1x64xf32> to vector<64x64xf32>
    %174 = arith.mulf %170, %173 : vector<64x64xf32>
    %175 = arith.addf %169, %174 : vector<64x64xf32>
    %176 = vector.extract_strided_slice %139 {offsets = [320, 0], sizes = [64, 64], strides = [1, 1]} : vector<576x64xf32> to vector<64x64xf32>
    %c63_i32_47 = arith.constant 63 : i32
    %177 = tpu.dynamic_rotate %176 by %c63_i32_47 dim 1 : vector<64x64xf32>, i32 -> vector<64x64xf32>
    %178 = vector.extract_strided_slice %66 {offsets = [5, 0, 0], sizes = [1, 1, 64], strides = [1, 1, 1]} : vector<9x1x64xf32> to vector<1x1x64xf32>
    %179 = vector.shape_cast %178 : vector<1x1x64xf32> to vector<1x64xf32>
    %180 = vector.broadcast %179 : vector<1x64xf32> to vector<64x64xf32>
    %181 = arith.mulf %177, %180 : vector<64x64xf32>
    %182 = arith.addf %175, %181 : vector<64x64xf32>
    %183 = vector.extract_strided_slice %139 {offsets = [384, 0], sizes = [64, 64], strides = [1, 1]} : vector<576x64xf32> to vector<64x64xf32>
    %c57_i32_48 = arith.constant 57 : i32
    %184 = tpu.dynamic_rotate %183 by %c57_i32_48 dim 1 : vector<64x64xf32>, i32 -> vector<64x64xf32>
    %185 = vector.extract_strided_slice %66 {offsets = [6, 0, 0], sizes = [1, 1, 64], strides = [1, 1, 1]} : vector<9x1x64xf32> to vector<1x1x64xf32>
    %186 = vector.shape_cast %185 : vector<1x1x64xf32> to vector<1x64xf32>
    %187 = vector.broadcast %186 : vector<1x64xf32> to vector<64x64xf32>
    %188 = arith.mulf %184, %187 : vector<64x64xf32>
    %189 = arith.addf %182, %188 : vector<64x64xf32>
    %190 = vector.extract_strided_slice %139 {offsets = [448, 0], sizes = [64, 64], strides = [1, 1]} : vector<576x64xf32> to vector<64x64xf32>
    %c56_i32_49 = arith.constant 56 : i32
    %191 = tpu.dynamic_rotate %190 by %c56_i32_49 dim 1 : vector<64x64xf32>, i32 -> vector<64x64xf32>
    %192 = vector.extract_strided_slice %66 {offsets = [7, 0, 0], sizes = [1, 1, 64], strides = [1, 1, 1]} : vector<9x1x64xf32> to vector<1x1x64xf32>
    %193 = vector.shape_cast %192 : vector<1x1x64xf32> to vector<1x64xf32>
    %194 = vector.broadcast %193 : vector<1x64xf32> to vector<64x64xf32>
    %195 = arith.mulf %191, %194 : vector<64x64xf32>
    %196 = arith.addf %189, %195 : vector<64x64xf32>
    %197 = vector.extract_strided_slice %139 {offsets = [512, 0], sizes = [64, 64], strides = [1, 1]} : vector<576x64xf32> to vector<64x64xf32>
    %c55_i32_50 = arith.constant 55 : i32
    %198 = tpu.dynamic_rotate %197 by %c55_i32_50 dim 1 : vector<64x64xf32>, i32 -> vector<64x64xf32>
    %199 = vector.extract_strided_slice %66 {offsets = [8, 0, 0], sizes = [1, 1, 64], strides = [1, 1, 1]} : vector<9x1x64xf32> to vector<1x1x64xf32>
    %200 = vector.shape_cast %199 : vector<1x1x64xf32> to vector<1x64xf32>
    %201 = vector.broadcast %200 : vector<1x64xf32> to vector<64x64xf32>
    %202 = arith.mulf %198, %201 : vector<64x64xf32>
    %203 = arith.addf %196, %202 : vector<64x64xf32>
    %cst_51 = arith.constant 0.000000e+00 : f32
    %204 = vector.broadcast %cst_51 : f32 to vector<64x64xf32>
    %205 = arith.maximumf %203, %204 : vector<64x64xf32>
    %c0_52 = arith.constant 0 : index
    %c0_53 = arith.constant 0 : index
    %206 = vector.load %arg14[%c0_52, %c0_53] : memref<576x64xbf16, #tpu.memory_space<vmem>>, vector<576x64xbf16>
    %207 = arith.truncf %205 : vector<64x64xf32> to vector<64x64xbf16>
    %cst_54 = arith.constant dense<0.000000e+00> : vector<576x64xf32>
    %208 = tpu.matmul %206, %207, %cst_54 {dimension_numbers = #tpu.dot_dimension_numbers<[1], [0], [0], [1], [0, 0, 1, 1], [], []>} : vector<576x64xbf16>, vector<64x64xbf16>, vector<576x64xf32> -> vector<576x64xf32>
    %c0_55 = arith.constant 0 : index
    %c0_56 = arith.constant 0 : index
    %209 = vector.load %arg15[%c0_55, %c0_56] : memref<64x1xf32, #tpu.memory_space<vmem>>, vector<64x1xf32>
    %210 = vector.extract_strided_slice %208 {offsets = [0, 0], sizes = [64, 64], strides = [1, 1]} : vector<576x64xf32> to vector<64x64xf32>
    %c9_i32_57 = arith.constant 9 : i32
    %211 = tpu.dynamic_rotate %210 by %c9_i32_57 dim 1 : vector<64x64xf32>, i32 -> vector<64x64xf32>
    %212 = vector.extract_strided_slice %66 {offsets = [0, 0, 0], sizes = [1, 1, 64], strides = [1, 1, 1]} : vector<9x1x64xf32> to vector<1x1x64xf32>
    %213 = vector.shape_cast %212 : vector<1x1x64xf32> to vector<1x64xf32>
    %214 = vector.broadcast %213 : vector<1x64xf32> to vector<64x64xf32>
    %215 = arith.mulf %211, %214 : vector<64x64xf32>
    %216 = vector.broadcast %209 : vector<64x1xf32> to vector<64x64xf32>
    %217 = arith.addf %216, %215 : vector<64x64xf32>
    %218 = vector.extract_strided_slice %208 {offsets = [64, 0], sizes = [64, 64], strides = [1, 1]} : vector<576x64xf32> to vector<64x64xf32>
    %c8_i32_58 = arith.constant 8 : i32
    %219 = tpu.dynamic_rotate %218 by %c8_i32_58 dim 1 : vector<64x64xf32>, i32 -> vector<64x64xf32>
    %220 = vector.extract_strided_slice %66 {offsets = [1, 0, 0], sizes = [1, 1, 64], strides = [1, 1, 1]} : vector<9x1x64xf32> to vector<1x1x64xf32>
    %221 = vector.shape_cast %220 : vector<1x1x64xf32> to vector<1x64xf32>
    %222 = vector.broadcast %221 : vector<1x64xf32> to vector<64x64xf32>
    %223 = arith.mulf %219, %222 : vector<64x64xf32>
    %224 = arith.addf %217, %223 : vector<64x64xf32>
    %225 = vector.extract_strided_slice %208 {offsets = [128, 0], sizes = [64, 64], strides = [1, 1]} : vector<576x64xf32> to vector<64x64xf32>
    %c7_i32_59 = arith.constant 7 : i32
    %226 = tpu.dynamic_rotate %225 by %c7_i32_59 dim 1 : vector<64x64xf32>, i32 -> vector<64x64xf32>
    %227 = vector.extract_strided_slice %66 {offsets = [2, 0, 0], sizes = [1, 1, 64], strides = [1, 1, 1]} : vector<9x1x64xf32> to vector<1x1x64xf32>
    %228 = vector.shape_cast %227 : vector<1x1x64xf32> to vector<1x64xf32>
    %229 = vector.broadcast %228 : vector<1x64xf32> to vector<64x64xf32>
    %230 = arith.mulf %226, %229 : vector<64x64xf32>
    %231 = arith.addf %224, %230 : vector<64x64xf32>
    %232 = vector.extract_strided_slice %208 {offsets = [192, 0], sizes = [64, 64], strides = [1, 1]} : vector<576x64xf32> to vector<64x64xf32>
    %c1_i32_60 = arith.constant 1 : i32
    %233 = tpu.dynamic_rotate %232 by %c1_i32_60 dim 1 : vector<64x64xf32>, i32 -> vector<64x64xf32>
    %234 = vector.extract_strided_slice %66 {offsets = [3, 0, 0], sizes = [1, 1, 64], strides = [1, 1, 1]} : vector<9x1x64xf32> to vector<1x1x64xf32>
    %235 = vector.shape_cast %234 : vector<1x1x64xf32> to vector<1x64xf32>
    %236 = vector.broadcast %235 : vector<1x64xf32> to vector<64x64xf32>
    %237 = arith.mulf %233, %236 : vector<64x64xf32>
    %238 = arith.addf %231, %237 : vector<64x64xf32>
    %239 = vector.extract_strided_slice %208 {offsets = [256, 0], sizes = [64, 64], strides = [1, 1]} : vector<576x64xf32> to vector<64x64xf32>
    %240 = vector.extract_strided_slice %66 {offsets = [4, 0, 0], sizes = [1, 1, 64], strides = [1, 1, 1]} : vector<9x1x64xf32> to vector<1x1x64xf32>
    %241 = vector.shape_cast %240 : vector<1x1x64xf32> to vector<1x64xf32>
    %242 = vector.broadcast %241 : vector<1x64xf32> to vector<64x64xf32>
    %243 = arith.mulf %239, %242 : vector<64x64xf32>
    %244 = arith.addf %238, %243 : vector<64x64xf32>
    %245 = vector.extract_strided_slice %208 {offsets = [320, 0], sizes = [64, 64], strides = [1, 1]} : vector<576x64xf32> to vector<64x64xf32>
    %c63_i32_61 = arith.constant 63 : i32
    %246 = tpu.dynamic_rotate %245 by %c63_i32_61 dim 1 : vector<64x64xf32>, i32 -> vector<64x64xf32>
    %247 = vector.extract_strided_slice %66 {offsets = [5, 0, 0], sizes = [1, 1, 64], strides = [1, 1, 1]} : vector<9x1x64xf32> to vector<1x1x64xf32>
    %248 = vector.shape_cast %247 : vector<1x1x64xf32> to vector<1x64xf32>
    %249 = vector.broadcast %248 : vector<1x64xf32> to vector<64x64xf32>
    %250 = arith.mulf %246, %249 : vector<64x64xf32>
    %251 = arith.addf %244, %250 : vector<64x64xf32>
    %252 = vector.extract_strided_slice %208 {offsets = [384, 0], sizes = [64, 64], strides = [1, 1]} : vector<576x64xf32> to vector<64x64xf32>
    %c57_i32_62 = arith.constant 57 : i32
    %253 = tpu.dynamic_rotate %252 by %c57_i32_62 dim 1 : vector<64x64xf32>, i32 -> vector<64x64xf32>
    %254 = vector.extract_strided_slice %66 {offsets = [6, 0, 0], sizes = [1, 1, 64], strides = [1, 1, 1]} : vector<9x1x64xf32> to vector<1x1x64xf32>
    %255 = vector.shape_cast %254 : vector<1x1x64xf32> to vector<1x64xf32>
    %256 = vector.broadcast %255 : vector<1x64xf32> to vector<64x64xf32>
    %257 = arith.mulf %253, %256 : vector<64x64xf32>
    %258 = arith.addf %251, %257 : vector<64x64xf32>
    %259 = vector.extract_strided_slice %208 {offsets = [448, 0], sizes = [64, 64], strides = [1, 1]} : vector<576x64xf32> to vector<64x64xf32>
    %c56_i32_63 = arith.constant 56 : i32
    %260 = tpu.dynamic_rotate %259 by %c56_i32_63 dim 1 : vector<64x64xf32>, i32 -> vector<64x64xf32>
    %261 = vector.extract_strided_slice %66 {offsets = [7, 0, 0], sizes = [1, 1, 64], strides = [1, 1, 1]} : vector<9x1x64xf32> to vector<1x1x64xf32>
    %262 = vector.shape_cast %261 : vector<1x1x64xf32> to vector<1x64xf32>
    %263 = vector.broadcast %262 : vector<1x64xf32> to vector<64x64xf32>
    %264 = arith.mulf %260, %263 : vector<64x64xf32>
    %265 = arith.addf %258, %264 : vector<64x64xf32>
    %266 = vector.extract_strided_slice %208 {offsets = [512, 0], sizes = [64, 64], strides = [1, 1]} : vector<576x64xf32> to vector<64x64xf32>
    %c55_i32_64 = arith.constant 55 : i32
    %267 = tpu.dynamic_rotate %266 by %c55_i32_64 dim 1 : vector<64x64xf32>, i32 -> vector<64x64xf32>
    %268 = vector.extract_strided_slice %66 {offsets = [8, 0, 0], sizes = [1, 1, 64], strides = [1, 1, 1]} : vector<9x1x64xf32> to vector<1x1x64xf32>
    %269 = vector.shape_cast %268 : vector<1x1x64xf32> to vector<1x64xf32>
    %270 = vector.broadcast %269 : vector<1x64xf32> to vector<64x64xf32>
    %271 = arith.mulf %267, %270 : vector<64x64xf32>
    %272 = arith.addf %265, %271 : vector<64x64xf32>
    %273 = arith.addf %134, %272 : vector<64x64xf32>
    %cst_65 = arith.constant 0.000000e+00 : f32
    %274 = vector.broadcast %cst_65 : f32 to vector<64x64xf32>
    %275 = arith.maximumf %273, %274 : vector<64x64xf32>
    %c0_66 = arith.constant 0 : index
    %c0_67 = arith.constant 0 : index
    %276 = vector.load %arg16[%c0_66, %c0_67] : memref<576x64xbf16, #tpu.memory_space<vmem>>, vector<576x64xbf16>
    %277 = arith.truncf %275 : vector<64x64xf32> to vector<64x64xbf16>
    %cst_68 = arith.constant dense<0.000000e+00> : vector<576x64xf32>
    %278 = tpu.matmul %276, %277, %cst_68 {dimension_numbers = #tpu.dot_dimension_numbers<[1], [0], [0], [1], [0, 0, 1, 1], [], []>} : vector<576x64xbf16>, vector<64x64xbf16>, vector<576x64xf32> -> vector<576x64xf32>
    %c0_69 = arith.constant 0 : index
    %c0_70 = arith.constant 0 : index
    %279 = vector.load %arg17[%c0_69, %c0_70] : memref<64x1xf32, #tpu.memory_space<vmem>>, vector<64x1xf32>
    %280 = vector.extract_strided_slice %278 {offsets = [0, 0], sizes = [64, 64], strides = [1, 1]} : vector<576x64xf32> to vector<64x64xf32>
    %c9_i32_71 = arith.constant 9 : i32
    %281 = tpu.dynamic_rotate %280 by %c9_i32_71 dim 1 : vector<64x64xf32>, i32 -> vector<64x64xf32>
    %282 = vector.extract_strided_slice %66 {offsets = [0, 0, 0], sizes = [1, 1, 64], strides = [1, 1, 1]} : vector<9x1x64xf32> to vector<1x1x64xf32>
    %283 = vector.shape_cast %282 : vector<1x1x64xf32> to vector<1x64xf32>
    %284 = vector.broadcast %283 : vector<1x64xf32> to vector<64x64xf32>
    %285 = arith.mulf %281, %284 : vector<64x64xf32>
    %286 = vector.broadcast %279 : vector<64x1xf32> to vector<64x64xf32>
    %287 = arith.addf %286, %285 : vector<64x64xf32>
    %288 = vector.extract_strided_slice %278 {offsets = [64, 0], sizes = [64, 64], strides = [1, 1]} : vector<576x64xf32> to vector<64x64xf32>
    %c8_i32_72 = arith.constant 8 : i32
    %289 = tpu.dynamic_rotate %288 by %c8_i32_72 dim 1 : vector<64x64xf32>, i32 -> vector<64x64xf32>
    %290 = vector.extract_strided_slice %66 {offsets = [1, 0, 0], sizes = [1, 1, 64], strides = [1, 1, 1]} : vector<9x1x64xf32> to vector<1x1x64xf32>
    %291 = vector.shape_cast %290 : vector<1x1x64xf32> to vector<1x64xf32>
    %292 = vector.broadcast %291 : vector<1x64xf32> to vector<64x64xf32>
    %293 = arith.mulf %289, %292 : vector<64x64xf32>
    %294 = arith.addf %287, %293 : vector<64x64xf32>
    %295 = vector.extract_strided_slice %278 {offsets = [128, 0], sizes = [64, 64], strides = [1, 1]} : vector<576x64xf32> to vector<64x64xf32>
    %c7_i32_73 = arith.constant 7 : i32
    %296 = tpu.dynamic_rotate %295 by %c7_i32_73 dim 1 : vector<64x64xf32>, i32 -> vector<64x64xf32>
    %297 = vector.extract_strided_slice %66 {offsets = [2, 0, 0], sizes = [1, 1, 64], strides = [1, 1, 1]} : vector<9x1x64xf32> to vector<1x1x64xf32>
    %298 = vector.shape_cast %297 : vector<1x1x64xf32> to vector<1x64xf32>
    %299 = vector.broadcast %298 : vector<1x64xf32> to vector<64x64xf32>
    %300 = arith.mulf %296, %299 : vector<64x64xf32>
    %301 = arith.addf %294, %300 : vector<64x64xf32>
    %302 = vector.extract_strided_slice %278 {offsets = [192, 0], sizes = [64, 64], strides = [1, 1]} : vector<576x64xf32> to vector<64x64xf32>
    %c1_i32_74 = arith.constant 1 : i32
    %303 = tpu.dynamic_rotate %302 by %c1_i32_74 dim 1 : vector<64x64xf32>, i32 -> vector<64x64xf32>
    %304 = vector.extract_strided_slice %66 {offsets = [3, 0, 0], sizes = [1, 1, 64], strides = [1, 1, 1]} : vector<9x1x64xf32> to vector<1x1x64xf32>
    %305 = vector.shape_cast %304 : vector<1x1x64xf32> to vector<1x64xf32>
    %306 = vector.broadcast %305 : vector<1x64xf32> to vector<64x64xf32>
    %307 = arith.mulf %303, %306 : vector<64x64xf32>
    %308 = arith.addf %301, %307 : vector<64x64xf32>
    %309 = vector.extract_strided_slice %278 {offsets = [256, 0], sizes = [64, 64], strides = [1, 1]} : vector<576x64xf32> to vector<64x64xf32>
    %310 = vector.extract_strided_slice %66 {offsets = [4, 0, 0], sizes = [1, 1, 64], strides = [1, 1, 1]} : vector<9x1x64xf32> to vector<1x1x64xf32>
    %311 = vector.shape_cast %310 : vector<1x1x64xf32> to vector<1x64xf32>
    %312 = vector.broadcast %311 : vector<1x64xf32> to vector<64x64xf32>
    %313 = arith.mulf %309, %312 : vector<64x64xf32>
    %314 = arith.addf %308, %313 : vector<64x64xf32>
    %315 = vector.extract_strided_slice %278 {offsets = [320, 0], sizes = [64, 64], strides = [1, 1]} : vector<576x64xf32> to vector<64x64xf32>
    %c63_i32_75 = arith.constant 63 : i32
    %316 = tpu.dynamic_rotate %315 by %c63_i32_75 dim 1 : vector<64x64xf32>, i32 -> vector<64x64xf32>
    %317 = vector.extract_strided_slice %66 {offsets = [5, 0, 0], sizes = [1, 1, 64], strides = [1, 1, 1]} : vector<9x1x64xf32> to vector<1x1x64xf32>
    %318 = vector.shape_cast %317 : vector<1x1x64xf32> to vector<1x64xf32>
    %319 = vector.broadcast %318 : vector<1x64xf32> to vector<64x64xf32>
    %320 = arith.mulf %316, %319 : vector<64x64xf32>
    %321 = arith.addf %314, %320 : vector<64x64xf32>
    %322 = vector.extract_strided_slice %278 {offsets = [384, 0], sizes = [64, 64], strides = [1, 1]} : vector<576x64xf32> to vector<64x64xf32>
    %c57_i32_76 = arith.constant 57 : i32
    %323 = tpu.dynamic_rotate %322 by %c57_i32_76 dim 1 : vector<64x64xf32>, i32 -> vector<64x64xf32>
    %324 = vector.extract_strided_slice %66 {offsets = [6, 0, 0], sizes = [1, 1, 64], strides = [1, 1, 1]} : vector<9x1x64xf32> to vector<1x1x64xf32>
    %325 = vector.shape_cast %324 : vector<1x1x64xf32> to vector<1x64xf32>
    %326 = vector.broadcast %325 : vector<1x64xf32> to vector<64x64xf32>
    %327 = arith.mulf %323, %326 : vector<64x64xf32>
    %328 = arith.addf %321, %327 : vector<64x64xf32>
    %329 = vector.extract_strided_slice %278 {offsets = [448, 0], sizes = [64, 64], strides = [1, 1]} : vector<576x64xf32> to vector<64x64xf32>
    %c56_i32_77 = arith.constant 56 : i32
    %330 = tpu.dynamic_rotate %329 by %c56_i32_77 dim 1 : vector<64x64xf32>, i32 -> vector<64x64xf32>
    %331 = vector.extract_strided_slice %66 {offsets = [7, 0, 0], sizes = [1, 1, 64], strides = [1, 1, 1]} : vector<9x1x64xf32> to vector<1x1x64xf32>
    %332 = vector.shape_cast %331 : vector<1x1x64xf32> to vector<1x64xf32>
    %333 = vector.broadcast %332 : vector<1x64xf32> to vector<64x64xf32>
    %334 = arith.mulf %330, %333 : vector<64x64xf32>
    %335 = arith.addf %328, %334 : vector<64x64xf32>
    %336 = vector.extract_strided_slice %278 {offsets = [512, 0], sizes = [64, 64], strides = [1, 1]} : vector<576x64xf32> to vector<64x64xf32>
    %c55_i32_78 = arith.constant 55 : i32
    %337 = tpu.dynamic_rotate %336 by %c55_i32_78 dim 1 : vector<64x64xf32>, i32 -> vector<64x64xf32>
    %338 = vector.extract_strided_slice %66 {offsets = [8, 0, 0], sizes = [1, 1, 64], strides = [1, 1, 1]} : vector<9x1x64xf32> to vector<1x1x64xf32>
    %339 = vector.shape_cast %338 : vector<1x1x64xf32> to vector<1x64xf32>
    %340 = vector.broadcast %339 : vector<1x64xf32> to vector<64x64xf32>
    %341 = arith.mulf %337, %340 : vector<64x64xf32>
    %342 = arith.addf %335, %341 : vector<64x64xf32>
    %343 = vector.extract_strided_slice %342 {offsets = [0, 0], sizes = [8, 64], strides = [1, 1]} : vector<64x64xf32> to vector<8x64xf32>
    %344 = vector.extract_strided_slice %65 {offsets = [0, 0], sizes = [8, 64], strides = [1, 1]} : vector<8x512xf32> to vector<8x64xf32>
    %345 = arith.addf %343, %344 : vector<8x64xf32>
    %cst_79 = arith.constant 0.000000e+00 : f32
    %346 = vector.broadcast %cst_79 : f32 to vector<8x64xf32>
    %347 = arith.maximumf %345, %346 : vector<8x64xf32>
    %c0_80 = arith.constant 0 : index
    %c0_81 = arith.constant 0 : index
    %c0_82 = arith.constant 0 : index
    %348 = vector.load %arg18[%c0_80, %c0_81, %c0_82] : memref<8x64x128xbf16, #tpu.memory_space<vmem>>, vector<1x64x128xbf16>
    %349 = vector.shape_cast %348 : vector<1x64x128xbf16> to vector<64x128xbf16>
    %350 = arith.truncf %347 : vector<8x64xf32> to vector<8x64xbf16>
    %cst_83 = arith.constant dense<0.000000e+00> : vector<8x128xf32>
    %351 = tpu.matmul %350, %349, %cst_83 {dimension_numbers = #tpu.dot_dimension_numbers<[1], [0], [0], [1], [0, 0, 1, 1], [], []>} : vector<8x64xbf16>, vector<64x128xbf16>, vector<8x128xf32> -> vector<8x128xf32>
    %352 = vector.extract_strided_slice %342 {offsets = [8, 0], sizes = [8, 64], strides = [1, 1]} : vector<64x64xf32> to vector<8x64xf32>
    %353 = vector.extract_strided_slice %65 {offsets = [0, 64], sizes = [8, 64], strides = [1, 1]} : vector<8x512xf32> to vector<8x64xf32>
    %354 = arith.addf %352, %353 : vector<8x64xf32>
    %cst_84 = arith.constant 0.000000e+00 : f32
    %355 = vector.broadcast %cst_84 : f32 to vector<8x64xf32>
    %356 = arith.maximumf %354, %355 : vector<8x64xf32>
    %c1 = arith.constant 1 : index
    %c0_85 = arith.constant 0 : index
    %c0_86 = arith.constant 0 : index
    %357 = vector.load %arg18[%c1, %c0_85, %c0_86] : memref<8x64x128xbf16, #tpu.memory_space<vmem>>, vector<1x64x128xbf16>
    %358 = vector.shape_cast %357 : vector<1x64x128xbf16> to vector<64x128xbf16>
    %359 = arith.truncf %356 : vector<8x64xf32> to vector<8x64xbf16>
    %cst_87 = arith.constant dense<0.000000e+00> : vector<8x128xf32>
    %360 = tpu.matmul %359, %358, %cst_87 {dimension_numbers = #tpu.dot_dimension_numbers<[1], [0], [0], [1], [0, 0, 1, 1], [], []>} : vector<8x64xbf16>, vector<64x128xbf16>, vector<8x128xf32> -> vector<8x128xf32>
    %361 = arith.addf %351, %360 : vector<8x128xf32>
    %362 = vector.extract_strided_slice %342 {offsets = [16, 0], sizes = [8, 64], strides = [1, 1]} : vector<64x64xf32> to vector<8x64xf32>
    %363 = vector.extract_strided_slice %65 {offsets = [0, 128], sizes = [8, 64], strides = [1, 1]} : vector<8x512xf32> to vector<8x64xf32>
    %364 = arith.addf %362, %363 : vector<8x64xf32>
    %cst_88 = arith.constant 0.000000e+00 : f32
    %365 = vector.broadcast %cst_88 : f32 to vector<8x64xf32>
    %366 = arith.maximumf %364, %365 : vector<8x64xf32>
    %c2 = arith.constant 2 : index
    %c0_89 = arith.constant 0 : index
    %c0_90 = arith.constant 0 : index
    %367 = vector.load %arg18[%c2, %c0_89, %c0_90] : memref<8x64x128xbf16, #tpu.memory_space<vmem>>, vector<1x64x128xbf16>
    %368 = vector.shape_cast %367 : vector<1x64x128xbf16> to vector<64x128xbf16>
    %369 = arith.truncf %366 : vector<8x64xf32> to vector<8x64xbf16>
    %cst_91 = arith.constant dense<0.000000e+00> : vector<8x128xf32>
    %370 = tpu.matmul %369, %368, %cst_91 {dimension_numbers = #tpu.dot_dimension_numbers<[1], [0], [0], [1], [0, 0, 1, 1], [], []>} : vector<8x64xbf16>, vector<64x128xbf16>, vector<8x128xf32> -> vector<8x128xf32>
    %371 = arith.addf %361, %370 : vector<8x128xf32>
    %372 = vector.extract_strided_slice %342 {offsets = [24, 0], sizes = [8, 64], strides = [1, 1]} : vector<64x64xf32> to vector<8x64xf32>
    %373 = vector.extract_strided_slice %65 {offsets = [0, 192], sizes = [8, 64], strides = [1, 1]} : vector<8x512xf32> to vector<8x64xf32>
    %374 = arith.addf %372, %373 : vector<8x64xf32>
    %cst_92 = arith.constant 0.000000e+00 : f32
    %375 = vector.broadcast %cst_92 : f32 to vector<8x64xf32>
    %376 = arith.maximumf %374, %375 : vector<8x64xf32>
    %c3 = arith.constant 3 : index
    %c0_93 = arith.constant 0 : index
    %c0_94 = arith.constant 0 : index
    %377 = vector.load %arg18[%c3, %c0_93, %c0_94] : memref<8x64x128xbf16, #tpu.memory_space<vmem>>, vector<1x64x128xbf16>
    %378 = vector.shape_cast %377 : vector<1x64x128xbf16> to vector<64x128xbf16>
    %379 = arith.truncf %376 : vector<8x64xf32> to vector<8x64xbf16>
    %cst_95 = arith.constant dense<0.000000e+00> : vector<8x128xf32>
    %380 = tpu.matmul %379, %378, %cst_95 {dimension_numbers = #tpu.dot_dimension_numbers<[1], [0], [0], [1], [0, 0, 1, 1], [], []>} : vector<8x64xbf16>, vector<64x128xbf16>, vector<8x128xf32> -> vector<8x128xf32>
    %381 = arith.addf %371, %380 : vector<8x128xf32>
    %382 = vector.extract_strided_slice %342 {offsets = [32, 0], sizes = [8, 64], strides = [1, 1]} : vector<64x64xf32> to vector<8x64xf32>
    %383 = vector.extract_strided_slice %65 {offsets = [0, 256], sizes = [8, 64], strides = [1, 1]} : vector<8x512xf32> to vector<8x64xf32>
    %384 = arith.addf %382, %383 : vector<8x64xf32>
    %cst_96 = arith.constant 0.000000e+00 : f32
    %385 = vector.broadcast %cst_96 : f32 to vector<8x64xf32>
    %386 = arith.maximumf %384, %385 : vector<8x64xf32>
    %c4 = arith.constant 4 : index
    %c0_97 = arith.constant 0 : index
    %c0_98 = arith.constant 0 : index
    %387 = vector.load %arg18[%c4, %c0_97, %c0_98] : memref<8x64x128xbf16, #tpu.memory_space<vmem>>, vector<1x64x128xbf16>
    %388 = vector.shape_cast %387 : vector<1x64x128xbf16> to vector<64x128xbf16>
    %389 = arith.truncf %386 : vector<8x64xf32> to vector<8x64xbf16>
    %cst_99 = arith.constant dense<0.000000e+00> : vector<8x128xf32>
    %390 = tpu.matmul %389, %388, %cst_99 {dimension_numbers = #tpu.dot_dimension_numbers<[1], [0], [0], [1], [0, 0, 1, 1], [], []>} : vector<8x64xbf16>, vector<64x128xbf16>, vector<8x128xf32> -> vector<8x128xf32>
    %391 = arith.addf %381, %390 : vector<8x128xf32>
    %392 = vector.extract_strided_slice %342 {offsets = [40, 0], sizes = [8, 64], strides = [1, 1]} : vector<64x64xf32> to vector<8x64xf32>
    %393 = vector.extract_strided_slice %65 {offsets = [0, 320], sizes = [8, 64], strides = [1, 1]} : vector<8x512xf32> to vector<8x64xf32>
    %394 = arith.addf %392, %393 : vector<8x64xf32>
    %cst_100 = arith.constant 0.000000e+00 : f32
    %395 = vector.broadcast %cst_100 : f32 to vector<8x64xf32>
    %396 = arith.maximumf %394, %395 : vector<8x64xf32>
    %c5 = arith.constant 5 : index
    %c0_101 = arith.constant 0 : index
    %c0_102 = arith.constant 0 : index
    %397 = vector.load %arg18[%c5, %c0_101, %c0_102] : memref<8x64x128xbf16, #tpu.memory_space<vmem>>, vector<1x64x128xbf16>
    %398 = vector.shape_cast %397 : vector<1x64x128xbf16> to vector<64x128xbf16>
    %399 = arith.truncf %396 : vector<8x64xf32> to vector<8x64xbf16>
    %cst_103 = arith.constant dense<0.000000e+00> : vector<8x128xf32>
    %400 = tpu.matmul %399, %398, %cst_103 {dimension_numbers = #tpu.dot_dimension_numbers<[1], [0], [0], [1], [0, 0, 1, 1], [], []>} : vector<8x64xbf16>, vector<64x128xbf16>, vector<8x128xf32> -> vector<8x128xf32>
    %401 = arith.addf %391, %400 : vector<8x128xf32>
    %402 = vector.extract_strided_slice %342 {offsets = [48, 0], sizes = [8, 64], strides = [1, 1]} : vector<64x64xf32> to vector<8x64xf32>
    %403 = vector.extract_strided_slice %65 {offsets = [0, 384], sizes = [8, 64], strides = [1, 1]} : vector<8x512xf32> to vector<8x64xf32>
    %404 = arith.addf %402, %403 : vector<8x64xf32>
    %cst_104 = arith.constant 0.000000e+00 : f32
    %405 = vector.broadcast %cst_104 : f32 to vector<8x64xf32>
    %406 = arith.maximumf %404, %405 : vector<8x64xf32>
    %c6 = arith.constant 6 : index
    %c0_105 = arith.constant 0 : index
    %c0_106 = arith.constant 0 : index
    %407 = vector.load %arg18[%c6, %c0_105, %c0_106] : memref<8x64x128xbf16, #tpu.memory_space<vmem>>, vector<1x64x128xbf16>
    %408 = vector.shape_cast %407 : vector<1x64x128xbf16> to vector<64x128xbf16>
    %409 = arith.truncf %406 : vector<8x64xf32> to vector<8x64xbf16>
    %cst_107 = arith.constant dense<0.000000e+00> : vector<8x128xf32>
    %410 = tpu.matmul %409, %408, %cst_107 {dimension_numbers = #tpu.dot_dimension_numbers<[1], [0], [0], [1], [0, 0, 1, 1], [], []>} : vector<8x64xbf16>, vector<64x128xbf16>, vector<8x128xf32> -> vector<8x128xf32>
    %411 = arith.addf %401, %410 : vector<8x128xf32>
    %412 = vector.extract_strided_slice %342 {offsets = [56, 0], sizes = [8, 64], strides = [1, 1]} : vector<64x64xf32> to vector<8x64xf32>
    %413 = vector.extract_strided_slice %65 {offsets = [0, 448], sizes = [8, 64], strides = [1, 1]} : vector<8x512xf32> to vector<8x64xf32>
    %414 = arith.addf %412, %413 : vector<8x64xf32>
    %cst_108 = arith.constant 0.000000e+00 : f32
    %415 = vector.broadcast %cst_108 : f32 to vector<8x64xf32>
    %416 = arith.maximumf %414, %415 : vector<8x64xf32>
    %c7 = arith.constant 7 : index
    %c0_109 = arith.constant 0 : index
    %c0_110 = arith.constant 0 : index
    %417 = vector.load %arg18[%c7, %c0_109, %c0_110] : memref<8x64x128xbf16, #tpu.memory_space<vmem>>, vector<1x64x128xbf16>
    %418 = vector.shape_cast %417 : vector<1x64x128xbf16> to vector<64x128xbf16>
    %419 = arith.truncf %416 : vector<8x64xf32> to vector<8x64xbf16>
    %cst_111 = arith.constant dense<0.000000e+00> : vector<8x128xf32>
    %420 = tpu.matmul %419, %418, %cst_111 {dimension_numbers = #tpu.dot_dimension_numbers<[1], [0], [0], [1], [0, 0, 1, 1], [], []>} : vector<8x64xbf16>, vector<64x128xbf16>, vector<8x128xf32> -> vector<8x128xf32>
    %421 = arith.addf %411, %420 : vector<8x128xf32>
    %c0_112 = arith.constant 0 : index
    %c0_113 = arith.constant 0 : index
    %c0_114 = arith.constant 0 : index
    %422 = vector.load %arg19[%c0_112, %c0_113, %c0_114] : memref<4x8x1xf32, #tpu.memory_space<vmem>>, vector<1x8x1xf32>
    %423 = vector.shape_cast %422 : vector<1x8x1xf32> to vector<8x1xf32>
    %424 = vector.extract_strided_slice %421 {offsets = [0, 0], sizes = [8, 32], strides = [1, 1]} : vector<8x128xf32> to vector<8x32xf32>
    %425 = vector.broadcast %423 : vector<8x1xf32> to vector<8x32xf32>
    %426 = arith.mulf %425, %424 : vector<8x32xf32>
    %c1_115 = arith.constant 1 : index
    %c0_116 = arith.constant 0 : index
    %c0_117 = arith.constant 0 : index
    %427 = vector.load %arg19[%c1_115, %c0_116, %c0_117] : memref<4x8x1xf32, #tpu.memory_space<vmem>>, vector<1x8x1xf32>
    %428 = vector.shape_cast %427 : vector<1x8x1xf32> to vector<8x1xf32>
    %429 = vector.extract_strided_slice %421 {offsets = [0, 32], sizes = [8, 32], strides = [1, 1]} : vector<8x128xf32> to vector<8x32xf32>
    %430 = vector.broadcast %428 : vector<8x1xf32> to vector<8x32xf32>
    %431 = arith.mulf %430, %429 : vector<8x32xf32>
    %432 = arith.addf %426, %431 : vector<8x32xf32>
    %c2_118 = arith.constant 2 : index
    %c0_119 = arith.constant 0 : index
    %c0_120 = arith.constant 0 : index
    %433 = vector.load %arg19[%c2_118, %c0_119, %c0_120] : memref<4x8x1xf32, #tpu.memory_space<vmem>>, vector<1x8x1xf32>
    %434 = vector.shape_cast %433 : vector<1x8x1xf32> to vector<8x1xf32>
    %435 = vector.extract_strided_slice %421 {offsets = [0, 64], sizes = [8, 32], strides = [1, 1]} : vector<8x128xf32> to vector<8x32xf32>
    %436 = vector.broadcast %434 : vector<8x1xf32> to vector<8x32xf32>
    %437 = arith.mulf %436, %435 : vector<8x32xf32>
    %438 = arith.addf %432, %437 : vector<8x32xf32>
    %c3_121 = arith.constant 3 : index
    %c0_122 = arith.constant 0 : index
    %c0_123 = arith.constant 0 : index
    %439 = vector.load %arg19[%c3_121, %c0_122, %c0_123] : memref<4x8x1xf32, #tpu.memory_space<vmem>>, vector<1x8x1xf32>
    %440 = vector.shape_cast %439 : vector<1x8x1xf32> to vector<8x1xf32>
    %441 = vector.extract_strided_slice %421 {offsets = [0, 96], sizes = [8, 32], strides = [1, 1]} : vector<8x128xf32> to vector<8x32xf32>
    %442 = vector.broadcast %440 : vector<8x1xf32> to vector<8x32xf32>
    %443 = arith.mulf %442, %441 : vector<8x32xf32>
    %444 = arith.addf %438, %443 : vector<8x32xf32>
    %c0_124 = arith.constant 0 : index
    %c0_125 = arith.constant 0 : index
    %445 = vector.load %arg21[%c0_124, %c0_125] : memref<10x32xf32, #tpu.memory_space<vmem>>, vector<10x32xf32>
    %c0_126 = arith.constant 0 : index
    %c0_127 = arith.constant 0 : index
    %446 = vector.load %arg20[%c0_126, %c0_127] : memref<10x8xf32, #tpu.memory_space<vmem>>, vector<10x8xf32>
    %447 = arith.truncf %446 : vector<10x8xf32> to vector<10x8xbf16>
    %448 = arith.truncf %444 : vector<8x32xf32> to vector<8x32xbf16>
    %cst_128 = arith.constant dense<0.000000e+00> : vector<10x32xf32>
    %449 = tpu.matmul %447, %448, %cst_128 {dimension_numbers = #tpu.dot_dimension_numbers<[1], [0], [0], [1], [0, 0, 1, 1], [], []>} : vector<10x8xbf16>, vector<8x32xbf16>, vector<10x32xf32> -> vector<10x32xf32>
    %450 = arith.addf %445, %449 : vector<10x32xf32>
    %c0_129 = arith.constant 0 : index
    %c0_130 = arith.constant 0 : index
    %451 = vector.load %arg22[%c0_129, %c0_130] : memref<10x10xf32, #tpu.memory_space<vmem>>, vector<10x10xf32>
    %c0_131 = arith.constant 0 : index
    %c0_132 = arith.constant 0 : index
    %c0_133 = arith.constant 0 : index
    %452 = vector.load %arg23[%c0_131, %c0_132, %c0_133] : memref<2x32x96xbf16, #tpu.memory_space<vmem>>, vector<1x32x96xbf16>
    %453 = vector.shape_cast %452 : vector<1x32x96xbf16> to vector<32x96xbf16>
    %454 = arith.truncf %450 : vector<10x32xf32> to vector<10x32xbf16>
    %cst_134 = arith.constant dense<0.000000e+00> : vector<10x96xf32>
    %455 = tpu.matmul %454, %453, %cst_134 {dimension_numbers = #tpu.dot_dimension_numbers<[1], [0], [0], [1], [0, 0, 1, 1], [], []>} : vector<10x32xbf16>, vector<32x96xbf16>, vector<10x96xf32> -> vector<10x96xf32>
    %c0_135 = arith.constant 0 : index
    %c0_136 = arith.constant 0 : index
    %c0_137 = arith.constant 0 : index
    %456 = vector.load %arg24[%c0_135, %c0_136, %c0_137] : memref<2x1x96xf32, #tpu.memory_space<vmem>>, vector<1x1x96xf32>
    %457 = vector.shape_cast %456 : vector<1x1x96xf32> to vector<1x96xf32>
    %458 = vector.broadcast %457 : vector<1x96xf32> to vector<10x96xf32>
    %459 = arith.addf %455, %458 : vector<10x96xf32>
    %460 = vector.extract_strided_slice %459 {offsets = [0, 0], sizes = [10, 8], strides = [1, 1]} : vector<10x96xf32> to vector<10x8xf32>
    %461 = vector.extract_strided_slice %459 {offsets = [0, 32], sizes = [10, 8], strides = [1, 1]} : vector<10x96xf32> to vector<10x8xf32>
    %462 = vector.extract_strided_slice %459 {offsets = [0, 64], sizes = [10, 8], strides = [1, 1]} : vector<10x96xf32> to vector<10x8xf32>
    %463 = arith.truncf %460 : vector<10x8xf32> to vector<10x8xbf16>
    %464 = arith.truncf %461 : vector<10x8xf32> to vector<10x8xbf16>
    %cst_138 = arith.constant dense<0.000000e+00> : vector<10x10xf32>
    %465 = tpu.matmul %463, %464, %cst_138 {dimension_numbers = #tpu.dot_dimension_numbers<[1], [1], [0], [0], [0, 0, 1, 0], [], []>} : vector<10x8xbf16>, vector<10x8xbf16>, vector<10x10xf32> -> vector<10x10xf32>
    %cst_139 = arith.constant 0.353553385 : f32
    %466 = vector.broadcast %cst_139 : f32 to vector<10x10xf32>
    %467 = arith.mulf %465, %466 : vector<10x10xf32>
    %468 = arith.addf %467, %451 : vector<10x10xf32>
    %cst_140 = arith.constant dense<0xFF800000> : vector<10xf32>
    %469 = vector.multi_reduction <maximumf>, %468, %cst_140 [1] : vector<10x10xf32> to vector<10xf32>
    %470 = vector.shape_cast %469 : vector<10xf32> to vector<10x1xf32>
    %471 = vector.broadcast %470 : vector<10x1xf32> to vector<10x10xf32>
    %472 = arith.subf %468, %471 : vector<10x10xf32>
    %473 = math.exp %472 : vector<10x10xf32>
    %cst_141 = arith.constant dense<0.000000e+00> : vector<10xf32>
    %474 = vector.multi_reduction <add>, %473, %cst_141 [1] : vector<10x10xf32> to vector<10xf32>
    %475 = vector.shape_cast %474 : vector<10xf32> to vector<10x1xf32>
    %476 = vector.broadcast %475 : vector<10x1xf32> to vector<10x10xf32>
    %477 = arith.divf %473, %476 : vector<10x10xf32>
    %478 = arith.truncf %477 : vector<10x10xf32> to vector<10x10xbf16>
    %479 = arith.truncf %462 : vector<10x8xf32> to vector<10x8xbf16>
    %cst_142 = arith.constant dense<0.000000e+00> : vector<10x8xf32>
    %480 = tpu.matmul %478, %479, %cst_142 {dimension_numbers = #tpu.dot_dimension_numbers<[1], [0], [0], [1], [0, 0, 1, 1], [], []>} : vector<10x10xbf16>, vector<10x8xbf16>, vector<10x8xf32> -> vector<10x8xf32>
    %481 = vector.extract_strided_slice %459 {offsets = [0, 8], sizes = [10, 8], strides = [1, 1]} : vector<10x96xf32> to vector<10x8xf32>
    %482 = vector.extract_strided_slice %459 {offsets = [0, 40], sizes = [10, 8], strides = [1, 1]} : vector<10x96xf32> to vector<10x8xf32>
    %483 = vector.extract_strided_slice %459 {offsets = [0, 72], sizes = [10, 8], strides = [1, 1]} : vector<10x96xf32> to vector<10x8xf32>
    %484 = arith.truncf %481 : vector<10x8xf32> to vector<10x8xbf16>
    %485 = arith.truncf %482 : vector<10x8xf32> to vector<10x8xbf16>
    %cst_143 = arith.constant dense<0.000000e+00> : vector<10x10xf32>
    %486 = tpu.matmul %484, %485, %cst_143 {dimension_numbers = #tpu.dot_dimension_numbers<[1], [1], [0], [0], [0, 0, 1, 0], [], []>} : vector<10x8xbf16>, vector<10x8xbf16>, vector<10x10xf32> -> vector<10x10xf32>
    %cst_144 = arith.constant 0.353553385 : f32
    %487 = vector.broadcast %cst_144 : f32 to vector<10x10xf32>
    %488 = arith.mulf %486, %487 : vector<10x10xf32>
    %489 = arith.addf %488, %451 : vector<10x10xf32>
    %cst_145 = arith.constant dense<0xFF800000> : vector<10xf32>
    %490 = vector.multi_reduction <maximumf>, %489, %cst_145 [1] : vector<10x10xf32> to vector<10xf32>
    %491 = vector.shape_cast %490 : vector<10xf32> to vector<10x1xf32>
    %492 = vector.broadcast %491 : vector<10x1xf32> to vector<10x10xf32>
    %493 = arith.subf %489, %492 : vector<10x10xf32>
    %494 = math.exp %493 : vector<10x10xf32>
    %cst_146 = arith.constant dense<0.000000e+00> : vector<10xf32>
    %495 = vector.multi_reduction <add>, %494, %cst_146 [1] : vector<10x10xf32> to vector<10xf32>
    %496 = vector.shape_cast %495 : vector<10xf32> to vector<10x1xf32>
    %497 = vector.broadcast %496 : vector<10x1xf32> to vector<10x10xf32>
    %498 = arith.divf %494, %497 : vector<10x10xf32>
    %499 = arith.truncf %498 : vector<10x10xf32> to vector<10x10xbf16>
    %500 = arith.truncf %483 : vector<10x8xf32> to vector<10x8xbf16>
    %cst_147 = arith.constant dense<0.000000e+00> : vector<10x8xf32>
    %501 = tpu.matmul %499, %500, %cst_147 {dimension_numbers = #tpu.dot_dimension_numbers<[1], [0], [0], [1], [0, 0, 1, 1], [], []>} : vector<10x10xbf16>, vector<10x8xbf16>, vector<10x8xf32> -> vector<10x8xf32>
    %502 = vector.extract_strided_slice %459 {offsets = [0, 16], sizes = [10, 8], strides = [1, 1]} : vector<10x96xf32> to vector<10x8xf32>
    %503 = vector.extract_strided_slice %459 {offsets = [0, 48], sizes = [10, 8], strides = [1, 1]} : vector<10x96xf32> to vector<10x8xf32>
    %504 = vector.extract_strided_slice %459 {offsets = [0, 80], sizes = [10, 8], strides = [1, 1]} : vector<10x96xf32> to vector<10x8xf32>
    %505 = arith.truncf %502 : vector<10x8xf32> to vector<10x8xbf16>
    %506 = arith.truncf %503 : vector<10x8xf32> to vector<10x8xbf16>
    %cst_148 = arith.constant dense<0.000000e+00> : vector<10x10xf32>
    %507 = tpu.matmul %505, %506, %cst_148 {dimension_numbers = #tpu.dot_dimension_numbers<[1], [1], [0], [0], [0, 0, 1, 0], [], []>} : vector<10x8xbf16>, vector<10x8xbf16>, vector<10x10xf32> -> vector<10x10xf32>
    %cst_149 = arith.constant 0.353553385 : f32
    %508 = vector.broadcast %cst_149 : f32 to vector<10x10xf32>
    %509 = arith.mulf %507, %508 : vector<10x10xf32>
    %510 = arith.addf %509, %451 : vector<10x10xf32>
    %cst_150 = arith.constant dense<0xFF800000> : vector<10xf32>
    %511 = vector.multi_reduction <maximumf>, %510, %cst_150 [1] : vector<10x10xf32> to vector<10xf32>
    %512 = vector.shape_cast %511 : vector<10xf32> to vector<10x1xf32>
    %513 = vector.broadcast %512 : vector<10x1xf32> to vector<10x10xf32>
    %514 = arith.subf %510, %513 : vector<10x10xf32>
    %515 = math.exp %514 : vector<10x10xf32>
    %cst_151 = arith.constant dense<0.000000e+00> : vector<10xf32>
    %516 = vector.multi_reduction <add>, %515, %cst_151 [1] : vector<10x10xf32> to vector<10xf32>
    %517 = vector.shape_cast %516 : vector<10xf32> to vector<10x1xf32>
    %518 = vector.broadcast %517 : vector<10x1xf32> to vector<10x10xf32>
    %519 = arith.divf %515, %518 : vector<10x10xf32>
    %520 = arith.truncf %519 : vector<10x10xf32> to vector<10x10xbf16>
    %521 = arith.truncf %504 : vector<10x8xf32> to vector<10x8xbf16>
    %cst_152 = arith.constant dense<0.000000e+00> : vector<10x8xf32>
    %522 = tpu.matmul %520, %521, %cst_152 {dimension_numbers = #tpu.dot_dimension_numbers<[1], [0], [0], [1], [0, 0, 1, 1], [], []>} : vector<10x10xbf16>, vector<10x8xbf16>, vector<10x8xf32> -> vector<10x8xf32>
    %523 = vector.extract_strided_slice %459 {offsets = [0, 24], sizes = [10, 8], strides = [1, 1]} : vector<10x96xf32> to vector<10x8xf32>
    %524 = vector.extract_strided_slice %459 {offsets = [0, 56], sizes = [10, 8], strides = [1, 1]} : vector<10x96xf32> to vector<10x8xf32>
    %525 = vector.extract_strided_slice %459 {offsets = [0, 88], sizes = [10, 8], strides = [1, 1]} : vector<10x96xf32> to vector<10x8xf32>
    %526 = arith.truncf %523 : vector<10x8xf32> to vector<10x8xbf16>
    %527 = arith.truncf %524 : vector<10x8xf32> to vector<10x8xbf16>
    %cst_153 = arith.constant dense<0.000000e+00> : vector<10x10xf32>
    %528 = tpu.matmul %526, %527, %cst_153 {dimension_numbers = #tpu.dot_dimension_numbers<[1], [1], [0], [0], [0, 0, 1, 0], [], []>} : vector<10x8xbf16>, vector<10x8xbf16>, vector<10x10xf32> -> vector<10x10xf32>
    %cst_154 = arith.constant 0.353553385 : f32
    %529 = vector.broadcast %cst_154 : f32 to vector<10x10xf32>
    %530 = arith.mulf %528, %529 : vector<10x10xf32>
    %531 = arith.addf %530, %451 : vector<10x10xf32>
    %cst_155 = arith.constant dense<0xFF800000> : vector<10xf32>
    %532 = vector.multi_reduction <maximumf>, %531, %cst_155 [1] : vector<10x10xf32> to vector<10xf32>
    %533 = vector.shape_cast %532 : vector<10xf32> to vector<10x1xf32>
    %534 = vector.broadcast %533 : vector<10x1xf32> to vector<10x10xf32>
    %535 = arith.subf %531, %534 : vector<10x10xf32>
    %536 = math.exp %535 : vector<10x10xf32>
    %cst_156 = arith.constant dense<0.000000e+00> : vector<10xf32>
    %537 = vector.multi_reduction <add>, %536, %cst_156 [1] : vector<10x10xf32> to vector<10xf32>
    %538 = vector.shape_cast %537 : vector<10xf32> to vector<10x1xf32>
    %539 = vector.broadcast %538 : vector<10x1xf32> to vector<10x10xf32>
    %540 = arith.divf %536, %539 : vector<10x10xf32>
    %541 = arith.truncf %540 : vector<10x10xf32> to vector<10x10xbf16>
    %542 = arith.truncf %525 : vector<10x8xf32> to vector<10x8xbf16>
    %cst_157 = arith.constant dense<0.000000e+00> : vector<10x8xf32>
    %543 = tpu.matmul %541, %542, %cst_157 {dimension_numbers = #tpu.dot_dimension_numbers<[1], [0], [0], [1], [0, 0, 1, 1], [], []>} : vector<10x10xbf16>, vector<10x8xbf16>, vector<10x8xf32> -> vector<10x8xf32>
    %544 = tpu.concatenate %480, %501, %522, %543 in 1 : vector<10x8xf32>, vector<10x8xf32>, vector<10x8xf32>, vector<10x8xf32> -> vector<10x32xf32>
    %c0_158 = arith.constant 0 : index
    %c0_159 = arith.constant 0 : index
    %c0_160 = arith.constant 0 : index
    %545 = vector.load %arg25[%c0_158, %c0_159, %c0_160] : memref<2x32x32xbf16, #tpu.memory_space<vmem>>, vector<1x32x32xbf16>
    %546 = vector.shape_cast %545 : vector<1x32x32xbf16> to vector<32x32xbf16>
    %547 = arith.truncf %544 : vector<10x32xf32> to vector<10x32xbf16>
    %cst_161 = arith.constant dense<0.000000e+00> : vector<10x32xf32>
    %548 = tpu.matmul %547, %546, %cst_161 {dimension_numbers = #tpu.dot_dimension_numbers<[1], [0], [0], [1], [0, 0, 1, 1], [], []>} : vector<10x32xbf16>, vector<32x32xbf16>, vector<10x32xf32> -> vector<10x32xf32>
    %c0_162 = arith.constant 0 : index
    %c0_163 = arith.constant 0 : index
    %c0_164 = arith.constant 0 : index
    %549 = vector.load %arg26[%c0_162, %c0_163, %c0_164] : memref<2x1x32xf32, #tpu.memory_space<vmem>>, vector<1x1x32xf32>
    %550 = vector.shape_cast %549 : vector<1x1x32xf32> to vector<1x32xf32>
    %551 = vector.broadcast %550 : vector<1x32xf32> to vector<10x32xf32>
    %552 = arith.addf %548, %551 : vector<10x32xf32>
    %553 = arith.addf %450, %552 : vector<10x32xf32>
    %c0_165 = arith.constant 0 : index
    %c0_166 = arith.constant 0 : index
    %c0_167 = arith.constant 0 : index
    %554 = vector.load %arg27[%c0_165, %c0_166, %c0_167] : memref<2x1x32xf32, #tpu.memory_space<vmem>>, vector<1x1x32xf32>
    %555 = vector.shape_cast %554 : vector<1x1x32xf32> to vector<1x32xf32>
    %c0_168 = arith.constant 0 : index
    %c0_169 = arith.constant 0 : index
    %c0_170 = arith.constant 0 : index
    %556 = vector.load %arg28[%c0_168, %c0_169, %c0_170] : memref<2x1x32xf32, #tpu.memory_space<vmem>>, vector<1x1x32xf32>
    %557 = vector.shape_cast %556 : vector<1x1x32xf32> to vector<1x32xf32>
    %cst_171 = arith.constant dense<0.000000e+00> : vector<10xf32>
    %558 = vector.multi_reduction <add>, %553, %cst_171 [1] : vector<10x32xf32> to vector<10xf32>
    %559 = vector.shape_cast %558 : vector<10xf32> to vector<10x1xf32>
    %cst_172 = arith.constant 3.200000e+01 : f32
    %560 = vector.broadcast %cst_172 : f32 to vector<10x1xf32>
    %561 = arith.divf %559, %560 : vector<10x1xf32>
    %562 = vector.broadcast %561 : vector<10x1xf32> to vector<10x32xf32>
    %563 = arith.subf %553, %562 : vector<10x32xf32>
    %564 = arith.mulf %563, %563 : vector<10x32xf32>
    %cst_173 = arith.constant dense<0.000000e+00> : vector<10xf32>
    %565 = vector.multi_reduction <add>, %564, %cst_173 [1] : vector<10x32xf32> to vector<10xf32>
    %566 = vector.shape_cast %565 : vector<10xf32> to vector<10x1xf32>
    %cst_174 = arith.constant 3.200000e+01 : f32
    %567 = vector.broadcast %cst_174 : f32 to vector<10x1xf32>
    %568 = arith.divf %566, %567 : vector<10x1xf32>
    %569 = vector.broadcast %561 : vector<10x1xf32> to vector<10x32xf32>
    %570 = arith.subf %553, %569 : vector<10x32xf32>
    %cst_175 = arith.constant 9.99999974E-6 : f32
    %571 = vector.broadcast %cst_175 : f32 to vector<10x1xf32>
    %572 = arith.addf %568, %571 : vector<10x1xf32>
    %573 = math.rsqrt %572 : vector<10x1xf32>
    %574 = vector.broadcast %573 : vector<10x1xf32> to vector<10x32xf32>
    %575 = arith.mulf %570, %574 : vector<10x32xf32>
    %576 = vector.broadcast %555 : vector<1x32xf32> to vector<10x32xf32>
    %577 = arith.mulf %575, %576 : vector<10x32xf32>
    %578 = vector.broadcast %557 : vector<1x32xf32> to vector<10x32xf32>
    %579 = arith.addf %577, %578 : vector<10x32xf32>
    %c0_176 = arith.constant 0 : index
    %c0_177 = arith.constant 0 : index
    %c0_178 = arith.constant 0 : index
    %580 = vector.load %arg29[%c0_176, %c0_177, %c0_178] : memref<2x32x64xbf16, #tpu.memory_space<vmem>>, vector<1x32x64xbf16>
    %581 = vector.shape_cast %580 : vector<1x32x64xbf16> to vector<32x64xbf16>
    %582 = arith.truncf %579 : vector<10x32xf32> to vector<10x32xbf16>
    %cst_179 = arith.constant dense<0.000000e+00> : vector<10x64xf32>
    %583 = tpu.matmul %582, %581, %cst_179 {dimension_numbers = #tpu.dot_dimension_numbers<[1], [0], [0], [1], [0, 0, 1, 1], [], []>} : vector<10x32xbf16>, vector<32x64xbf16>, vector<10x64xf32> -> vector<10x64xf32>
    %c0_180 = arith.constant 0 : index
    %c0_181 = arith.constant 0 : index
    %c0_182 = arith.constant 0 : index
    %584 = vector.load %arg30[%c0_180, %c0_181, %c0_182] : memref<2x1x64xf32, #tpu.memory_space<vmem>>, vector<1x1x64xf32>
    %585 = vector.shape_cast %584 : vector<1x1x64xf32> to vector<1x64xf32>
    %586 = vector.broadcast %585 : vector<1x64xf32> to vector<10x64xf32>
    %587 = arith.addf %583, %586 : vector<10x64xf32>
    %cst_183 = arith.constant 0.000000e+00 : f32
    %588 = vector.broadcast %cst_183 : f32 to vector<10x64xf32>
    %589 = arith.maximumf %587, %588 : vector<10x64xf32>
    %c0_184 = arith.constant 0 : index
    %c0_185 = arith.constant 0 : index
    %c0_186 = arith.constant 0 : index
    %590 = vector.load %arg31[%c0_184, %c0_185, %c0_186] : memref<2x64x32xbf16, #tpu.memory_space<vmem>>, vector<1x64x32xbf16>
    %591 = vector.shape_cast %590 : vector<1x64x32xbf16> to vector<64x32xbf16>
    %592 = arith.truncf %589 : vector<10x64xf32> to vector<10x64xbf16>
    %cst_187 = arith.constant dense<0.000000e+00> : vector<10x32xf32>
    %593 = tpu.matmul %592, %591, %cst_187 {dimension_numbers = #tpu.dot_dimension_numbers<[1], [0], [0], [1], [0, 0, 1, 1], [], []>} : vector<10x64xbf16>, vector<64x32xbf16>, vector<10x32xf32> -> vector<10x32xf32>
    %c0_188 = arith.constant 0 : index
    %c0_189 = arith.constant 0 : index
    %c0_190 = arith.constant 0 : index
    %594 = vector.load %arg32[%c0_188, %c0_189, %c0_190] : memref<2x1x32xf32, #tpu.memory_space<vmem>>, vector<1x1x32xf32>
    %595 = vector.shape_cast %594 : vector<1x1x32xf32> to vector<1x32xf32>
    %596 = vector.broadcast %595 : vector<1x32xf32> to vector<10x32xf32>
    %597 = arith.addf %593, %596 : vector<10x32xf32>
    %598 = arith.addf %579, %597 : vector<10x32xf32>
    %c0_191 = arith.constant 0 : index
    %c0_192 = arith.constant 0 : index
    %c0_193 = arith.constant 0 : index
    %599 = vector.load %arg33[%c0_191, %c0_192, %c0_193] : memref<2x1x32xf32, #tpu.memory_space<vmem>>, vector<1x1x32xf32>
    %600 = vector.shape_cast %599 : vector<1x1x32xf32> to vector<1x32xf32>
    %c0_194 = arith.constant 0 : index
    %c0_195 = arith.constant 0 : index
    %c0_196 = arith.constant 0 : index
    %601 = vector.load %arg34[%c0_194, %c0_195, %c0_196] : memref<2x1x32xf32, #tpu.memory_space<vmem>>, vector<1x1x32xf32>
    %602 = vector.shape_cast %601 : vector<1x1x32xf32> to vector<1x32xf32>
    %cst_197 = arith.constant dense<0.000000e+00> : vector<10xf32>
    %603 = vector.multi_reduction <add>, %598, %cst_197 [1] : vector<10x32xf32> to vector<10xf32>
    %604 = vector.shape_cast %603 : vector<10xf32> to vector<10x1xf32>
    %cst_198 = arith.constant 3.200000e+01 : f32
    %605 = vector.broadcast %cst_198 : f32 to vector<10x1xf32>
    %606 = arith.divf %604, %605 : vector<10x1xf32>
    %607 = vector.broadcast %606 : vector<10x1xf32> to vector<10x32xf32>
    %608 = arith.subf %598, %607 : vector<10x32xf32>
    %609 = arith.mulf %608, %608 : vector<10x32xf32>
    %cst_199 = arith.constant dense<0.000000e+00> : vector<10xf32>
    %610 = vector.multi_reduction <add>, %609, %cst_199 [1] : vector<10x32xf32> to vector<10xf32>
    %611 = vector.shape_cast %610 : vector<10xf32> to vector<10x1xf32>
    %cst_200 = arith.constant 3.200000e+01 : f32
    %612 = vector.broadcast %cst_200 : f32 to vector<10x1xf32>
    %613 = arith.divf %611, %612 : vector<10x1xf32>
    %614 = vector.broadcast %606 : vector<10x1xf32> to vector<10x32xf32>
    %615 = arith.subf %598, %614 : vector<10x32xf32>
    %cst_201 = arith.constant 9.99999974E-6 : f32
    %616 = vector.broadcast %cst_201 : f32 to vector<10x1xf32>
    %617 = arith.addf %613, %616 : vector<10x1xf32>
    %618 = math.rsqrt %617 : vector<10x1xf32>
    %619 = vector.broadcast %618 : vector<10x1xf32> to vector<10x32xf32>
    %620 = arith.mulf %615, %619 : vector<10x32xf32>
    %621 = vector.broadcast %600 : vector<1x32xf32> to vector<10x32xf32>
    %622 = arith.mulf %620, %621 : vector<10x32xf32>
    %623 = vector.broadcast %602 : vector<1x32xf32> to vector<10x32xf32>
    %624 = arith.addf %622, %623 : vector<10x32xf32>
    %c1_202 = arith.constant 1 : index
    %c0_203 = arith.constant 0 : index
    %c0_204 = arith.constant 0 : index
    %625 = vector.load %arg23[%c1_202, %c0_203, %c0_204] : memref<2x32x96xbf16, #tpu.memory_space<vmem>>, vector<1x32x96xbf16>
    %626 = vector.shape_cast %625 : vector<1x32x96xbf16> to vector<32x96xbf16>
    %627 = arith.truncf %624 : vector<10x32xf32> to vector<10x32xbf16>
    %cst_205 = arith.constant dense<0.000000e+00> : vector<10x96xf32>
    %628 = tpu.matmul %627, %626, %cst_205 {dimension_numbers = #tpu.dot_dimension_numbers<[1], [0], [0], [1], [0, 0, 1, 1], [], []>} : vector<10x32xbf16>, vector<32x96xbf16>, vector<10x96xf32> -> vector<10x96xf32>
    %c1_206 = arith.constant 1 : index
    %c0_207 = arith.constant 0 : index
    %c0_208 = arith.constant 0 : index
    %629 = vector.load %arg24[%c1_206, %c0_207, %c0_208] : memref<2x1x96xf32, #tpu.memory_space<vmem>>, vector<1x1x96xf32>
    %630 = vector.shape_cast %629 : vector<1x1x96xf32> to vector<1x96xf32>
    %631 = vector.broadcast %630 : vector<1x96xf32> to vector<10x96xf32>
    %632 = arith.addf %628, %631 : vector<10x96xf32>
    %633 = vector.extract_strided_slice %632 {offsets = [0, 0], sizes = [10, 8], strides = [1, 1]} : vector<10x96xf32> to vector<10x8xf32>
    %634 = vector.extract_strided_slice %632 {offsets = [0, 32], sizes = [10, 8], strides = [1, 1]} : vector<10x96xf32> to vector<10x8xf32>
    %635 = vector.extract_strided_slice %632 {offsets = [0, 64], sizes = [10, 8], strides = [1, 1]} : vector<10x96xf32> to vector<10x8xf32>
    %636 = arith.truncf %633 : vector<10x8xf32> to vector<10x8xbf16>
    %637 = arith.truncf %634 : vector<10x8xf32> to vector<10x8xbf16>
    %cst_209 = arith.constant dense<0.000000e+00> : vector<10x10xf32>
    %638 = tpu.matmul %636, %637, %cst_209 {dimension_numbers = #tpu.dot_dimension_numbers<[1], [1], [0], [0], [0, 0, 1, 0], [], []>} : vector<10x8xbf16>, vector<10x8xbf16>, vector<10x10xf32> -> vector<10x10xf32>
    %cst_210 = arith.constant 0.353553385 : f32
    %639 = vector.broadcast %cst_210 : f32 to vector<10x10xf32>
    %640 = arith.mulf %638, %639 : vector<10x10xf32>
    %641 = arith.addf %640, %451 : vector<10x10xf32>
    %cst_211 = arith.constant dense<0xFF800000> : vector<10xf32>
    %642 = vector.multi_reduction <maximumf>, %641, %cst_211 [1] : vector<10x10xf32> to vector<10xf32>
    %643 = vector.shape_cast %642 : vector<10xf32> to vector<10x1xf32>
    %644 = vector.broadcast %643 : vector<10x1xf32> to vector<10x10xf32>
    %645 = arith.subf %641, %644 : vector<10x10xf32>
    %646 = math.exp %645 : vector<10x10xf32>
    %cst_212 = arith.constant dense<0.000000e+00> : vector<10xf32>
    %647 = vector.multi_reduction <add>, %646, %cst_212 [1] : vector<10x10xf32> to vector<10xf32>
    %648 = vector.shape_cast %647 : vector<10xf32> to vector<10x1xf32>
    %649 = vector.broadcast %648 : vector<10x1xf32> to vector<10x10xf32>
    %650 = arith.divf %646, %649 : vector<10x10xf32>
    %651 = arith.truncf %650 : vector<10x10xf32> to vector<10x10xbf16>
    %652 = arith.truncf %635 : vector<10x8xf32> to vector<10x8xbf16>
    %cst_213 = arith.constant dense<0.000000e+00> : vector<10x8xf32>
    %653 = tpu.matmul %651, %652, %cst_213 {dimension_numbers = #tpu.dot_dimension_numbers<[1], [0], [0], [1], [0, 0, 1, 1], [], []>} : vector<10x10xbf16>, vector<10x8xbf16>, vector<10x8xf32> -> vector<10x8xf32>
    %654 = vector.extract_strided_slice %632 {offsets = [0, 8], sizes = [10, 8], strides = [1, 1]} : vector<10x96xf32> to vector<10x8xf32>
    %655 = vector.extract_strided_slice %632 {offsets = [0, 40], sizes = [10, 8], strides = [1, 1]} : vector<10x96xf32> to vector<10x8xf32>
    %656 = vector.extract_strided_slice %632 {offsets = [0, 72], sizes = [10, 8], strides = [1, 1]} : vector<10x96xf32> to vector<10x8xf32>
    %657 = arith.truncf %654 : vector<10x8xf32> to vector<10x8xbf16>
    %658 = arith.truncf %655 : vector<10x8xf32> to vector<10x8xbf16>
    %cst_214 = arith.constant dense<0.000000e+00> : vector<10x10xf32>
    %659 = tpu.matmul %657, %658, %cst_214 {dimension_numbers = #tpu.dot_dimension_numbers<[1], [1], [0], [0], [0, 0, 1, 0], [], []>} : vector<10x8xbf16>, vector<10x8xbf16>, vector<10x10xf32> -> vector<10x10xf32>
    %cst_215 = arith.constant 0.353553385 : f32
    %660 = vector.broadcast %cst_215 : f32 to vector<10x10xf32>
    %661 = arith.mulf %659, %660 : vector<10x10xf32>
    %662 = arith.addf %661, %451 : vector<10x10xf32>
    %cst_216 = arith.constant dense<0xFF800000> : vector<10xf32>
    %663 = vector.multi_reduction <maximumf>, %662, %cst_216 [1] : vector<10x10xf32> to vector<10xf32>
    %664 = vector.shape_cast %663 : vector<10xf32> to vector<10x1xf32>
    %665 = vector.broadcast %664 : vector<10x1xf32> to vector<10x10xf32>
    %666 = arith.subf %662, %665 : vector<10x10xf32>
    %667 = math.exp %666 : vector<10x10xf32>
    %cst_217 = arith.constant dense<0.000000e+00> : vector<10xf32>
    %668 = vector.multi_reduction <add>, %667, %cst_217 [1] : vector<10x10xf32> to vector<10xf32>
    %669 = vector.shape_cast %668 : vector<10xf32> to vector<10x1xf32>
    %670 = vector.broadcast %669 : vector<10x1xf32> to vector<10x10xf32>
    %671 = arith.divf %667, %670 : vector<10x10xf32>
    %672 = arith.truncf %671 : vector<10x10xf32> to vector<10x10xbf16>
    %673 = arith.truncf %656 : vector<10x8xf32> to vector<10x8xbf16>
    %cst_218 = arith.constant dense<0.000000e+00> : vector<10x8xf32>
    %674 = tpu.matmul %672, %673, %cst_218 {dimension_numbers = #tpu.dot_dimension_numbers<[1], [0], [0], [1], [0, 0, 1, 1], [], []>} : vector<10x10xbf16>, vector<10x8xbf16>, vector<10x8xf32> -> vector<10x8xf32>
    %675 = vector.extract_strided_slice %632 {offsets = [0, 16], sizes = [10, 8], strides = [1, 1]} : vector<10x96xf32> to vector<10x8xf32>
    %676 = vector.extract_strided_slice %632 {offsets = [0, 48], sizes = [10, 8], strides = [1, 1]} : vector<10x96xf32> to vector<10x8xf32>
    %677 = vector.extract_strided_slice %632 {offsets = [0, 80], sizes = [10, 8], strides = [1, 1]} : vector<10x96xf32> to vector<10x8xf32>
    %678 = arith.truncf %675 : vector<10x8xf32> to vector<10x8xbf16>
    %679 = arith.truncf %676 : vector<10x8xf32> to vector<10x8xbf16>
    %cst_219 = arith.constant dense<0.000000e+00> : vector<10x10xf32>
    %680 = tpu.matmul %678, %679, %cst_219 {dimension_numbers = #tpu.dot_dimension_numbers<[1], [1], [0], [0], [0, 0, 1, 0], [], []>} : vector<10x8xbf16>, vector<10x8xbf16>, vector<10x10xf32> -> vector<10x10xf32>
    %cst_220 = arith.constant 0.353553385 : f32
    %681 = vector.broadcast %cst_220 : f32 to vector<10x10xf32>
    %682 = arith.mulf %680, %681 : vector<10x10xf32>
    %683 = arith.addf %682, %451 : vector<10x10xf32>
    %cst_221 = arith.constant dense<0xFF800000> : vector<10xf32>
    %684 = vector.multi_reduction <maximumf>, %683, %cst_221 [1] : vector<10x10xf32> to vector<10xf32>
    %685 = vector.shape_cast %684 : vector<10xf32> to vector<10x1xf32>
    %686 = vector.broadcast %685 : vector<10x1xf32> to vector<10x10xf32>
    %687 = arith.subf %683, %686 : vector<10x10xf32>
    %688 = math.exp %687 : vector<10x10xf32>
    %cst_222 = arith.constant dense<0.000000e+00> : vector<10xf32>
    %689 = vector.multi_reduction <add>, %688, %cst_222 [1] : vector<10x10xf32> to vector<10xf32>
    %690 = vector.shape_cast %689 : vector<10xf32> to vector<10x1xf32>
    %691 = vector.broadcast %690 : vector<10x1xf32> to vector<10x10xf32>
    %692 = arith.divf %688, %691 : vector<10x10xf32>
    %693 = arith.truncf %692 : vector<10x10xf32> to vector<10x10xbf16>
    %694 = arith.truncf %677 : vector<10x8xf32> to vector<10x8xbf16>
    %cst_223 = arith.constant dense<0.000000e+00> : vector<10x8xf32>
    %695 = tpu.matmul %693, %694, %cst_223 {dimension_numbers = #tpu.dot_dimension_numbers<[1], [0], [0], [1], [0, 0, 1, 1], [], []>} : vector<10x10xbf16>, vector<10x8xbf16>, vector<10x8xf32> -> vector<10x8xf32>
    %696 = vector.extract_strided_slice %632 {offsets = [0, 24], sizes = [10, 8], strides = [1, 1]} : vector<10x96xf32> to vector<10x8xf32>
    %697 = vector.extract_strided_slice %632 {offsets = [0, 56], sizes = [10, 8], strides = [1, 1]} : vector<10x96xf32> to vector<10x8xf32>
    %698 = vector.extract_strided_slice %632 {offsets = [0, 88], sizes = [10, 8], strides = [1, 1]} : vector<10x96xf32> to vector<10x8xf32>
    %699 = arith.truncf %696 : vector<10x8xf32> to vector<10x8xbf16>
    %700 = arith.truncf %697 : vector<10x8xf32> to vector<10x8xbf16>
    %cst_224 = arith.constant dense<0.000000e+00> : vector<10x10xf32>
    %701 = tpu.matmul %699, %700, %cst_224 {dimension_numbers = #tpu.dot_dimension_numbers<[1], [1], [0], [0], [0, 0, 1, 0], [], []>} : vector<10x8xbf16>, vector<10x8xbf16>, vector<10x10xf32> -> vector<10x10xf32>
    %cst_225 = arith.constant 0.353553385 : f32
    %702 = vector.broadcast %cst_225 : f32 to vector<10x10xf32>
    %703 = arith.mulf %701, %702 : vector<10x10xf32>
    %704 = arith.addf %703, %451 : vector<10x10xf32>
    %cst_226 = arith.constant dense<0xFF800000> : vector<10xf32>
    %705 = vector.multi_reduction <maximumf>, %704, %cst_226 [1] : vector<10x10xf32> to vector<10xf32>
    %706 = vector.shape_cast %705 : vector<10xf32> to vector<10x1xf32>
    %707 = vector.broadcast %706 : vector<10x1xf32> to vector<10x10xf32>
    %708 = arith.subf %704, %707 : vector<10x10xf32>
    %709 = math.exp %708 : vector<10x10xf32>
    %cst_227 = arith.constant dense<0.000000e+00> : vector<10xf32>
    %710 = vector.multi_reduction <add>, %709, %cst_227 [1] : vector<10x10xf32> to vector<10xf32>
    %711 = vector.shape_cast %710 : vector<10xf32> to vector<10x1xf32>
    %712 = vector.broadcast %711 : vector<10x1xf32> to vector<10x10xf32>
    %713 = arith.divf %709, %712 : vector<10x10xf32>
    %714 = arith.truncf %713 : vector<10x10xf32> to vector<10x10xbf16>
    %715 = arith.truncf %698 : vector<10x8xf32> to vector<10x8xbf16>
    %cst_228 = arith.constant dense<0.000000e+00> : vector<10x8xf32>
    %716 = tpu.matmul %714, %715, %cst_228 {dimension_numbers = #tpu.dot_dimension_numbers<[1], [0], [0], [1], [0, 0, 1, 1], [], []>} : vector<10x10xbf16>, vector<10x8xbf16>, vector<10x8xf32> -> vector<10x8xf32>
    %717 = tpu.concatenate %653, %674, %695, %716 in 1 : vector<10x8xf32>, vector<10x8xf32>, vector<10x8xf32>, vector<10x8xf32> -> vector<10x32xf32>
    %c1_229 = arith.constant 1 : index
    %c0_230 = arith.constant 0 : index
    %c0_231 = arith.constant 0 : index
    %718 = vector.load %arg25[%c1_229, %c0_230, %c0_231] : memref<2x32x32xbf16, #tpu.memory_space<vmem>>, vector<1x32x32xbf16>
    %719 = vector.shape_cast %718 : vector<1x32x32xbf16> to vector<32x32xbf16>
    %720 = arith.truncf %717 : vector<10x32xf32> to vector<10x32xbf16>
    %cst_232 = arith.constant dense<0.000000e+00> : vector<10x32xf32>
    %721 = tpu.matmul %720, %719, %cst_232 {dimension_numbers = #tpu.dot_dimension_numbers<[1], [0], [0], [1], [0, 0, 1, 1], [], []>} : vector<10x32xbf16>, vector<32x32xbf16>, vector<10x32xf32> -> vector<10x32xf32>
    %c1_233 = arith.constant 1 : index
    %c0_234 = arith.constant 0 : index
    %c0_235 = arith.constant 0 : index
    %722 = vector.load %arg26[%c1_233, %c0_234, %c0_235] : memref<2x1x32xf32, #tpu.memory_space<vmem>>, vector<1x1x32xf32>
    %723 = vector.shape_cast %722 : vector<1x1x32xf32> to vector<1x32xf32>
    %724 = vector.broadcast %723 : vector<1x32xf32> to vector<10x32xf32>
    %725 = arith.addf %721, %724 : vector<10x32xf32>
    %726 = arith.addf %624, %725 : vector<10x32xf32>
    %c1_236 = arith.constant 1 : index
    %c0_237 = arith.constant 0 : index
    %c0_238 = arith.constant 0 : index
    %727 = vector.load %arg27[%c1_236, %c0_237, %c0_238] : memref<2x1x32xf32, #tpu.memory_space<vmem>>, vector<1x1x32xf32>
    %728 = vector.shape_cast %727 : vector<1x1x32xf32> to vector<1x32xf32>
    %c1_239 = arith.constant 1 : index
    %c0_240 = arith.constant 0 : index
    %c0_241 = arith.constant 0 : index
    %729 = vector.load %arg28[%c1_239, %c0_240, %c0_241] : memref<2x1x32xf32, #tpu.memory_space<vmem>>, vector<1x1x32xf32>
    %730 = vector.shape_cast %729 : vector<1x1x32xf32> to vector<1x32xf32>
    %cst_242 = arith.constant dense<0.000000e+00> : vector<10xf32>
    %731 = vector.multi_reduction <add>, %726, %cst_242 [1] : vector<10x32xf32> to vector<10xf32>
    %732 = vector.shape_cast %731 : vector<10xf32> to vector<10x1xf32>
    %cst_243 = arith.constant 3.200000e+01 : f32
    %733 = vector.broadcast %cst_243 : f32 to vector<10x1xf32>
    %734 = arith.divf %732, %733 : vector<10x1xf32>
    %735 = vector.broadcast %734 : vector<10x1xf32> to vector<10x32xf32>
    %736 = arith.subf %726, %735 : vector<10x32xf32>
    %737 = arith.mulf %736, %736 : vector<10x32xf32>
    %cst_244 = arith.constant dense<0.000000e+00> : vector<10xf32>
    %738 = vector.multi_reduction <add>, %737, %cst_244 [1] : vector<10x32xf32> to vector<10xf32>
    %739 = vector.shape_cast %738 : vector<10xf32> to vector<10x1xf32>
    %cst_245 = arith.constant 3.200000e+01 : f32
    %740 = vector.broadcast %cst_245 : f32 to vector<10x1xf32>
    %741 = arith.divf %739, %740 : vector<10x1xf32>
    %742 = vector.broadcast %734 : vector<10x1xf32> to vector<10x32xf32>
    %743 = arith.subf %726, %742 : vector<10x32xf32>
    %cst_246 = arith.constant 9.99999974E-6 : f32
    %744 = vector.broadcast %cst_246 : f32 to vector<10x1xf32>
    %745 = arith.addf %741, %744 : vector<10x1xf32>
    %746 = math.rsqrt %745 : vector<10x1xf32>
    %747 = vector.broadcast %746 : vector<10x1xf32> to vector<10x32xf32>
    %748 = arith.mulf %743, %747 : vector<10x32xf32>
    %749 = vector.broadcast %728 : vector<1x32xf32> to vector<10x32xf32>
    %750 = arith.mulf %748, %749 : vector<10x32xf32>
    %751 = vector.broadcast %730 : vector<1x32xf32> to vector<10x32xf32>
    %752 = arith.addf %750, %751 : vector<10x32xf32>
    %c1_247 = arith.constant 1 : index
    %c0_248 = arith.constant 0 : index
    %c0_249 = arith.constant 0 : index
    %753 = vector.load %arg29[%c1_247, %c0_248, %c0_249] : memref<2x32x64xbf16, #tpu.memory_space<vmem>>, vector<1x32x64xbf16>
    %754 = vector.shape_cast %753 : vector<1x32x64xbf16> to vector<32x64xbf16>
    %755 = arith.truncf %752 : vector<10x32xf32> to vector<10x32xbf16>
    %cst_250 = arith.constant dense<0.000000e+00> : vector<10x64xf32>
    %756 = tpu.matmul %755, %754, %cst_250 {dimension_numbers = #tpu.dot_dimension_numbers<[1], [0], [0], [1], [0, 0, 1, 1], [], []>} : vector<10x32xbf16>, vector<32x64xbf16>, vector<10x64xf32> -> vector<10x64xf32>
    %c1_251 = arith.constant 1 : index
    %c0_252 = arith.constant 0 : index
    %c0_253 = arith.constant 0 : index
    %757 = vector.load %arg30[%c1_251, %c0_252, %c0_253] : memref<2x1x64xf32, #tpu.memory_space<vmem>>, vector<1x1x64xf32>
    %758 = vector.shape_cast %757 : vector<1x1x64xf32> to vector<1x64xf32>
    %759 = vector.broadcast %758 : vector<1x64xf32> to vector<10x64xf32>
    %760 = arith.addf %756, %759 : vector<10x64xf32>
    %cst_254 = arith.constant 0.000000e+00 : f32
    %761 = vector.broadcast %cst_254 : f32 to vector<10x64xf32>
    %762 = arith.maximumf %760, %761 : vector<10x64xf32>
    %c1_255 = arith.constant 1 : index
    %c0_256 = arith.constant 0 : index
    %c0_257 = arith.constant 0 : index
    %763 = vector.load %arg31[%c1_255, %c0_256, %c0_257] : memref<2x64x32xbf16, #tpu.memory_space<vmem>>, vector<1x64x32xbf16>
    %764 = vector.shape_cast %763 : vector<1x64x32xbf16> to vector<64x32xbf16>
    %765 = arith.truncf %762 : vector<10x64xf32> to vector<10x64xbf16>
    %cst_258 = arith.constant dense<0.000000e+00> : vector<10x32xf32>
    %766 = tpu.matmul %765, %764, %cst_258 {dimension_numbers = #tpu.dot_dimension_numbers<[1], [0], [0], [1], [0, 0, 1, 1], [], []>} : vector<10x64xbf16>, vector<64x32xbf16>, vector<10x32xf32> -> vector<10x32xf32>
    %c1_259 = arith.constant 1 : index
    %c0_260 = arith.constant 0 : index
    %c0_261 = arith.constant 0 : index
    %767 = vector.load %arg32[%c1_259, %c0_260, %c0_261] : memref<2x1x32xf32, #tpu.memory_space<vmem>>, vector<1x1x32xf32>
    %768 = vector.shape_cast %767 : vector<1x1x32xf32> to vector<1x32xf32>
    %769 = vector.broadcast %768 : vector<1x32xf32> to vector<10x32xf32>
    %770 = arith.addf %766, %769 : vector<10x32xf32>
    %771 = arith.addf %752, %770 : vector<10x32xf32>
    %c1_262 = arith.constant 1 : index
    %c0_263 = arith.constant 0 : index
    %c0_264 = arith.constant 0 : index
    %772 = vector.load %arg33[%c1_262, %c0_263, %c0_264] : memref<2x1x32xf32, #tpu.memory_space<vmem>>, vector<1x1x32xf32>
    %773 = vector.shape_cast %772 : vector<1x1x32xf32> to vector<1x32xf32>
    %c1_265 = arith.constant 1 : index
    %c0_266 = arith.constant 0 : index
    %c0_267 = arith.constant 0 : index
    %774 = vector.load %arg34[%c1_265, %c0_266, %c0_267] : memref<2x1x32xf32, #tpu.memory_space<vmem>>, vector<1x1x32xf32>
    %775 = vector.shape_cast %774 : vector<1x1x32xf32> to vector<1x32xf32>
    %cst_268 = arith.constant dense<0.000000e+00> : vector<10xf32>
    %776 = vector.multi_reduction <add>, %771, %cst_268 [1] : vector<10x32xf32> to vector<10xf32>
    %777 = vector.shape_cast %776 : vector<10xf32> to vector<10x1xf32>
    %cst_269 = arith.constant 3.200000e+01 : f32
    %778 = vector.broadcast %cst_269 : f32 to vector<10x1xf32>
    %779 = arith.divf %777, %778 : vector<10x1xf32>
    %780 = vector.broadcast %779 : vector<10x1xf32> to vector<10x32xf32>
    %781 = arith.subf %771, %780 : vector<10x32xf32>
    %782 = arith.mulf %781, %781 : vector<10x32xf32>
    %cst_270 = arith.constant dense<0.000000e+00> : vector<10xf32>
    %783 = vector.multi_reduction <add>, %782, %cst_270 [1] : vector<10x32xf32> to vector<10xf32>
    %784 = vector.shape_cast %783 : vector<10xf32> to vector<10x1xf32>
    %cst_271 = arith.constant 3.200000e+01 : f32
    %785 = vector.broadcast %cst_271 : f32 to vector<10x1xf32>
    %786 = arith.divf %784, %785 : vector<10x1xf32>
    %787 = vector.broadcast %779 : vector<10x1xf32> to vector<10x32xf32>
    %788 = arith.subf %771, %787 : vector<10x32xf32>
    %cst_272 = arith.constant 9.99999974E-6 : f32
    %789 = vector.broadcast %cst_272 : f32 to vector<10x1xf32>
    %790 = arith.addf %786, %789 : vector<10x1xf32>
    %791 = math.rsqrt %790 : vector<10x1xf32>
    %792 = vector.broadcast %791 : vector<10x1xf32> to vector<10x32xf32>
    %793 = arith.mulf %788, %792 : vector<10x32xf32>
    %794 = vector.broadcast %773 : vector<1x32xf32> to vector<10x32xf32>
    %795 = arith.mulf %793, %794 : vector<10x32xf32>
    %796 = vector.broadcast %775 : vector<1x32xf32> to vector<10x32xf32>
    %797 = arith.addf %795, %796 : vector<10x32xf32>
    %c0_273 = arith.constant 0 : index
    %c0_274 = arith.constant 0 : index
    %798 = vector.load %arg35[%c0_273, %c0_274] : memref<32x640xbf16, #tpu.memory_space<vmem>>, vector<32x640xbf16>
    %799 = arith.truncf %797 : vector<10x32xf32> to vector<10x32xbf16>
    %cst_275 = arith.constant dense<0.000000e+00> : vector<10x640xf32>
    %800 = tpu.matmul %799, %798, %cst_275 {dimension_numbers = #tpu.dot_dimension_numbers<[1], [0], [0], [1], [0, 0, 1, 1], [], []>} : vector<10x32xbf16>, vector<32x640xbf16>, vector<10x640xf32> -> vector<10x640xf32>
    %c0_276 = arith.constant 0 : index
    %c0_277 = arith.constant 0 : index
    %c0_278 = arith.constant 0 : index
    %801 = vector.load %arg36[%c0_276, %c0_277, %c0_278] : memref<5x10x1xf32, #tpu.memory_space<vmem>>, vector<1x10x1xf32>
    %802 = vector.shape_cast %801 : vector<1x10x1xf32> to vector<10x1xf32>
    %803 = vector.extract_strided_slice %800 {offsets = [0, 0], sizes = [10, 128], strides = [1, 1]} : vector<10x640xf32> to vector<10x128xf32>
    %804 = vector.broadcast %802 : vector<10x1xf32> to vector<10x128xf32>
    %805 = arith.mulf %804, %803 : vector<10x128xf32>
    %c1_279 = arith.constant 1 : index
    %c0_280 = arith.constant 0 : index
    %c0_281 = arith.constant 0 : index
    %806 = vector.load %arg36[%c1_279, %c0_280, %c0_281] : memref<5x10x1xf32, #tpu.memory_space<vmem>>, vector<1x10x1xf32>
    %807 = vector.shape_cast %806 : vector<1x10x1xf32> to vector<10x1xf32>
    %808 = vector.extract_strided_slice %800 {offsets = [0, 128], sizes = [10, 128], strides = [1, 1]} : vector<10x640xf32> to vector<10x128xf32>
    %809 = vector.broadcast %807 : vector<10x1xf32> to vector<10x128xf32>
    %810 = arith.mulf %809, %808 : vector<10x128xf32>
    %811 = arith.addf %805, %810 : vector<10x128xf32>
    %c2_282 = arith.constant 2 : index
    %c0_283 = arith.constant 0 : index
    %c0_284 = arith.constant 0 : index
    %812 = vector.load %arg36[%c2_282, %c0_283, %c0_284] : memref<5x10x1xf32, #tpu.memory_space<vmem>>, vector<1x10x1xf32>
    %813 = vector.shape_cast %812 : vector<1x10x1xf32> to vector<10x1xf32>
    %814 = vector.extract_strided_slice %800 {offsets = [0, 256], sizes = [10, 128], strides = [1, 1]} : vector<10x640xf32> to vector<10x128xf32>
    %815 = vector.broadcast %813 : vector<10x1xf32> to vector<10x128xf32>
    %816 = arith.mulf %815, %814 : vector<10x128xf32>
    %817 = arith.addf %811, %816 : vector<10x128xf32>
    %c3_285 = arith.constant 3 : index
    %c0_286 = arith.constant 0 : index
    %c0_287 = arith.constant 0 : index
    %818 = vector.load %arg36[%c3_285, %c0_286, %c0_287] : memref<5x10x1xf32, #tpu.memory_space<vmem>>, vector<1x10x1xf32>
    %819 = vector.shape_cast %818 : vector<1x10x1xf32> to vector<10x1xf32>
    %820 = vector.extract_strided_slice %800 {offsets = [0, 384], sizes = [10, 128], strides = [1, 1]} : vector<10x640xf32> to vector<10x128xf32>
    %821 = vector.broadcast %819 : vector<10x1xf32> to vector<10x128xf32>
    %822 = arith.mulf %821, %820 : vector<10x128xf32>
    %823 = arith.addf %817, %822 : vector<10x128xf32>
    %c4_288 = arith.constant 4 : index
    %c0_289 = arith.constant 0 : index
    %c0_290 = arith.constant 0 : index
    %824 = vector.load %arg36[%c4_288, %c0_289, %c0_290] : memref<5x10x1xf32, #tpu.memory_space<vmem>>, vector<1x10x1xf32>
    %825 = vector.shape_cast %824 : vector<1x10x1xf32> to vector<10x1xf32>
    %826 = vector.extract_strided_slice %800 {offsets = [0, 512], sizes = [10, 128], strides = [1, 1]} : vector<10x640xf32> to vector<10x128xf32>
    %827 = vector.broadcast %825 : vector<10x1xf32> to vector<10x128xf32>
    %828 = arith.mulf %827, %826 : vector<10x128xf32>
    %829 = arith.addf %823, %828 : vector<10x128xf32>
    %c0_291 = arith.constant 0 : index
    %c0_292 = arith.constant 0 : index
    %830 = vector.load %arg37[%c0_291, %c0_292] : memref<2x10xf32, #tpu.memory_space<vmem>>, vector<2x10xf32>
    %831 = arith.truncf %830 : vector<2x10xf32> to vector<2x10xbf16>
    %832 = arith.truncf %829 : vector<10x128xf32> to vector<10x128xbf16>
    %cst_293 = arith.constant dense<0.000000e+00> : vector<2x128xf32>
    %833 = tpu.matmul %831, %832, %cst_293 {dimension_numbers = #tpu.dot_dimension_numbers<[1], [0], [0], [1], [0, 0, 1, 1], [], []>} : vector<2x10xbf16>, vector<10x128xbf16>, vector<2x128xf32> -> vector<2x128xf32>
    %c0_294 = arith.constant 0 : index
    %c0_295 = arith.constant 0 : index
    %834 = vector.load %arg38[%c0_294, %c0_295] : memref<1x128xf32, #tpu.memory_space<vmem>>, vector<1x128xf32>
    %835 = vector.broadcast %834 : vector<1x128xf32> to vector<2x128xf32>
    %836 = arith.addf %833, %835 : vector<2x128xf32>
    %c0_296 = arith.constant 0 : index
    %c0_297 = arith.constant 0 : index
    %837 = vector.load %arg2[%c0_296, %c0_297] : memref<2x8xf32, #tpu.memory_space<vmem>>, vector<2x8xf32>
    %c0_298 = arith.constant 0 : index
    %c0_299 = arith.constant 0 : index
    %838 = vector.load %arg39[%c0_298, %c0_299] : memref<8x16xbf16, #tpu.memory_space<vmem>>, vector<8x16xbf16>
    %c0_300 = arith.constant 0 : index
    %c0_301 = arith.constant 0 : index
    %839 = vector.load %arg40[%c0_300, %c0_301] : memref<1x16xf32, #tpu.memory_space<vmem>>, vector<1x16xf32>
    %c0_302 = arith.constant 0 : index
    %c0_303 = arith.constant 0 : index
    %840 = vector.load %arg41[%c0_302, %c0_303] : memref<16x3xbf16, #tpu.memory_space<vmem>>, vector<16x3xbf16>
    %c0_304 = arith.constant 0 : index
    %c0_305 = arith.constant 0 : index
    %841 = vector.load %arg42[%c0_304, %c0_305] : memref<1x3xf32, #tpu.memory_space<vmem>>, vector<1x3xf32>
    %c0_306 = arith.constant 0 : index
    %c0_307 = arith.constant 0 : index
    %842 = vector.load %arg43[%c0_306, %c0_307] : memref<16x384xbf16, #tpu.memory_space<vmem>>, vector<16x384xbf16>
    %c0_308 = arith.constant 0 : index
    %c0_309 = arith.constant 0 : index
    %843 = vector.load %arg44[%c0_308, %c0_309] : memref<1x384xf32, #tpu.memory_space<vmem>>, vector<1x384xf32>
    %844 = arith.truncf %837 : vector<2x8xf32> to vector<2x8xbf16>
    %cst_310 = arith.constant dense<0.000000e+00> : vector<2x16xf32>
    %845 = tpu.matmul %844, %838, %cst_310 {dimension_numbers = #tpu.dot_dimension_numbers<[1], [0], [0], [1], [0, 0, 1, 1], [], []>} : vector<2x8xbf16>, vector<8x16xbf16>, vector<2x16xf32> -> vector<2x16xf32>
    %846 = vector.broadcast %839 : vector<1x16xf32> to vector<2x16xf32>
    %847 = arith.addf %845, %846 : vector<2x16xf32>
    %cst_311 = arith.constant 0.000000e+00 : f32
    %848 = vector.broadcast %cst_311 : f32 to vector<2x16xf32>
    %849 = arith.minimumf %847, %848 : vector<2x16xf32>
    %850 = math.exp %849 : vector<2x16xf32>
    %cst_312 = arith.constant 1.000000e+00 : f32
    %851 = vector.broadcast %cst_312 : f32 to vector<2x16xf32>
    %852 = arith.subf %850, %851 : vector<2x16xf32>
    %cst_313 = arith.constant 1.67326319 : f32
    %853 = vector.broadcast %cst_313 : f32 to vector<2x16xf32>
    %854 = arith.mulf %853, %852 : vector<2x16xf32>
    %cst_314 = arith.constant 0.000000e+00 : f32
    %855 = vector.broadcast %cst_314 : f32 to vector<2x16xf32>
    %856 = arith.cmpf ogt, %847, %855 : vector<2x16xf32>
    %857 = arith.select %856, %847, %854 : vector<2x16xi1>, vector<2x16xf32>
    %cst_315 = arith.constant 1.05070102 : f32
    %858 = vector.broadcast %cst_315 : f32 to vector<2x16xf32>
    %859 = arith.mulf %858, %857 : vector<2x16xf32>
    %860 = arith.truncf %859 : vector<2x16xf32> to vector<2x16xbf16>
    %cst_316 = arith.constant dense<0.000000e+00> : vector<2x3xf32>
    %861 = tpu.matmul %860, %840, %cst_316 {dimension_numbers = #tpu.dot_dimension_numbers<[1], [0], [0], [1], [0, 0, 1, 1], [], []>} : vector<2x16xbf16>, vector<16x3xbf16>, vector<2x3xf32> -> vector<2x3xf32>
    %862 = vector.broadcast %841 : vector<1x3xf32> to vector<2x3xf32>
    %863 = arith.addf %861, %862 : vector<2x3xf32>
    %cst_317 = arith.constant dense<0xFF800000> : vector<2xf32>
    %864 = vector.multi_reduction <maximumf>, %863, %cst_317 [1] : vector<2x3xf32> to vector<2xf32>
    %865 = vector.shape_cast %864 : vector<2xf32> to vector<2x1xf32>
    %866 = vector.broadcast %865 : vector<2x1xf32> to vector<2x3xf32>
    %867 = arith.subf %863, %866 : vector<2x3xf32>
    %868 = math.exp %867 : vector<2x3xf32>
    %cst_318 = arith.constant dense<0.000000e+00> : vector<2xf32>
    %869 = vector.multi_reduction <add>, %868, %cst_318 [1] : vector<2x3xf32> to vector<2xf32>
    %870 = vector.shape_cast %869 : vector<2xf32> to vector<2x1xf32>
    %871 = vector.broadcast %870 : vector<2x1xf32> to vector<2x3xf32>
    %872 = arith.divf %868, %871 : vector<2x3xf32>
    %873 = arith.truncf %859 : vector<2x16xf32> to vector<2x16xbf16>
    %cst_319 = arith.constant dense<0.000000e+00> : vector<2x384xf32>
    %874 = tpu.matmul %873, %842, %cst_319 {dimension_numbers = #tpu.dot_dimension_numbers<[1], [0], [0], [1], [0, 0, 1, 1], [], []>} : vector<2x16xbf16>, vector<16x384xbf16>, vector<2x384xf32> -> vector<2x384xf32>
    %875 = vector.broadcast %843 : vector<1x384xf32> to vector<2x384xf32>
    %876 = arith.addf %874, %875 : vector<2x384xf32>
    %877 = vector.extract_strided_slice %872 {offsets = [0, 0], sizes = [2, 1], strides = [1, 1]} : vector<2x3xf32> to vector<2x1xf32>
    %878 = vector.extract_strided_slice %876 {offsets = [0, 0], sizes = [2, 128], strides = [1, 1]} : vector<2x384xf32> to vector<2x128xf32>
    %879 = vector.broadcast %877 : vector<2x1xf32> to vector<2x128xf32>
    %880 = arith.mulf %879, %878 : vector<2x128xf32>
    %881 = vector.extract_strided_slice %872 {offsets = [0, 1], sizes = [2, 1], strides = [1, 1]} : vector<2x3xf32> to vector<2x1xf32>
    %882 = vector.extract_strided_slice %876 {offsets = [0, 128], sizes = [2, 128], strides = [1, 1]} : vector<2x384xf32> to vector<2x128xf32>
    %883 = vector.broadcast %881 : vector<2x1xf32> to vector<2x128xf32>
    %884 = arith.mulf %883, %882 : vector<2x128xf32>
    %885 = arith.addf %880, %884 : vector<2x128xf32>
    %886 = vector.extract_strided_slice %872 {offsets = [0, 2], sizes = [2, 1], strides = [1, 1]} : vector<2x3xf32> to vector<2x1xf32>
    %887 = vector.extract_strided_slice %876 {offsets = [0, 256], sizes = [2, 128], strides = [1, 1]} : vector<2x384xf32> to vector<2x128xf32>
    %888 = vector.broadcast %886 : vector<2x1xf32> to vector<2x128xf32>
    %889 = arith.mulf %888, %887 : vector<2x128xf32>
    %890 = arith.addf %885, %889 : vector<2x128xf32>
    %cst_320 = arith.constant 0.000000e+00 : f32
    %891 = vector.broadcast %cst_320 : f32 to vector<2x128xf32>
    %892 = arith.minimumf %890, %891 : vector<2x128xf32>
    %893 = math.exp %892 : vector<2x128xf32>
    %cst_321 = arith.constant 1.000000e+00 : f32
    %894 = vector.broadcast %cst_321 : f32 to vector<2x128xf32>
    %895 = arith.subf %893, %894 : vector<2x128xf32>
    %cst_322 = arith.constant 1.67326319 : f32
    %896 = vector.broadcast %cst_322 : f32 to vector<2x128xf32>
    %897 = arith.mulf %896, %895 : vector<2x128xf32>
    %cst_323 = arith.constant 0.000000e+00 : f32
    %898 = vector.broadcast %cst_323 : f32 to vector<2x128xf32>
    %899 = arith.cmpf ogt, %890, %898 : vector<2x128xf32>
    %900 = arith.select %899, %890, %897 : vector<2x128xi1>, vector<2x128xf32>
    %cst_324 = arith.constant 1.05070102 : f32
    %901 = vector.broadcast %cst_324 : f32 to vector<2x128xf32>
    %902 = arith.mulf %901, %900 : vector<2x128xf32>
    %903 = arith.addf %836, %902 : vector<2x128xf32>
    %904 = math.tanh %903 : vector<2x128xf32>
    %c0_325 = arith.constant 0 : index
    %c0_326 = arith.constant 0 : index
    %905 = vector.load %arg45[%c0_325, %c0_326] : memref<2x128xf32, #tpu.memory_space<vmem>>, vector<2x128xf32>
    tpu.vector_store %arg45[%c0_325, %c0_326], %904 {strides = array<i32>} : memref<2x128xf32, #tpu.memory_space<vmem>>, vector<2x128xf32>,
    return
  }
}

</mosaic_0001>

<llo_original>
// kernel: stgsp_forward.1
$region0: #{stgsp_forward.1}
  #allocation0 [shape = 'u32[]', space=smem, size = 0x4, offset = 0x4, fixed_abs, tag = 'smem constant byte address 0x4 - core index']
  #allocation1 [shape = 'u32[144,128]{1,0:T(1,128)}', space=vmem, size = 0x12000, scoped, tag = 'internal scratch']
  %s0 = inlined_call_operand.smem [shape: u32[46], index: -1, kind: input, shape index: {}]
  %s1 = sld [smem:[%s0]]
  %s2 = scalar_lea.smem %s0, 1
  %s3 = sld [smem:[%s2]]
  %s4 = scalar_lea.smem %s0, 2
  %s5 = sld [smem:[%s4]]
  %s6 = scalar_lea.smem %s0, 3
  %s7 = sld [smem:[%s6]]
  %s8 = scalar_lea.smem %s0, 4
  %s9 = sld [smem:[%s8]]
  %s10 = scalar_lea.smem %s0, 5
  %s11 = sld [smem:[%s10]]
  %s12 = scalar_lea.smem %s0, 6
  %s13 = sld [smem:[%s12]]
  %s14 = scalar_lea.smem %s0, 7
  %s15 = sld [smem:[%s14]]
  %s16 = scalar_lea.smem %s0, 8
  %s17 = sld [smem:[%s16]]
  %s18 = scalar_lea.smem %s0, 9
  %s19 = sld [smem:[%s18]]
  %s20 = scalar_lea.smem %s0, 10
  %s21 = sld [smem:[%s20]]
  %s22 = scalar_lea.smem %s0, 11
  %s23 = sld [smem:[%s22]]
  %s24 = scalar_lea.smem %s0, 12
  %s25 = sld [smem:[%s24]]
  %s26 = scalar_lea.smem %s0, 13
  %s27 = sld [smem:[%s26]]
  %s28 = scalar_lea.smem %s0, 14
  %s29 = sld [smem:[%s28]]
  %s30 = scalar_lea.smem %s0, 15
  %s31 = sld [smem:[%s30]]
  %s32 = scalar_lea.smem %s0, 16
  %s33 = sld [smem:[%s32]]
  %s34 = scalar_lea.smem %s0, 17
  %s35 = sld [smem:[%s34]]
  %s36 = scalar_lea.smem %s0, 18
  %s37 = sld [smem:[%s36]]
  %s38 = scalar_lea.smem %s0, 19
  %s39 = sld [smem:[%s38]]
  %s40 = scalar_lea.smem %s0, 20
  %s41 = sld [smem:[%s40]]
  %s42 = scalar_lea.smem %s0, 21
  %s43 = sld [smem:[%s42]]
  %s44 = scalar_lea.smem %s0, 22
  %s45 = sld [smem:[%s44]]
  %s46 = scalar_lea.smem %s0, 23
  %s47 = sld [smem:[%s46]]
  %s48 = scalar_lea.smem %s0, 24
  %s49 = sld [smem:[%s48]]
  %s50 = scalar_lea.smem %s0, 25
  %s51 = sld [smem:[%s50]]
  %s52 = scalar_lea.smem %s0, 26
  %s53 = sld [smem:[%s52]]
  %s54 = scalar_lea.smem %s0, 27
  %s55 = sld [smem:[%s54]]
  %s56 = scalar_lea.smem %s0, 28
  %s57 = sld [smem:[%s56]]
  %s58 = scalar_lea.smem %s0, 29
  %s59 = sld [smem:[%s58]]
  %s60 = scalar_lea.smem %s0, 30
  %s61 = sld [smem:[%s60]]
  %s62 = scalar_lea.smem %s0, 31
  %s63 = sld [smem:[%s62]]
  %s64 = scalar_lea.smem %s0, 32
  %s65 = sld [smem:[%s64]]
  %s66 = scalar_lea.smem %s0, 33
  %s67 = sld [smem:[%s66]]
  %s68 = scalar_lea.smem %s0, 34
  %s69 = sld [smem:[%s68]]
  %s70 = scalar_lea.smem %s0, 35
  %s71 = sld [smem:[%s70]]
  %s72 = scalar_lea.smem %s0, 36
  %s73 = sld [smem:[%s72]]
  %s74 = scalar_lea.smem %s0, 37
  %s75 = sld [smem:[%s74]]
  %s76 = scalar_lea.smem %s0, 38
  %s77 = sld [smem:[%s76]]
  %s78 = scalar_lea.smem %s0, 39
  %s79 = sld [smem:[%s78]]
  %s80 = scalar_lea.smem %s0, 40
  %s81 = sld [smem:[%s80]]
  %s82 = scalar_lea.smem %s0, 41
  %s83 = sld [smem:[%s82]]
  %s84 = scalar_lea.smem %s0, 42
  %s85 = sld [smem:[%s84]]
  %s86 = scalar_lea.smem %s0, 43
  %s87 = sld [smem:[%s86]]
  %s88 = scalar_lea.smem %s0, 44
  %s89 = sld [smem:[%s88]]
  %s90 = scalar_lea.smem %s0, 45
  %s91 = sld [smem:[%s90]]
  %s92 = sld [smem:[#allocation0]]
  $region190: #{stgsp_forward.1} parent=0
    _
  %s94 = ssub.s32 1, %s92
  %s95 = scalar_select 0, %s94, %s92
  // Predicated region
  $region2: #{stgsp_forward.1} parent=0 // pred_check
    _
  $region3: #{stgsp_forward.1} parent=0 // pred_check_branch
    %97 = sbr.rel (0) target = $region5
  $region4: #{stgsp_forward.1} parent=0 // pred_region
    _
  $region5: #{stgsp_forward.1} parent=0 // pred_fallthru
    _
  // Predicated region
  $region6: #{stgsp_forward.1} parent=0 // pred_check
    _
  $region7: #{stgsp_forward.1} parent=0 // pred_check_branch
    %99 = sbr.rel (0) target = $region9
  $region8: #{stgsp_forward.1} parent=0 // pred_region
    _
  $region9: #{stgsp_forward.1} parent=0 // pred_fallthru
    _
  // Predicated region
  $region10: #{stgsp_forward.1} parent=0 // pred_check
    _
  $region11: #{stgsp_forward.1} parent=0 // pred_check_branch
    %101 = sbr.rel (0) target = $region13
  $region12: #{stgsp_forward.1} parent=0 // pred_region
    _
  $region13: #{stgsp_forward.1} parent=0 // pred_fallthru
    _
  // Predicated region
  $region14: #{stgsp_forward.1} parent=0 // pred_check
    _
  $region15: #{stgsp_forward.1} parent=0 // pred_check_branch
    %103 = sbr.rel (0) target = $region17
  $region16: #{stgsp_forward.1} parent=0 // pred_region
    _
  $region17: #{stgsp_forward.1} parent=0 // pred_fallthru
    _
  // Predicated region
  $region18: #{stgsp_forward.1} parent=0 // pred_check
    _
  $region19: #{stgsp_forward.1} parent=0 // pred_check_branch
    %105 = sbr.rel (0) target = $region21
  $region20: #{stgsp_forward.1} parent=0 // pred_region
    _
  $region21: #{stgsp_forward.1} parent=0 // pred_fallthru
    _
  // Predicated region
  $region22: #{stgsp_forward.1} parent=0 // pred_check
    _
  $region23: #{stgsp_forward.1} parent=0 // pred_check_branch
    %107 = sbr.rel (0) target = $region25
  $region24: #{stgsp_forward.1} parent=0 // pred_region
    _
  $region25: #{stgsp_forward.1} parent=0 // pred_fallthru
    _
  // Predicated region
  $region26: #{stgsp_forward.1} parent=0 // pred_check
    _
  $region27: #{stgsp_forward.1} parent=0 // pred_check_branch
    %109 = sbr.rel (0) target = $region29
  $region28: #{stgsp_forward.1} parent=0 // pred_region
    _
  $region29: #{stgsp_forward.1} parent=0 // pred_fallthru
    _
  // Predicated region
  $region30: #{stgsp_forward.1} parent=0 // pred_check
    _
  $region31: #{stgsp_forward.1} parent=0 // pred_check_branch
    %111 = sbr.rel (0) target = $region33
  $region32: #{stgsp_forward.1} parent=0 // pred_region
    _
  $region33: #{stgsp_forward.1} parent=0 // pred_fallthru
    _
  // Predicated region
  $region34: #{stgsp_forward.1} parent=0 // pred_check
    _
  $region35: #{stgsp_forward.1} parent=0 // pred_check_branch
    %113 = sbr.rel (0) target = $region37
  $region36: #{stgsp_forward.1} parent=0 // pred_region
    _
  $region37: #{stgsp_forward.1} parent=0 // pred_fallthru
    _
  // Predicated region
  $region38: #{stgsp_forward.1} parent=0 // pred_check
    _
  $region39: #{stgsp_forward.1} parent=0 // pred_check_branch
    %115 = sbr.rel (0) target = $region41
  $region40: #{stgsp_forward.1} parent=0 // pred_region
    _
  $region41: #{stgsp_forward.1} parent=0 // pred_fallthru
    _
  // Predicated region
  $region42: #{stgsp_forward.1} parent=0 // pred_check
    _
  $region43: #{stgsp_forward.1} parent=0 // pred_check_branch
    %117 = sbr.rel (0) target = $region45
  $region44: #{stgsp_forward.1} parent=0 // pred_region
    _
  $region45: #{stgsp_forward.1} parent=0 // pred_fallthru
    _
  // Predicated region
  $region46: #{stgsp_forward.1} parent=0 // pred_check
    _
  $region47: #{stgsp_forward.1} parent=0 // pred_check_branch
    %119 = sbr.rel (0) target = $region49
  $region48: #{stgsp_forward.1} parent=0 // pred_region
    _
  $region49: #{stgsp_forward.1} parent=0 // pred_fallthru
    _
  // Predicated region
  $region50: #{stgsp_forward.1} parent=0 // pred_check
    _
  $region51: #{stgsp_forward.1} parent=0 // pred_check_branch
    %121 = sbr.rel (0) target = $region53
  $region52: #{stgsp_forward.1} parent=0 // pred_region
    _
  $region53: #{stgsp_forward.1} parent=0 // pred_fallthru
    _
  // Predicated region
  $region54: #{stgsp_forward.1} parent=0 // pred_check
    _
  $region55: #{stgsp_forward.1} parent=0 // pred_check_branch
    %123 = sbr.rel (0) target = $region57
  $region56: #{stgsp_forward.1} parent=0 // pred_region
    _
  $region57: #{stgsp_forward.1} parent=0 // pred_fallthru
    _
  // Predicated region
  $region58: #{stgsp_forward.1} parent=0 // pred_check
    _
  $region59: #{stgsp_forward.1} parent=0 // pred_check_branch
    %125 = sbr.rel (0) target = $region61
  $region60: #{stgsp_forward.1} parent=0 // pred_region
    _
  $region61: #{stgsp_forward.1} parent=0 // pred_fallthru
    _
  // Predicated region
  $region62: #{stgsp_forward.1} parent=0 // pred_check
    _
  $region63: #{stgsp_forward.1} parent=0 // pred_check_branch
    %127 = sbr.rel (0) target = $region65
  $region64: #{stgsp_forward.1} parent=0 // pred_region
    _
  $region65: #{stgsp_forward.1} parent=0 // pred_fallthru
    _
  // Predicated region
  $region66: #{stgsp_forward.1} parent=0 // pred_check
    _
  $region67: #{stgsp_forward.1} parent=0 // pred_check_branch
    %129 = sbr.rel (0) target = $region69
  $region68: #{stgsp_forward.1} parent=0 // pred_region
    _
  $region69: #{stgsp_forward.1} parent=0 // pred_fallthru
    _
  // Predicated region
  $region70: #{stgsp_forward.1} parent=0 // pred_check
    _
  $region71: #{stgsp_forward.1} parent=0 // pred_check_branch
    %131 = sbr.rel (0) target = $region73
  $region72: #{stgsp_forward.1} parent=0 // pred_region
    _
  $region73: #{stgsp_forward.1} parent=0 // pred_fallthru
    _
  // Predicated region
  $region74: #{stgsp_forward.1} parent=0 // pred_check
    _
  $region75: #{stgsp_forward.1} parent=0 // pred_check_branch
    %133 = sbr.rel (0) target = $region77
  $region76: #{stgsp_forward.1} parent=0 // pred_region
    _
  $region77: #{stgsp_forward.1} parent=0 // pred_fallthru
    _
  // Predicated region
  $region78: #{stgsp_forward.1} parent=0 // pred_check
    _
  $region79: #{stgsp_forward.1} parent=0 // pred_check_branch
    %135 = sbr.rel (0) target = $region81
  $region80: #{stgsp_forward.1} parent=0 // pred_region
    _
  $region81: #{stgsp_forward.1} parent=0 // pred_fallthru
    _
  // Predicated region
  $region82: #{stgsp_forward.1} parent=0 // pred_check
    _
  $region83: #{stgsp_forward.1} parent=0 // pred_check_branch
    %137 = sbr.rel (0) target = $region85
  $region84: #{stgsp_forward.1} parent=0 // pred_region
    _
  $region85: #{stgsp_forward.1} parent=0 // pred_fallthru
    _
  // Predicated region
  $region86: #{stgsp_forward.1} parent=0 // pred_check
    _
  $region87: #{stgsp_forward.1} parent=0 // pred_check_branch
    %139 = sbr.rel (0) target = $region89
  $region88: #{stgsp_forward.1} parent=0 // pred_region
    _
  $region89: #{stgsp_forward.1} parent=0 // pred_fallthru
    _
  // Predicated region
  $region90: #{stgsp_forward.1} parent=0 // pred_check
    _
  $region91: #{stgsp_forward.1} parent=0 // pred_check_branch
    %141 = sbr.rel (0) target = $region93
  $region92: #{stgsp_forward.1} parent=0 // pred_region
    _
  $region93: #{stgsp_forward.1} parent=0 // pred_fallthru
    _
  // Predicated region
  $region94: #{stgsp_forward.1} parent=0 // pred_check
    _
  $region95: #{stgsp_forward.1} parent=0 // pred_check_branch
    %143 = sbr.rel (0) target = $region97
  $region96: #{stgsp_forward.1} parent=0 // pred_region
    _
  $region97: #{stgsp_forward.1} parent=0 // pred_fallthru
    _
  // Predicated region
  $region98: #{stgsp_forward.1} parent=0 // pred_check
    _
  $region99: #{stgsp_forward.1} parent=0 // pred_check_branch
    %145 = sbr.rel (0) target = $region101
  $region100: #{stgsp_forward.1} parent=0 // pred_region
    _
  $region101: #{stgsp_forward.1} parent=0 // pred_fallthru
    _
  // Predicated region
  $region102: #{stgsp_forward.1} parent=0 // pred_check
    _
  $region103: #{stgsp_forward.1} parent=0 // pred_check_branch
    %147 = sbr.rel (0) target = $region105
  $region104: #{stgsp_forward.1} parent=0 // pred_region
    _
  $region105: #{stgsp_forward.1} parent=0 // pred_fallthru
    _
  // Predicated region
  $region106: #{stgsp_forward.1} parent=0 // pred_check
    _
  $region107: #{stgsp_forward.1} parent=0 // pred_check_branch
    %149 = sbr.rel (0) target = $region109
  $region108: #{stgsp_forward.1} parent=0 // pred_region
    _
  $region109: #{stgsp_forward.1} parent=0 // pred_fallthru
    _
  // Predicated region
  $region110: #{stgsp_forward.1} parent=0 // pred_check
    _
  $region111: #{stgsp_forward.1} parent=0 // pred_check_branch
    %151 = sbr.rel (0) target = $region113
  $region112: #{stgsp_forward.1} parent=0 // pred_region
    _
  $region113: #{stgsp_forward.1} parent=0 // pred_fallthru
    _
  // Predicated region
  $region114: #{stgsp_forward.1} parent=0 // pred_check
    _
  $region115: #{stgsp_forward.1} parent=0 // pred_check_branch
    %153 = sbr.rel (0) target = $region117
  $region116: #{stgsp_forward.1} parent=0 // pred_region
    _
  $region117: #{stgsp_forward.1} parent=0 // pred_fallthru
    _
  // Predicated region
  $region118: #{stgsp_forward.1} parent=0 // pred_check
    _
  $region119: #{stgsp_forward.1} parent=0 // pred_check_branch
    %155 = sbr.rel (0) target = $region121
  $region120: #{stgsp_forward.1} parent=0 // pred_region
    _
  $region121: #{stgsp_forward.1} parent=0 // pred_fallthru
    _
  // Predicated region
  $region122: #{stgsp_forward.1} parent=0 // pred_check
    _
  $region123: #{stgsp_forward.1} parent=0 // pred_check_branch
    %157 = sbr.rel (0) target = $region125
  $region124: #{stgsp_forward.1} parent=0 // pred_region
    _
  $region125: #{stgsp_forward.1} parent=0 // pred_fallthru
    _
  // Predicated region
  $region126: #{stgsp_forward.1} parent=0 // pred_check
    _
  $region127: #{stgsp_forward.1} parent=0 // pred_check_branch
    %159 = sbr.rel (0) target = $region129
  $region128: #{stgsp_forward.1} parent=0 // pred_region
    _
  $region129: #{stgsp_forward.1} parent=0 // pred_fallthru
    _
  // Predicated region
  $region130: #{stgsp_forward.1} parent=0 // pred_check
    _
  $region131: #{stgsp_forward.1} parent=0 // pred_check_branch
    %161 = sbr.rel (0) target = $region133
  $region132: #{stgsp_forward.1} parent=0 // pred_region
    _
  $region133: #{stgsp_forward.1} parent=0 // pred_fallthru
    _
  // Predicated region
  $region134: #{stgsp_forward.1} parent=0 // pred_check
    _
  $region135: #{stgsp_forward.1} parent=0 // pred_check_branch
    %163 = sbr.rel (0) target = $region137
  $region136: #{stgsp_forward.1} parent=0 // pred_region
    _
  $region137: #{stgsp_forward.1} parent=0 // pred_fallthru
    _
  // Predicated region
  $region138: #{stgsp_forward.1} parent=0 // pred_check
    _
  $region139: #{stgsp_forward.1} parent=0 // pred_check_branch
    %165 = sbr.rel (0) target = $region141
  $region140: #{stgsp_forward.1} parent=0 // pred_region
    _
  $region141: #{stgsp_forward.1} parent=0 // pred_fallthru
    _
  // Predicated region
  $region142: #{stgsp_forward.1} parent=0 // pred_check
    _
  $region143: #{stgsp_forward.1} parent=0 // pred_check_branch
    %167 = sbr.rel (0) target = $region145
  $region144: #{stgsp_forward.1} parent=0 // pred_region
    _
  $region145: #{stgsp_forward.1} parent=0 // pred_fallthru
    _
  // Predicated region
  $region146: #{stgsp_forward.1} parent=0 // pred_check
    _
  $region147: #{stgsp_forward.1} parent=0 // pred_check_branch
    %169 = sbr.rel (0) target = $region149
  $region148: #{stgsp_forward.1} parent=0 // pred_region
    _
  $region149: #{stgsp_forward.1} parent=0 // pred_fallthru
    _
  // Predicated region
  $region150: #{stgsp_forward.1} parent=0 // pred_check
    _
  $region151: #{stgsp_forward.1} parent=0 // pred_check_branch
    %171 = sbr.rel (0) target = $region153
  $region152: #{stgsp_forward.1} parent=0 // pred_region
    _
  $region153: #{stgsp_forward.1} parent=0 // pred_fallthru
    _
  // Predicated region
  $region154: #{stgsp_forward.1} parent=0 // pred_check
    _
  $region155: #{stgsp_forward.1} parent=0 // pred_check_branch
    %173 = sbr.rel (0) target = $region157
  $region156: #{stgsp_forward.1} parent=0 // pred_region
    _
  $region157: #{stgsp_forward.1} parent=0 // pred_fallthru
    _
  // Predicated region
  $region158: #{stgsp_forward.1} parent=0 // pred_check
    _
  $region159: #{stgsp_forward.1} parent=0 // pred_check_branch
    %175 = sbr.rel (0) target = $region161
  $region160: #{stgsp_forward.1} parent=0 // pred_region
    _
  $region161: #{stgsp_forward.1} parent=0 // pred_fallthru
    _
  // Predicated region
  $region162: #{stgsp_forward.1} parent=0 // pred_check
    _
  $region163: #{stgsp_forward.1} parent=0 // pred_check_branch
    %177 = sbr.rel (0) target = $region165
  $region164: #{stgsp_forward.1} parent=0 // pred_region
    _
  $region165: #{stgsp_forward.1} parent=0 // pred_fallthru
    _
  // Predicated region
  $region166: #{stgsp_forward.1} parent=0 // pred_check
    _
  $region167: #{stgsp_forward.1} parent=0 // pred_check_branch
    %179 = sbr.rel (0) target = $region169
  $region168: #{stgsp_forward.1} parent=0 // pred_region
    _
  $region169: #{stgsp_forward.1} parent=0 // pred_fallthru
    _
  // Predicated region
  $region170: #{stgsp_forward.1} parent=0 // pred_check
    _
  $region171: #{stgsp_forward.1} parent=0 // pred_check_branch
    %181 = sbr.rel (0) target = $region173
  $region172: #{stgsp_forward.1} parent=0 // pred_region
    _
  $region173: #{stgsp_forward.1} parent=0 // pred_fallthru
    _
  // Predicated region
  $region174: #{stgsp_forward.1} parent=0 // pred_check
    _
  $region175: #{stgsp_forward.1} parent=0 // pred_check_branch
    %183 = sbr.rel (0) target = $region177
  $region176: #{stgsp_forward.1} parent=0 // pred_region
    _
  $region177: #{stgsp_forward.1} parent=0 // pred_fallthru
    _
  // Predicated region
  $region178: #{stgsp_forward.1} parent=0 // pred_check
    _
  $region179: #{stgsp_forward.1} parent=0 // pred_check_branch
    %185 = sbr.rel (0) target = $region181
  $region180: #{stgsp_forward.1} parent=0 // pred_region
    _
  $region181: #{stgsp_forward.1} parent=0 // pred_fallthru
    _
  %v187 = vld [vmem:[%s3] sm:$0xff]
  %v188 = vld [vmem:[%s7] sm:$0xf]
  %v189 = vld [vmem:[%s9] sm:$0x1]
  %v190 = vld [vmem:[%s11] sm:$0xf]
  %v191 = vld [vmem:[%s11 + $0x4] sm:$0xf]
  %v192 = vld [vmem:[%s13] sm:$0x1]
  %v193 = vld [vmem:[%s15] sm:$0xff]
  %v194 = vld [vmem:[%s15 + $0x8] sm:$0xff]
  %v195 = vld [vmem:[%s15 + $0x10] sm:$0xff]
  %v196 = vld [vmem:[%s15 + $0x18] sm:$0xff]
  %v197 = vld [vmem:[%s15 + $0x20] sm:$0xff]
  %v198 = vld [vmem:[%s15 + $0x28] sm:$0xff]
  %v199 = vld [vmem:[%s15 + $0x30] sm:$0xff]
  %v200 = vld [vmem:[%s15 + $0x38] sm:$0xff]
  %v201 = vld [vmem:[%s15 + $0x40] sm:$0xff]
  %v202 = vld [vmem:[%s15 + $0x48] sm:$0xff]
  %v203 = vld [vmem:[%s15 + $0x50] sm:$0xff]
  %v204 = vld [vmem:[%s15 + $0x58] sm:$0xff]
  %v205 = vld [vmem:[%s17] sm:$0xff]
  %v206 = vld [vmem:[%s17 + $0x8] sm:$0xf]
  %v207 = vpack.c.bf16 %v187, %v187
  %v209 = vlaneseq
  %v210 = vshrl.u32 %v209, 7
  %v211 = vsub.s32 0, %v210
  %v212 = vrot.slane %v189, %v211
  %vm214 = vcmask 64512
  %v216 = vsel %vm214, %v207, 0
  %vm218 = vcmask 1043456
  %v220 = vsel %vm218, %v188, 0
  %222 = vmatprep.subr.bf16.mxu0 0
  %223 = vmatpush1.bf16.msra.mxu0 %v220
  %224 = vmatprep.subr.bf16.mxu0 0
  %225 = vmatpush1.bf16.msra.mxu0 0
  %226 = vmatprep.subr.bf16.mxu0 0
  %227 = vmatpush1.bf16.msra.mxu0 0
  %228 = vmatprep.subr.bf16.mxu0 0
  %229 = vmatpush1.bf16.msra.mxu0 0
  %230 = vmatprep.subr.bf16.mxu0 0
  %231 = vmatpush1.bf16.msra.mxu0 0
  %232 = vmatprep.subr.bf16.mxu0 0
  %233 = vmatpush1.bf16.msra.mxu0 0
  %234 = vmatprep.subr.bf16.mxu0 0
  %235 = vmatpush1.bf16.msra.mxu0 0
  %236 = vmatprep.subr.bf16.mxu0 0
  %237 = vmatpush1.bf16.msra.mxu0 0
  %238 = vmatprep.subr.bf16.mxu0 0
  %239 = vmatpush1.bf16.msra.mxu0 0
  %240 = vmatprep.subr.bf16.mxu0 0
  %241 = vmatpush1.bf16.msra.mxu0 0
  %242 = vmatprep.subr.bf16.mxu0 0
  %243 = vmatpush1.bf16.msra.mxu0 0
  %244 = vmatprep.subr.bf16.mxu0 0
  %245 = vmatpush1.bf16.msra.mxu0 0
  %246 = vmatprep.subr.bf16.mxu0 0
  %247 = vmatpush1.bf16.msra.mxu0 0
  %248 = vmatprep.subr.bf16.mxu0 0
  %249 = vmatpush1.bf16.msra.mxu0 0
  %250 = vmatprep.subr.bf16.mxu0 0
  %251 = vmatpush1.bf16.msra.mxu0 0
  %252 = vmatprep.subr.bf16.mxu0 0
  %253 = vmatpush1.bf16.msra.mxu0 0
  %254 = vmatprep.mubr.bf16.mxu0 0
  %255 = vmatmul.mubr.bf16.gmra.mrb[0].mxu0 %v216
  %v256 = vpop.f32.mrb[0].mxu0
  %v257 = vadd.f32 %v212, %v256
  %v258 = vpop.f32.mrb[0].mxu0
  %v259 = vpop.f32.mrb[0].mxu0
  %v260 = vpop.f32.mrb[0].mxu0
  %261 = vdwg.mxu0
  %v262 = vmin.f32 %v257, 0.0
  %v263 = vmul.f32 %v262, 1.442695
  %v264 = vpow.pop %v263
  %v265 = vsub.f32 %v264, 1.0
  %v266 = vmul.f32 %v265, 1.6732632
  %vm267 = vcmp.gt.f32.partialorder %v257, 0.0
  %v268 = vsel %vm267, %v257, %v266
  %v269 = vmul.f32 %v268, 1.050701
  %v270 = vpack.c.bf16 %v269, %v269
  %v272 = vlaneseq
  %v273 = vshrl.u32 %v272, 7
  %v274 = vsub.s32 0, %v273
  %v275 = vrot.slane %v192, %v274
  %v279 = vunpack.c.l.b16 %v190
  %v280 = vunpack.c.l.b16 %v191
  %v281 = vpack.c.b16 %v280, %v279
  %vm283 = vcmask 130048
  %v285 = vsel %vm283, %v270, 0
  %287 = vmatprep.subr.bf16.mxu0 0
  %288 = vmatpush1.bf16.msra.mxu0 %v281
  %289 = vmatprep.subr.bf16.mxu0 0
  %290 = vmatpush1.bf16.msra.mxu0 0
  %291 = vmatprep.subr.bf16.mxu0 0
  %292 = vmatpush1.bf16.msra.mxu0 0
  %293 = vmatprep.subr.bf16.mxu0 0
  %294 = vmatpush1.bf16.msra.mxu0 0
  %295 = vmatprep.subr.bf16.mxu0 0
  %296 = vmatpush1.bf16.msra.mxu0 0
  %297 = vmatprep.subr.bf16.mxu0 0
  %298 = vmatpush1.bf16.msra.mxu0 0
  %299 = vmatprep.subr.bf16.mxu0 0
  %300 = vmatpush1.bf16.msra.mxu0 0
  %301 = vmatprep.subr.bf16.mxu0 0
  %302 = vmatpush1.bf16.msra.mxu0 0
  %303 = vmatprep.subr.bf16.mxu0 0
  %304 = vmatpush1.bf16.msra.mxu0 0
  %305 = vmatprep.subr.bf16.mxu0 0
  %306 = vmatpush1.bf16.msra.mxu0 0
  %307 = vmatprep.subr.bf16.mxu0 0
  %308 = vmatpush1.bf16.msra.mxu0 0
  %309 = vmatprep.subr.bf16.mxu0 0
  %310 = vmatpush1.bf16.msra.mxu0 0
  %311 = vmatprep.subr.bf16.mxu0 0
  %312 = vmatpush1.bf16.msra.mxu0 0
  %313 = vmatprep.subr.bf16.mxu0 0
  %314 = vmatpush1.bf16.msra.mxu0 0
  %315 = vmatprep.subr.bf16.mxu0 0
  %316 = vmatpush1.bf16.msra.mxu0 0
  %317 = vmatprep.subr.bf16.mxu0 0
  %318 = vmatpush1.bf16.msra.mxu0 0
  %319 = vmatprep.mubr.bf16.mxu0 0
  %320 = vmatmul.mubr.bf16.gmra.mrb[0].mxu0 %v285
  %v321 = vpop.f32.mrb[0].mxu0
  %v322 = vadd.f32 %v275, %v321
  %v323 = vpop.f32.mrb[0].mxu0
  %v324 = vpop.f32.mrb[0].mxu0
  %v325 = vpop.f32.mrb[0].mxu0
  %326 = vdwg.mxu0
  %vm327 = vcmask 23552
  %v328 = vsel %vm327, %v322, -inf
  %329 = vmax.xlane.f32.xlu0 %v328
  %v330 = vpop.xlane.xlu0 %329
  %v331 = vsub.f32 %v322, %v330
  %v332 = vmul.f32 %v331, 1.442695
  %v333 = vpow.pop %v332
  %v334 = vsel %vm327, %v333, 0.0
  %335 = vadd.xlane.f32.xlu0 %v334
  %v336 = vpop.xlane.xlu0 %335
  %v337 = vrcp.pop %v336
  %v338 = vmul.f32 %v333, %v337
  %v341 = vlaneseq
  %v342 = vshrl.u32 %v341, 7
  %v343 = vsub.s32 0, %v342
  %v344 = vrot.slane %v205, %v343
  %v345 = vlaneseq
  %v346 = vshrl.u32 %v345, 7
  %v347 = vsub.s32 1, %v346
  %v348 = vrot.slane %v205, %v347
  %v349 = vlaneseq
  %v350 = vshrl.u32 %v349, 7
  %v351 = vsub.s32 2, %v350
  %v352 = vrot.slane %v205, %v351
  %v353 = vlaneseq
  %v354 = vshrl.u32 %v353, 7
  %v355 = vsub.s32 3, %v354
  %v356 = vrot.slane %v205, %v355
  %v357 = vlaneseq
  %v358 = vshrl.u32 %v357, 7
  %v359 = vsub.s32 4, %v358
  %v360 = vrot.slane %v205, %v359
  %v361 = vlaneseq
  %v362 = vshrl.u32 %v361, 7
  %v363 = vsub.s32 5, %v362
  %v364 = vrot.slane %v205, %v363
  %v365 = vlaneseq
  %v366 = vshrl.u32 %v365, 7
  %v367 = vsub.s32 6, %v366
  %v368 = vrot.slane %v205, %v367
  %v369 = vlaneseq
  %v370 = vshrl.u32 %v369, 7
  %v371 = vsub.s32 7, %v370
  %v372 = vrot.slane %v205, %v371
  %v373 = vlaneseq
  %v374 = vshrl.u32 %v373, 7
  %v375 = vsub.s32 0, %v374
  %v376 = vrot.slane %v206, %v375
  %v377 = vlaneseq
  %v378 = vshrl.u32 %v377, 7
  %v379 = vsub.s32 1, %v378
  %v380 = vrot.slane %v206, %v379
  %v381 = vlaneseq
  %v382 = vshrl.u32 %v381, 7
  %v383 = vsub.s32 2, %v382
  %v384 = vrot.slane %v206, %v383
  %v385 = vlaneseq
  %v386 = vshrl.u32 %v385, 7
  %v387 = vsub.s32 3, %v386
  %v388 = vrot.slane %v206, %v387
  %v413 = vunpack.c.l.b16 %v193
  %v414 = vunpack.c.h.b16 %v193
  %v415 = vunpack.c.l.b16 %v194
  %v416 = vunpack.c.h.b16 %v194
  %v417 = vunpack.c.l.b16 %v195
  %v418 = vunpack.c.h.b16 %v195
  %v419 = vunpack.c.l.b16 %v196
  %v420 = vunpack.c.h.b16 %v196
  %v421 = vunpack.c.l.b16 %v197
  %v422 = vunpack.c.h.b16 %v197
  %v423 = vunpack.c.l.b16 %v198
  %v424 = vunpack.c.h.b16 %v198
  %v425 = vunpack.c.l.b16 %v199
  %v426 = vunpack.c.h.b16 %v199
  %v427 = vunpack.c.l.b16 %v200
  %v428 = vunpack.c.h.b16 %v200
  %v429 = vunpack.c.l.b16 %v201
  %v430 = vunpack.c.h.b16 %v201
  %v431 = vunpack.c.l.b16 %v202
  %v432 = vunpack.c.h.b16 %v202
  %v433 = vunpack.c.l.b16 %v203
  %v434 = vunpack.c.h.b16 %v203
  %v435 = vunpack.c.l.b16 %v204
  %v436 = vunpack.c.h.b16 %v204
  %v437 = vpack.c.b16 %v425, %v413
  %v438 = vpack.c.b16 %v426, %v414
  %v439 = vpack.c.b16 %v427, %v415
  %v440 = vpack.c.b16 %v428, %v416
  %v441 = vpack.c.b16 %v429, %v417
  %v442 = vpack.c.b16 %v430, %v418
  %v443 = vpack.c.b16 %v431, %v419
  %v444 = vpack.c.b16 %v432, %v420
  %v445 = vpack.c.b16 %v433, %v421
  %v446 = vpack.c.b16 %v434, %v422
  %v447 = vpack.c.b16 %v435, %v423
  %v448 = vpack.c.b16 %v436, %v424
  %461 = vmatprep.subr.bf16.mxu0 %v438
  %462 = vmatpush1.bf16.msra.mxu0 %v437
  %463 = vmatprep.subr.bf16.mxu0 0
  %464 = vmatpush1.bf16.msra.mxu0 0
  %465 = vmatprep.subr.bf16.mxu0 0
  %466 = vmatpush1.bf16.msra.mxu0 0
  %467 = vmatprep.subr.bf16.mxu0 0
  %468 = vmatpush1.bf16.msra.mxu0 0
  %469 = vmatprep.subr.bf16.mxu0 0
  %470 = vmatpush1.bf16.msra.mxu0 0
  %471 = vmatprep.subr.bf16.mxu0 0
  %472 = vmatpush1.bf16.msra.mxu0 0
  %473 = vmatprep.subr.bf16.mxu0 0
  %474 = vmatpush1.bf16.msra.mxu0 0
  %475 = vmatprep.subr.bf16.mxu0 0
  %476 = vmatpush1.bf16.msra.mxu0 0
  %477 = vmatprep.subr.bf16.mxu0 0
  %478 = vmatpush1.bf16.msra.mxu0 0
  %479 = vmatprep.subr.bf16.mxu0 0
  %480 = vmatpush1.bf16.msra.mxu0 0
  %481 = vmatprep.subr.bf16.mxu0 0
  %482 = vmatpush1.bf16.msra.mxu0 0
  %483 = vmatprep.subr.bf16.mxu0 0
  %484 = vmatpush1.bf16.msra.mxu0 0
  %485 = vmatprep.subr.bf16.mxu0 0
  %486 = vmatpush1.bf16.msra.mxu0 0
  %487 = vmatprep.subr.bf16.mxu0 0
  %488 = vmatpush1.bf16.msra.mxu0 0
  %489 = vmatprep.subr.bf16.mxu0 0
  %490 = vmatpush1.bf16.msra.mxu0 0
  %491 = vmatprep.subr.bf16.mxu0 0
  %492 = vmatpush1.bf16.msra.mxu0 0
  %493 = vmatprep.mubr.bf16.mxu0 0
  %494 = vmatmul.mubr.bf16.gmra.mrb[0].mxu0 %v285
  %v495 = vpop.f32.mrb[0].mxu0
  %v496 = vadd.f32 %v344, %v495
  %v497 = vpop.f32.mrb[0].mxu0
  %v498 = vadd.f32 %v348, %v497
  %v499 = vpop.f32.mrb[0].mxu0
  %v500 = vpop.f32.mrb[0].mxu0
  %501 = vdwg.mxu0
  %502 = vmatprep.subr.bf16.mxu0 %v440
  %503 = vmatpush1.bf16.msra.mxu0 %v439
  %504 = vmatprep.subr.bf16.mxu0 0
  %505 = vmatpush1.bf16.msra.mxu0 0
  %506 = vmatprep.subr.bf16.mxu0 0
  %507 = vmatpush1.bf16.msra.mxu0 0
  %508 = vmatprep.subr.bf16.mxu0 0
  %509 = vmatpush1.bf16.msra.mxu0 0
  %510 = vmatprep.subr.bf16.mxu0 0
  %511 = vmatpush1.bf16.msra.mxu0 0
  %512 = vmatprep.subr.bf16.mxu0 0
  %513 = vmatpush1.bf16.msra.mxu0 0
  %514 = vmatprep.subr.bf16.mxu0 0
  %515 = vmatpush1.bf16.msra.mxu0 0
  %516 = vmatprep.subr.bf16.mxu0 0
  %517 = vmatpush1.bf16.msra.mxu0 0
  %518 = vmatprep.subr.bf16.mxu0 0
  %519 = vmatpush1.bf16.msra.mxu0 0
  %520 = vmatprep.subr.bf16.mxu0 0
  %521 = vmatpush1.bf16.msra.mxu0 0
  %522 = vmatprep.subr.bf16.mxu0 0
  %523 = vmatpush1.bf16.msra.mxu0 0
  %524 = vmatprep.subr.bf16.mxu0 0
  %525 = vmatpush1.bf16.msra.mxu0 0
  %526 = vmatprep.subr.bf16.mxu0 0
  %527 = vmatpush1.bf16.msra.mxu0 0
  %528 = vmatprep.subr.bf16.mxu0 0
  %529 = vmatpush1.bf16.msra.mxu0 0
  %530 = vmatprep.subr.bf16.mxu0 0
  %531 = vmatpush1.bf16.msra.mxu0 0
  %532 = vmatprep.subr.bf16.mxu0 0
  %533 = vmatpush1.bf16.msra.mxu0 0
  %534 = vmatprep.mubr.bf16.mxu0 0
  %535 = vmatmul.mubr.bf16.gmra.mrb[0].mxu0 %v285
  %v536 = vpop.f32.mrb[0].mxu0
  %v537 = vadd.f32 %v352, %v536
  %v538 = vpop.f32.mrb[0].mxu0
  %v539 = vadd.f32 %v356, %v538
  %v540 = vpop.f32.mrb[0].mxu0
  %v541 = vpop.f32.mrb[0].mxu0
  %542 = vdwg.mxu0
  %543 = vmatprep.subr.bf16.mxu0 %v442
  %544 = vmatpush1.bf16.msra.mxu0 %v441
  %545 = vmatprep.subr.bf16.mxu0 0
  %546 = vmatpush1.bf16.msra.mxu0 0
  %547 = vmatprep.subr.bf16.mxu0 0
  %548 = vmatpush1.bf16.msra.mxu0 0
  %549 = vmatprep.subr.bf16.mxu0 0
  %550 = vmatpush1.bf16.msra.mxu0 0
  %551 = vmatprep.subr.bf16.mxu0 0
  %552 = vmatpush1.bf16.msra.mxu0 0
  %553 = vmatprep.subr.bf16.mxu0 0
  %554 = vmatpush1.bf16.msra.mxu0 0
  %555 = vmatprep.subr.bf16.mxu0 0
  %556 = vmatpush1.bf16.msra.mxu0 0
  %557 = vmatprep.subr.bf16.mxu0 0
  %558 = vmatpush1.bf16.msra.mxu0 0
  %559 = vmatprep.subr.bf16.mxu0 0
  %560 = vmatpush1.bf16.msra.mxu0 0
  %561 = vmatprep.subr.bf16.mxu0 0
  %562 = vmatpush1.bf16.msra.mxu0 0
  %563 = vmatprep.subr.bf16.mxu0 0
  %564 = vmatpush1.bf16.msra.mxu0 0
  %565 = vmatprep.subr.bf16.mxu0 0
  %566 = vmatpush1.bf16.msra.mxu0 0
  %567 = vmatprep.subr.bf16.mxu0 0
  %568 = vmatpush1.bf16.msra.mxu0 0
  %569 = vmatprep.subr.bf16.mxu0 0
  %570 = vmatpush1.bf16.msra.mxu0 0
  %571 = vmatprep.subr.bf16.mxu0 0
  %572 = vmatpush1.bf16.msra.mxu0 0
  %573 = vmatprep.subr.bf16.mxu0 0
  %574 = vmatpush1.bf16.msra.mxu0 0
  %575 = vmatprep.mubr.bf16.mxu0 0
  %576 = vmatmul.mubr.bf16.gmra.mrb[0].mxu0 %v285
  %v577 = vpop.f32.mrb[0].mxu0
  %v578 = vadd.f32 %v360, %v577
  %v579 = vpop.f32.mrb[0].mxu0
  %v580 = vadd.f32 %v364, %v579
  %v581 = vpop.f32.mrb[0].mxu0
  %v582 = vpop.f32.mrb[0].mxu0
  %583 = vdwg.mxu0
  %584 = vmatprep.subr.bf16.mxu0 %v444
  %585 = vmatpush1.bf16.msra.mxu0 %v443
  %586 = vmatprep.subr.bf16.mxu0 0
  %587 = vmatpush1.bf16.msra.mxu0 0
  %588 = vmatprep.subr.bf16.mxu0 0
  %589 = vmatpush1.bf16.msra.mxu0 0
  %590 = vmatprep.subr.bf16.mxu0 0
  %591 = vmatpush1.bf16.msra.mxu0 0
  %592 = vmatprep.subr.bf16.mxu0 0
  %593 = vmatpush1.bf16.msra.mxu0 0
  %594 = vmatprep.subr.bf16.mxu0 0
  %595 = vmatpush1.bf16.msra.mxu0 0
  %596 = vmatprep.subr.bf16.mxu0 0
  %597 = vmatpush1.bf16.msra.mxu0 0
  %598 = vmatprep.subr.bf16.mxu0 0
  %599 = vmatpush1.bf16.msra.mxu0 0
  %600 = vmatprep.subr.bf16.mxu0 0
  %601 = vmatpush1.bf16.msra.mxu0 0
  %602 = vmatprep.subr.bf16.mxu0 0
  %603 = vmatpush1.bf16.msra.mxu0 0
  %604 = vmatprep.subr.bf16.mxu0 0
  %605 = vmatpush1.bf16.msra.mxu0 0
  %606 = vmatprep.subr.bf16.mxu0 0
  %607 = vmatpush1.bf16.msra.mxu0 0
  %608 = vmatprep.subr.bf16.mxu0 0
  %609 = vmatpush1.bf16.msra.mxu0 0
  %610 = vmatprep.subr.bf16.mxu0 0
  %611 = vmatpush1.bf16.msra.mxu0 0
  %612 = vmatprep.subr.bf16.mxu0 0
  %613 = vmatpush1.bf16.msra.mxu0 0
  %614 = vmatprep.subr.bf16.mxu0 0
  %615 = vmatpush1.bf16.msra.mxu0 0
  %616 = vmatprep.mubr.bf16.mxu0 0
  %617 = vmatmul.mubr.bf16.gmra.mrb[0].mxu0 %v285
  %v618 = vpop.f32.mrb[0].mxu0
  %v619 = vadd.f32 %v368, %v618
  %v620 = vpop.f32.mrb[0].mxu0
  %v621 = vadd.f32 %v372, %v620
  %v622 = vpop.f32.mrb[0].mxu0
  %v623 = vpop.f32.mrb[0].mxu0
  %624 = vdwg.mxu0
  %625 = vmatprep.subr.bf16.mxu0 %v446
  %626 = vmatpush1.bf16.msra.mxu0 %v445
  %627 = vmatprep.subr.bf16.mxu0 0
  %628 = vmatpush1.bf16.msra.mxu0 0
  %629 = vmatprep.subr.bf16.mxu0 0
  %630 = vmatpush1.bf16.msra.mxu0 0
  %631 = vmatprep.subr.bf16.mxu0 0
  %632 = vmatpush1.bf16.msra.mxu0 0
  %633 = vmatprep.subr.bf16.mxu0 0
  %634 = vmatpush1.bf16.msra.mxu0 0
  %635 = vmatprep.subr.bf16.mxu0 0
  %636 = vmatpush1.bf16.msra.mxu0 0
  %637 = vmatprep.subr.bf16.mxu0 0
  %638 = vmatpush1.bf16.msra.mxu0 0
  %639 = vmatprep.subr.bf16.mxu0 0
  %640 = vmatpush1.bf16.msra.mxu0 0
  %641 = vmatprep.subr.bf16.mxu0 0
  %642 = vmatpush1.bf16.msra.mxu0 0
  %643 = vmatprep.subr.bf16.mxu0 0
  %644 = vmatpush1.bf16.msra.mxu0 0
  %645 = vmatprep.subr.bf16.mxu0 0
  %646 = vmatpush1.bf16.msra.mxu0 0
  %647 = vmatprep.subr.bf16.mxu0 0
  %648 = vmatpush1.bf16.msra.mxu0 0
  %649 = vmatprep.subr.bf16.mxu0 0
  %650 = vmatpush1.bf16.msra.mxu0 0
  %651 = vmatprep.subr.bf16.mxu0 0
  %652 = vmatpush1.bf16.msra.mxu0 0
  %653 = vmatprep.subr.bf16.mxu0 0
  %654 = vmatpush1.bf16.msra.mxu0 0
  %655 = vmatprep.subr.bf16.mxu0 0
  %656 = vmatpush1.bf16.msra.mxu0 0
  %657 = vmatprep.mubr.bf16.mxu0 0
  %658 = vmatmul.mubr.bf16.gmra.mrb[0].mxu0 %v285
  %v659 = vpop.f32.mrb[0].mxu0
  %v660 = vadd.f32 %v376, %v659
  %v661 = vpop.f32.mrb[0].mxu0
  %v662 = vadd.f32 %v380, %v661
  %v663 = vpop.f32.mrb[0].mxu0
  %v664 = vpop.f32.mrb[0].mxu0
  %665 = vdwg.mxu0
  %666 = vmatprep.subr.bf16.mxu0 %v448
  %667 = vmatpush1.bf16.msra.mxu0 %v447
  %668 = vmatprep.subr.bf16.mxu0 0
  %669 = vmatpush1.bf16.msra.mxu0 0
  %670 = vmatprep.subr.bf16.mxu0 0
  %671 = vmatpush1.bf16.msra.mxu0 0
  %672 = vmatprep.subr.bf16.mxu0 0
  %673 = vmatpush1.bf16.msra.mxu0 0
  %674 = vmatprep.subr.bf16.mxu0 0
  %675 = vmatpush1.bf16.msra.mxu0 0
  %676 = vmatprep.subr.bf16.mxu0 0
  %677 = vmatpush1.bf16.msra.mxu0 0
  %678 = vmatprep.subr.bf16.mxu0 0
  %679 = vmatpush1.bf16.msra.mxu0 0
  %680 = vmatprep.subr.bf16.mxu0 0
  %681 = vmatpush1.bf16.msra.mxu0 0
  %682 = vmatprep.subr.bf16.mxu0 0
  %683 = vmatpush1.bf16.msra.mxu0 0
  %684 = vmatprep.subr.bf16.mxu0 0
  %685 = vmatpush1.bf16.msra.mxu0 0
  %686 = vmatprep.subr.bf16.mxu0 0
  %687 = vmatpush1.bf16.msra.mxu0 0
  %688 = vmatprep.subr.bf16.mxu0 0
  %689 = vmatpush1.bf16.msra.mxu0 0
  %690 = vmatprep.subr.bf16.mxu0 0
  %691 = vmatpush1.bf16.msra.mxu0 0
  %692 = vmatprep.subr.bf16.mxu0 0
  %693 = vmatpush1.bf16.msra.mxu0 0
  %694 = vmatprep.subr.bf16.mxu0 0
  %695 = vmatpush1.bf16.msra.mxu0 0
  %696 = vmatprep.subr.bf16.mxu0 0
  %697 = vmatpush1.bf16.msra.mxu0 0
  %698 = vmatprep.mubr.bf16.mxu0 0
  %699 = vmatmul.mubr.bf16.gmra.mrb[0].mxu0 %v285
  %v700 = vpop.f32.mrb[0].mxu0
  %v701 = vadd.f32 %v384, %v700
  %v702 = vpop.f32.mrb[0].mxu0
  %v703 = vadd.f32 %v388, %v702
  %v704 = vpop.f32.mrb[0].mxu0
  %v705 = vpop.f32.mrb[0].mxu0
  %706 = vdwg.mxu0
  %708 = vset.pattern.permute.xlu0 0
  %709 = vperm.xlu0 %708, %v338
  %v710 = vpop.permute.xlu0 %709
  %v712 = vmul.f32 %v710, %v496
  %v713 = vmul.f32 %v710, %v498
  %v714 = vmul.f32 %v710, %v537
  %v715 = vmul.f32 %v710, %v539
  %716 = vset.pattern.permute.xlu0 1
  %717 = vperm.xlu0 %716, %v338
  %v718 = vpop.permute.xlu0 %717
  %v720 = vmul.f32 %v718, %v578
  %v721 = vmul.f32 %v718, %v580
  %v722 = vmul.f32 %v718, %v619
  %v723 = vmul.f32 %v718, %v621
  %v724 = vadd.f32 %v712, %v720
  %v725 = vadd.f32 %v713, %v721
  %v726 = vadd.f32 %v714, %v722
  %v727 = vadd.f32 %v715, %v723
  %728 = vset.pattern.permute.xlu0 2
  %729 = vperm.xlu0 %728, %v338
  %v730 = vpop.permute.xlu0 %729
  %v732 = vmul.f32 %v730, %v660
  %v733 = vmul.f32 %v730, %v662
  %v734 = vmul.f32 %v730, %v701
  %v735 = vmul.f32 %v730, %v703
  %v736 = vadd.f32 %v724, %v732
  %v737 = vadd.f32 %v725, %v733
  %v738 = vadd.f32 %v726, %v734
  %v739 = vadd.f32 %v727, %v735
  %v740 = vmin.f32 %v736, 0.0
  %v741 = vmin.f32 %v737, 0.0
  %v742 = vmin.f32 %v738, 0.0
  %v743 = vmin.f32 %v739, 0.0
  %v744 = vmul.f32 %v740, 1.442695
  %v745 = vpow.pop %v744
  %v746 = vmul.f32 %v741, 1.442695
  %v747 = vpow.pop %v746
  %v748 = vmul.f32 %v742, 1.442695
  %v749 = vpow.pop %v748
  %v750 = vmul.f32 %v743, 1.442695
  %v751 = vpow.pop %v750
  %v752 = vsub.f32 %v745, 1.0
  %v753 = vsub.f32 %v747, 1.0
  %v754 = vsub.f32 %v749, 1.0
  %v755 = vsub.f32 %v751, 1.0
  %v756 = vmul.f32 %v752, 1.6732632
  %v757 = vmul.f32 %v753, 1.6732632
  %v758 = vmul.f32 %v754, 1.6732632
  %v759 = vmul.f32 %v755, 1.6732632
  %vm760 = vcmp.gt.f32.partialorder %v736, 0.0
  %vm761 = vcmp.gt.f32.partialorder %v737, 0.0
  %vm762 = vcmp.gt.f32.partialorder %v738, 0.0
  %vm763 = vcmp.gt.f32.partialorder %v739, 0.0
  %v764 = vsel %vm760, %v736, %v756
  %v765 = vsel %vm761, %v737, %v757
  %v766 = vsel %vm762, %v738, %v758
  %v767 = vsel %vm763, %v739, %v759
  %v768 = vmul.f32 %v764, 1.050701
  %v769 = vmul.f32 %v765, 1.050701
  %v770 = vmul.f32 %v766, 1.050701
  %v771 = vmul.f32 %v767, 1.050701
  %v772 = vld [vmem:[%s19] sm:$0x1]
  %v773 = vld [vmem:[%s19 + $0x1] sm:$0x1]
  %v774 = vld [vmem:[%s19 + $0x2] sm:$0x1]
  %v775 = vld [vmem:[%s19 + $0x3] sm:$0x1]
  %v776 = vld [vmem:[%s19 + $0x4] sm:$0x1]
  %v777 = vld [vmem:[%s19 + $0x5] sm:$0x1]
  %v778 = vld [vmem:[%s19 + $0x6] sm:$0x1]
  %v779 = vld [vmem:[%s19 + $0x7] sm:$0x1]
  %v780 = vld [vmem:[%s19 + $0x8] sm:$0x1]
  %v781 = vld [vmem:[%s1] sm:$0xff]
  %v782 = vld [vmem:[%s1 + $0x8] sm:$0xff]
  %v783 = vld [vmem:[%s21] sm:$0xf]
  %v784 = vld [vmem:[%s21 + $0x4] sm:$0xf]
  %v785 = vld [vmem:[%s21 + $0x8] sm:$0xf]
  %v786 = vld [vmem:[%s21 + $0xc] sm:$0xf]
  %v787 = vld [vmem:[%s21 + $0x10] sm:$0xf]
  %v788 = vld [vmem:[%s21 + $0x14] sm:$0xf]
  %v789 = vld [vmem:[%s21 + $0x18] sm:$0xf]
  %v790 = vld [vmem:[%s21 + $0x1c] sm:$0xf]
  %v791 = vld [vmem:[%s21 + $0x20] sm:$0xf]
  %v792 = vld [vmem:[%s21 + $0x24] sm:$0xf]
  %v793 = vld [vmem:[%s21 + $0x28] sm:$0xf]
  %v794 = vld [vmem:[%s21 + $0x2c] sm:$0xf]
  %v795 = vld [vmem:[%s21 + $0x30] sm:$0xf]
  %v796 = vld [vmem:[%s21 + $0x34] sm:$0xf]
  %v797 = vld [vmem:[%s21 + $0x38] sm:$0xf]
  %v798 = vld [vmem:[%s21 + $0x3c] sm:$0xf]
  %v799 = vld [vmem:[%s21 + $0x40] sm:$0xf]
  %v800 = vld [vmem:[%s21 + $0x44] sm:$0xf]
  %v801 = vld [vmem:[%s21 + $0x48] sm:$0xf]
  %v802 = vld [vmem:[%s21 + $0x4c] sm:$0xf]
  %v803 = vld [vmem:[%s21 + $0x50] sm:$0xf]
  %v804 = vld [vmem:[%s21 + $0x54] sm:$0xf]
  %v805 = vld [vmem:[%s21 + $0x58] sm:$0xf]
  %v806 = vld [vmem:[%s21 + $0x5c] sm:$0xf]
  %v807 = vld [vmem:[%s21 + $0x60] sm:$0xf]
  %v808 = vld [vmem:[%s21 + $0x64] sm:$0xf]
  %v809 = vld [vmem:[%s21 + $0x68] sm:$0xf]
  %v810 = vld [vmem:[%s21 + $0x6c] sm:$0xf]
  %v811 = vld [vmem:[%s21 + $0x70] sm:$0xf]
  %v812 = vld [vmem:[%s21 + $0x74] sm:$0xf]
  %v813 = vld [vmem:[%s21 + $0x78] sm:$0xf]
  %v814 = vld [vmem:[%s21 + $0x7c] sm:$0xf]
  %v815 = vld [vmem:[%s21 + $0x80] sm:$0xf]
  %v816 = vld [vmem:[%s21 + $0x84] sm:$0xf]
  %v817 = vld [vmem:[%s21 + $0x88] sm:$0xf]
  %v818 = vld [vmem:[%s21 + $0x8c] sm:$0xf]
  %v819 = vld [vmem:[%s21 + $0x90] sm:$0xf]
  %v820 = vld [vmem:[%s21 + $0x94] sm:$0xf]
  %v821 = vld [vmem:[%s21 + $0x98] sm:$0xf]
  %v822 = vld [vmem:[%s21 + $0x9c] sm:$0xf]
  %v823 = vld [vmem:[%s21 + $0xa0] sm:$0xf]
  %v824 = vld [vmem:[%s21 + $0xa4] sm:$0xf]
  %v825 = vld [vmem:[%s21 + $0xa8] sm:$0xf]
  %v826 = vld [vmem:[%s21 + $0xac] sm:$0xf]
  %v827 = vld [vmem:[%s21 + $0xb0] sm:$0xf]
  %v828 = vld [vmem:[%s21 + $0xb4] sm:$0xf]
  %v829 = vld [vmem:[%s21 + $0xb8] sm:$0xf]
  %v830 = vld [vmem:[%s21 + $0xbc] sm:$0xf]
  %v831 = vld [vmem:[%s21 + $0xc0] sm:$0xf]
  %v832 = vld [vmem:[%s21 + $0xc4] sm:$0xf]
  %v833 = vld [vmem:[%s21 + $0xc8] sm:$0xf]
  %v834 = vld [vmem:[%s21 + $0xcc] sm:$0xf]
  %v835 = vld [vmem:[%s21 + $0xd0] sm:$0xf]
  %v836 = vld [vmem:[%s21 + $0xd4] sm:$0xf]
  %v837 = vld [vmem:[%s21 + $0xd8] sm:$0xf]
  %v838 = vld [vmem:[%s21 + $0xdc] sm:$0xf]
  %v839 = vld [vmem:[%s21 + $0xe0] sm:$0xf]
  %v840 = vld [vmem:[%s21 + $0xe4] sm:$0xf]
  %v841 = vld [vmem:[%s21 + $0xe8] sm:$0xf]
  %v842 = vld [vmem:[%s21 + $0xec] sm:$0xf]
  %v843 = vld [vmem:[%s21 + $0xf0] sm:$0xf]
  %v844 = vld [vmem:[%s21 + $0xf4] sm:$0xf]
  %v845 = vld [vmem:[%s21 + $0xf8] sm:$0xf]
  %v846 = vld [vmem:[%s21 + $0xfc] sm:$0xf]
  %v847 = vld [vmem:[%s21 + $0x100] sm:$0xf]
  %v848 = vld [vmem:[%s21 + $0x104] sm:$0xf]
  %v849 = vld [vmem:[%s21 + $0x108] sm:$0xf]
  %v850 = vld [vmem:[%s21 + $0x10c] sm:$0xf]
  %v851 = vld [vmem:[%s21 + $0x110] sm:$0xf]
  %v852 = vld [vmem:[%s21 + $0x114] sm:$0xf]
  %v853 = vld [vmem:[%s21 + $0x118] sm:$0xf]
  %v854 = vld [vmem:[%s21 + $0x11c] sm:$0xf]
  %v855 = vpack.c.bf16 %v782, %v781
  %v928 = vunpack.c.l.b16 %v783
  %v929 = vunpack.c.l.b16 %v784
  %v930 = vunpack.c.l.b16 %v785
  %v931 = vunpack.c.l.b16 %v786
  %v932 = vunpack.c.l.b16 %v787
  %v933 = vunpack.c.l.b16 %v788
  %v934 = vunpack.c.l.b16 %v789
  %v935 = vunpack.c.l.b16 %v790
  %v936 = vunpack.c.l.b16 %v791
  %v937 = vunpack.c.l.b16 %v792
  %v938 = vunpack.c.l.b16 %v793
  %v939 = vunpack.c.l.b16 %v794
  %v940 = vunpack.c.l.b16 %v795
  %v941 = vunpack.c.l.b16 %v796
  %v942 = vunpack.c.l.b16 %v797
  %v943 = vunpack.c.l.b16 %v798
  %v944 = vunpack.c.l.b16 %v799
  %v945 = vunpack.c.l.b16 %v800
  %v946 = vunpack.c.l.b16 %v801
  %v947 = vunpack.c.l.b16 %v802
  %v948 = vunpack.c.l.b16 %v803
  %v949 = vunpack.c.l.b16 %v804
  %v950 = vunpack.c.l.b16 %v805
  %v951 = vunpack.c.l.b16 %v806
  %v952 = vunpack.c.l.b16 %v807
  %v953 = vunpack.c.l.b16 %v808
  %v954 = vunpack.c.l.b16 %v809
  %v955 = vunpack.c.l.b16 %v810
  %v956 = vunpack.c.l.b16 %v811
  %v957 = vunpack.c.l.b16 %v812
  %v958 = vunpack.c.l.b16 %v813
  %v959 = vunpack.c.l.b16 %v814
  %v960 = vunpack.c.l.b16 %v815
  %v961 = vunpack.c.l.b16 %v816
  %v962 = vunpack.c.l.b16 %v817
  %v963 = vunpack.c.l.b16 %v818
  %v964 = vunpack.c.l.b16 %v819
  %v965 = vunpack.c.l.b16 %v820
  %v966 = vunpack.c.l.b16 %v821
  %v967 = vunpack.c.l.b16 %v822
  %v968 = vunpack.c.l.b16 %v823
  %v969 = vunpack.c.l.b16 %v824
  %v970 = vunpack.c.l.b16 %v825
  %v971 = vunpack.c.l.b16 %v826
  %v972 = vunpack.c.l.b16 %v827
  %v973 = vunpack.c.l.b16 %v828
  %v974 = vunpack.c.l.b16 %v829
  %v975 = vunpack.c.l.b16 %v830
  %v976 = vunpack.c.l.b16 %v831
  %v977 = vunpack.c.l.b16 %v832
  %v978 = vunpack.c.l.b16 %v833
  %v979 = vunpack.c.l.b16 %v834
  %v980 = vunpack.c.l.b16 %v835
  %v981 = vunpack.c.l.b16 %v836
  %v982 = vunpack.c.l.b16 %v837
  %v983 = vunpack.c.l.b16 %v838
  %v984 = vunpack.c.l.b16 %v839
  %v985 = vunpack.c.l.b16 %v840
  %v986 = vunpack.c.l.b16 %v841
  %v987 = vunpack.c.l.b16 %v842
  %v988 = vunpack.c.l.b16 %v843
  %v989 = vunpack.c.l.b16 %v844
  %v990 = vunpack.c.l.b16 %v845
  %v991 = vunpack.c.l.b16 %v846
  %v992 = vunpack.c.l.b16 %v847
  %v993 = vunpack.c.l.b16 %v848
  %v994 = vunpack.c.l.b16 %v849
  %v995 = vunpack.c.l.b16 %v850
  %v996 = vunpack.c.l.b16 %v851
  %v997 = vunpack.c.l.b16 %v852
  %v998 = vunpack.c.l.b16 %v853
  %v999 = vunpack.c.l.b16 %v854
  %v1000 = vpack.c.b16 %v929, %v928
  %v1001 = vpack.c.b16 %v931, %v930
  %v1002 = vpack.c.b16 %v933, %v932
  %v1003 = vpack.c.b16 %v935, %v934
  %v1004 = vpack.c.b16 %v937, %v936
  %v1005 = vpack.c.b16 %v939, %v938
  %v1006 = vpack.c.b16 %v941, %v940
  %v1007 = vpack.c.b16 %v943, %v942
  %v1008 = vpack.c.b16 %v945, %v944
  %v1009 = vpack.c.b16 %v947, %v946
  %v1010 = vpack.c.b16 %v949, %v948
  %v1011 = vpack.c.b16 %v951, %v950
  %v1012 = vpack.c.b16 %v953, %v952
  %v1013 = vpack.c.b16 %v955, %v954
  %v1014 = vpack.c.b16 %v957, %v956
  %v1015 = vpack.c.b16 %v959, %v958
  %v1016 = vpack.c.b16 %v961, %v960
  %v1017 = vpack.c.b16 %v963, %v962
  %v1018 = vpack.c.b16 %v965, %v964
  %v1019 = vpack.c.b16 %v967, %v966
  %v1020 = vpack.c.b16 %v969, %v968
  %v1021 = vpack.c.b16 %v971, %v970
  %v1022 = vpack.c.b16 %v973, %v972
  %v1023 = vpack.c.b16 %v975, %v974
  %v1024 = vpack.c.b16 %v977, %v976
  %v1025 = vpack.c.b16 %v979, %v978
  %v1026 = vpack.c.b16 %v981, %v980
  %v1027 = vpack.c.b16 %v983, %v982
  %v1028 = vpack.c.b16 %v985, %v984
  %v1029 = vpack.c.b16 %v987, %v986
  %v1030 = vpack.c.b16 %v989, %v988
  %v1031 = vpack.c.b16 %v991, %v990
  %v1032 = vpack.c.b16 %v993, %v992
  %v1033 = vpack.c.b16 %v995, %v994
  %v1034 = vpack.c.b16 %v997, %v996
  %v1035 = vpack.c.b16 %v999, %v998
  %v1037 = vsel %vm283, %v1000, 0
  %v1040 = vsel %vm283, %v1001, 0
  %v1043 = vsel %vm283, %v1002, 0
  %v1046 = vsel %vm283, %v1003, 0
  %v1049 = vsel %vm283, %v1004, 0
  %v1052 = vsel %vm283, %v1005, 0
  %v1055 = vsel %vm283, %v1006, 0
  %v1058 = vsel %vm283, %v1007, 0
  %v1061 = vsel %vm283, %v1008, 0
  %v1064 = vsel %vm283, %v1009, 0
  %v1067 = vsel %vm283, %v1010, 0
  %v1070 = vsel %vm283, %v1011, 0
  %v1073 = vsel %vm283, %v1012, 0
  %v1076 = vsel %vm283, %v1013, 0
  %v1079 = vsel %vm283, %v1014, 0
  %v1082 = vsel %vm283, %v1015, 0
  %v1085 = vsel %vm283, %v1016, 0
  %v1088 = vsel %vm283, %v1017, 0
  %v1091 = vsel %vm283, %v1018, 0
  %v1094 = vsel %vm283, %v1019, 0
  %v1097 = vsel %vm283, %v1020, 0
  %v1100 = vsel %vm283, %v1021, 0
  %v1103 = vsel %vm283, %v1022, 0
  %v1106 = vsel %vm283, %v1023, 0
  %v1109 = vsel %vm283, %v1024, 0
  %v1112 = vsel %vm283, %v1025, 0
  %v1115 = vsel %vm283, %v1026, 0
  %v1118 = vsel %vm283, %v1027, 0
  %v1121 = vsel %vm283, %v1028, 0
  %v1124 = vsel %vm283, %v1029, 0
  %v1127 = vsel %vm283, %v1030, 0
  %v1130 = vsel %vm283, %v1031, 0
  %v1133 = vsel %vm283, %v1032, 0
  %v1136 = vsel %vm283, %v1033, 0
  %v1139 = vsel %vm283, %v1034, 0
  %v1142 = vsel %vm283, %v1035, 0
  %1144 = vmatprep.subr.bf16.mxu0 0
  %1145 = vmatpush1.bf16.msra.mxu0 %v855
  %1146 = vmatprep.subr.bf16.mxu0 0
  %1147 = vmatpush1.bf16.msra.mxu0 0
  %1148 = vmatprep.subr.bf16.mxu0 0
  %1149 = vmatpush1.bf16.msra.mxu0 0
  %1150 = vmatprep.subr.bf16.mxu0 0
  %1151 = vmatpush1.bf16.msra.mxu0 0
  %1152 = vmatprep.subr.bf16.mxu0 0
  %1153 = vmatpush1.bf16.msra.mxu0 0
  %1154 = vmatprep.subr.bf16.mxu0 0
  %1155 = vmatpush1.bf16.msra.mxu0 0
  %1156 = vmatprep.subr.bf16.mxu0 0
  %1157 = vmatpush1.bf16.msra.mxu0 0
  %1158 = vmatprep.subr.bf16.mxu0 0
  %1159 = vmatpush1.bf16.msra.mxu0 0
  %1160 = vmatprep.subr.bf16.mxu0 0
  %1161 = vmatpush1.bf16.msra.mxu0 0
  %1162 = vmatprep.subr.bf16.mxu0 0
  %1163 = vmatpush1.bf16.msra.mxu0 0
  %1164 = vmatprep.subr.bf16.mxu0 0
  %1165 = vmatpush1.bf16.msra.mxu0 0
  %1166 = vmatprep.subr.bf16.mxu0 0
  %1167 = vmatpush1.bf16.msra.mxu0 0
  %1168 = vmatprep.subr.bf16.mxu0 0
  %1169 = vmatpush1.bf16.msra.mxu0 0
  %1170 = vmatprep.subr.bf16.mxu0 0
  %1171 = vmatpush1.bf16.msra.mxu0 0
  %1172 = vmatprep.subr.bf16.mxu0 0
  %1173 = vmatpush1.bf16.msra.mxu0 0
  %1174 = vmatprep.subr.bf16.mxu0 0
  %1175 = vmatpush1.bf16.msra.mxu0 0
  %1176 = vmatprep.mubr.bf16.mxu0 0
  %1177 = vmatmul.mubr.bf16.gmra.mrb[0].mxu0 %v1037
  %v1178 = vpop.f32.mrb[0].mxu0
  %v1179 = vadd.f32 0.0, %v1178
  %v1180 = vpop.f32.mrb[0].mxu0
  %v1181 = vpop.f32.mrb[0].mxu0
  %v1182 = vadd.f32 0.0, %v1181
  %v1183 = vpop.f32.mrb[0].mxu0
  %1184 = vmatprep.mubr.bf16.mxu0 0
  %1185 = vmatmul.mubr.bf16.gmra.mrb[0].mxu0 %v1040
  %v1186 = vpop.f32.mrb[0].mxu0
  %v1187 = vadd.f32 0.0, %v1186
  %v1188 = vpop.f32.mrb[0].mxu0
  %v1189 = vpop.f32.mrb[0].mxu0
  %v1190 = vadd.f32 0.0, %v1189
  %v1191 = vpop.f32.mrb[0].mxu0
  %1192 = vmatprep.mubr.bf16.mxu0 0
  %1193 = vmatmul.mubr.bf16.gmra.mrb[0].mxu0 %v1043
  %v1194 = vpop.f32.mrb[0].mxu0
  %v1195 = vadd.f32 0.0, %v1194
  %v1196 = vpop.f32.mrb[0].mxu0
  %v1197 = vpop.f32.mrb[0].mxu0
  %v1198 = vadd.f32 0.0, %v1197
  %v1199 = vpop.f32.mrb[0].mxu0
  %1200 = vmatprep.mubr.bf16.mxu0 0
  %1201 = vmatmul.mubr.bf16.gmra.mrb[0].mxu0 %v1046
  %v1202 = vpop.f32.mrb[0].mxu0
  %v1203 = vadd.f32 0.0, %v1202
  %v1204 = vpop.f32.mrb[0].mxu0
  %v1205 = vpop.f32.mrb[0].mxu0
  %v1206 = vadd.f32 0.0, %v1205
  %v1207 = vpop.f32.mrb[0].mxu0
  %1208 = vmatprep.mubr.bf16.mxu0 0
  %1209 = vmatmul.mubr.bf16.gmra.mrb[0].mxu0 %v1049
  %v1210 = vpop.f32.mrb[0].mxu0
  %v1211 = vadd.f32 0.0, %v1210
  %v1212 = vpop.f32.mrb[0].mxu0
  %v1213 = vpop.f32.mrb[0].mxu0
  %v1214 = vadd.f32 0.0, %v1213
  %v1215 = vpop.f32.mrb[0].mxu0
  %1216 = vmatprep.mubr.bf16.mxu0 0
  %1217 = vmatmul.mubr.bf16.gmra.mrb[0].mxu0 %v1052
  %v1218 = vpop.f32.mrb[0].mxu0
  %v1219 = vadd.f32 0.0, %v1218
  %v1220 = vpop.f32.mrb[0].mxu0
  %v1221 = vpop.f32.mrb[0].mxu0
  %v1222 = vadd.f32 0.0, %v1221
  %v1223 = vpop.f32.mrb[0].mxu0
  %1224 = vmatprep.mubr.bf16.mxu0 0
  %1225 = vmatmul.mubr.bf16.gmra.mrb[0].mxu0 %v1055
  %v1226 = vpop.f32.mrb[0].mxu0
  %v1227 = vadd.f32 0.0, %v1226
  %v1228 = vpop.f32.mrb[0].mxu0
  %v1229 = vpop.f32.mrb[0].mxu0
  %v1230 = vadd.f32 0.0, %v1229
  %v1231 = vpop.f32.mrb[0].mxu0
  %1232 = vmatprep.mubr.bf16.mxu0 0
  %1233 = vmatmul.mubr.bf16.gmra.mrb[0].mxu0 %v1058
  %v1234 = vpop.f32.mrb[0].mxu0
  %v1235 = vadd.f32 0.0, %v1234
  %v1236 = vpop.f32.mrb[0].mxu0
  %v1237 = vpop.f32.mrb[0].mxu0
  %v1238 = vadd.f32 0.0, %v1237
  %v1239 = vpop.f32.mrb[0].mxu0
  %1240 = vmatprep.mubr.bf16.mxu0 0
  %1241 = vmatmul.mubr.bf16.gmra.mrb[0].mxu0 %v1061
  %v1242 = vpop.f32.mrb[0].mxu0
  %v1243 = vadd.f32 0.0, %v1242
  %v1244 = vpop.f32.mrb[0].mxu0
  %v1245 = vpop.f32.mrb[0].mxu0
  %v1246 = vadd.f32 0.0, %v1245
  %v1247 = vpop.f32.mrb[0].mxu0
  %1248 = vmatprep.mubr.bf16.mxu0 0
  %1249 = vmatmul.mubr.bf16.gmra.mrb[0].mxu0 %v1064
  %v1250 = vpop.f32.mrb[0].mxu0
  %v1251 = vadd.f32 0.0, %v1250
  %v1252 = vpop.f32.mrb[0].mxu0
  %v1253 = vpop.f32.mrb[0].mxu0
  %v1254 = vadd.f32 0.0, %v1253
  %v1255 = vpop.f32.mrb[0].mxu0
  %1256 = vmatprep.mubr.bf16.mxu0 0
  %1257 = vmatmul.mubr.bf16.gmra.mrb[0].mxu0 %v1067
  %v1258 = vpop.f32.mrb[0].mxu0
  %v1259 = vadd.f32 0.0, %v1258
  %v1260 = vpop.f32.mrb[0].mxu0
  %v1261 = vpop.f32.mrb[0].mxu0
  %v1262 = vadd.f32 0.0, %v1261
  %v1263 = vpop.f32.mrb[0].mxu0
  %1264 = vmatprep.mubr.bf16.mxu0 0
  %1265 = vmatmul.mubr.bf16.gmra.mrb[0].mxu0 %v1070
  %v1266 = vpop.f32.mrb[0].mxu0
  %v1267 = vadd.f32 0.0, %v1266
  %v1268 = vpop.f32.mrb[0].mxu0
  %v1269 = vpop.f32.mrb[0].mxu0
  %v1270 = vadd.f32 0.0, %v1269
  %v1271 = vpop.f32.mrb[0].mxu0
  %1272 = vmatprep.mubr.bf16.mxu0 0
  %1273 = vmatmul.mubr.bf16.gmra.mrb[0].mxu0 %v1073
  %v1274 = vpop.f32.mrb[0].mxu0
  %v1275 = vadd.f32 0.0, %v1274
  %v1276 = vpop.f32.mrb[0].mxu0
  %v1277 = vpop.f32.mrb[0].mxu0
  %v1278 = vadd.f32 0.0, %v1277
  %v1279 = vpop.f32.mrb[0].mxu0
  %1280 = vmatprep.mubr.bf16.mxu0 0
  %1281 = vmatmul.mubr.bf16.gmra.mrb[0].mxu0 %v1076
  %v1282 = vpop.f32.mrb[0].mxu0
  %v1283 = vadd.f32 0.0, %v1282
  %v1284 = vpop.f32.mrb[0].mxu0
  %v1285 = vpop.f32.mrb[0].mxu0
  %v1286 = vadd.f32 0.0, %v1285
  %v1287 = vpop.f32.mrb[0].mxu0
  %1288 = vmatprep.mubr.bf16.mxu0 0
  %1289 = vmatmul.mubr.bf16.gmra.mrb[0].mxu0 %v1079
  %v1290 = vpop.f32.mrb[0].mxu0
  %v1291 = vadd.f32 0.0, %v1290
  %v1292 = vpop.f32.mrb[0].mxu0
  %v1293 = vpop.f32.mrb[0].mxu0
  %v1294 = vadd.f32 0.0, %v1293
  %v1295 = vpop.f32.mrb[0].mxu0
  %1296 = vmatprep.mubr.bf16.mxu0 0
  %1297 = vmatmul.mubr.bf16.gmra.mrb[0].mxu0 %v1082
  %v1298 = vpop.f32.mrb[0].mxu0
  %v1299 = vadd.f32 0.0, %v1298
  %v1300 = vpop.f32.mrb[0].mxu0
  %v1301 = vpop.f32.mrb[0].mxu0
  %v1302 = vadd.f32 0.0, %v1301
  %v1303 = vpop.f32.mrb[0].mxu0
  %1304 = vmatprep.mubr.bf16.mxu0 0
  %1305 = vmatmul.mubr.bf16.gmra.mrb[0].mxu0 %v1085
  %v1306 = vpop.f32.mrb[0].mxu0
  %v1307 = vadd.f32 0.0, %v1306
  %v1308 = vpop.f32.mrb[0].mxu0
  %v1309 = vpop.f32.mrb[0].mxu0
  %v1310 = vadd.f32 0.0, %v1309
  %v1311 = vpop.f32.mrb[0].mxu0
  %1312 = vmatprep.mubr.bf16.mxu0 0
  %1313 = vmatmul.mubr.bf16.gmra.mrb[0].mxu0 %v1088
  %v1314 = vpop.f32.mrb[0].mxu0
  %v1315 = vadd.f32 0.0, %v1314
  %v1316 = vpop.f32.mrb[0].mxu0
  %v1317 = vpop.f32.mrb[0].mxu0
  %v1318 = vadd.f32 0.0, %v1317
  %v1319 = vpop.f32.mrb[0].mxu0
  %1320 = vmatprep.mubr.bf16.mxu0 0
  %1321 = vmatmul.mubr.bf16.gmra.mrb[0].mxu0 %v1091
  %v1322 = vpop.f32.mrb[0].mxu0
  %v1323 = vadd.f32 0.0, %v1322
  %v1324 = vpop.f32.mrb[0].mxu0
  %v1325 = vpop.f32.mrb[0].mxu0
  %v1326 = vadd.f32 0.0, %v1325
  %v1327 = vpop.f32.mrb[0].mxu0
  %1328 = vmatprep.mubr.bf16.mxu0 0
  %1329 = vmatmul.mubr.bf16.gmra.mrb[0].mxu0 %v1094
  %v1330 = vpop.f32.mrb[0].mxu0
  %v1331 = vadd.f32 0.0, %v1330
  %v1332 = vpop.f32.mrb[0].mxu0
  %v1333 = vpop.f32.mrb[0].mxu0
  %v1334 = vadd.f32 0.0, %v1333
  %v1335 = vpop.f32.mrb[0].mxu0
  %1336 = vmatprep.mubr.bf16.mxu0 0
  %1337 = vmatmul.mubr.bf16.gmra.mrb[0].mxu0 %v1097
  %v1338 = vpop.f32.mrb[0].mxu0
  %v1339 = vadd.f32 0.0, %v1338
  %v1340 = vpop.f32.mrb[0].mxu0
  %v1341 = vpop.f32.mrb[0].mxu0
  %v1342 = vadd.f32 0.0, %v1341
  %v1343 = vpop.f32.mrb[0].mxu0
  %1344 = vmatprep.mubr.bf16.mxu0 0
  %1345 = vmatmul.mubr.bf16.gmra.mrb[0].mxu0 %v1100
  %v1346 = vpop.f32.mrb[0].mxu0
  %v1347 = vadd.f32 0.0, %v1346
  %v1348 = vpop.f32.mrb[0].mxu0
  %v1349 = vpop.f32.mrb[0].mxu0
  %v1350 = vadd.f32 0.0, %v1349
  %v1351 = vpop.f32.mrb[0].mxu0
  %1352 = vmatprep.mubr.bf16.mxu0 0
  %1353 = vmatmul.mubr.bf16.gmra.mrb[0].mxu0 %v1103
  %v1354 = vpop.f32.mrb[0].mxu0
  %v1355 = vadd.f32 0.0, %v1354
  %v1356 = vpop.f32.mrb[0].mxu0
  %v1357 = vpop.f32.mrb[0].mxu0
  %v1358 = vadd.f32 0.0, %v1357
  %v1359 = vpop.f32.mrb[0].mxu0
  %1360 = vmatprep.mubr.bf16.mxu0 0
  %1361 = vmatmul.mubr.bf16.gmra.mrb[0].mxu0 %v1106
  %v1362 = vpop.f32.mrb[0].mxu0
  %v1363 = vadd.f32 0.0, %v1362
  %v1364 = vpop.f32.mrb[0].mxu0
  %v1365 = vpop.f32.mrb[0].mxu0
  %v1366 = vadd.f32 0.0, %v1365
  %v1367 = vpop.f32.mrb[0].mxu0
  %1368 = vmatprep.mubr.bf16.mxu0 0
  %1369 = vmatmul.mubr.bf16.gmra.mrb[0].mxu0 %v1109
  %v1370 = vpop.f32.mrb[0].mxu0
  %v1371 = vadd.f32 0.0, %v1370
  %v1372 = vpop.f32.mrb[0].mxu0
  %v1373 = vpop.f32.mrb[0].mxu0
  %v1374 = vadd.f32 0.0, %v1373
  %v1375 = vpop.f32.mrb[0].mxu0
  %1376 = vmatprep.mubr.bf16.mxu0 0
  %1377 = vmatmul.mubr.bf16.gmra.mrb[0].mxu0 %v1112
  %v1378 = vpop.f32.mrb[0].mxu0
  %v1379 = vadd.f32 0.0, %v1378
  %v1380 = vpop.f32.mrb[0].mxu0
  %v1381 = vpop.f32.mrb[0].mxu0
  %v1382 = vadd.f32 0.0, %v1381
  %v1383 = vpop.f32.mrb[0].mxu0
  %1384 = vmatprep.mubr.bf16.mxu0 0
  %1385 = vmatmul.mubr.bf16.gmra.mrb[0].mxu0 %v1115
  %v1386 = vpop.f32.mrb[0].mxu0
  %v1387 = vadd.f32 0.0, %v1386
  %v1388 = vpop.f32.mrb[0].mxu0
  %v1389 = vpop.f32.mrb[0].mxu0
  %v1390 = vadd.f32 0.0, %v1389
  %v1391 = vpop.f32.mrb[0].mxu0
  %1392 = vmatprep.mubr.bf16.mxu0 0
  %1393 = vmatmul.mubr.bf16.gmra.mrb[0].mxu0 %v1118
  %v1394 = vpop.f32.mrb[0].mxu0
  %v1395 = vadd.f32 0.0, %v1394
  %v1396 = vpop.f32.mrb[0].mxu0
  %v1397 = vpop.f32.mrb[0].mxu0
  %v1398 = vadd.f32 0.0, %v1397
  %v1399 = vpop.f32.mrb[0].mxu0
  %1400 = vmatprep.mubr.bf16.mxu0 0
  %1401 = vmatmul.mubr.bf16.gmra.mrb[0].mxu0 %v1121
  %v1402 = vpop.f32.mrb[0].mxu0
  %v1403 = vadd.f32 0.0, %v1402
  %v1404 = vpop.f32.mrb[0].mxu0
  %v1405 = vpop.f32.mrb[0].mxu0
  %v1406 = vadd.f32 0.0, %v1405
  %v1407 = vpop.f32.mrb[0].mxu0
  %1408 = vmatprep.mubr.bf16.mxu0 0
  %1409 = vmatmul.mubr.bf16.gmra.mrb[0].mxu0 %v1124
  %v1410 = vpop.f32.mrb[0].mxu0
  %v1411 = vadd.f32 0.0, %v1410
  %v1412 = vpop.f32.mrb[0].mxu0
  %v1413 = vpop.f32.mrb[0].mxu0
  %v1414 = vadd.f32 0.0, %v1413
  %v1415 = vpop.f32.mrb[0].mxu0
  %1416 = vmatprep.mubr.bf16.mxu0 0
  %1417 = vmatmul.mubr.bf16.gmra.mrb[0].mxu0 %v1127
  %v1418 = vpop.f32.mrb[0].mxu0
  %v1419 = vadd.f32 0.0, %v1418
  %v1420 = vpop.f32.mrb[0].mxu0
  %v1421 = vpop.f32.mrb[0].mxu0
  %v1422 = vadd.f32 0.0, %v1421
  %v1423 = vpop.f32.mrb[0].mxu0
  %1424 = vmatprep.mubr.bf16.mxu0 0
  %1425 = vmatmul.mubr.bf16.gmra.mrb[0].mxu0 %v1130
  %v1426 = vpop.f32.mrb[0].mxu0
  %v1427 = vadd.f32 0.0, %v1426
  %v1428 = vpop.f32.mrb[0].mxu0
  %v1429 = vpop.f32.mrb[0].mxu0
  %v1430 = vadd.f32 0.0, %v1429
  %v1431 = vpop.f32.mrb[0].mxu0
  %1432 = vmatprep.mubr.bf16.mxu0 0
  %1433 = vmatmul.mubr.bf16.gmra.mrb[0].mxu0 %v1133
  %v1434 = vpop.f32.mrb[0].mxu0
  %v1435 = vadd.f32 0.0, %v1434
  %v1436 = vpop.f32.mrb[0].mxu0
  %v1437 = vpop.f32.mrb[0].mxu0
  %v1438 = vadd.f32 0.0, %v1437
  %v1439 = vpop.f32.mrb[0].mxu0
  %1440 = vmatprep.mubr.bf16.mxu0 0
  %1441 = vmatmul.mubr.bf16.gmra.mrb[0].mxu0 %v1136
  %v1442 = vpop.f32.mrb[0].mxu0
  %v1443 = vadd.f32 0.0, %v1442
  %v1444 = vpop.f32.mrb[0].mxu0
  %v1445 = vpop.f32.mrb[0].mxu0
  %v1446 = vadd.f32 0.0, %v1445
  %v1447 = vpop.f32.mrb[0].mxu0
  %1448 = vmatprep.mubr.bf16.mxu0 0
  %1449 = vmatmul.mubr.bf16.gmra.mrb[0].mxu0 %v1139
  %v1450 = vpop.f32.mrb[0].mxu0
  %v1451 = vadd.f32 0.0, %v1450
  %v1452 = vpop.f32.mrb[0].mxu0
  %v1453 = vpop.f32.mrb[0].mxu0
  %v1454 = vadd.f32 0.0, %v1453
  %v1455 = vpop.f32.mrb[0].mxu0
  %1456 = vmatprep.mubr.bf16.mxu0 0
  %1457 = vmatmul.mubr.bf16.gmra.mrb[0].mxu0 %v1142
  %v1458 = vpop.f32.mrb[0].mxu0
  %v1459 = vadd.f32 0.0, %v1458
  %v1460 = vpop.f32.mrb[0].mxu0
  %v1461 = vpop.f32.mrb[0].mxu0
  %v1462 = vadd.f32 0.0, %v1461
  %v1463 = vpop.f32.mrb[0].mxu0
  %1464 = vdwg.mxu0
  %v1465 = vld [vmem:[%s23] sm:$0xff]
  %v1466 = vld [vmem:[%s23 + $0x8] sm:$0xff]
  %v1467 = vld [vmem:[%s23 + $0x10] sm:$0xff]
  %v1468 = vld [vmem:[%s23 + $0x18] sm:$0xff]
  %v1469 = vld [vmem:[%s23 + $0x20] sm:$0xff]
  %v1470 = vld [vmem:[%s23 + $0x28] sm:$0xff]
  %v1471 = vld [vmem:[%s23 + $0x30] sm:$0xff]
  %v1472 = vld [vmem:[%s23 + $0x38] sm:$0xff]
  %vm1473 = vcmask 1048064
  %1474 = vrot.lane.b32.xlu0 %v1179, 64
  %v1475 = vpop.permute.xlu0 %1474
  %v1476 = vsel %vm1473, %v1475, %v1179
  %1477 = vrot.lane.b32.xlu0 %v1182, 64
  %v1478 = vpop.permute.xlu0 %1477
  %v1479 = vsel %vm1473, %v1478, %v1182
  %1480 = vrot.lane.b32.xlu0 %v1187, 64
  %v1481 = vpop.permute.xlu0 %1480
  %v1482 = vsel %vm1473, %v1481, %v1187
  %1483 = vrot.lane.b32.xlu0 %v1190, 64
  %v1484 = vpop.permute.xlu0 %1483
  %v1485 = vsel %vm1473, %v1484, %v1190
  %1486 = vrot.lane.b32.xlu0 %v1195, 64
  %v1487 = vpop.permute.xlu0 %1486
  %v1488 = vsel %vm1473, %v1487, %v1195
  %1489 = vrot.lane.b32.xlu0 %v1198, 64
  %v1490 = vpop.permute.xlu0 %1489
  %v1491 = vsel %vm1473, %v1490, %v1198
  %1492 = vrot.lane.b32.xlu0 %v1203, 64
  %v1493 = vpop.permute.xlu0 %1492
  %v1494 = vsel %vm1473, %v1493, %v1203
  %1495 = vrot.lane.b32.xlu0 %v1206, 64
  %v1496 = vpop.permute.xlu0 %1495
  %v1497 = vsel %vm1473, %v1496, %v1206
  %1498 = vrot.lane.b32.xlu0 %v1476, 64
  %v1499 = vpop.permute.xlu0 %1498
  %1500 = vrot.lane.b32.xlu0 %v1479, 64
  %v1501 = vpop.permute.xlu0 %1500
  %1502 = vrot.lane.b32.xlu0 %v1482, 64
  %v1503 = vpop.permute.xlu0 %1502
  %1504 = vrot.lane.b32.xlu0 %v1485, 64
  %v1505 = vpop.permute.xlu0 %1504
  %1506 = vrot.lane.b32.xlu0 %v1488, 64
  %v1507 = vpop.permute.xlu0 %1506
  %1508 = vrot.lane.b32.xlu0 %v1491, 64
  %v1509 = vpop.permute.xlu0 %1508
  %1510 = vrot.lane.b32.xlu0 %v1494, 64
  %v1511 = vpop.permute.xlu0 %1510
  %1512 = vrot.lane.b32.xlu0 %v1497, 64
  %v1513 = vpop.permute.xlu0 %1512
  %v1514 = vsel %vm1473, %v1499, %v1179
  %v1515 = vsel %vm1473, %v1501, %v1182
  %v1516 = vsel %vm1473, %v1503, %v1187
  %v1517 = vsel %vm1473, %v1505, %v1190
  %v1518 = vsel %vm1473, %v1507, %v1195
  %v1519 = vsel %vm1473, %v1509, %v1198
  %v1520 = vsel %vm1473, %v1511, %v1203
  %v1521 = vsel %vm1473, %v1513, %v1206
  %v1523 = vlaneseq
  %v1524 = vshrl.u32 %v1523, 7
  %v1525 = vsub.s32 0, %v1524
  %v1526 = vrot.slane %v772, %v1525
  %1527 = vrot.lane.b32.xlu0 %v1526, 55
  %v1528 = vpop.permute.xlu0 %1527
  %v1530 = vmul.f32 %v1514, %v1528
  %v1531 = vmul.f32 %v1515, %v1528
  %v1532 = vmul.f32 %v1516, %v1528
  %v1533 = vmul.f32 %v1517, %v1528
  %v1534 = vmul.f32 %v1518, %v1528
  %v1535 = vmul.f32 %v1519, %v1528
  %v1536 = vmul.f32 %v1520, %v1528
  %v1537 = vmul.f32 %v1521, %v1528
  %1539 = vset.pattern.permute.xlu0 0
  %1540 = vperm.xlu0 %1539, %v1465
  %v1541 = vpop.permute.xlu0 %1540
  %1544 = vset.pattern.permute.xlu0 0
  %1545 = vperm.xlu0 %1544, %v1466
  %v1546 = vpop.permute.xlu0 %1545
  %1549 = vset.pattern.permute.xlu0 0
  %1550 = vperm.xlu0 %1549, %v1467
  %v1551 = vpop.permute.xlu0 %1550
  %1554 = vset.pattern.permute.xlu0 0
  %1555 = vperm.xlu0 %1554, %v1468
  %v1556 = vpop.permute.xlu0 %1555
  %1559 = vset.pattern.permute.xlu0 0
  %1560 = vperm.xlu0 %1559, %v1469
  %v1561 = vpop.permute.xlu0 %1560
  %1564 = vset.pattern.permute.xlu0 0
  %1565 = vperm.xlu0 %1564, %v1470
  %v1566 = vpop.permute.xlu0 %1565
  %1569 = vset.pattern.permute.xlu0 0
  %1570 = vperm.xlu0 %1569, %v1471
  %v1571 = vpop.permute.xlu0 %1570
  %1574 = vset.pattern.permute.xlu0 0
  %1575 = vperm.xlu0 %1574, %v1472
  %v1576 = vpop.permute.xlu0 %1575
  %v1578 = vadd.f32 %v1541, %v1530
  %v1579 = vadd.f32 %v1546, %v1531
  %v1580 = vadd.f32 %v1551, %v1532
  %v1581 = vadd.f32 %v1556, %v1533
  %v1582 = vadd.f32 %v1561, %v1534
  %v1583 = vadd.f32 %v1566, %v1535
  %v1584 = vadd.f32 %v1571, %v1536
  %v1585 = vadd.f32 %v1576, %v1537
  %1586 = vrot.lane.b32.xlu0 %v1211, 64
  %v1587 = vpop.permute.xlu0 %1586
  %v1588 = vsel %vm1473, %v1587, %v1211
  %1589 = vrot.lane.b32.xlu0 %v1214, 64
  %v1590 = vpop.permute.xlu0 %1589
  %v1591 = vsel %vm1473, %v1590, %v1214
  %1592 = vrot.lane.b32.xlu0 %v1219, 64
  %v1593 = vpop.permute.xlu0 %1592
  %v1594 = vsel %vm1473, %v1593, %v1219
  %1595 = vrot.lane.b32.xlu0 %v1222, 64
  %v1596 = vpop.permute.xlu0 %1595
  %v1597 = vsel %vm1473, %v1596, %v1222
  %1598 = vrot.lane.b32.xlu0 %v1227, 64
  %v1599 = vpop.permute.xlu0 %1598
  %v1600 = vsel %vm1473, %v1599, %v1227
  %1601 = vrot.lane.b32.xlu0 %v1230, 64
  %v1602 = vpop.permute.xlu0 %1601
  %v1603 = vsel %vm1473, %v1602, %v1230
  %1604 = vrot.lane.b32.xlu0 %v1235, 64
  %v1605 = vpop.permute.xlu0 %1604
  %v1606 = vsel %vm1473, %v1605, %v1235
  %1607 = vrot.lane.b32.xlu0 %v1238, 64
  %v1608 = vpop.permute.xlu0 %1607
  %v1609 = vsel %vm1473, %v1608, %v1238
  %1610 = vrot.lane.b32.xlu0 %v1588, 64
  %v1611 = vpop.permute.xlu0 %1610
  %1612 = vrot.lane.b32.xlu0 %v1591, 64
  %v1613 = vpop.permute.xlu0 %1612
  %1614 = vrot.lane.b32.xlu0 %v1594, 64
  %v1615 = vpop.permute.xlu0 %1614
  %1616 = vrot.lane.b32.xlu0 %v1597, 64
  %v1617 = vpop.permute.xlu0 %1616
  %1618 = vrot.lane.b32.xlu0 %v1600, 64
  %v1619 = vpop.permute.xlu0 %1618
  %1620 = vrot.lane.b32.xlu0 %v1603, 64
  %v1621 = vpop.permute.xlu0 %1620
  %1622 = vrot.lane.b32.xlu0 %v1606, 64
  %v1623 = vpop.permute.xlu0 %1622
  %1624 = vrot.lane.b32.xlu0 %v1609, 64
  %v1625 = vpop.permute.xlu0 %1624
  %v1626 = vsel %vm1473, %v1611, %v1211
  %v1627 = vsel %vm1473, %v1613, %v1214
  %v1628 = vsel %vm1473, %v1615, %v1219
  %v1629 = vsel %vm1473, %v1617, %v1222
  %v1630 = vsel %vm1473, %v1619, %v1227
  %v1631 = vsel %vm1473, %v1621, %v1230
  %v1632 = vsel %vm1473, %v1623, %v1235
  %v1633 = vsel %vm1473, %v1625, %v1238
  %v1635 = vlaneseq
  %v1636 = vshrl.u32 %v1635, 7
  %v1637 = vsub.s32 0, %v1636
  %v1638 = vrot.slane %v773, %v1637
  %1639 = vrot.lane.b32.xlu0 %v1638, 56
  %v1640 = vpop.permute.xlu0 %1639
  %v1642 = vmul.f32 %v1626, %v1640
  %v1643 = vmul.f32 %v1627, %v1640
  %v1644 = vmul.f32 %v1628, %v1640
  %v1645 = vmul.f32 %v1629, %v1640
  %v1646 = vmul.f32 %v1630, %v1640
  %v1647 = vmul.f32 %v1631, %v1640
  %v1648 = vmul.f32 %v1632, %v1640
  %v1649 = vmul.f32 %v1633, %v1640
  %1658 = vrot.lane.b32.xlu0 %v1642, 127
  %v1659 = vpop.permute.xlu0 %1658
  %1660 = vrot.lane.b32.xlu0 %v1643, 127
  %v1661 = vpop.permute.xlu0 %1660
  %1662 = vrot.lane.b32.xlu0 %v1644, 127
  %v1663 = vpop.permute.xlu0 %1662
  %1664 = vrot.lane.b32.xlu0 %v1645, 127
  %v1665 = vpop.permute.xlu0 %1664
  %1666 = vrot.lane.b32.xlu0 %v1646, 127
  %v1667 = vpop.permute.xlu0 %1666
  %1668 = vrot.lane.b32.xlu0 %v1647, 127
  %v1669 = vpop.permute.xlu0 %1668
  %1670 = vrot.lane.b32.xlu0 %v1648, 127
  %v1671 = vpop.permute.xlu0 %1670
  %1672 = vrot.lane.b32.xlu0 %v1649, 127
  %v1673 = vpop.permute.xlu0 %1672
  %v1682 = vadd.f32 %v1578, %v1659
  %v1683 = vadd.f32 %v1579, %v1661
  %v1684 = vadd.f32 %v1580, %v1663
  %v1685 = vadd.f32 %v1581, %v1665
  %v1686 = vadd.f32 %v1582, %v1667
  %v1687 = vadd.f32 %v1583, %v1669
  %v1688 = vadd.f32 %v1584, %v1671
  %v1689 = vadd.f32 %v1585, %v1673
  %1690 = vrot.lane.b32.xlu0 %v1243, 64
  %v1691 = vpop.permute.xlu0 %1690
  %v1692 = vsel %vm1473, %v1691, %v1243
  %1693 = vrot.lane.b32.xlu0 %v1246, 64
  %v1694 = vpop.permute.xlu0 %1693
  %v1695 = vsel %vm1473, %v1694, %v1246
  %1696 = vrot.lane.b32.xlu0 %v1251, 64
  %v1697 = vpop.permute.xlu0 %1696
  %v1698 = vsel %vm1473, %v1697, %v1251
  %1699 = vrot.lane.b32.xlu0 %v1254, 64
  %v1700 = vpop.permute.xlu0 %1699
  %v1701 = vsel %vm1473, %v1700, %v1254
  %1702 = vrot.lane.b32.xlu0 %v1259, 64
  %v1703 = vpop.permute.xlu0 %1702
  %v1704 = vsel %vm1473, %v1703, %v1259
  %1705 = vrot.lane.b32.xlu0 %v1262, 64
  %v1706 = vpop.permute.xlu0 %1705
  %v1707 = vsel %vm1473, %v1706, %v1262
  %1708 = vrot.lane.b32.xlu0 %v1267, 64
  %v1709 = vpop.permute.xlu0 %1708
  %v1710 = vsel %vm1473, %v1709, %v1267
  %1711 = vrot.lane.b32.xlu0 %v1270, 64
  %v1712 = vpop.permute.xlu0 %1711
  %v1713 = vsel %vm1473, %v1712, %v1270
  %1714 = vrot.lane.b32.xlu0 %v1692, 64
  %v1715 = vpop.permute.xlu0 %1714
  %1716 = vrot.lane.b32.xlu0 %v1695, 64
  %v1717 = vpop.permute.xlu0 %1716
  %1718 = vrot.lane.b32.xlu0 %v1698, 64
  %v1719 = vpop.permute.xlu0 %1718
  %1720 = vrot.lane.b32.xlu0 %v1701, 64
  %v1721 = vpop.permute.xlu0 %1720
  %1722 = vrot.lane.b32.xlu0 %v1704, 64
  %v1723 = vpop.permute.xlu0 %1722
  %1724 = vrot.lane.b32.xlu0 %v1707, 64
  %v1725 = vpop.permute.xlu0 %1724
  %1726 = vrot.lane.b32.xlu0 %v1710, 64
  %v1727 = vpop.permute.xlu0 %1726
  %1728 = vrot.lane.b32.xlu0 %v1713, 64
  %v1729 = vpop.permute.xlu0 %1728
  %v1730 = vsel %vm1473, %v1715, %v1243
  %v1731 = vsel %vm1473, %v1717, %v1246
  %v1732 = vsel %vm1473, %v1719, %v1251
  %v1733 = vsel %vm1473, %v1721, %v1254
  %v1734 = vsel %vm1473, %v1723, %v1259
  %v1735 = vsel %vm1473, %v1725, %v1262
  %v1736 = vsel %vm1473, %v1727, %v1267
  %v1737 = vsel %vm1473, %v1729, %v1270
  %v1739 = vlaneseq
  %v1740 = vshrl.u32 %v1739, 7
  %v1741 = vsub.s32 0, %v1740
  %v1742 = vrot.slane %v774, %v1741
  %1743 = vrot.lane.b32.xlu0 %v1742, 57
  %v1744 = vpop.permute.xlu0 %1743
  %v1746 = vmul.f32 %v1730, %v1744
  %v1747 = vmul.f32 %v1731, %v1744
  %v1748 = vmul.f32 %v1732, %v1744
  %v1749 = vmul.f32 %v1733, %v1744
  %v1750 = vmul.f32 %v1734, %v1744
  %v1751 = vmul.f32 %v1735, %v1744
  %v1752 = vmul.f32 %v1736, %v1744
  %v1753 = vmul.f32 %v1737, %v1744
  %1762 = vrot.lane.b32.xlu0 %v1746, 126
  %v1763 = vpop.permute.xlu0 %1762
  %1764 = vrot.lane.b32.xlu0 %v1747, 126
  %v1765 = vpop.permute.xlu0 %1764
  %1766 = vrot.lane.b32.xlu0 %v1748, 126
  %v1767 = vpop.permute.xlu0 %1766
  %1768 = vrot.lane.b32.xlu0 %v1749, 126
  %v1769 = vpop.permute.xlu0 %1768
  %1770 = vrot.lane.b32.xlu0 %v1750, 126
  %v1771 = vpop.permute.xlu0 %1770
  %1772 = vrot.lane.b32.xlu0 %v1751, 126
  %v1773 = vpop.permute.xlu0 %1772
  %1774 = vrot.lane.b32.xlu0 %v1752, 126
  %v1775 = vpop.permute.xlu0 %1774
  %1776 = vrot.lane.b32.xlu0 %v1753, 126
  %v1777 = vpop.permute.xlu0 %1776
  %v1786 = vadd.f32 %v1682, %v1763
  %v1787 = vadd.f32 %v1683, %v1765
  %v1788 = vadd.f32 %v1684, %v1767
  %v1789 = vadd.f32 %v1685, %v1769
  %v1790 = vadd.f32 %v1686, %v1771
  %v1791 = vadd.f32 %v1687, %v1773
  %v1792 = vadd.f32 %v1688, %v1775
  %v1793 = vadd.f32 %v1689, %v1777
  %1794 = vrot.lane.b32.xlu0 %v1275, 64
  %v1795 = vpop.permute.xlu0 %1794
  %v1796 = vsel %vm1473, %v1795, %v1275
  %1797 = vrot.lane.b32.xlu0 %v1278, 64
  %v1798 = vpop.permute.xlu0 %1797
  %v1799 = vsel %vm1473, %v1798, %v1278
  %1800 = vrot.lane.b32.xlu0 %v1283, 64
  %v1801 = vpop.permute.xlu0 %1800
  %v1802 = vsel %vm1473, %v1801, %v1283
  %1803 = vrot.lane.b32.xlu0 %v1286, 64
  %v1804 = vpop.permute.xlu0 %1803
  %v1805 = vsel %vm1473, %v1804, %v1286
  %1806 = vrot.lane.b32.xlu0 %v1291, 64
  %v1807 = vpop.permute.xlu0 %1806
  %v1808 = vsel %vm1473, %v1807, %v1291
  %1809 = vrot.lane.b32.xlu0 %v1294, 64
  %v1810 = vpop.permute.xlu0 %1809
  %v1811 = vsel %vm1473, %v1810, %v1294
  %1812 = vrot.lane.b32.xlu0 %v1299, 64
  %v1813 = vpop.permute.xlu0 %1812
  %v1814 = vsel %vm1473, %v1813, %v1299
  %1815 = vrot.lane.b32.xlu0 %v1302, 64
  %v1816 = vpop.permute.xlu0 %1815
  %v1817 = vsel %vm1473, %v1816, %v1302
  %1818 = vrot.lane.b32.xlu0 %v1796, 64
  %v1819 = vpop.permute.xlu0 %1818
  %1820 = vrot.lane.b32.xlu0 %v1799, 64
  %v1821 = vpop.permute.xlu0 %1820
  %1822 = vrot.lane.b32.xlu0 %v1802, 64
  %v1823 = vpop.permute.xlu0 %1822
  %1824 = vrot.lane.b32.xlu0 %v1805, 64
  %v1825 = vpop.permute.xlu0 %1824
  %1826 = vrot.lane.b32.xlu0 %v1808, 64
  %v1827 = vpop.permute.xlu0 %1826
  %1828 = vrot.lane.b32.xlu0 %v1811, 64
  %v1829 = vpop.permute.xlu0 %1828
  %1830 = vrot.lane.b32.xlu0 %v1814, 64
  %v1831 = vpop.permute.xlu0 %1830
  %1832 = vrot.lane.b32.xlu0 %v1817, 64
  %v1833 = vpop.permute.xlu0 %1832
  %v1834 = vsel %vm1473, %v1819, %v1275
  %v1835 = vsel %vm1473, %v1821, %v1278
  %v1836 = vsel %vm1473, %v1823, %v1283
  %v1837 = vsel %vm1473, %v1825, %v1286
  %v1838 = vsel %vm1473, %v1827, %v1291
  %v1839 = vsel %vm1473, %v1829, %v1294
  %v1840 = vsel %vm1473, %v1831, %v1299
  %v1841 = vsel %vm1473, %v1833, %v1302
  %v1843 = vlaneseq
  %v1844 = vshrl.u32 %v1843, 7
  %v1845 = vsub.s32 0, %v1844
  %v1846 = vrot.slane %v775, %v1845
  %1847 = vrot.lane.b32.xlu0 %v1846, 63
  %v1848 = vpop.permute.xlu0 %1847
  %v1850 = vmul.f32 %v1834, %v1848
  %v1851 = vmul.f32 %v1835, %v1848
  %v1852 = vmul.f32 %v1836, %v1848
  %v1853 = vmul.f32 %v1837, %v1848
  %v1854 = vmul.f32 %v1838, %v1848
  %v1855 = vmul.f32 %v1839, %v1848
  %v1856 = vmul.f32 %v1840, %v1848
  %v1857 = vmul.f32 %v1841, %v1848
  %1866 = vrot.lane.b32.xlu0 %v1850, 120
  %v1867 = vpop.permute.xlu0 %1866
  %1868 = vrot.lane.b32.xlu0 %v1851, 120
  %v1869 = vpop.permute.xlu0 %1868
  %1870 = vrot.lane.b32.xlu0 %v1852, 120
  %v1871 = vpop.permute.xlu0 %1870
  %1872 = vrot.lane.b32.xlu0 %v1853, 120
  %v1873 = vpop.permute.xlu0 %1872
  %1874 = vrot.lane.b32.xlu0 %v1854, 120
  %v1875 = vpop.permute.xlu0 %1874
  %1876 = vrot.lane.b32.xlu0 %v1855, 120
  %v1877 = vpop.permute.xlu0 %1876
  %1878 = vrot.lane.b32.xlu0 %v1856, 120
  %v1879 = vpop.permute.xlu0 %1878
  %1880 = vrot.lane.b32.xlu0 %v1857, 120
  %v1881 = vpop.permute.xlu0 %1880
  %v1890 = vadd.f32 %v1786, %v1867
  %v1891 = vadd.f32 %v1787, %v1869
  %v1892 = vadd.f32 %v1788, %v1871
  %v1893 = vadd.f32 %v1789, %v1873
  %v1894 = vadd.f32 %v1790, %v1875
  %v1895 = vadd.f32 %v1791, %v1877
  %v1896 = vadd.f32 %v1792, %v1879
  %v1897 = vadd.f32 %v1793, %v1881
  %v1899 = vlaneseq
  %v1900 = vshrl.u32 %v1899, 7
  %v1901 = vsub.s32 0, %v1900
  %v1902 = vrot.slane %v776, %v1901
  %v1904 = vmul.f32 %v1307, %v1902
  %v1905 = vmul.f32 %v1310, %v1902
  %v1906 = vmul.f32 %v1315, %v1902
  %v1907 = vmul.f32 %v1318, %v1902
  %v1908 = vmul.f32 %v1323, %v1902
  %v1909 = vmul.f32 %v1326, %v1902
  %v1910 = vmul.f32 %v1331, %v1902
  %v1911 = vmul.f32 %v1334, %v1902
  %1920 = vrot.lane.b32.xlu0 %v1904, 55
  %v1921 = vpop.permute.xlu0 %1920
  %1922 = vrot.lane.b32.xlu0 %v1905, 55
  %v1923 = vpop.permute.xlu0 %1922
  %1924 = vrot.lane.b32.xlu0 %v1906, 55
  %v1925 = vpop.permute.xlu0 %1924
  %1926 = vrot.lane.b32.xlu0 %v1907, 55
  %v1927 = vpop.permute.xlu0 %1926
  %1928 = vrot.lane.b32.xlu0 %v1908, 55
  %v1929 = vpop.permute.xlu0 %1928
  %1930 = vrot.lane.b32.xlu0 %v1909, 55
  %v1931 = vpop.permute.xlu0 %1930
  %1932 = vrot.lane.b32.xlu0 %v1910, 55
  %v1933 = vpop.permute.xlu0 %1932
  %1934 = vrot.lane.b32.xlu0 %v1911, 55
  %v1935 = vpop.permute.xlu0 %1934
  %v1944 = vadd.f32 %v1890, %v1921
  %v1945 = vadd.f32 %v1891, %v1923
  %v1946 = vadd.f32 %v1892, %v1925
  %v1947 = vadd.f32 %v1893, %v1927
  %v1948 = vadd.f32 %v1894, %v1929
  %v1949 = vadd.f32 %v1895, %v1931
  %v1950 = vadd.f32 %v1896, %v1933
  %v1951 = vadd.f32 %v1897, %v1935
  %1952 = vrot.lane.b32.xlu0 %v1339, 64
  %v1953 = vpop.permute.xlu0 %1952
  %v1954 = vsel %vm1473, %v1953, %v1339
  %1955 = vrot.lane.b32.xlu0 %v1342, 64
  %v1956 = vpop.permute.xlu0 %1955
  %v1957 = vsel %vm1473, %v1956, %v1342
  %1958 = vrot.lane.b32.xlu0 %v1347, 64
  %v1959 = vpop.permute.xlu0 %1958
  %v1960 = vsel %vm1473, %v1959, %v1347
  %1961 = vrot.lane.b32.xlu0 %v1350, 64
  %v1962 = vpop.permute.xlu0 %1961
  %v1963 = vsel %vm1473, %v1962, %v1350
  %1964 = vrot.lane.b32.xlu0 %v1355, 64
  %v1965 = vpop.permute.xlu0 %1964
  %v1966 = vsel %vm1473, %v1965, %v1355
  %1967 = vrot.lane.b32.xlu0 %v1358, 64
  %v1968 = vpop.permute.xlu0 %1967
  %v1969 = vsel %vm1473, %v1968, %v1358
  %1970 = vrot.lane.b32.xlu0 %v1363, 64
  %v1971 = vpop.permute.xlu0 %1970
  %v1972 = vsel %vm1473, %v1971, %v1363
  %1973 = vrot.lane.b32.xlu0 %v1366, 64
  %v1974 = vpop.permute.xlu0 %1973
  %v1975 = vsel %vm1473, %v1974, %v1366
  %1976 = vrot.lane.b32.xlu0 %v1954, 64
  %v1977 = vpop.permute.xlu0 %1976
  %1978 = vrot.lane.b32.xlu0 %v1957, 64
  %v1979 = vpop.permute.xlu0 %1978
  %1980 = vrot.lane.b32.xlu0 %v1960, 64
  %v1981 = vpop.permute.xlu0 %1980
  %1982 = vrot.lane.b32.xlu0 %v1963, 64
  %v1983 = vpop.permute.xlu0 %1982
  %1984 = vrot.lane.b32.xlu0 %v1966, 64
  %v1985 = vpop.permute.xlu0 %1984
  %1986 = vrot.lane.b32.xlu0 %v1969, 64
  %v1987 = vpop.permute.xlu0 %1986
  %1988 = vrot.lane.b32.xlu0 %v1972, 64
  %v1989 = vpop.permute.xlu0 %1988
  %1990 = vrot.lane.b32.xlu0 %v1975, 64
  %v1991 = vpop.permute.xlu0 %1990
  %v1992 = vsel %vm1473, %v1977, %v1339
  %v1993 = vsel %vm1473, %v1979, %v1342
  %v1994 = vsel %vm1473, %v1981, %v1347
  %v1995 = vsel %vm1473, %v1983, %v1350
  %v1996 = vsel %vm1473, %v1985, %v1355
  %v1997 = vsel %vm1473, %v1987, %v1358
  %v1998 = vsel %vm1473, %v1989, %v1363
  %v1999 = vsel %vm1473, %v1991, %v1366
  %v2001 = vlaneseq
  %v2002 = vshrl.u32 %v2001, 7
  %v2003 = vsub.s32 0, %v2002
  %v2004 = vrot.slane %v777, %v2003
  %2005 = vrot.lane.b32.xlu0 %v2004, 1
  %v2006 = vpop.permute.xlu0 %2005
  %v2008 = vmul.f32 %v1992, %v2006
  %v2009 = vmul.f32 %v1993, %v2006
  %v2010 = vmul.f32 %v1994, %v2006
  %v2011 = vmul.f32 %v1995, %v2006
  %v2012 = vmul.f32 %v1996, %v2006
  %v2013 = vmul.f32 %v1997, %v2006
  %v2014 = vmul.f32 %v1998, %v2006
  %v2015 = vmul.f32 %v1999, %v2006
  %2024 = vrot.lane.b32.xlu0 %v2008, 54
  %v2025 = vpop.permute.xlu0 %2024
  %2026 = vrot.lane.b32.xlu0 %v2009, 54
  %v2027 = vpop.permute.xlu0 %2026
  %2028 = vrot.lane.b32.xlu0 %v2010, 54
  %v2029 = vpop.permute.xlu0 %2028
  %2030 = vrot.lane.b32.xlu0 %v2011, 54
  %v2031 = vpop.permute.xlu0 %2030
  %2032 = vrot.lane.b32.xlu0 %v2012, 54
  %v2033 = vpop.permute.xlu0 %2032
  %2034 = vrot.lane.b32.xlu0 %v2013, 54
  %v2035 = vpop.permute.xlu0 %2034
  %2036 = vrot.lane.b32.xlu0 %v2014, 54
  %v2037 = vpop.permute.xlu0 %2036
  %2038 = vrot.lane.b32.xlu0 %v2015, 54
  %v2039 = vpop.permute.xlu0 %2038
  %v2048 = vadd.f32 %v1944, %v2025
  %v2049 = vadd.f32 %v1945, %v2027
  %v2050 = vadd.f32 %v1946, %v2029
  %v2051 = vadd.f32 %v1947, %v2031
  %v2052 = vadd.f32 %v1948, %v2033
  %v2053 = vadd.f32 %v1949, %v2035
  %v2054 = vadd.f32 %v1950, %v2037
  %v2055 = vadd.f32 %v1951, %v2039
  %2056 = vrot.lane.b32.xlu0 %v1371, 64
  %v2057 = vpop.permute.xlu0 %2056
  %v2058 = vsel %vm1473, %v2057, %v1371
  %2059 = vrot.lane.b32.xlu0 %v1374, 64
  %v2060 = vpop.permute.xlu0 %2059
  %v2061 = vsel %vm1473, %v2060, %v1374
  %2062 = vrot.lane.b32.xlu0 %v1379, 64
  %v2063 = vpop.permute.xlu0 %2062
  %v2064 = vsel %vm1473, %v2063, %v1379
  %2065 = vrot.lane.b32.xlu0 %v1382, 64
  %v2066 = vpop.permute.xlu0 %2065
  %v2067 = vsel %vm1473, %v2066, %v1382
  %2068 = vrot.lane.b32.xlu0 %v1387, 64
  %v2069 = vpop.permute.xlu0 %2068
  %v2070 = vsel %vm1473, %v2069, %v1387
  %2071 = vrot.lane.b32.xlu0 %v1390, 64
  %v2072 = vpop.permute.xlu0 %2071
  %v2073 = vsel %vm1473, %v2072, %v1390
  %2074 = vrot.lane.b32.xlu0 %v1395, 64
  %v2075 = vpop.permute.xlu0 %2074
  %v2076 = vsel %vm1473, %v2075, %v1395
  %2077 = vrot.lane.b32.xlu0 %v1398, 64
  %v2078 = vpop.permute.xlu0 %2077
  %v2079 = vsel %vm1473, %v2078, %v1398
  %2080 = vrot.lane.b32.xlu0 %v2058, 64
  %v2081 = vpop.permute.xlu0 %2080
  %2082 = vrot.lane.b32.xlu0 %v2061, 64
  %v2083 = vpop.permute.xlu0 %2082
  %2084 = vrot.lane.b32.xlu0 %v2064, 64
  %v2085 = vpop.permute.xlu0 %2084
  %2086 = vrot.lane.b32.xlu0 %v2067, 64
  %v2087 = vpop.permute.xlu0 %2086
  %2088 = vrot.lane.b32.xlu0 %v2070, 64
  %v2089 = vpop.permute.xlu0 %2088
  %2090 = vrot.lane.b32.xlu0 %v2073, 64
  %v2091 = vpop.permute.xlu0 %2090
  %2092 = vrot.lane.b32.xlu0 %v2076, 64
  %v2093 = vpop.permute.xlu0 %2092
  %2094 = vrot.lane.b32.xlu0 %v2079, 64
  %v2095 = vpop.permute.xlu0 %2094
  %v2096 = vsel %vm1473, %v2081, %v1371
  %v2097 = vsel %vm1473, %v2083, %v1374
  %v2098 = vsel %vm1473, %v2085, %v1379
  %v2099 = vsel %vm1473, %v2087, %v1382
  %v2100 = vsel %vm1473, %v2089, %v1387
  %v2101 = vsel %vm1473, %v2091, %v1390
  %v2102 = vsel %vm1473, %v2093, %v1395
  %v2103 = vsel %vm1473, %v2095, %v1398
  %v2105 = vlaneseq
  %v2106 = vshrl.u32 %v2105, 7
  %v2107 = vsub.s32 0, %v2106
  %v2108 = vrot.slane %v778, %v2107
  %2109 = vrot.lane.b32.xlu0 %v2108, 7
  %v2110 = vpop.permute.xlu0 %2109
  %v2112 = vmul.f32 %v2096, %v2110
  %v2113 = vmul.f32 %v2097, %v2110
  %v2114 = vmul.f32 %v2098, %v2110
  %v2115 = vmul.f32 %v2099, %v2110
  %v2116 = vmul.f32 %v2100, %v2110
  %v2117 = vmul.f32 %v2101, %v2110
  %v2118 = vmul.f32 %v2102, %v2110
  %v2119 = vmul.f32 %v2103, %v2110
  %2128 = vrot.lane.b32.xlu0 %v2112, 48
  %v2129 = vpop.permute.xlu0 %2128
  %2130 = vrot.lane.b32.xlu0 %v2113, 48
  %v2131 = vpop.permute.xlu0 %2130
  %2132 = vrot.lane.b32.xlu0 %v2114, 48
  %v2133 = vpop.permute.xlu0 %2132
  %2134 = vrot.lane.b32.xlu0 %v2115, 48
  %v2135 = vpop.permute.xlu0 %2134
  %2136 = vrot.lane.b32.xlu0 %v2116, 48
  %v2137 = vpop.permute.xlu0 %2136
  %2138 = vrot.lane.b32.xlu0 %v2117, 48
  %v2139 = vpop.permute.xlu0 %2138
  %2140 = vrot.lane.b32.xlu0 %v2118, 48
  %v2141 = vpop.permute.xlu0 %2140
  %2142 = vrot.lane.b32.xlu0 %v2119, 48
  %v2143 = vpop.permute.xlu0 %2142
  %v2152 = vadd.f32 %v2048, %v2129
  %v2153 = vadd.f32 %v2049, %v2131
  %v2154 = vadd.f32 %v2050, %v2133
  %v2155 = vadd.f32 %v2051, %v2135
  %v2156 = vadd.f32 %v2052, %v2137
  %v2157 = vadd.f32 %v2053, %v2139
  %v2158 = vadd.f32 %v2054, %v2141
  %v2159 = vadd.f32 %v2055, %v2143
  %2160 = vrot.lane.b32.xlu0 %v1403, 64
  %v2161 = vpop.permute.xlu0 %2160
  %v2162 = vsel %vm1473, %v2161, %v1403
  %2163 = vrot.lane.b32.xlu0 %v1406, 64
  %v2164 = vpop.permute.xlu0 %2163
  %v2165 = vsel %vm1473, %v2164, %v1406
  %2166 = vrot.lane.b32.xlu0 %v1411, 64
  %v2167 = vpop.permute.xlu0 %2166
  %v2168 = vsel %vm1473, %v2167, %v1411
  %2169 = vrot.lane.b32.xlu0 %v1414, 64
  %v2170 = vpop.permute.xlu0 %2169
  %v2171 = vsel %vm1473, %v2170, %v1414
  %2172 = vrot.lane.b32.xlu0 %v1419, 64
  %v2173 = vpop.permute.xlu0 %2172
  %v2174 = vsel %vm1473, %v2173, %v1419
  %2175 = vrot.lane.b32.xlu0 %v1422, 64
  %v2176 = vpop.permute.xlu0 %2175
  %v2177 = vsel %vm1473, %v2176, %v1422
  %2178 = vrot.lane.b32.xlu0 %v1427, 64
  %v2179 = vpop.permute.xlu0 %2178
  %v2180 = vsel %vm1473, %v2179, %v1427
  %2181 = vrot.lane.b32.xlu0 %v1430, 64
  %v2182 = vpop.permute.xlu0 %2181
  %v2183 = vsel %vm1473, %v2182, %v1430
  %2184 = vrot.lane.b32.xlu0 %v2162, 64
  %v2185 = vpop.permute.xlu0 %2184
  %2186 = vrot.lane.b32.xlu0 %v2165, 64
  %v2187 = vpop.permute.xlu0 %2186
  %2188 = vrot.lane.b32.xlu0 %v2168, 64
  %v2189 = vpop.permute.xlu0 %2188
  %2190 = vrot.lane.b32.xlu0 %v2171, 64
  %v2191 = vpop.permute.xlu0 %2190
  %2192 = vrot.lane.b32.xlu0 %v2174, 64
  %v2193 = vpop.permute.xlu0 %2192
  %2194 = vrot.lane.b32.xlu0 %v2177, 64
  %v2195 = vpop.permute.xlu0 %2194
  %2196 = vrot.lane.b32.xlu0 %v2180, 64
  %v2197 = vpop.permute.xlu0 %2196
  %2198 = vrot.lane.b32.xlu0 %v2183, 64
  %v2199 = vpop.permute.xlu0 %2198
  %v2200 = vsel %vm1473, %v2185, %v1403
  %v2201 = vsel %vm1473, %v2187, %v1406
  %v2202 = vsel %vm1473, %v2189, %v1411
  %v2203 = vsel %vm1473, %v2191, %v1414
  %v2204 = vsel %vm1473, %v2193, %v1419
  %v2205 = vsel %vm1473, %v2195, %v1422
  %v2206 = vsel %vm1473, %v2197, %v1427
  %v2207 = vsel %vm1473, %v2199, %v1430
  %v2209 = vlaneseq
  %v2210 = vshrl.u32 %v2209, 7
  %v2211 = vsub.s32 0, %v2210
  %v2212 = vrot.slane %v779, %v2211
  %2213 = vrot.lane.b32.xlu0 %v2212, 8
  %v2214 = vpop.permute.xlu0 %2213
  %v2216 = vmul.f32 %v2200, %v2214
  %v2217 = vmul.f32 %v2201, %v2214
  %v2218 = vmul.f32 %v2202, %v2214
  %v2219 = vmul.f32 %v2203, %v2214
  %v2220 = vmul.f32 %v2204, %v2214
  %v2221 = vmul.f32 %v2205, %v2214
  %v2222 = vmul.f32 %v2206, %v2214
  %v2223 = vmul.f32 %v2207, %v2214
  %2232 = vrot.lane.b32.xlu0 %v2216, 47
  %v2233 = vpop.permute.xlu0 %2232
  %2234 = vrot.lane.b32.xlu0 %v2217, 47
  %v2235 = vpop.permute.xlu0 %2234
  %2236 = vrot.lane.b32.xlu0 %v2218, 47
  %v2237 = vpop.permute.xlu0 %2236
  %2238 = vrot.lane.b32.xlu0 %v2219, 47
  %v2239 = vpop.permute.xlu0 %2238
  %2240 = vrot.lane.b32.xlu0 %v2220, 47
  %v2241 = vpop.permute.xlu0 %2240
  %2242 = vrot.lane.b32.xlu0 %v2221, 47
  %v2243 = vpop.permute.xlu0 %2242
  %2244 = vrot.lane.b32.xlu0 %v2222, 47
  %v2245 = vpop.permute.xlu0 %2244
  %2246 = vrot.lane.b32.xlu0 %v2223, 47
  %v2247 = vpop.permute.xlu0 %2246
  %v2256 = vadd.f32 %v2152, %v2233
  %v2257 = vadd.f32 %v2153, %v2235
  %v2258 = vadd.f32 %v2154, %v2237
  %v2259 = vadd.f32 %v2155, %v2239
  %v2260 = vadd.f32 %v2156, %v2241
  %v2261 = vadd.f32 %v2157, %v2243
  %v2262 = vadd.f32 %v2158, %v2245
  %v2263 = vadd.f32 %v2159, %v2247
  %2264 = vrot.lane.b32.xlu0 %v1435, 64
  %v2265 = vpop.permute.xlu0 %2264
  %v2266 = vsel %vm1473, %v2265, %v1435
  %2267 = vrot.lane.b32.xlu0 %v1438, 64
  %v2268 = vpop.permute.xlu0 %2267
  %v2269 = vsel %vm1473, %v2268, %v1438
  %2270 = vrot.lane.b32.xlu0 %v1443, 64
  %v2271 = vpop.permute.xlu0 %2270
  %v2272 = vsel %vm1473, %v2271, %v1443
  %2273 = vrot.lane.b32.xlu0 %v1446, 64
  %v2274 = vpop.permute.xlu0 %2273
  %v2275 = vsel %vm1473, %v2274, %v1446
  %2276 = vrot.lane.b32.xlu0 %v1451, 64
  %v2277 = vpop.permute.xlu0 %2276
  %v2278 = vsel %vm1473, %v2277, %v1451
  %2279 = vrot.lane.b32.xlu0 %v1454, 64
  %v2280 = vpop.permute.xlu0 %2279
  %v2281 = vsel %vm1473, %v2280, %v1454
  %2282 = vrot.lane.b32.xlu0 %v1459, 64
  %v2283 = vpop.permute.xlu0 %2282
  %v2284 = vsel %vm1473, %v2283, %v1459
  %2285 = vrot.lane.b32.xlu0 %v1462, 64
  %v2286 = vpop.permute.xlu0 %2285
  %v2287 = vsel %vm1473, %v2286, %v1462
  %2288 = vrot.lane.b32.xlu0 %v2266, 64
  %v2289 = vpop.permute.xlu0 %2288
  %2290 = vrot.lane.b32.xlu0 %v2269, 64
  %v2291 = vpop.permute.xlu0 %2290
  %2292 = vrot.lane.b32.xlu0 %v2272, 64
  %v2293 = vpop.permute.xlu0 %2292
  %2294 = vrot.lane.b32.xlu0 %v2275, 64
  %v2295 = vpop.permute.xlu0 %2294
  %2296 = vrot.lane.b32.xlu0 %v2278, 64
  %v2297 = vpop.permute.xlu0 %2296
  %2298 = vrot.lane.b32.xlu0 %v2281, 64
  %v2299 = vpop.permute.xlu0 %2298
  %2300 = vrot.lane.b32.xlu0 %v2284, 64
  %v2301 = vpop.permute.xlu0 %2300
  %2302 = vrot.lane.b32.xlu0 %v2287, 64
  %v2303 = vpop.permute.xlu0 %2302
  %v2304 = vsel %vm1473, %v2289, %v1435
  %v2305 = vsel %vm1473, %v2291, %v1438
  %v2306 = vsel %vm1473, %v2293, %v1443
  %v2307 = vsel %vm1473, %v2295, %v1446
  %v2308 = vsel %vm1473, %v2297, %v1451
  %v2309 = vsel %vm1473, %v2299, %v1454
  %v2310 = vsel %vm1473, %v2301, %v1459
  %v2311 = vsel %vm1473, %v2303, %v1462
  %v2313 = vlaneseq
  %v2314 = vshrl.u32 %v2313, 7
  %v2315 = vsub.s32 0, %v2314
  %v2316 = vrot.slane %v780, %v2315
  %2317 = vrot.lane.b32.xlu0 %v2316, 9
  %v2318 = vpop.permute.xlu0 %2317
  %v2320 = vmul.f32 %v2304, %v2318
  %v2321 = vmul.f32 %v2305, %v2318
  %v2322 = vmul.f32 %v2306, %v2318
  %v2323 = vmul.f32 %v2307, %v2318
  %v2324 = vmul.f32 %v2308, %v2318
  %v2325 = vmul.f32 %v2309, %v2318
  %v2326 = vmul.f32 %v2310, %v2318
  %v2327 = vmul.f32 %v2311, %v2318
  %2336 = vrot.lane.b32.xlu0 %v2320, 46
  %v2337 = vpop.permute.xlu0 %2336
  %2338 = vrot.lane.b32.xlu0 %v2321, 46
  %v2339 = vpop.permute.xlu0 %2338
  %2340 = vrot.lane.b32.xlu0 %v2322, 46
  %v2341 = vpop.permute.xlu0 %2340
  %2342 = vrot.lane.b32.xlu0 %v2323, 46
  %v2343 = vpop.permute.xlu0 %2342
  %2344 = vrot.lane.b32.xlu0 %v2324, 46
  %v2345 = vpop.permute.xlu0 %2344
  %2346 = vrot.lane.b32.xlu0 %v2325, 46
  %v2347 = vpop.permute.xlu0 %2346
  %2348 = vrot.lane.b32.xlu0 %v2326, 46
  %v2349 = vpop.permute.xlu0 %2348
  %2350 = vrot.lane.b32.xlu0 %v2327, 46
  %v2351 = vpop.permute.xlu0 %2350
  %v2360 = vadd.f32 %v2256, %v2337
  %v2361 = vadd.f32 %v2257, %v2339
  %v2362 = vadd.f32 %v2258, %v2341
  %v2363 = vadd.f32 %v2259, %v2343
  %v2364 = vadd.f32 %v2260, %v2345
  %v2365 = vadd.f32 %v2261, %v2347
  %v2366 = vadd.f32 %v2262, %v2349
  %v2367 = vadd.f32 %v2263, %v2351
  %v2368 = vmax.f32 %v2360, 0.0
  %v2369 = vmax.f32 %v2361, 0.0
  %v2370 = vmax.f32 %v2362, 0.0
  %v2371 = vmax.f32 %v2363, 0.0
  %v2372 = vmax.f32 %v2364, 0.0
  %v2373 = vmax.f32 %v2365, 0.0
  %v2374 = vmax.f32 %v2366, 0.0
  %v2375 = vmax.f32 %v2367, 0.0
  %v2376 = vld [vmem:[%s25] sm:$0xf]
  %v2377 = vld [vmem:[%s25 + $0x4] sm:$0xf]
  %v2378 = vld [vmem:[%s25 + $0x8] sm:$0xf]
  %v2379 = vld [vmem:[%s25 + $0xc] sm:$0xf]
  %v2380 = vld [vmem:[%s25 + $0x10] sm:$0xf]
  %v2381 = vld [vmem:[%s25 + $0x14] sm:$0xf]
  %v2382 = vld [vmem:[%s25 + $0x18] sm:$0xf]
  %v2383 = vld [vmem:[%s25 + $0x1c] sm:$0xf]
  %v2384 = vld [vmem:[%s25 + $0x20] sm:$0xf]
  %v2385 = vld [vmem:[%s25 + $0x24] sm:$0xf]
  %v2386 = vld [vmem:[%s25 + $0x28] sm:$0xf]
  %v2387 = vld [vmem:[%s25 + $0x2c] sm:$0xf]
  %v2388 = vld [vmem:[%s25 + $0x30] sm:$0xf]
  %v2389 = vld [vmem:[%s25 + $0x34] sm:$0xf]
  %v2390 = vld [vmem:[%s25 + $0x38] sm:$0xf]
  %v2391 = vld [vmem:[%s25 + $0x3c] sm:$0xf]
  %v2392 = vld [vmem:[%s25 + $0x40] sm:$0xf]
  %v2393 = vld [vmem:[%s25 + $0x44] sm:$0xf]
  %v2394 = vld [vmem:[%s25 + $0x48] sm:$0xf]
  %v2395 = vld [vmem:[%s25 + $0x4c] sm:$0xf]
  %v2396 = vld [vmem:[%s25 + $0x50] sm:$0xf]
  %v2397 = vld [vmem:[%s25 + $0x54] sm:$0xf]
  %v2398 = vld [vmem:[%s25 + $0x58] sm:$0xf]
  %v2399 = vld [vmem:[%s25 + $0x5c] sm:$0xf]
  %v2400 = vld [vmem:[%s25 + $0x60] sm:$0xf]
  %v2401 = vld [vmem:[%s25 + $0x64] sm:$0xf]
  %v2402 = vld [vmem:[%s25 + $0x68] sm:$0xf]
  %v2403 = vld [vmem:[%s25 + $0x6c] sm:$0xf]
  %v2404 = vld [vmem:[%s25 + $0x70] sm:$0xf]
  %v2405 = vld [vmem:[%s25 + $0x74] sm:$0xf]
  %v2406 = vld [vmem:[%s25 + $0x78] sm:$0xf]
  %v2407 = vld [vmem:[%s25 + $0x7c] sm:$0xf]
  %v2408 = vld [vmem:[%s25 + $0x80] sm:$0xf]
  %v2409 = vld [vmem:[%s25 + $0x84] sm:$0xf]
  %v2410 = vld [vmem:[%s25 + $0x88] sm:$0xf]
  %v2411 = vld [vmem:[%s25 + $0x8c] sm:$0xf]
  %v2412 = vld [vmem:[%s25 + $0x90] sm:$0xf]
  %v2413 = vld [vmem:[%s25 + $0x94] sm:$0xf]
  %v2414 = vld [vmem:[%s25 + $0x98] sm:$0xf]
  %v2415 = vld [vmem:[%s25 + $0x9c] sm:$0xf]
  %v2416 = vld [vmem:[%s25 + $0xa0] sm:$0xf]
  %v2417 = vld [vmem:[%s25 + $0xa4] sm:$0xf]
  %v2418 = vld [vmem:[%s25 + $0xa8] sm:$0xf]
  %v2419 = vld [vmem:[%s25 + $0xac] sm:$0xf]
  %v2420 = vld [vmem:[%s25 + $0xb0] sm:$0xf]
  %v2421 = vld [vmem:[%s25 + $0xb4] sm:$0xf]
  %v2422 = vld [vmem:[%s25 + $0xb8] sm:$0xf]
  %v2423 = vld [vmem:[%s25 + $0xbc] sm:$0xf]
  %v2424 = vld [vmem:[%s25 + $0xc0] sm:$0xf]
  %v2425 = vld [vmem:[%s25 + $0xc4] sm:$0xf]
  %v2426 = vld [vmem:[%s25 + $0xc8] sm:$0xf]
  %v2427 = vld [vmem:[%s25 + $0xcc] sm:$0xf]
  %v2428 = vld [vmem:[%s25 + $0xd0] sm:$0xf]
  %v2429 = vld [vmem:[%s25 + $0xd4] sm:$0xf]
  %v2430 = vld [vmem:[%s25 + $0xd8] sm:$0xf]
  %v2431 = vld [vmem:[%s25 + $0xdc] sm:$0xf]
  %v2432 = vld [vmem:[%s25 + $0xe0] sm:$0xf]
  %v2433 = vld [vmem:[%s25 + $0xe4] sm:$0xf]
  %v2434 = vld [vmem:[%s25 + $0xe8] sm:$0xf]
  %v2435 = vld [vmem:[%s25 + $0xec] sm:$0xf]
  %v2436 = vld [vmem:[%s25 + $0xf0] sm:$0xf]
  %v2437 = vld [vmem:[%s25 + $0xf4] sm:$0xf]
  %v2438 = vld [vmem:[%s25 + $0xf8] sm:$0xf]
  %v2439 = vld [vmem:[%s25 + $0xfc] sm:$0xf]
  %v2440 = vld [vmem:[%s25 + $0x100] sm:$0xf]
  %v2441 = vld [vmem:[%s25 + $0x104] sm:$0xf]
  %v2442 = vld [vmem:[%s25 + $0x108] sm:$0xf]
  %v2443 = vld [vmem:[%s25 + $0x10c] sm:$0xf]
  %v2444 = vld [vmem:[%s25 + $0x110] sm:$0xf]
  %v2445 = vld [vmem:[%s25 + $0x114] sm:$0xf]
  %v2446 = vld [vmem:[%s25 + $0x118] sm:$0xf]
  %v2447 = vld [vmem:[%s25 + $0x11c] sm:$0xf]
  %v2448 = vpack.c.bf16 %v2369, %v2368
  %v2449 = vpack.c.bf16 %v2371, %v2370
  %v2450 = vpack.c.bf16 %v2373, %v2372
  %v2451 = vpack.c.bf16 %v2375, %v2374
  %v2524 = vunpack.c.l.b16 %v2376
  %v2525 = vunpack.c.l.b16 %v2377
  %v2526 = vunpack.c.l.b16 %v2378
  %v2527 = vunpack.c.l.b16 %v2379
  %v2528 = vunpack.c.l.b16 %v2380
  %v2529 = vunpack.c.l.b16 %v2381
  %v2530 = vunpack.c.l.b16 %v2382
  %v2531 = vunpack.c.l.b16 %v2383
  %v2532 = vunpack.c.l.b16 %v2384
  %v2533 = vunpack.c.l.b16 %v2385
  %v2534 = vunpack.c.l.b16 %v2386
  %v2535 = vunpack.c.l.b16 %v2387
  %v2536 = vunpack.c.l.b16 %v2388
  %v2537 = vunpack.c.l.b16 %v2389
  %v2538 = vunpack.c.l.b16 %v2390
  %v2539 = vunpack.c.l.b16 %v2391
  %v2540 = vunpack.c.l.b16 %v2392
  %v2541 = vunpack.c.l.b16 %v2393
  %v2542 = vunpack.c.l.b16 %v2394
  %v2543 = vunpack.c.l.b16 %v2395
  %v2544 = vunpack.c.l.b16 %v2396
  %v2545 = vunpack.c.l.b16 %v2397
  %v2546 = vunpack.c.l.b16 %v2398
  %v2547 = vunpack.c.l.b16 %v2399
  %v2548 = vunpack.c.l.b16 %v2400
  %v2549 = vunpack.c.l.b16 %v2401
  %v2550 = vunpack.c.l.b16 %v2402
  %v2551 = vunpack.c.l.b16 %v2403
  %v2552 = vunpack.c.l.b16 %v2404
  %v2553 = vunpack.c.l.b16 %v2405
  %v2554 = vunpack.c.l.b16 %v2406
  %v2555 = vunpack.c.l.b16 %v2407
  %v2556 = vunpack.c.l.b16 %v2408
  %v2557 = vunpack.c.l.b16 %v2409
  %v2558 = vunpack.c.l.b16 %v2410
  %v2559 = vunpack.c.l.b16 %v2411
  %v2560 = vunpack.c.l.b16 %v2412
  %v2561 = vunpack.c.l.b16 %v2413
  %v2562 = vunpack.c.l.b16 %v2414
  %v2563 = vunpack.c.l.b16 %v2415
  %v2564 = vunpack.c.l.b16 %v2416
  %v2565 = vunpack.c.l.b16 %v2417
  %v2566 = vunpack.c.l.b16 %v2418
  %v2567 = vunpack.c.l.b16 %v2419
  %v2568 = vunpack.c.l.b16 %v2420
  %v2569 = vunpack.c.l.b16 %v2421
  %v2570 = vunpack.c.l.b16 %v2422
  %v2571 = vunpack.c.l.b16 %v2423
  %v2572 = vunpack.c.l.b16 %v2424
  %v2573 = vunpack.c.l.b16 %v2425
  %v2574 = vunpack.c.l.b16 %v2426
  %v2575 = vunpack.c.l.b16 %v2427
  %v2576 = vunpack.c.l.b16 %v2428
  %v2577 = vunpack.c.l.b16 %v2429
  %v2578 = vunpack.c.l.b16 %v2430
  %v2579 = vunpack.c.l.b16 %v2431
  %v2580 = vunpack.c.l.b16 %v2432
  %v2581 = vunpack.c.l.b16 %v2433
  %v2582 = vunpack.c.l.b16 %v2434
  %v2583 = vunpack.c.l.b16 %v2435
  %v2584 = vunpack.c.l.b16 %v2436
  %v2585 = vunpack.c.l.b16 %v2437
  %v2586 = vunpack.c.l.b16 %v2438
  %v2587 = vunpack.c.l.b16 %v2439
  %v2588 = vunpack.c.l.b16 %v2440
  %v2589 = vunpack.c.l.b16 %v2441
  %v2590 = vunpack.c.l.b16 %v2442
  %v2591 = vunpack.c.l.b16 %v2443
  %v2592 = vunpack.c.l.b16 %v2444
  %v2593 = vunpack.c.l.b16 %v2445
  %v2594 = vunpack.c.l.b16 %v2446
  %v2595 = vunpack.c.l.b16 %v2447
  %v2596 = vpack.c.b16 %v2525, %v2524
  %v2597 = vpack.c.b16 %v2527, %v2526
  %v2598 = vpack.c.b16 %v2529, %v2528
  %v2599 = vpack.c.b16 %v2531, %v2530
  %v2600 = vpack.c.b16 %v2533, %v2532
  %v2601 = vpack.c.b16 %v2535, %v2534
  %v2602 = vpack.c.b16 %v2537, %v2536
  %v2603 = vpack.c.b16 %v2539, %v2538
  %v2604 = vpack.c.b16 %v2541, %v2540
  %v2605 = vpack.c.b16 %v2543, %v2542
  %v2606 = vpack.c.b16 %v2545, %v2544
  %v2607 = vpack.c.b16 %v2547, %v2546
  %v2608 = vpack.c.b16 %v2549, %v2548
  %v2609 = vpack.c.b16 %v2551, %v2550
  %v2610 = vpack.c.b16 %v2553, %v2552
  %v2611 = vpack.c.b16 %v2555, %v2554
  %v2612 = vpack.c.b16 %v2557, %v2556
  %v2613 = vpack.c.b16 %v2559, %v2558
  %v2614 = vpack.c.b16 %v2561, %v2560
  %v2615 = vpack.c.b16 %v2563, %v2562
  %v2616 = vpack.c.b16 %v2565, %v2564
  %v2617 = vpack.c.b16 %v2567, %v2566
  %v2618 = vpack.c.b16 %v2569, %v2568
  %v2619 = vpack.c.b16 %v2571, %v2570
  %v2620 = vpack.c.b16 %v2573, %v2572
  %v2621 = vpack.c.b16 %v2575, %v2574
  %v2622 = vpack.c.b16 %v2577, %v2576
  %v2623 = vpack.c.b16 %v2579, %v2578
  %v2624 = vpack.c.b16 %v2581, %v2580
  %v2625 = vpack.c.b16 %v2583, %v2582
  %v2626 = vpack.c.b16 %v2585, %v2584
  %v2627 = vpack.c.b16 %v2587, %v2586
  %v2628 = vpack.c.b16 %v2589, %v2588
  %v2629 = vpack.c.b16 %v2591, %v2590
  %v2630 = vpack.c.b16 %v2593, %v2592
  %v2631 = vpack.c.b16 %v2595, %v2594
  %2636 = vrot.lane.b32.xlu0 %v2448, 73
  %v2637 = vpop.permute.xlu0 %2636
  %2638 = vrot.lane.b32.xlu0 %v2449, 73
  %v2639 = vpop.permute.xlu0 %2638
  %2640 = vrot.lane.b32.xlu0 %v2450, 73
  %v2641 = vpop.permute.xlu0 %2640
  %2642 = vrot.lane.b32.xlu0 %v2451, 73
  %v2643 = vpop.permute.xlu0 %2642
  %vm2648 = vcmask 523264
  %v2650 = vsel %vm2648, %v2596, 0
  %v2653 = vsel %vm2648, %v2597, 0
  %v2656 = vsel %vm2648, %v2598, 0
  %v2659 = vsel %vm2648, %v2599, 0
  %v2662 = vsel %vm2648, %v2600, 0
  %v2665 = vsel %vm2648, %v2601, 0
  %v2668 = vsel %vm2648, %v2602, 0
  %v2671 = vsel %vm2648, %v2603, 0
  %v2674 = vsel %vm2648, %v2604, 0
  %v2677 = vsel %vm2648, %v2605, 0
  %v2680 = vsel %vm2648, %v2606, 0
  %v2683 = vsel %vm2648, %v2607, 0
  %v2686 = vsel %vm2648, %v2608, 0
  %v2689 = vsel %vm2648, %v2609, 0
  %v2692 = vsel %vm2648, %v2610, 0
  %v2695 = vsel %vm2648, %v2611, 0
  %v2698 = vsel %vm2648, %v2612, 0
  %v2701 = vsel %vm2648, %v2613, 0
  %v2704 = vsel %vm2648, %v2614, 0
  %v2707 = vsel %vm2648, %v2615, 0
  %v2710 = vsel %vm2648, %v2616, 0
  %v2713 = vsel %vm2648, %v2617, 0
  %v2716 = vsel %vm2648, %v2618, 0
  %v2719 = vsel %vm2648, %v2619, 0
  %v2722 = vsel %vm2648, %v2620, 0
  %v2725 = vsel %vm2648, %v2621, 0
  %v2728 = vsel %vm2648, %v2622, 0
  %v2731 = vsel %vm2648, %v2623, 0
  %v2734 = vsel %vm2648, %v2624, 0
  %v2737 = vsel %vm2648, %v2625, 0
  %v2740 = vsel %vm2648, %v2626, 0
  %v2743 = vsel %vm2648, %v2627, 0
  %v2746 = vsel %vm2648, %v2628, 0
  %v2749 = vsel %vm2648, %v2629, 0
  %v2752 = vsel %vm2648, %v2630, 0
  %v2755 = vsel %vm2648, %v2631, 0
  %2757 = vmatprep.subr.bf16.mxu0 0
  %2758 = vmatpush1.bf16.msra.mxu0 %v2637
  %2759 = vmatprep.subr.bf16.mxu0 0
  %2760 = vmatpush1.bf16.msra.mxu0 %v2639
  %2761 = vmatprep.subr.bf16.mxu0 0
  %2762 = vmatpush1.bf16.msra.mxu0 %v2641
  %2763 = vmatprep.subr.bf16.mxu0 0
  %2764 = vmatpush1.bf16.msra.mxu0 %v2643
  %2765 = vmatprep.subr.bf16.mxu0 0
  %2766 = vmatpush1.bf16.msra.mxu0 0
  %2767 = vmatprep.subr.bf16.mxu0 0
  %2768 = vmatpush1.bf16.msra.mxu0 0
  %2769 = vmatprep.subr.bf16.mxu0 0
  %2770 = vmatpush1.bf16.msra.mxu0 0
  %2771 = vmatprep.subr.bf16.mxu0 0
  %2772 = vmatpush1.bf16.msra.mxu0 0
  %2773 = vmatprep.subr.bf16.mxu0 0
  %2774 = vmatpush1.bf16.msra.mxu0 0
  %2775 = vmatprep.subr.bf16.mxu0 0
  %2776 = vmatpush1.bf16.msra.mxu0 0
  %2777 = vmatprep.subr.bf16.mxu0 0
  %2778 = vmatpush1.bf16.msra.mxu0 0
  %2779 = vmatprep.subr.bf16.mxu0 0
  %2780 = vmatpush1.bf16.msra.mxu0 0
  %2781 = vmatprep.subr.bf16.mxu0 0
  %2782 = vmatpush1.bf16.msra.mxu0 0
  %2783 = vmatprep.subr.bf16.mxu0 0
  %2784 = vmatpush1.bf16.msra.mxu0 0
  %2785 = vmatprep.subr.bf16.mxu0 0
  %2786 = vmatpush1.bf16.msra.mxu0 0
  %2787 = vmatprep.subr.bf16.mxu0 0
  %2788 = vmatpush1.bf16.msra.mxu0 0
  %2789 = vmatprep.mubr.bf16.mxu0 0
  %2790 = vmatmul.mubr.bf16.gmra.mrb[0].mxu0 %v2650
  %v2791 = vpop.f32.mrb[0].mxu0
  %v2792 = vadd.f32 0.0, %v2791
  %v2793 = vpop.f32.mrb[0].mxu0
  %v2794 = vpop.f32.mrb[0].mxu0
  %v2795 = vadd.f32 0.0, %v2794
  %v2796 = vpop.f32.mrb[0].mxu0
  %2797 = vmatprep.mubr.bf16.mxu0 0
  %2798 = vmatmul.mubr.bf16.gmra.mrb[0].mxu0 %v2653
  %v2799 = vpop.f32.mrb[0].mxu0
  %v2800 = vadd.f32 0.0, %v2799
  %v2801 = vpop.f32.mrb[0].mxu0
  %v2802 = vpop.f32.mrb[0].mxu0
  %v2803 = vadd.f32 0.0, %v2802
  %v2804 = vpop.f32.mrb[0].mxu0
  %2805 = vmatprep.mubr.bf16.mxu0 0
  %2806 = vmatmul.mubr.bf16.gmra.mrb[0].mxu0 %v2656
  %v2807 = vpop.f32.mrb[0].mxu0
  %v2808 = vadd.f32 0.0, %v2807
  %v2809 = vpop.f32.mrb[0].mxu0
  %v2810 = vpop.f32.mrb[0].mxu0
  %v2811 = vadd.f32 0.0, %v2810
  %v2812 = vpop.f32.mrb[0].mxu0
  %2813 = vmatprep.mubr.bf16.mxu0 0
  %2814 = vmatmul.mubr.bf16.gmra.mrb[0].mxu0 %v2659
  %v2815 = vpop.f32.mrb[0].mxu0
  %v2816 = vadd.f32 0.0, %v2815
  %v2817 = vpop.f32.mrb[0].mxu0
  %v2818 = vpop.f32.mrb[0].mxu0
  %v2819 = vadd.f32 0.0, %v2818
  %v2820 = vpop.f32.mrb[0].mxu0
  %2821 = vmatprep.mubr.bf16.mxu0 0
  %2822 = vmatmul.mubr.bf16.gmra.mrb[0].mxu0 %v2662
  %v2823 = vpop.f32.mrb[0].mxu0
  %v2824 = vadd.f32 0.0, %v2823
  %v2825 = vpop.f32.mrb[0].mxu0
  %v2826 = vpop.f32.mrb[0].mxu0
  %v2827 = vadd.f32 0.0, %v2826
  %v2828 = vpop.f32.mrb[0].mxu0
  %2829 = vmatprep.mubr.bf16.mxu0 0
  %2830 = vmatmul.mubr.bf16.gmra.mrb[0].mxu0 %v2665
  %v2831 = vpop.f32.mrb[0].mxu0
  %v2832 = vadd.f32 0.0, %v2831
  %v2833 = vpop.f32.mrb[0].mxu0
  %v2834 = vpop.f32.mrb[0].mxu0
  %v2835 = vadd.f32 0.0, %v2834
  %v2836 = vpop.f32.mrb[0].mxu0
  %2837 = vmatprep.mubr.bf16.mxu0 0
  %2838 = vmatmul.mubr.bf16.gmra.mrb[0].mxu0 %v2668
  %v2839 = vpop.f32.mrb[0].mxu0
  %v2840 = vadd.f32 0.0, %v2839
  %v2841 = vpop.f32.mrb[0].mxu0
  %v2842 = vpop.f32.mrb[0].mxu0
  %v2843 = vadd.f32 0.0, %v2842
  %v2844 = vpop.f32.mrb[0].mxu0
  %2845 = vmatprep.mubr.bf16.mxu0 0
  %2846 = vmatmul.mubr.bf16.gmra.mrb[0].mxu0 %v2671
  %v2847 = vpop.f32.mrb[0].mxu0
  %v2848 = vadd.f32 0.0, %v2847
  %v2849 = vpop.f32.mrb[0].mxu0
  %v2850 = vpop.f32.mrb[0].mxu0
  %v2851 = vadd.f32 0.0, %v2850
  %v2852 = vpop.f32.mrb[0].mxu0
  %2853 = vmatprep.mubr.bf16.mxu0 0
  %2854 = vmatmul.mubr.bf16.gmra.mrb[0].mxu0 %v2674
  %v2855 = vpop.f32.mrb[0].mxu0
  %v2856 = vadd.f32 0.0, %v2855
  %v2857 = vpop.f32.mrb[0].mxu0
  %v2858 = vpop.f32.mrb[0].mxu0
  %v2859 = vadd.f32 0.0, %v2858
  %v2860 = vpop.f32.mrb[0].mxu0
  %2861 = vmatprep.mubr.bf16.mxu0 0
  %2862 = vmatmul.mubr.bf16.gmra.mrb[0].mxu0 %v2677
  %v2863 = vpop.f32.mrb[0].mxu0
  %v2864 = vadd.f32 0.0, %v2863
  %v2865 = vpop.f32.mrb[0].mxu0
  %v2866 = vpop.f32.mrb[0].mxu0
  %v2867 = vadd.f32 0.0, %v2866
  %v2868 = vpop.f32.mrb[0].mxu0
  %2869 = vmatprep.mubr.bf16.mxu0 0
  %2870 = vmatmul.mubr.bf16.gmra.mrb[0].mxu0 %v2680
  %v2871 = vpop.f32.mrb[0].mxu0
  %v2872 = vadd.f32 0.0, %v2871
  %v2873 = vpop.f32.mrb[0].mxu0
  %v2874 = vpop.f32.mrb[0].mxu0
  %v2875 = vadd.f32 0.0, %v2874
  %v2876 = vpop.f32.mrb[0].mxu0
  %2877 = vmatprep.mubr.bf16.mxu0 0
  %2878 = vmatmul.mubr.bf16.gmra.mrb[0].mxu0 %v2683
  %v2879 = vpop.f32.mrb[0].mxu0
  %v2880 = vadd.f32 0.0, %v2879
  %v2881 = vpop.f32.mrb[0].mxu0
  %v2882 = vpop.f32.mrb[0].mxu0
  %v2883 = vadd.f32 0.0, %v2882
  %v2884 = vpop.f32.mrb[0].mxu0
  %2885 = vmatprep.mubr.bf16.mxu0 0
  %2886 = vmatmul.mubr.bf16.gmra.mrb[0].mxu0 %v2686
  %v2887 = vpop.f32.mrb[0].mxu0
  %v2888 = vadd.f32 0.0, %v2887
  %v2889 = vpop.f32.mrb[0].mxu0
  %v2890 = vpop.f32.mrb[0].mxu0
  %v2891 = vadd.f32 0.0, %v2890
  %v2892 = vpop.f32.mrb[0].mxu0
  %2893 = vmatprep.mubr.bf16.mxu0 0
  %2894 = vmatmul.mubr.bf16.gmra.mrb[0].mxu0 %v2689
  %v2895 = vpop.f32.mrb[0].mxu0
  %v2896 = vadd.f32 0.0, %v2895
  %v2897 = vpop.f32.mrb[0].mxu0
  %v2898 = vpop.f32.mrb[0].mxu0
  %v2899 = vadd.f32 0.0, %v2898
  %v2900 = vpop.f32.mrb[0].mxu0
  %2901 = vmatprep.mubr.bf16.mxu0 0
  %2902 = vmatmul.mubr.bf16.gmra.mrb[0].mxu0 %v2692
  %v2903 = vpop.f32.mrb[0].mxu0
  %v2904 = vadd.f32 0.0, %v2903
  %v2905 = vpop.f32.mrb[0].mxu0
  %v2906 = vpop.f32.mrb[0].mxu0
  %v2907 = vadd.f32 0.0, %v2906
  %v2908 = vpop.f32.mrb[0].mxu0
  %2909 = vmatprep.mubr.bf16.mxu0 0
  %2910 = vmatmul.mubr.bf16.gmra.mrb[0].mxu0 %v2695
  %v2911 = vpop.f32.mrb[0].mxu0
  %v2912 = vadd.f32 0.0, %v2911
  %v2913 = vpop.f32.mrb[0].mxu0
  %v2914 = vpop.f32.mrb[0].mxu0
  %v2915 = vadd.f32 0.0, %v2914
  %v2916 = vpop.f32.mrb[0].mxu0
  %2917 = vmatprep.mubr.bf16.mxu0 0
  %2918 = vmatmul.mubr.bf16.gmra.mrb[0].mxu0 %v2698
  %v2919 = vpop.f32.mrb[0].mxu0
  %v2920 = vadd.f32 0.0, %v2919
  %v2921 = vpop.f32.mrb[0].mxu0
  %v2922 = vpop.f32.mrb[0].mxu0
  %v2923 = vadd.f32 0.0, %v2922
  %v2924 = vpop.f32.mrb[0].mxu0
  %2925 = vmatprep.mubr.bf16.mxu0 0
  %2926 = vmatmul.mubr.bf16.gmra.mrb[0].mxu0 %v2701
  %v2927 = vpop.f32.mrb[0].mxu0
  %v2928 = vadd.f32 0.0, %v2927
  %v2929 = vpop.f32.mrb[0].mxu0
  %v2930 = vpop.f32.mrb[0].mxu0
  %v2931 = vadd.f32 0.0, %v2930
  %v2932 = vpop.f32.mrb[0].mxu0
  %2933 = vmatprep.mubr.bf16.mxu0 0
  %2934 = vmatmul.mubr.bf16.gmra.mrb[0].mxu0 %v2704
  %v2935 = vpop.f32.mrb[0].mxu0
  %v2936 = vadd.f32 0.0, %v2935
  %v2937 = vpop.f32.mrb[0].mxu0
  %v2938 = vpop.f32.mrb[0].mxu0
  %v2939 = vadd.f32 0.0, %v2938
  %v2940 = vpop.f32.mrb[0].mxu0
  %2941 = vmatprep.mubr.bf16.mxu0 0
  %2942 = vmatmul.mubr.bf16.gmra.mrb[0].mxu0 %v2707
  %v2943 = vpop.f32.mrb[0].mxu0
  %v2944 = vadd.f32 0.0, %v2943
  %v2945 = vpop.f32.mrb[0].mxu0
  %v2946 = vpop.f32.mrb[0].mxu0
  %v2947 = vadd.f32 0.0, %v2946
  %v2948 = vpop.f32.mrb[0].mxu0
  %2949 = vmatprep.mubr.bf16.mxu0 0
  %2950 = vmatmul.mubr.bf16.gmra.mrb[0].mxu0 %v2710
  %v2951 = vpop.f32.mrb[0].mxu0
  %v2952 = vadd.f32 0.0, %v2951
  %v2953 = vpop.f32.mrb[0].mxu0
  %v2954 = vpop.f32.mrb[0].mxu0
  %v2955 = vadd.f32 0.0, %v2954
  %v2956 = vpop.f32.mrb[0].mxu0
  %2957 = vmatprep.mubr.bf16.mxu0 0
  %2958 = vmatmul.mubr.bf16.gmra.mrb[0].mxu0 %v2713
  %v2959 = vpop.f32.mrb[0].mxu0
  %v2960 = vadd.f32 0.0, %v2959
  %v2961 = vpop.f32.mrb[0].mxu0
  %v2962 = vpop.f32.mrb[0].mxu0
  %v2963 = vadd.f32 0.0, %v2962
  %v2964 = vpop.f32.mrb[0].mxu0
  %2965 = vmatprep.mubr.bf16.mxu0 0
  %2966 = vmatmul.mubr.bf16.gmra.mrb[0].mxu0 %v2716
  %v2967 = vpop.f32.mrb[0].mxu0
  %v2968 = vadd.f32 0.0, %v2967
  %v2969 = vpop.f32.mrb[0].mxu0
  %v2970 = vpop.f32.mrb[0].mxu0
  %v2971 = vadd.f32 0.0, %v2970
  %v2972 = vpop.f32.mrb[0].mxu0
  %2973 = vmatprep.mubr.bf16.mxu0 0
  %2974 = vmatmul.mubr.bf16.gmra.mrb[0].mxu0 %v2719
  %v2975 = vpop.f32.mrb[0].mxu0
  %v2976 = vadd.f32 0.0, %v2975
  %v2977 = vpop.f32.mrb[0].mxu0
  %v2978 = vpop.f32.mrb[0].mxu0
  %v2979 = vadd.f32 0.0, %v2978
  %v2980 = vpop.f32.mrb[0].mxu0
  %2981 = vmatprep.mubr.bf16.mxu0 0
  %2982 = vmatmul.mubr.bf16.gmra.mrb[0].mxu0 %v2722
  %v2983 = vpop.f32.mrb[0].mxu0
  %v2984 = vadd.f32 0.0, %v2983
  %v2985 = vpop.f32.mrb[0].mxu0
  %v2986 = vpop.f32.mrb[0].mxu0
  %v2987 = vadd.f32 0.0, %v2986
  %v2988 = vpop.f32.mrb[0].mxu0
  %2989 = vmatprep.mubr.bf16.mxu0 0
  %2990 = vmatmul.mubr.bf16.gmra.mrb[0].mxu0 %v2725
  %v2991 = vpop.f32.mrb[0].mxu0
  %v2992 = vadd.f32 0.0, %v2991
  %v2993 = vpop.f32.mrb[0].mxu0
  %v2994 = vpop.f32.mrb[0].mxu0
  %v2995 = vadd.f32 0.0, %v2994
  %v2996 = vpop.f32.mrb[0].mxu0
  %2997 = vmatprep.mubr.bf16.mxu0 0
  %2998 = vmatmul.mubr.bf16.gmra.mrb[0].mxu0 %v2728
  %v2999 = vpop.f32.mrb[0].mxu0
  %v3000 = vadd.f32 0.0, %v2999
  %v3001 = vpop.f32.mrb[0].mxu0
  %v3002 = vpop.f32.mrb[0].mxu0
  %v3003 = vadd.f32 0.0, %v3002
  %v3004 = vpop.f32.mrb[0].mxu0
  %3005 = vmatprep.mubr.bf16.mxu0 0
  %3006 = vmatmul.mubr.bf16.gmra.mrb[0].mxu0 %v2731
  %v3007 = vpop.f32.mrb[0].mxu0
  %v3008 = vadd.f32 0.0, %v3007
  %v3009 = vpop.f32.mrb[0].mxu0
  %v3010 = vpop.f32.mrb[0].mxu0
  %v3011 = vadd.f32 0.0, %v3010
  %v3012 = vpop.f32.mrb[0].mxu0
  %3013 = vmatprep.mubr.bf16.mxu0 0
  %3014 = vmatmul.mubr.bf16.gmra.mrb[0].mxu0 %v2734
  %v3015 = vpop.f32.mrb[0].mxu0
  %v3016 = vadd.f32 0.0, %v3015
  %v3017 = vpop.f32.mrb[0].mxu0
  %v3018 = vpop.f32.mrb[0].mxu0
  %v3019 = vadd.f32 0.0, %v3018
  %v3020 = vpop.f32.mrb[0].mxu0
  %3021 = vmatprep.mubr.bf16.mxu0 0
  %3022 = vmatmul.mubr.bf16.gmra.mrb[0].mxu0 %v2737
  %v3023 = vpop.f32.mrb[0].mxu0
  %v3024 = vadd.f32 0.0, %v3023
  %v3025 = vpop.f32.mrb[0].mxu0
  %v3026 = vpop.f32.mrb[0].mxu0
  %v3027 = vadd.f32 0.0, %v3026
  %v3028 = vpop.f32.mrb[0].mxu0
  %3029 = vmatprep.mubr.bf16.mxu0 0
  %3030 = vmatmul.mubr.bf16.gmra.mrb[0].mxu0 %v2740
  %v3031 = vpop.f32.mrb[0].mxu0
  %v3032 = vadd.f32 0.0, %v3031
  %v3033 = vpop.f32.mrb[0].mxu0
  %v3034 = vpop.f32.mrb[0].mxu0
  %v3035 = vadd.f32 0.0, %v3034
  %v3036 = vpop.f32.mrb[0].mxu0
  %3037 = vmatprep.mubr.bf16.mxu0 0
  %3038 = vmatmul.mubr.bf16.gmra.mrb[0].mxu0 %v2743
  %v3039 = vpop.f32.mrb[0].mxu0
  %v3040 = vadd.f32 0.0, %v3039
  %v3041 = vpop.f32.mrb[0].mxu0
  %v3042 = vpop.f32.mrb[0].mxu0
  %v3043 = vadd.f32 0.0, %v3042
  %v3044 = vpop.f32.mrb[0].mxu0
  %3045 = vmatprep.mubr.bf16.mxu0 0
  %3046 = vmatmul.mubr.bf16.gmra.mrb[0].mxu0 %v2746
  %v3047 = vpop.f32.mrb[0].mxu0
  %v3048 = vadd.f32 0.0, %v3047
  %v3049 = vpop.f32.mrb[0].mxu0
  %v3050 = vpop.f32.mrb[0].mxu0
  %v3051 = vadd.f32 0.0, %v3050
  %v3052 = vpop.f32.mrb[0].mxu0
  %3053 = vmatprep.mubr.bf16.mxu0 0
  %3054 = vmatmul.mubr.bf16.gmra.mrb[0].mxu0 %v2749
  %v3055 = vpop.f32.mrb[0].mxu0
  %v3056 = vadd.f32 0.0, %v3055
  %v3057 = vpop.f32.mrb[0].mxu0
  %v3058 = vpop.f32.mrb[0].mxu0
  %v3059 = vadd.f32 0.0, %v3058
  %v3060 = vpop.f32.mrb[0].mxu0
  %3061 = vmatprep.mubr.bf16.mxu0 0
  %3062 = vmatmul.mubr.bf16.gmra.mrb[0].mxu0 %v2752
  %v3063 = vpop.f32.mrb[0].mxu0
  %v3064 = vadd.f32 0.0, %v3063
  %v3065 = vpop.f32.mrb[0].mxu0
  %v3066 = vpop.f32.mrb[0].mxu0
  %v3067 = vadd.f32 0.0, %v3066
  %v3068 = vpop.f32.mrb[0].mxu0
  %3069 = vmatprep.mubr.bf16.mxu0 0
  %3070 = vmatmul.mubr.bf16.gmra.mrb[0].mxu0 %v2755
  %v3071 = vpop.f32.mrb[0].mxu0
  %v3072 = vadd.f32 0.0, %v3071
  %v3073 = vpop.f32.mrb[0].mxu0
  %v3074 = vpop.f32.mrb[0].mxu0
  %v3075 = vadd.f32 0.0, %v3074
  %v3076 = vpop.f32.mrb[0].mxu0
  %3077 = vdwg.mxu0
  %v3078 = vld [vmem:[%s27] sm:$0xff]
  %v3079 = vld [vmem:[%s27 + $0x8] sm:$0xff]
  %v3080 = vld [vmem:[%s27 + $0x10] sm:$0xff]
  %v3081 = vld [vmem:[%s27 + $0x18] sm:$0xff]
  %v3082 = vld [vmem:[%s27 + $0x20] sm:$0xff]
  %v3083 = vld [vmem:[%s27 + $0x28] sm:$0xff]
  %v3084 = vld [vmem:[%s27 + $0x30] sm:$0xff]
  %v3085 = vld [vmem:[%s27 + $0x38] sm:$0xff]
  %3086 = vrot.lane.b32.xlu0 %v2792, 64
  %v3087 = vpop.permute.xlu0 %3086
  %v3088 = vsel %vm1473, %v3087, %v2792
  %3089 = vrot.lane.b32.xlu0 %v2795, 64
  %v3090 = vpop.permute.xlu0 %3089
  %v3091 = vsel %vm1473, %v3090, %v2795
  %3092 = vrot.lane.b32.xlu0 %v2800, 64
  %v3093 = vpop.permute.xlu0 %3092
  %v3094 = vsel %vm1473, %v3093, %v2800
  %3095 = vrot.lane.b32.xlu0 %v2803, 64
  %v3096 = vpop.permute.xlu0 %3095
  %v3097 = vsel %vm1473, %v3096, %v2803
  %3098 = vrot.lane.b32.xlu0 %v2808, 64
  %v3099 = vpop.permute.xlu0 %3098
  %v3100 = vsel %vm1473, %v3099, %v2808
  %3101 = vrot.lane.b32.xlu0 %v2811, 64
  %v3102 = vpop.permute.xlu0 %3101
  %v3103 = vsel %vm1473, %v3102, %v2811
  %3104 = vrot.lane.b32.xlu0 %v2816, 64
  %v3105 = vpop.permute.xlu0 %3104
  %v3106 = vsel %vm1473, %v3105, %v2816
  %3107 = vrot.lane.b32.xlu0 %v2819, 64
  %v3108 = vpop.permute.xlu0 %3107
  %v3109 = vsel %vm1473, %v3108, %v2819
  %3110 = vrot.lane.b32.xlu0 %v3088, 64
  %v3111 = vpop.permute.xlu0 %3110
  %3112 = vrot.lane.b32.xlu0 %v3091, 64
  %v3113 = vpop.permute.xlu0 %3112
  %3114 = vrot.lane.b32.xlu0 %v3094, 64
  %v3115 = vpop.permute.xlu0 %3114
  %3116 = vrot.lane.b32.xlu0 %v3097, 64
  %v3117 = vpop.permute.xlu0 %3116
  %3118 = vrot.lane.b32.xlu0 %v3100, 64
  %v3119 = vpop.permute.xlu0 %3118
  %3120 = vrot.lane.b32.xlu0 %v3103, 64
  %v3121 = vpop.permute.xlu0 %3120
  %3122 = vrot.lane.b32.xlu0 %v3106, 64
  %v3123 = vpop.permute.xlu0 %3122
  %3124 = vrot.lane.b32.xlu0 %v3109, 64
  %v3125 = vpop.permute.xlu0 %3124
  %v3126 = vsel %vm1473, %v3111, %v2792
  %v3127 = vsel %vm1473, %v3113, %v2795
  %v3128 = vsel %vm1473, %v3115, %v2800
  %v3129 = vsel %vm1473, %v3117, %v2803
  %v3130 = vsel %vm1473, %v3119, %v2808
  %v3131 = vsel %vm1473, %v3121, %v2811
  %v3132 = vsel %vm1473, %v3123, %v2816
  %v3133 = vsel %vm1473, %v3125, %v2819
  %v3134 = vmul.f32 %v3126, %v1528
  %v3135 = vmul.f32 %v3127, %v1528
  %v3136 = vmul.f32 %v3128, %v1528
  %v3137 = vmul.f32 %v3129, %v1528
  %v3138 = vmul.f32 %v3130, %v1528
  %v3139 = vmul.f32 %v3131, %v1528
  %v3140 = vmul.f32 %v3132, %v1528
  %v3141 = vmul.f32 %v3133, %v1528
  %3143 = vset.pattern.permute.xlu0 0
  %3144 = vperm.xlu0 %3143, %v3078
  %v3145 = vpop.permute.xlu0 %3144
  %3148 = vset.pattern.permute.xlu0 0
  %3149 = vperm.xlu0 %3148, %v3079
  %v3150 = vpop.permute.xlu0 %3149
  %3153 = vset.pattern.permute.xlu0 0
  %3154 = vperm.xlu0 %3153, %v3080
  %v3155 = vpop.permute.xlu0 %3154
  %3158 = vset.pattern.permute.xlu0 0
  %3159 = vperm.xlu0 %3158, %v3081
  %v3160 = vpop.permute.xlu0 %3159
  %3163 = vset.pattern.permute.xlu0 0
  %3164 = vperm.xlu0 %3163, %v3082
  %v3165 = vpop.permute.xlu0 %3164
  %3168 = vset.pattern.permute.xlu0 0
  %3169 = vperm.xlu0 %3168, %v3083
  %v3170 = vpop.permute.xlu0 %3169
  %3173 = vset.pattern.permute.xlu0 0
  %3174 = vperm.xlu0 %3173, %v3084
  %v3175 = vpop.permute.xlu0 %3174
  %3178 = vset.pattern.permute.xlu0 0
  %3179 = vperm.xlu0 %3178, %v3085
  %v3180 = vpop.permute.xlu0 %3179
  %v3182 = vadd.f32 %v3145, %v3134
  %v3183 = vadd.f32 %v3150, %v3135
  %v3184 = vadd.f32 %v3155, %v3136
  %v3185 = vadd.f32 %v3160, %v3137
  %v3186 = vadd.f32 %v3165, %v3138
  %v3187 = vadd.f32 %v3170, %v3139
  %v3188 = vadd.f32 %v3175, %v3140
  %v3189 = vadd.f32 %v3180, %v3141
  %3190 = vrot.lane.b32.xlu0 %v2824, 64
  %v3191 = vpop.permute.xlu0 %3190
  %v3192 = vsel %vm1473, %v3191, %v2824
  %3193 = vrot.lane.b32.xlu0 %v2827, 64
  %v3194 = vpop.permute.xlu0 %3193
  %v3195 = vsel %vm1473, %v3194, %v2827
  %3196 = vrot.lane.b32.xlu0 %v2832, 64
  %v3197 = vpop.permute.xlu0 %3196
  %v3198 = vsel %vm1473, %v3197, %v2832
  %3199 = vrot.lane.b32.xlu0 %v2835, 64
  %v3200 = vpop.permute.xlu0 %3199
  %v3201 = vsel %vm1473, %v3200, %v2835
  %3202 = vrot.lane.b32.xlu0 %v2840, 64
  %v3203 = vpop.permute.xlu0 %3202
  %v3204 = vsel %vm1473, %v3203, %v2840
  %3205 = vrot.lane.b32.xlu0 %v2843, 64
  %v3206 = vpop.permute.xlu0 %3205
  %v3207 = vsel %vm1473, %v3206, %v2843
  %3208 = vrot.lane.b32.xlu0 %v2848, 64
  %v3209 = vpop.permute.xlu0 %3208
  %v3210 = vsel %vm1473, %v3209, %v2848
  %3211 = vrot.lane.b32.xlu0 %v2851, 64
  %v3212 = vpop.permute.xlu0 %3211
  %v3213 = vsel %vm1473, %v3212, %v2851
  %3214 = vrot.lane.b32.xlu0 %v3192, 64
  %v3215 = vpop.permute.xlu0 %3214
  %3216 = vrot.lane.b32.xlu0 %v3195, 64
  %v3217 = vpop.permute.xlu0 %3216
  %3218 = vrot.lane.b32.xlu0 %v3198, 64
  %v3219 = vpop.permute.xlu0 %3218
  %3220 = vrot.lane.b32.xlu0 %v3201, 64
  %v3221 = vpop.permute.xlu0 %3220
  %3222 = vrot.lane.b32.xlu0 %v3204, 64
  %v3223 = vpop.permute.xlu0 %3222
  %3224 = vrot.lane.b32.xlu0 %v3207, 64
  %v3225 = vpop.permute.xlu0 %3224
  %3226 = vrot.lane.b32.xlu0 %v3210, 64
  %v3227 = vpop.permute.xlu0 %3226
  %3228 = vrot.lane.b32.xlu0 %v3213, 64
  %v3229 = vpop.permute.xlu0 %3228
  %v3230 = vsel %vm1473, %v3215, %v2824
  %v3231 = vsel %vm1473, %v3217, %v2827
  %v3232 = vsel %vm1473, %v3219, %v2832
  %v3233 = vsel %vm1473, %v3221, %v2835
  %v3234 = vsel %vm1473, %v3223, %v2840
  %v3235 = vsel %vm1473, %v3225, %v2843
  %v3236 = vsel %vm1473, %v3227, %v2848
  %v3237 = vsel %vm1473, %v3229, %v2851
  %v3238 = vmul.f32 %v3230, %v1640
  %v3239 = vmul.f32 %v3231, %v1640
  %v3240 = vmul.f32 %v3232, %v1640
  %v3241 = vmul.f32 %v3233, %v1640
  %v3242 = vmul.f32 %v3234, %v1640
  %v3243 = vmul.f32 %v3235, %v1640
  %v3244 = vmul.f32 %v3236, %v1640
  %v3245 = vmul.f32 %v3237, %v1640
  %3254 = vrot.lane.b32.xlu0 %v3238, 127
  %v3255 = vpop.permute.xlu0 %3254
  %3256 = vrot.lane.b32.xlu0 %v3239, 127
  %v3257 = vpop.permute.xlu0 %3256
  %3258 = vrot.lane.b32.xlu0 %v3240, 127
  %v3259 = vpop.permute.xlu0 %3258
  %3260 = vrot.lane.b32.xlu0 %v3241, 127
  %v3261 = vpop.permute.xlu0 %3260
  %3262 = vrot.lane.b32.xlu0 %v3242, 127
  %v3263 = vpop.permute.xlu0 %3262
  %3264 = vrot.lane.b32.xlu0 %v3243, 127
  %v3265 = vpop.permute.xlu0 %3264
  %3266 = vrot.lane.b32.xlu0 %v3244, 127
  %v3267 = vpop.permute.xlu0 %3266
  %3268 = vrot.lane.b32.xlu0 %v3245, 127
  %v3269 = vpop.permute.xlu0 %3268
  %v3278 = vadd.f32 %v3182, %v3255
  %v3279 = vadd.f32 %v3183, %v3257
  %v3280 = vadd.f32 %v3184, %v3259
  %v3281 = vadd.f32 %v3185, %v3261
  %v3282 = vadd.f32 %v3186, %v3263
  %v3283 = vadd.f32 %v3187, %v3265
  %v3284 = vadd.f32 %v3188, %v3267
  %v3285 = vadd.f32 %v3189, %v3269
  %3286 = vrot.lane.b32.xlu0 %v2856, 64
  %v3287 = vpop.permute.xlu0 %3286
  %v3288 = vsel %vm1473, %v3287, %v2856
  %3289 = vrot.lane.b32.xlu0 %v2859, 64
  %v3290 = vpop.permute.xlu0 %3289
  %v3291 = vsel %vm1473, %v3290, %v2859
  %3292 = vrot.lane.b32.xlu0 %v2864, 64
  %v3293 = vpop.permute.xlu0 %3292
  %v3294 = vsel %vm1473, %v3293, %v2864
  %3295 = vrot.lane.b32.xlu0 %v2867, 64
  %v3296 = vpop.permute.xlu0 %3295
  %v3297 = vsel %vm1473, %v3296, %v2867
  %3298 = vrot.lane.b32.xlu0 %v2872, 64
  %v3299 = vpop.permute.xlu0 %3298
  %v3300 = vsel %vm1473, %v3299, %v2872
  %3301 = vrot.lane.b32.xlu0 %v2875, 64
  %v3302 = vpop.permute.xlu0 %3301
  %v3303 = vsel %vm1473, %v3302, %v2875
  %3304 = vrot.lane.b32.xlu0 %v2880, 64
  %v3305 = vpop.permute.xlu0 %3304
  %v3306 = vsel %vm1473, %v3305, %v2880
  %3307 = vrot.lane.b32.xlu0 %v2883, 64
  %v3308 = vpop.permute.xlu0 %3307
  %v3309 = vsel %vm1473, %v3308, %v2883
  %3310 = vrot.lane.b32.xlu0 %v3288, 64
  %v3311 = vpop.permute.xlu0 %3310
  %3312 = vrot.lane.b32.xlu0 %v3291, 64
  %v3313 = vpop.permute.xlu0 %3312
  %3314 = vrot.lane.b32.xlu0 %v3294, 64
  %v3315 = vpop.permute.xlu0 %3314
  %3316 = vrot.lane.b32.xlu0 %v3297, 64
  %v3317 = vpop.permute.xlu0 %3316
  %3318 = vrot.lane.b32.xlu0 %v3300, 64
  %v3319 = vpop.permute.xlu0 %3318
  %3320 = vrot.lane.b32.xlu0 %v3303, 64
  %v3321 = vpop.permute.xlu0 %3320
  %3322 = vrot.lane.b32.xlu0 %v3306, 64
  %v3323 = vpop.permute.xlu0 %3322
  %3324 = vrot.lane.b32.xlu0 %v3309, 64
  %v3325 = vpop.permute.xlu0 %3324
  %v3326 = vsel %vm1473, %v3311, %v2856
  %v3327 = vsel %vm1473, %v3313, %v2859
  %v3328 = vsel %vm1473, %v3315, %v2864
  %v3329 = vsel %vm1473, %v3317, %v2867
  %v3330 = vsel %vm1473, %v3319, %v2872
  %v3331 = vsel %vm1473, %v3321, %v2875
  %v3332 = vsel %vm1473, %v3323, %v2880
  %v3333 = vsel %vm1473, %v3325, %v2883
  %v3334 = vmul.f32 %v3326, %v1744
  %v3335 = vmul.f32 %v3327, %v1744
  %v3336 = vmul.f32 %v3328, %v1744
  %v3337 = vmul.f32 %v3329, %v1744
  %v3338 = vmul.f32 %v3330, %v1744
  %v3339 = vmul.f32 %v3331, %v1744
  %v3340 = vmul.f32 %v3332, %v1744
  %v3341 = vmul.f32 %v3333, %v1744
  %3350 = vrot.lane.b32.xlu0 %v3334, 126
  %v3351 = vpop.permute.xlu0 %3350
  %3352 = vrot.lane.b32.xlu0 %v3335, 126
  %v3353 = vpop.permute.xlu0 %3352
  %3354 = vrot.lane.b32.xlu0 %v3336, 126
  %v3355 = vpop.permute.xlu0 %3354
  %3356 = vrot.lane.b32.xlu0 %v3337, 126
  %v3357 = vpop.permute.xlu0 %3356
  %3358 = vrot.lane.b32.xlu0 %v3338, 126
  %v3359 = vpop.permute.xlu0 %3358
  %3360 = vrot.lane.b32.xlu0 %v3339, 126
  %v3361 = vpop.permute.xlu0 %3360
  %3362 = vrot.lane.b32.xlu0 %v3340, 126
  %v3363 = vpop.permute.xlu0 %3362
  %3364 = vrot.lane.b32.xlu0 %v3341, 126
  %v3365 = vpop.permute.xlu0 %3364
  %v3374 = vadd.f32 %v3278, %v3351
  %v3375 = vadd.f32 %v3279, %v3353
  %v3376 = vadd.f32 %v3280, %v3355
  %v3377 = vadd.f32 %v3281, %v3357
  %v3378 = vadd.f32 %v3282, %v3359
  %v3379 = vadd.f32 %v3283, %v3361
  %v3380 = vadd.f32 %v3284, %v3363
  %v3381 = vadd.f32 %v3285, %v3365
  %3382 = vrot.lane.b32.xlu0 %v2888, 64
  %v3383 = vpop.permute.xlu0 %3382
  %v3384 = vsel %vm1473, %v3383, %v2888
  %3385 = vrot.lane.b32.xlu0 %v2891, 64
  %v3386 = vpop.permute.xlu0 %3385
  %v3387 = vsel %vm1473, %v3386, %v2891
  %3388 = vrot.lane.b32.xlu0 %v2896, 64
  %v3389 = vpop.permute.xlu0 %3388
  %v3390 = vsel %vm1473, %v3389, %v2896
  %3391 = vrot.lane.b32.xlu0 %v2899, 64
  %v3392 = vpop.permute.xlu0 %3391
  %v3393 = vsel %vm1473, %v3392, %v2899
  %3394 = vrot.lane.b32.xlu0 %v2904, 64
  %v3395 = vpop.permute.xlu0 %3394
  %v3396 = vsel %vm1473, %v3395, %v2904
  %3397 = vrot.lane.b32.xlu0 %v2907, 64
  %v3398 = vpop.permute.xlu0 %3397
  %v3399 = vsel %vm1473, %v3398, %v2907
  %3400 = vrot.lane.b32.xlu0 %v2912, 64
  %v3401 = vpop.permute.xlu0 %3400
  %v3402 = vsel %vm1473, %v3401, %v2912
  %3403 = vrot.lane.b32.xlu0 %v2915, 64
  %v3404 = vpop.permute.xlu0 %3403
  %v3405 = vsel %vm1473, %v3404, %v2915
  %3406 = vrot.lane.b32.xlu0 %v3384, 64
  %v3407 = vpop.permute.xlu0 %3406
  %3408 = vrot.lane.b32.xlu0 %v3387, 64
  %v3409 = vpop.permute.xlu0 %3408
  %3410 = vrot.lane.b32.xlu0 %v3390, 64
  %v3411 = vpop.permute.xlu0 %3410
  %3412 = vrot.lane.b32.xlu0 %v3393, 64
  %v3413 = vpop.permute.xlu0 %3412
  %3414 = vrot.lane.b32.xlu0 %v3396, 64
  %v3415 = vpop.permute.xlu0 %3414
  %3416 = vrot.lane.b32.xlu0 %v3399, 64
  %v3417 = vpop.permute.xlu0 %3416
  %3418 = vrot.lane.b32.xlu0 %v3402, 64
  %v3419 = vpop.permute.xlu0 %3418
  %3420 = vrot.lane.b32.xlu0 %v3405, 64
  %v3421 = vpop.permute.xlu0 %3420
  %v3422 = vsel %vm1473, %v3407, %v2888
  %v3423 = vsel %vm1473, %v3409, %v2891
  %v3424 = vsel %vm1473, %v3411, %v2896
  %v3425 = vsel %vm1473, %v3413, %v2899
  %v3426 = vsel %vm1473, %v3415, %v2904
  %v3427 = vsel %vm1473, %v3417, %v2907
  %v3428 = vsel %vm1473, %v3419, %v2912
  %v3429 = vsel %vm1473, %v3421, %v2915
  %v3430 = vmul.f32 %v3422, %v1848
  %v3431 = vmul.f32 %v3423, %v1848
  %v3432 = vmul.f32 %v3424, %v1848
  %v3433 = vmul.f32 %v3425, %v1848
  %v3434 = vmul.f32 %v3426, %v1848
  %v3435 = vmul.f32 %v3427, %v1848
  %v3436 = vmul.f32 %v3428, %v1848
  %v3437 = vmul.f32 %v3429, %v1848
  %3446 = vrot.lane.b32.xlu0 %v3430, 120
  %v3447 = vpop.permute.xlu0 %3446
  %3448 = vrot.lane.b32.xlu0 %v3431, 120
  %v3449 = vpop.permute.xlu0 %3448
  %3450 = vrot.lane.b32.xlu0 %v3432, 120
  %v3451 = vpop.permute.xlu0 %3450
  %3452 = vrot.lane.b32.xlu0 %v3433, 120
  %v3453 = vpop.permute.xlu0 %3452
  %3454 = vrot.lane.b32.xlu0 %v3434, 120
  %v3455 = vpop.permute.xlu0 %3454
  %3456 = vrot.lane.b32.xlu0 %v3435, 120
  %v3457 = vpop.permute.xlu0 %3456
  %3458 = vrot.lane.b32.xlu0 %v3436, 120
  %v3459 = vpop.permute.xlu0 %3458
  %3460 = vrot.lane.b32.xlu0 %v3437, 120
  %v3461 = vpop.permute.xlu0 %3460
  %v3470 = vadd.f32 %v3374, %v3447
  %v3471 = vadd.f32 %v3375, %v3449
  %v3472 = vadd.f32 %v3376, %v3451
  %v3473 = vadd.f32 %v3377, %v3453
  %v3474 = vadd.f32 %v3378, %v3455
  %v3475 = vadd.f32 %v3379, %v3457
  %v3476 = vadd.f32 %v3380, %v3459
  %v3477 = vadd.f32 %v3381, %v3461
  %v3478 = vmul.f32 %v2920, %v1902
  %v3479 = vmul.f32 %v2923, %v1902
  %v3480 = vmul.f32 %v2928, %v1902
  %v3481 = vmul.f32 %v2931, %v1902
  %v3482 = vmul.f32 %v2936, %v1902
  %v3483 = vmul.f32 %v2939, %v1902
  %v3484 = vmul.f32 %v2944, %v1902
  %v3485 = vmul.f32 %v2947, %v1902
  %3494 = vrot.lane.b32.xlu0 %v3478, 55
  %v3495 = vpop.permute.xlu0 %3494
  %3496 = vrot.lane.b32.xlu0 %v3479, 55
  %v3497 = vpop.permute.xlu0 %3496
  %3498 = vrot.lane.b32.xlu0 %v3480, 55
  %v3499 = vpop.permute.xlu0 %3498
  %3500 = vrot.lane.b32.xlu0 %v3481, 55
  %v3501 = vpop.permute.xlu0 %3500
  %3502 = vrot.lane.b32.xlu0 %v3482, 55
  %v3503 = vpop.permute.xlu0 %3502
  %3504 = vrot.lane.b32.xlu0 %v3483, 55
  %v3505 = vpop.permute.xlu0 %3504
  %3506 = vrot.lane.b32.xlu0 %v3484, 55
  %v3507 = vpop.permute.xlu0 %3506
  %3508 = vrot.lane.b32.xlu0 %v3485, 55
  %v3509 = vpop.permute.xlu0 %3508
  %v3518 = vadd.f32 %v3470, %v3495
  %v3519 = vadd.f32 %v3471, %v3497
  %v3520 = vadd.f32 %v3472, %v3499
  %v3521 = vadd.f32 %v3473, %v3501
  %v3522 = vadd.f32 %v3474, %v3503
  %v3523 = vadd.f32 %v3475, %v3505
  %v3524 = vadd.f32 %v3476, %v3507
  %v3525 = vadd.f32 %v3477, %v3509
  %3526 = vrot.lane.b32.xlu0 %v2952, 64
  %v3527 = vpop.permute.xlu0 %3526
  %v3528 = vsel %vm1473, %v3527, %v2952
  %3529 = vrot.lane.b32.xlu0 %v2955, 64
  %v3530 = vpop.permute.xlu0 %3529
  %v3531 = vsel %vm1473, %v3530, %v2955
  %3532 = vrot.lane.b32.xlu0 %v2960, 64
  %v3533 = vpop.permute.xlu0 %3532
  %v3534 = vsel %vm1473, %v3533, %v2960
  %3535 = vrot.lane.b32.xlu0 %v2963, 64
  %v3536 = vpop.permute.xlu0 %3535
  %v3537 = vsel %vm1473, %v3536, %v2963
  %3538 = vrot.lane.b32.xlu0 %v2968, 64
  %v3539 = vpop.permute.xlu0 %3538
  %v3540 = vsel %vm1473, %v3539, %v2968
  %3541 = vrot.lane.b32.xlu0 %v2971, 64
  %v3542 = vpop.permute.xlu0 %3541
  %v3543 = vsel %vm1473, %v3542, %v2971
  %3544 = vrot.lane.b32.xlu0 %v2976, 64
  %v3545 = vpop.permute.xlu0 %3544
  %v3546 = vsel %vm1473, %v3545, %v2976
  %3547 = vrot.lane.b32.xlu0 %v2979, 64
  %v3548 = vpop.permute.xlu0 %3547
  %v3549 = vsel %vm1473, %v3548, %v2979
  %3550 = vrot.lane.b32.xlu0 %v3528, 64
  %v3551 = vpop.permute.xlu0 %3550
  %3552 = vrot.lane.b32.xlu0 %v3531, 64
  %v3553 = vpop.permute.xlu0 %3552
  %3554 = vrot.lane.b32.xlu0 %v3534, 64
  %v3555 = vpop.permute.xlu0 %3554
  %3556 = vrot.lane.b32.xlu0 %v3537, 64
  %v3557 = vpop.permute.xlu0 %3556
  %3558 = vrot.lane.b32.xlu0 %v3540, 64
  %v3559 = vpop.permute.xlu0 %3558
  %3560 = vrot.lane.b32.xlu0 %v3543, 64
  %v3561 = vpop.permute.xlu0 %3560
  %3562 = vrot.lane.b32.xlu0 %v3546, 64
  %v3563 = vpop.permute.xlu0 %3562
  %3564 = vrot.lane.b32.xlu0 %v3549, 64
  %v3565 = vpop.permute.xlu0 %3564
  %v3566 = vsel %vm1473, %v3551, %v2952
  %v3567 = vsel %vm1473, %v3553, %v2955
  %v3568 = vsel %vm1473, %v3555, %v2960
  %v3569 = vsel %vm1473, %v3557, %v2963
  %v3570 = vsel %vm1473, %v3559, %v2968
  %v3571 = vsel %vm1473, %v3561, %v2971
  %v3572 = vsel %vm1473, %v3563, %v2976
  %v3573 = vsel %vm1473, %v3565, %v2979
  %v3574 = vmul.f32 %v3566, %v2006
  %v3575 = vmul.f32 %v3567, %v2006
  %v3576 = vmul.f32 %v3568, %v2006
  %v3577 = vmul.f32 %v3569, %v2006
  %v3578 = vmul.f32 %v3570, %v2006
  %v3579 = vmul.f32 %v3571, %v2006
  %v3580 = vmul.f32 %v3572, %v2006
  %v3581 = vmul.f32 %v3573, %v2006
  %3590 = vrot.lane.b32.xlu0 %v3574, 54
  %v3591 = vpop.permute.xlu0 %3590
  %3592 = vrot.lane.b32.xlu0 %v3575, 54
  %v3593 = vpop.permute.xlu0 %3592
  %3594 = vrot.lane.b32.xlu0 %v3576, 54
  %v3595 = vpop.permute.xlu0 %3594
  %3596 = vrot.lane.b32.xlu0 %v3577, 54
  %v3597 = vpop.permute.xlu0 %3596
  %3598 = vrot.lane.b32.xlu0 %v3578, 54
  %v3599 = vpop.permute.xlu0 %3598
  %3600 = vrot.lane.b32.xlu0 %v3579, 54
  %v3601 = vpop.permute.xlu0 %3600
  %3602 = vrot.lane.b32.xlu0 %v3580, 54
  %v3603 = vpop.permute.xlu0 %3602
  %3604 = vrot.lane.b32.xlu0 %v3581, 54
  %v3605 = vpop.permute.xlu0 %3604
  %v3614 = vadd.f32 %v3518, %v3591
  %v3615 = vadd.f32 %v3519, %v3593
  %v3616 = vadd.f32 %v3520, %v3595
  %v3617 = vadd.f32 %v3521, %v3597
  %v3618 = vadd.f32 %v3522, %v3599
  %v3619 = vadd.f32 %v3523, %v3601
  %v3620 = vadd.f32 %v3524, %v3603
  %v3621 = vadd.f32 %v3525, %v3605
  %3622 = vrot.lane.b32.xlu0 %v2984, 64
  %v3623 = vpop.permute.xlu0 %3622
  %v3624 = vsel %vm1473, %v3623, %v2984
  %3625 = vrot.lane.b32.xlu0 %v2987, 64
  %v3626 = vpop.permute.xlu0 %3625
  %v3627 = vsel %vm1473, %v3626, %v2987
  %3628 = vrot.lane.b32.xlu0 %v2992, 64
  %v3629 = vpop.permute.xlu0 %3628
  %v3630 = vsel %vm1473, %v3629, %v2992
  %3631 = vrot.lane.b32.xlu0 %v2995, 64
  %v3632 = vpop.permute.xlu0 %3631
  %v3633 = vsel %vm1473, %v3632, %v2995
  %3634 = vrot.lane.b32.xlu0 %v3000, 64
  %v3635 = vpop.permute.xlu0 %3634
  %v3636 = vsel %vm1473, %v3635, %v3000
  %3637 = vrot.lane.b32.xlu0 %v3003, 64
  %v3638 = vpop.permute.xlu0 %3637
  %v3639 = vsel %vm1473, %v3638, %v3003
  %3640 = vrot.lane.b32.xlu0 %v3008, 64
  %v3641 = vpop.permute.xlu0 %3640
  %v3642 = vsel %vm1473, %v3641, %v3008
  %3643 = vrot.lane.b32.xlu0 %v3011, 64
  %v3644 = vpop.permute.xlu0 %3643
  %v3645 = vsel %vm1473, %v3644, %v3011
  %3646 = vrot.lane.b32.xlu0 %v3624, 64
  %v3647 = vpop.permute.xlu0 %3646
  %3648 = vrot.lane.b32.xlu0 %v3627, 64
  %v3649 = vpop.permute.xlu0 %3648
  %3650 = vrot.lane.b32.xlu0 %v3630, 64
  %v3651 = vpop.permute.xlu0 %3650
  %3652 = vrot.lane.b32.xlu0 %v3633, 64
  %v3653 = vpop.permute.xlu0 %3652
  %3654 = vrot.lane.b32.xlu0 %v3636, 64
  %v3655 = vpop.permute.xlu0 %3654
  %3656 = vrot.lane.b32.xlu0 %v3639, 64
  %v3657 = vpop.permute.xlu0 %3656
  %3658 = vrot.lane.b32.xlu0 %v3642, 64
  %v3659 = vpop.permute.xlu0 %3658
  %3660 = vrot.lane.b32.xlu0 %v3645, 64
  %v3661 = vpop.permute.xlu0 %3660
  %v3662 = vsel %vm1473, %v3647, %v2984
  %v3663 = vsel %vm1473, %v3649, %v2987
  %v3664 = vsel %vm1473, %v3651, %v2992
  %v3665 = vsel %vm1473, %v3653, %v2995
  %v3666 = vsel %vm1473, %v3655, %v3000
  %v3667 = vsel %vm1473, %v3657, %v3003
  %v3668 = vsel %vm1473, %v3659, %v3008
  %v3669 = vsel %vm1473, %v3661, %v3011
  %v3670 = vmul.f32 %v3662, %v2110
  %v3671 = vmul.f32 %v3663, %v2110
  %v3672 = vmul.f32 %v3664, %v2110
  %v3673 = vmul.f32 %v3665, %v2110
  %v3674 = vmul.f32 %v3666, %v2110
  %v3675 = vmul.f32 %v3667, %v2110
  %v3676 = vmul.f32 %v3668, %v2110
  %v3677 = vmul.f32 %v3669, %v2110
  %3686 = vrot.lane.b32.xlu0 %v3670, 48
  %v3687 = vpop.permute.xlu0 %3686
  %3688 = vrot.lane.b32.xlu0 %v3671, 48
  %v3689 = vpop.permute.xlu0 %3688
  %3690 = vrot.lane.b32.xlu0 %v3672, 48
  %v3691 = vpop.permute.xlu0 %3690
  %3692 = vrot.lane.b32.xlu0 %v3673, 48
  %v3693 = vpop.permute.xlu0 %3692
  %3694 = vrot.lane.b32.xlu0 %v3674, 48
  %v3695 = vpop.permute.xlu0 %3694
  %3696 = vrot.lane.b32.xlu0 %v3675, 48
  %v3697 = vpop.permute.xlu0 %3696
  %3698 = vrot.lane.b32.xlu0 %v3676, 48
  %v3699 = vpop.permute.xlu0 %3698
  %3700 = vrot.lane.b32.xlu0 %v3677, 48
  %v3701 = vpop.permute.xlu0 %3700
  %v3710 = vadd.f32 %v3614, %v3687
  %v3711 = vadd.f32 %v3615, %v3689
  %v3712 = vadd.f32 %v3616, %v3691
  %v3713 = vadd.f32 %v3617, %v3693
  %v3714 = vadd.f32 %v3618, %v3695
  %v3715 = vadd.f32 %v3619, %v3697
  %v3716 = vadd.f32 %v3620, %v3699
  %v3717 = vadd.f32 %v3621, %v3701
  %3718 = vrot.lane.b32.xlu0 %v3016, 64
  %v3719 = vpop.permute.xlu0 %3718
  %v3720 = vsel %vm1473, %v3719, %v3016
  %3721 = vrot.lane.b32.xlu0 %v3019, 64
  %v3722 = vpop.permute.xlu0 %3721
  %v3723 = vsel %vm1473, %v3722, %v3019
  %3724 = vrot.lane.b32.xlu0 %v3024, 64
  %v3725 = vpop.permute.xlu0 %3724
  %v3726 = vsel %vm1473, %v3725, %v3024
  %3727 = vrot.lane.b32.xlu0 %v3027, 64
  %v3728 = vpop.permute.xlu0 %3727
  %v3729 = vsel %vm1473, %v3728, %v3027
  %3730 = vrot.lane.b32.xlu0 %v3032, 64
  %v3731 = vpop.permute.xlu0 %3730
  %v3732 = vsel %vm1473, %v3731, %v3032
  %3733 = vrot.lane.b32.xlu0 %v3035, 64
  %v3734 = vpop.permute.xlu0 %3733
  %v3735 = vsel %vm1473, %v3734, %v3035
  %3736 = vrot.lane.b32.xlu0 %v3040, 64
  %v3737 = vpop.permute.xlu0 %3736
  %v3738 = vsel %vm1473, %v3737, %v3040
  %3739 = vrot.lane.b32.xlu0 %v3043, 64
  %v3740 = vpop.permute.xlu0 %3739
  %v3741 = vsel %vm1473, %v3740, %v3043
  %3742 = vrot.lane.b32.xlu0 %v3720, 64
  %v3743 = vpop.permute.xlu0 %3742
  %3744 = vrot.lane.b32.xlu0 %v3723, 64
  %v3745 = vpop.permute.xlu0 %3744
  %3746 = vrot.lane.b32.xlu0 %v3726, 64
  %v3747 = vpop.permute.xlu0 %3746
  %3748 = vrot.lane.b32.xlu0 %v3729, 64
  %v3749 = vpop.permute.xlu0 %3748
  %3750 = vrot.lane.b32.xlu0 %v3732, 64
  %v3751 = vpop.permute.xlu0 %3750
  %3752 = vrot.lane.b32.xlu0 %v3735, 64
  %v3753 = vpop.permute.xlu0 %3752
  %3754 = vrot.lane.b32.xlu0 %v3738, 64
  %v3755 = vpop.permute.xlu0 %3754
  %3756 = vrot.lane.b32.xlu0 %v3741, 64
  %v3757 = vpop.permute.xlu0 %3756
  %v3758 = vsel %vm1473, %v3743, %v3016
  %v3759 = vsel %vm1473, %v3745, %v3019
  %v3760 = vsel %vm1473, %v3747, %v3024
  %v3761 = vsel %vm1473, %v3749, %v3027
  %v3762 = vsel %vm1473, %v3751, %v3032
  %v3763 = vsel %vm1473, %v3753, %v3035
  %v3764 = vsel %vm1473, %v3755, %v3040
  %v3765 = vsel %vm1473, %v3757, %v3043
  %v3766 = vmul.f32 %v3758, %v2214
  %v3767 = vmul.f32 %v3759, %v2214
  %v3768 = vmul.f32 %v3760, %v2214
  %v3769 = vmul.f32 %v3761, %v2214
  %v3770 = vmul.f32 %v3762, %v2214
  %v3771 = vmul.f32 %v3763, %v2214
  %v3772 = vmul.f32 %v3764, %v2214
  %v3773 = vmul.f32 %v3765, %v2214
  %3782 = vrot.lane.b32.xlu0 %v3766, 47
  %v3783 = vpop.permute.xlu0 %3782
  %3784 = vrot.lane.b32.xlu0 %v3767, 47
  %v3785 = vpop.permute.xlu0 %3784
  %3786 = vrot.lane.b32.xlu0 %v3768, 47
  %v3787 = vpop.permute.xlu0 %3786
  %3788 = vrot.lane.b32.xlu0 %v3769, 47
  %v3789 = vpop.permute.xlu0 %3788
  %3790 = vrot.lane.b32.xlu0 %v3770, 47
  %v3791 = vpop.permute.xlu0 %3790
  %3792 = vrot.lane.b32.xlu0 %v3771, 47
  %v3793 = vpop.permute.xlu0 %3792
  %3794 = vrot.lane.b32.xlu0 %v3772, 47
  %v3795 = vpop.permute.xlu0 %3794
  %3796 = vrot.lane.b32.xlu0 %v3773, 47
  %v3797 = vpop.permute.xlu0 %3796
  %v3806 = vadd.f32 %v3710, %v3783
  %v3807 = vadd.f32 %v3711, %v3785
  %v3808 = vadd.f32 %v3712, %v3787
  %v3809 = vadd.f32 %v3713, %v3789
  %v3810 = vadd.f32 %v3714, %v3791
  %v3811 = vadd.f32 %v3715, %v3793
  %v3812 = vadd.f32 %v3716, %v3795
  %v3813 = vadd.f32 %v3717, %v3797
  %3814 = vrot.lane.b32.xlu0 %v3048, 64
  %v3815 = vpop.permute.xlu0 %3814
  %v3816 = vsel %vm1473, %v3815, %v3048
  %3817 = vrot.lane.b32.xlu0 %v3051, 64
  %v3818 = vpop.permute.xlu0 %3817
  %v3819 = vsel %vm1473, %v3818, %v3051
  %3820 = vrot.lane.b32.xlu0 %v3056, 64
  %v3821 = vpop.permute.xlu0 %3820
  %v3822 = vsel %vm1473, %v3821, %v3056
  %3823 = vrot.lane.b32.xlu0 %v3059, 64
  %v3824 = vpop.permute.xlu0 %3823
  %v3825 = vsel %vm1473, %v3824, %v3059
  %3826 = vrot.lane.b32.xlu0 %v3064, 64
  %v3827 = vpop.permute.xlu0 %3826
  %v3828 = vsel %vm1473, %v3827, %v3064
  %3829 = vrot.lane.b32.xlu0 %v3067, 64
  %v3830 = vpop.permute.xlu0 %3829
  %v3831 = vsel %vm1473, %v3830, %v3067
  %3832 = vrot.lane.b32.xlu0 %v3072, 64
  %v3833 = vpop.permute.xlu0 %3832
  %v3834 = vsel %vm1473, %v3833, %v3072
  %3835 = vrot.lane.b32.xlu0 %v3075, 64
  %v3836 = vpop.permute.xlu0 %3835
  %v3837 = vsel %vm1473, %v3836, %v3075
  %3838 = vrot.lane.b32.xlu0 %v3816, 64
  %v3839 = vpop.permute.xlu0 %3838
  %3840 = vrot.lane.b32.xlu0 %v3819, 64
  %v3841 = vpop.permute.xlu0 %3840
  %3842 = vrot.lane.b32.xlu0 %v3822, 64
  %v3843 = vpop.permute.xlu0 %3842
  %3844 = vrot.lane.b32.xlu0 %v3825, 64
  %v3845 = vpop.permute.xlu0 %3844
  %3846 = vrot.lane.b32.xlu0 %v3828, 64
  %v3847 = vpop.permute.xlu0 %3846
  %3848 = vrot.lane.b32.xlu0 %v3831, 64
  %v3849 = vpop.permute.xlu0 %3848
  %3850 = vrot.lane.b32.xlu0 %v3834, 64
  %v3851 = vpop.permute.xlu0 %3850
  %3852 = vrot.lane.b32.xlu0 %v3837, 64
  %v3853 = vpop.permute.xlu0 %3852
  %v3854 = vsel %vm1473, %v3839, %v3048
  %v3855 = vsel %vm1473, %v3841, %v3051
  %v3856 = vsel %vm1473, %v3843, %v3056
  %v3857 = vsel %vm1473, %v3845, %v3059
  %v3858 = vsel %vm1473, %v3847, %v3064
  %v3859 = vsel %vm1473, %v3849, %v3067
  %v3860 = vsel %vm1473, %v3851, %v3072
  %v3861 = vsel %vm1473, %v3853, %v3075
  %v3862 = vmul.f32 %v3854, %v2318
  %v3863 = vmul.f32 %v3855, %v2318
  %v3864 = vmul.f32 %v3856, %v2318
  %v3865 = vmul.f32 %v3857, %v2318
  %v3866 = vmul.f32 %v3858, %v2318
  %v3867 = vmul.f32 %v3859, %v2318
  %v3868 = vmul.f32 %v3860, %v2318
  %v3869 = vmul.f32 %v3861, %v2318
  %3878 = vrot.lane.b32.xlu0 %v3862, 46
  %v3879 = vpop.permute.xlu0 %3878
  %3880 = vrot.lane.b32.xlu0 %v3863, 46
  %v3881 = vpop.permute.xlu0 %3880
  %3882 = vrot.lane.b32.xlu0 %v3864, 46
  %v3883 = vpop.permute.xlu0 %3882
  %3884 = vrot.lane.b32.xlu0 %v3865, 46
  %v3885 = vpop.permute.xlu0 %3884
  %3886 = vrot.lane.b32.xlu0 %v3866, 46
  %v3887 = vpop.permute.xlu0 %3886
  %3888 = vrot.lane.b32.xlu0 %v3867, 46
  %v3889 = vpop.permute.xlu0 %3888
  %3890 = vrot.lane.b32.xlu0 %v3868, 46
  %v3891 = vpop.permute.xlu0 %3890
  %3892 = vrot.lane.b32.xlu0 %v3869, 46
  %v3893 = vpop.permute.xlu0 %3892
  %v3902 = vadd.f32 %v3806, %v3879
  %v3903 = vadd.f32 %v3807, %v3881
  %v3904 = vadd.f32 %v3808, %v3883
  %v3905 = vadd.f32 %v3809, %v3885
  %v3906 = vadd.f32 %v3810, %v3887
  %v3907 = vadd.f32 %v3811, %v3889
  %v3908 = vadd.f32 %v3812, %v3891
  %v3909 = vadd.f32 %v3813, %v3893
  %v3910 = vmax.f32 %v3902, 0.0
  %v3911 = vmax.f32 %v3903, 0.0
  %v3912 = vmax.f32 %v3904, 0.0
  %v3913 = vmax.f32 %v3905, 0.0
  %v3914 = vmax.f32 %v3906, 0.0
  %v3915 = vmax.f32 %v3907, 0.0
  %v3916 = vmax.f32 %v3908, 0.0
  %v3917 = vmax.f32 %v3909, 0.0
  %v3918 = vld [vmem:[%s29] sm:$0xf]
  %v3919 = vld [vmem:[%s29 + $0x4] sm:$0xf]
  %v3920 = vld [vmem:[%s29 + $0x8] sm:$0xf]
  %v3921 = vld [vmem:[%s29 + $0xc] sm:$0xf]
  %v3922 = vld [vmem:[%s29 + $0x10] sm:$0xf]
  %v3923 = vld [vmem:[%s29 + $0x14] sm:$0xf]
  %v3924 = vld [vmem:[%s29 + $0x18] sm:$0xf]
  %v3925 = vld [vmem:[%s29 + $0x1c] sm:$0xf]
  %v3926 = vld [vmem:[%s29 + $0x20] sm:$0xf]
  %v3927 = vld [vmem:[%s29 + $0x24] sm:$0xf]
  %v3928 = vld [vmem:[%s29 + $0x28] sm:$0xf]
  %v3929 = vld [vmem:[%s29 + $0x2c] sm:$0xf]
  %v3930 = vld [vmem:[%s29 + $0x30] sm:$0xf]
  %v3931 = vld [vmem:[%s29 + $0x34] sm:$0xf]
  %v3932 = vld [vmem:[%s29 + $0x38] sm:$0xf]
  %v3933 = vld [vmem:[%s29 + $0x3c] sm:$0xf]
  %v3934 = vld [vmem:[%s29 + $0x40] sm:$0xf]
  %v3935 = vld [vmem:[%s29 + $0x44] sm:$0xf]
  %v3936 = vld [vmem:[%s29 + $0x48] sm:$0xf]
  %v3937 = vld [vmem:[%s29 + $0x4c] sm:$0xf]
  %v3938 = vld [vmem:[%s29 + $0x50] sm:$0xf]
  %v3939 = vld [vmem:[%s29 + $0x54] sm:$0xf]
  %v3940 = vld [vmem:[%s29 + $0x58] sm:$0xf]
  %v3941 = vld [vmem:[%s29 + $0x5c] sm:$0xf]
  %v3942 = vld [vmem:[%s29 + $0x60] sm:$0xf]
  %v3943 = vld [vmem:[%s29 + $0x64] sm:$0xf]
  %v3944 = vld [vmem:[%s29 + $0x68] sm:$0xf]
  %v3945 = vld [vmem:[%s29 + $0x6c] sm:$0xf]
  %v3946 = vld [vmem:[%s29 + $0x70] sm:$0xf]
  %v3947 = vld [vmem:[%s29 + $0x74] sm:$0xf]
  %v3948 = vld [vmem:[%s29 + $0x78] sm:$0xf]
  %v3949 = vld [vmem:[%s29 + $0x7c] sm:$0xf]
  %v3950 = vld [vmem:[%s29 + $0x80] sm:$0xf]
  %v3951 = vld [vmem:[%s29 + $0x84] sm:$0xf]
  %v3952 = vld [vmem:[%s29 + $0x88] sm:$0xf]
  %v3953 = vld [vmem:[%s29 + $0x8c] sm:$0xf]
  %v3954 = vld [vmem:[%s29 + $0x90] sm:$0xf]
  %v3955 = vld [vmem:[%s29 + $0x94] sm:$0xf]
  %v3956 = vld [vmem:[%s29 + $0x98] sm:$0xf]
  %v3957 = vld [vmem:[%s29 + $0x9c] sm:$0xf]
  %v3958 = vld [vmem:[%s29 + $0xa0] sm:$0xf]
  %v3959 = vld [vmem:[%s29 + $0xa4] sm:$0xf]
  %v3960 = vld [vmem:[%s29 + $0xa8] sm:$0xf]
  %v3961 = vld [vmem:[%s29 + $0xac] sm:$0xf]
  %v3962 = vld [vmem:[%s29 + $0xb0] sm:$0xf]
  %v3963 = vld [vmem:[%s29 + $0xb4] sm:$0xf]
  %v3964 = vld [vmem:[%s29 + $0xb8] sm:$0xf]
  %v3965 = vld [vmem:[%s29 + $0xbc] sm:$0xf]
  %v3966 = vld [vmem:[%s29 + $0xc0] sm:$0xf]
  %v3967 = vld [vmem:[%s29 + $0xc4] sm:$0xf]
  %v3968 = vld [vmem:[%s29 + $0xc8] sm:$0xf]
  %v3969 = vld [vmem:[%s29 + $0xcc] sm:$0xf]
  %v3970 = vld [vmem:[%s29 + $0xd0] sm:$0xf]
  %v3971 = vld [vmem:[%s29 + $0xd4] sm:$0xf]
  %v3972 = vld [vmem:[%s29 + $0xd8] sm:$0xf]
  %v3973 = vld [vmem:[%s29 + $0xdc] sm:$0xf]
  %v3974 = vld [vmem:[%s29 + $0xe0] sm:$0xf]
  %v3975 = vld [vmem:[%s29 + $0xe4] sm:$0xf]
  %v3976 = vld [vmem:[%s29 + $0xe8] sm:$0xf]
  %v3977 = vld [vmem:[%s29 + $0xec] sm:$0xf]
  %v3978 = vld [vmem:[%s29 + $0xf0] sm:$0xf]
  %v3979 = vld [vmem:[%s29 + $0xf4] sm:$0xf]
  %v3980 = vld [vmem:[%s29 + $0xf8] sm:$0xf]
  %v3981 = vld [vmem:[%s29 + $0xfc] sm:$0xf]
  %v3982 = vld [vmem:[%s29 + $0x100] sm:$0xf]
  %v3983 = vld [vmem:[%s29 + $0x104] sm:$0xf]
  %v3984 = vld [vmem:[%s29 + $0x108] sm:$0xf]
  %v3985 = vld [vmem:[%s29 + $0x10c] sm:$0xf]
  %v3986 = vld [vmem:[%s29 + $0x110] sm:$0xf]
  %v3987 = vld [vmem:[%s29 + $0x114] sm:$0xf]
  %v3988 = vld [vmem:[%s29 + $0x118] sm:$0xf]
  %v3989 = vld [vmem:[%s29 + $0x11c] sm:$0xf]
  %v3990 = vpack.c.bf16 %v3911, %v3910
  %v3991 = vpack.c.bf16 %v3913, %v3912
  %v3992 = vpack.c.bf16 %v3915, %v3914
  %v3993 = vpack.c.bf16 %v3917, %v3916
  %v4066 = vunpack.c.l.b16 %v3918
  %v4067 = vunpack.c.l.b16 %v3919
  %v4068 = vunpack.c.l.b16 %v3920
  %v4069 = vunpack.c.l.b16 %v3921
  %v4070 = vunpack.c.l.b16 %v3922
  %v4071 = vunpack.c.l.b16 %v3923
  %v4072 = vunpack.c.l.b16 %v3924
  %v4073 = vunpack.c.l.b16 %v3925
  %v4074 = vunpack.c.l.b16 %v3926
  %v4075 = vunpack.c.l.b16 %v3927
  %v4076 = vunpack.c.l.b16 %v3928
  %v4077 = vunpack.c.l.b16 %v3929
  %v4078 = vunpack.c.l.b16 %v3930
  %v4079 = vunpack.c.l.b16 %v3931
  %v4080 = vunpack.c.l.b16 %v3932
  %v4081 = vunpack.c.l.b16 %v3933
  %v4082 = vunpack.c.l.b16 %v3934
  %v4083 = vunpack.c.l.b16 %v3935
  %v4084 = vunpack.c.l.b16 %v3936
  %v4085 = vunpack.c.l.b16 %v3937
  %v4086 = vunpack.c.l.b16 %v3938
  %v4087 = vunpack.c.l.b16 %v3939
  %v4088 = vunpack.c.l.b16 %v3940
  %v4089 = vunpack.c.l.b16 %v3941
  %v4090 = vunpack.c.l.b16 %v3942
  %v4091 = vunpack.c.l.b16 %v3943
  %v4092 = vunpack.c.l.b16 %v3944
  %v4093 = vunpack.c.l.b16 %v3945
  %v4094 = vunpack.c.l.b16 %v3946
  %v4095 = vunpack.c.l.b16 %v3947
  %v4096 = vunpack.c.l.b16 %v3948
  %v4097 = vunpack.c.l.b16 %v3949
  %v4098 = vunpack.c.l.b16 %v3950
  %v4099 = vunpack.c.l.b16 %v3951
  %v4100 = vunpack.c.l.b16 %v3952
  %v4101 = vunpack.c.l.b16 %v3953
  %v4102 = vunpack.c.l.b16 %v3954
  %v4103 = vunpack.c.l.b16 %v3955
  %v4104 = vunpack.c.l.b16 %v3956
  %v4105 = vunpack.c.l.b16 %v3957
  %v4106 = vunpack.c.l.b16 %v3958
  %v4107 = vunpack.c.l.b16 %v3959
  %v4108 = vunpack.c.l.b16 %v3960
  %v4109 = vunpack.c.l.b16 %v3961
  %v4110 = vunpack.c.l.b16 %v3962
  %v4111 = vunpack.c.l.b16 %v3963
  %v4112 = vunpack.c.l.b16 %v3964
  %v4113 = vunpack.c.l.b16 %v3965
  %v4114 = vunpack.c.l.b16 %v3966
  %v4115 = vunpack.c.l.b16 %v3967
  %v4116 = vunpack.c.l.b16 %v3968
  %v4117 = vunpack.c.l.b16 %v3969
  %v4118 = vunpack.c.l.b16 %v3970
  %v4119 = vunpack.c.l.b16 %v3971
  %v4120 = vunpack.c.l.b16 %v3972
  %v4121 = vunpack.c.l.b16 %v3973
  %v4122 = vunpack.c.l.b16 %v3974
  %v4123 = vunpack.c.l.b16 %v3975
  %v4124 = vunpack.c.l.b16 %v3976
  %v4125 = vunpack.c.l.b16 %v3977
  %v4126 = vunpack.c.l.b16 %v3978
  %v4127 = vunpack.c.l.b16 %v3979
  %v4128 = vunpack.c.l.b16 %v3980
  %v4129 = vunpack.c.l.b16 %v3981
  %v4130 = vunpack.c.l.b16 %v3982
  %v4131 = vunpack.c.l.b16 %v3983
  %v4132 = vunpack.c.l.b16 %v3984
  %v4133 = vunpack.c.l.b16 %v3985
  %v4134 = vunpack.c.l.b16 %v3986
  %v4135 = vunpack.c.l.b16 %v3987
  %v4136 = vunpack.c.l.b16 %v3988
  %v4137 = vunpack.c.l.b16 %v3989
  %v4138 = vpack.c.b16 %v4067, %v4066
  %v4139 = vpack.c.b16 %v4069, %v4068
  %v4140 = vpack.c.b16 %v4071, %v4070
  %v4141 = vpack.c.b16 %v4073, %v4072
  %v4142 = vpack.c.b16 %v4075, %v4074
  %v4143 = vpack.c.b16 %v4077, %v4076
  %v4144 = vpack.c.b16 %v4079, %v4078
  %v4145 = vpack.c.b16 %v4081, %v4080
  %v4146 = vpack.c.b16 %v4083, %v4082
  %v4147 = vpack.c.b16 %v4085, %v4084
  %v4148 = vpack.c.b16 %v4087, %v4086
  %v4149 = vpack.c.b16 %v4089, %v4088
  %v4150 = vpack.c.b16 %v4091, %v4090
  %v4151 = vpack.c.b16 %v4093, %v4092
  %v4152 = vpack.c.b16 %v4095, %v4094
  %v4153 = vpack.c.b16 %v4097, %v4096
  %v4154 = vpack.c.b16 %v4099, %v4098
  %v4155 = vpack.c.b16 %v4101, %v4100
  %v4156 = vpack.c.b16 %v4103, %v4102
  %v4157 = vpack.c.b16 %v4105, %v4104
  %v4158 = vpack.c.b16 %v4107, %v4106
  %v4159 = vpack.c.b16 %v4109, %v4108
  %v4160 = vpack.c.b16 %v4111, %v4110
  %v4161 = vpack.c.b16 %v4113, %v4112
  %v4162 = vpack.c.b16 %v4115, %v4114
  %v4163 = vpack.c.b16 %v4117, %v4116
  %v4164 = vpack.c.b16 %v4119, %v4118
  %v4165 = vpack.c.b16 %v4121, %v4120
  %v4166 = vpack.c.b16 %v4123, %v4122
  %v4167 = vpack.c.b16 %v4125, %v4124
  %v4168 = vpack.c.b16 %v4127, %v4126
  %v4169 = vpack.c.b16 %v4129, %v4128
  %v4170 = vpack.c.b16 %v4131, %v4130
  %v4171 = vpack.c.b16 %v4133, %v4132
  %v4172 = vpack.c.b16 %v4135, %v4134
  %v4173 = vpack.c.b16 %v4137, %v4136
  %4178 = vrot.lane.b32.xlu0 %v3990, 73
  %v4179 = vpop.permute.xlu0 %4178
  %4180 = vrot.lane.b32.xlu0 %v3991, 73
  %v4181 = vpop.permute.xlu0 %4180
  %4182 = vrot.lane.b32.xlu0 %v3992, 73
  %v4183 = vpop.permute.xlu0 %4182
  %4184 = vrot.lane.b32.xlu0 %v3993, 73
  %v4185 = vpop.permute.xlu0 %4184
  %v4191 = vsel %vm2648, %v4138, 0
  %v4194 = vsel %vm2648, %v4139, 0
  %v4197 = vsel %vm2648, %v4140, 0
  %v4200 = vsel %vm2648, %v4141, 0
  %v4203 = vsel %vm2648, %v4142, 0
  %v4206 = vsel %vm2648, %v4143, 0
  %v4209 = vsel %vm2648, %v4144, 0
  %v4212 = vsel %vm2648, %v4145, 0
  %v4215 = vsel %vm2648, %v4146, 0
  %v4218 = vsel %vm2648, %v4147, 0
  %v4221 = vsel %vm2648, %v4148, 0
  %v4224 = vsel %vm2648, %v4149, 0
  %v4227 = vsel %vm2648, %v4150, 0
  %v4230 = vsel %vm2648, %v4151, 0
  %v4233 = vsel %vm2648, %v4152, 0
  %v4236 = vsel %vm2648, %v4153, 0
  %v4239 = vsel %vm2648, %v4154, 0
  %v4242 = vsel %vm2648, %v4155, 0
  %v4245 = vsel %vm2648, %v4156, 0
  %v4248 = vsel %vm2648, %v4157, 0
  %v4251 = vsel %vm2648, %v4158, 0
  %v4254 = vsel %vm2648, %v4159, 0
  %v4257 = vsel %vm2648, %v4160, 0
  %v4260 = vsel %vm2648, %v4161, 0
  %v4263 = vsel %vm2648, %v4162, 0
  %v4266 = vsel %vm2648, %v4163, 0
  %v4269 = vsel %vm2648, %v4164, 0
  %v4272 = vsel %vm2648, %v4165, 0
  %v4275 = vsel %vm2648, %v4166, 0
  %v4278 = vsel %vm2648, %v4167, 0
  %v4281 = vsel %vm2648, %v4168, 0
  %v4284 = vsel %vm2648, %v4169, 0
  %v4287 = vsel %vm2648, %v4170, 0
  %v4290 = vsel %vm2648, %v4171, 0
  %v4293 = vsel %vm2648, %v4172, 0
  %v4296 = vsel %vm2648, %v4173, 0
  %4298 = vmatprep.subr.bf16.mxu0 0
  %4299 = vmatpush1.bf16.msra.mxu0 %v4179
  %4300 = vmatprep.subr.bf16.mxu0 0
  %4301 = vmatpush1.bf16.msra.mxu0 %v4181
  %4302 = vmatprep.subr.bf16.mxu0 0
  %4303 = vmatpush1.bf16.msra.mxu0 %v4183
  %4304 = vmatprep.subr.bf16.mxu0 0
  %4305 = vmatpush1.bf16.msra.mxu0 %v4185
  %4306 = vmatprep.subr.bf16.mxu0 0
  %4307 = vmatpush1.bf16.msra.mxu0 0
  %4308 = vmatprep.subr.bf16.mxu0 0
  %4309 = vmatpush1.bf16.msra.mxu0 0
  %4310 = vmatprep.subr.bf16.mxu0 0
  %4311 = vmatpush1.bf16.msra.mxu0 0
  %4312 = vmatprep.subr.bf16.mxu0 0
  %4313 = vmatpush1.bf16.msra.mxu0 0
  %4314 = vmatprep.subr.bf16.mxu0 0
  %4315 = vmatpush1.bf16.msra.mxu0 0
  %4316 = vmatprep.subr.bf16.mxu0 0
  %4317 = vmatpush1.bf16.msra.mxu0 0
  %4318 = vmatprep.subr.bf16.mxu0 0
  %4319 = vmatpush1.bf16.msra.mxu0 0
  %4320 = vmatprep.subr.bf16.mxu0 0
  %4321 = vmatpush1.bf16.msra.mxu0 0
  %4322 = vmatprep.subr.bf16.mxu0 0
  %4323 = vmatpush1.bf16.msra.mxu0 0
  %4324 = vmatprep.subr.bf16.mxu0 0
  %4325 = vmatpush1.bf16.msra.mxu0 0
  %4326 = vmatprep.subr.bf16.mxu0 0
  %4327 = vmatpush1.bf16.msra.mxu0 0
  %4328 = vmatprep.subr.bf16.mxu0 0
  %4329 = vmatpush1.bf16.msra.mxu0 0
  %4330 = vmatprep.mubr.bf16.mxu0 0
  %4331 = vmatmul.mubr.bf16.gmra.mrb[0].mxu0 %v4191
  %v4332 = vpop.f32.mrb[0].mxu0
  %v4333 = vadd.f32 0.0, %v4332
  %v4334 = vpop.f32.mrb[0].mxu0
  %v4335 = vpop.f32.mrb[0].mxu0
  %v4336 = vadd.f32 0.0, %v4335
  %v4337 = vpop.f32.mrb[0].mxu0
  %4338 = vmatprep.mubr.bf16.mxu0 0
  %4339 = vmatmul.mubr.bf16.gmra.mrb[0].mxu0 %v4194
  %v4340 = vpop.f32.mrb[0].mxu0
  %v4341 = vadd.f32 0.0, %v4340
  %v4342 = vpop.f32.mrb[0].mxu0
  %v4343 = vpop.f32.mrb[0].mxu0
  %v4344 = vadd.f32 0.0, %v4343
  %v4345 = vpop.f32.mrb[0].mxu0
  %4346 = vmatprep.mubr.bf16.mxu0 0
  %4347 = vmatmul.mubr.bf16.gmra.mrb[0].mxu0 %v4197
  %v4348 = vpop.f32.mrb[0].mxu0
  %v4349 = vadd.f32 0.0, %v4348
  %v4350 = vpop.f32.mrb[0].mxu0
  %v4351 = vpop.f32.mrb[0].mxu0
  %v4352 = vadd.f32 0.0, %v4351
  %v4353 = vpop.f32.mrb[0].mxu0
  %4354 = vmatprep.mubr.bf16.mxu0 0
  %4355 = vmatmul.mubr.bf16.gmra.mrb[0].mxu0 %v4200
  %v4356 = vpop.f32.mrb[0].mxu0
  %v4357 = vadd.f32 0.0, %v4356
  %v4358 = vpop.f32.mrb[0].mxu0
  %v4359 = vpop.f32.mrb[0].mxu0
  %v4360 = vadd.f32 0.0, %v4359
  %v4361 = vpop.f32.mrb[0].mxu0
  %4362 = vmatprep.mubr.bf16.mxu0 0
  %4363 = vmatmul.mubr.bf16.gmra.mrb[0].mxu0 %v4203
  %v4364 = vpop.f32.mrb[0].mxu0
  %v4365 = vadd.f32 0.0, %v4364
  %v4366 = vpop.f32.mrb[0].mxu0
  %v4367 = vpop.f32.mrb[0].mxu0
  %v4368 = vadd.f32 0.0, %v4367
  %v4369 = vpop.f32.mrb[0].mxu0
  %4370 = vmatprep.mubr.bf16.mxu0 0
  %4371 = vmatmul.mubr.bf16.gmra.mrb[0].mxu0 %v4206
  %v4372 = vpop.f32.mrb[0].mxu0
  %v4373 = vadd.f32 0.0, %v4372
  %v4374 = vpop.f32.mrb[0].mxu0
  %v4375 = vpop.f32.mrb[0].mxu0
  %v4376 = vadd.f32 0.0, %v4375
  %v4377 = vpop.f32.mrb[0].mxu0
  %4378 = vmatprep.mubr.bf16.mxu0 0
  %4379 = vmatmul.mubr.bf16.gmra.mrb[0].mxu0 %v4209
  %v4380 = vpop.f32.mrb[0].mxu0
  %v4381 = vadd.f32 0.0, %v4380
  %v4382 = vpop.f32.mrb[0].mxu0
  %v4383 = vpop.f32.mrb[0].mxu0
  %v4384 = vadd.f32 0.0, %v4383
  %v4385 = vpop.f32.mrb[0].mxu0
  %4386 = vmatprep.mubr.bf16.mxu0 0
  %4387 = vmatmul.mubr.bf16.gmra.mrb[0].mxu0 %v4212
  %v4388 = vpop.f32.mrb[0].mxu0
  %v4389 = vadd.f32 0.0, %v4388
  %v4390 = vpop.f32.mrb[0].mxu0
  %v4391 = vpop.f32.mrb[0].mxu0
  %v4392 = vadd.f32 0.0, %v4391
  %v4393 = vpop.f32.mrb[0].mxu0
  %4394 = vmatprep.mubr.bf16.mxu0 0
  %4395 = vmatmul.mubr.bf16.gmra.mrb[0].mxu0 %v4215
  %v4396 = vpop.f32.mrb[0].mxu0
  %v4397 = vadd.f32 0.0, %v4396
  %v4398 = vpop.f32.mrb[0].mxu0
  %v4399 = vpop.f32.mrb[0].mxu0
  %v4400 = vadd.f32 0.0, %v4399
  %v4401 = vpop.f32.mrb[0].mxu0
  %4402 = vmatprep.mubr.bf16.mxu0 0
  %4403 = vmatmul.mubr.bf16.gmra.mrb[0].mxu0 %v4218
  %v4404 = vpop.f32.mrb[0].mxu0
  %v4405 = vadd.f32 0.0, %v4404
  %v4406 = vpop.f32.mrb[0].mxu0
  %v4407 = vpop.f32.mrb[0].mxu0
  %v4408 = vadd.f32 0.0, %v4407
  %v4409 = vpop.f32.mrb[0].mxu0
  %4410 = vmatprep.mubr.bf16.mxu0 0
  %4411 = vmatmul.mubr.bf16.gmra.mrb[0].mxu0 %v4221
  %v4412 = vpop.f32.mrb[0].mxu0
  %v4413 = vadd.f32 0.0, %v4412
  %v4414 = vpop.f32.mrb[0].mxu0
  %v4415 = vpop.f32.mrb[0].mxu0
  %v4416 = vadd.f32 0.0, %v4415
  %v4417 = vpop.f32.mrb[0].mxu0
  %4418 = vmatprep.mubr.bf16.mxu0 0
  %4419 = vmatmul.mubr.bf16.gmra.mrb[0].mxu0 %v4224
  %v4420 = vpop.f32.mrb[0].mxu0
  %v4421 = vadd.f32 0.0, %v4420
  %v4422 = vpop.f32.mrb[0].mxu0
  %v4423 = vpop.f32.mrb[0].mxu0
  %v4424 = vadd.f32 0.0, %v4423
  %v4425 = vpop.f32.mrb[0].mxu0
  %4426 = vmatprep.mubr.bf16.mxu0 0
  %4427 = vmatmul.mubr.bf16.gmra.mrb[0].mxu0 %v4227
  %v4428 = vpop.f32.mrb[0].mxu0
  %v4429 = vadd.f32 0.0, %v4428
  %v4430 = vpop.f32.mrb[0].mxu0
  %v4431 = vpop.f32.mrb[0].mxu0
  %v4432 = vadd.f32 0.0, %v4431
  %v4433 = vpop.f32.mrb[0].mxu0
  %4434 = vmatprep.mubr.bf16.mxu0 0
  %4435 = vmatmul.mubr.bf16.gmra.mrb[0].mxu0 %v4230
  %v4436 = vpop.f32.mrb[0].mxu0
  %v4437 = vadd.f32 0.0, %v4436
  %v4438 = vpop.f32.mrb[0].mxu0
  %v4439 = vpop.f32.mrb[0].mxu0
  %v4440 = vadd.f32 0.0, %v4439
  %v4441 = vpop.f32.mrb[0].mxu0
  %4442 = vmatprep.mubr.bf16.mxu0 0
  %4443 = vmatmul.mubr.bf16.gmra.mrb[0].mxu0 %v4233
  %v4444 = vpop.f32.mrb[0].mxu0
  %v4445 = vadd.f32 0.0, %v4444
  %v4446 = vpop.f32.mrb[0].mxu0
  %v4447 = vpop.f32.mrb[0].mxu0
  %v4448 = vadd.f32 0.0, %v4447
  %v4449 = vpop.f32.mrb[0].mxu0
  %4450 = vmatprep.mubr.bf16.mxu0 0
  %4451 = vmatmul.mubr.bf16.gmra.mrb[0].mxu0 %v4236
  %v4452 = vpop.f32.mrb[0].mxu0
  %v4453 = vadd.f32 0.0, %v4452
  %v4454 = vpop.f32.mrb[0].mxu0
  %v4455 = vpop.f32.mrb[0].mxu0
  %v4456 = vadd.f32 0.0, %v4455
  %v4457 = vpop.f32.mrb[0].mxu0
  %4458 = vmatprep.mubr.bf16.mxu0 0
  %4459 = vmatmul.mubr.bf16.gmra.mrb[0].mxu0 %v4239
  %v4460 = vpop.f32.mrb[0].mxu0
  %v4461 = vadd.f32 0.0, %v4460
  %v4462 = vpop.f32.mrb[0].mxu0
  %v4463 = vpop.f32.mrb[0].mxu0
  %v4464 = vadd.f32 0.0, %v4463
  %v4465 = vpop.f32.mrb[0].mxu0
  %4466 = vmatprep.mubr.bf16.mxu0 0
  %4467 = vmatmul.mubr.bf16.gmra.mrb[0].mxu0 %v4242
  %v4468 = vpop.f32.mrb[0].mxu0
  %v4469 = vadd.f32 0.0, %v4468
  %v4470 = vpop.f32.mrb[0].mxu0
  %v4471 = vpop.f32.mrb[0].mxu0
  %v4472 = vadd.f32 0.0, %v4471
  %v4473 = vpop.f32.mrb[0].mxu0
  %4474 = vmatprep.mubr.bf16.mxu0 0
  %4475 = vmatmul.mubr.bf16.gmra.mrb[0].mxu0 %v4245
  %v4476 = vpop.f32.mrb[0].mxu0
  %v4477 = vadd.f32 0.0, %v4476
  %v4478 = vpop.f32.mrb[0].mxu0
  %v4479 = vpop.f32.mrb[0].mxu0
  %v4480 = vadd.f32 0.0, %v4479
  %v4481 = vpop.f32.mrb[0].mxu0
  %4482 = vmatprep.mubr.bf16.mxu0 0
  %4483 = vmatmul.mubr.bf16.gmra.mrb[0].mxu0 %v4248
  %v4484 = vpop.f32.mrb[0].mxu0
  %v4485 = vadd.f32 0.0, %v4484
  %v4486 = vpop.f32.mrb[0].mxu0
  %v4487 = vpop.f32.mrb[0].mxu0
  %v4488 = vadd.f32 0.0, %v4487
  %v4489 = vpop.f32.mrb[0].mxu0
  %4490 = vmatprep.mubr.bf16.mxu0 0
  %4491 = vmatmul.mubr.bf16.gmra.mrb[0].mxu0 %v4251
  %v4492 = vpop.f32.mrb[0].mxu0
  %v4493 = vadd.f32 0.0, %v4492
  %v4494 = vpop.f32.mrb[0].mxu0
  %v4495 = vpop.f32.mrb[0].mxu0
  %v4496 = vadd.f32 0.0, %v4495
  %v4497 = vpop.f32.mrb[0].mxu0
  %4498 = vmatprep.mubr.bf16.mxu0 0
  %4499 = vmatmul.mubr.bf16.gmra.mrb[0].mxu0 %v4254
  %v4500 = vpop.f32.mrb[0].mxu0
  %v4501 = vadd.f32 0.0, %v4500
  %v4502 = vpop.f32.mrb[0].mxu0
  %v4503 = vpop.f32.mrb[0].mxu0
  %v4504 = vadd.f32 0.0, %v4503
  %v4505 = vpop.f32.mrb[0].mxu0
  %4506 = vmatprep.mubr.bf16.mxu0 0
  %4507 = vmatmul.mubr.bf16.gmra.mrb[0].mxu0 %v4257
  %v4508 = vpop.f32.mrb[0].mxu0
  %v4509 = vadd.f32 0.0, %v4508
  %v4510 = vpop.f32.mrb[0].mxu0
  %v4511 = vpop.f32.mrb[0].mxu0
  %v4512 = vadd.f32 0.0, %v4511
  %v4513 = vpop.f32.mrb[0].mxu0
  %4514 = vmatprep.mubr.bf16.mxu0 0
  %4515 = vmatmul.mubr.bf16.gmra.mrb[0].mxu0 %v4260
  %v4516 = vpop.f32.mrb[0].mxu0
  %v4517 = vadd.f32 0.0, %v4516
  %v4518 = vpop.f32.mrb[0].mxu0
  %v4519 = vpop.f32.mrb[0].mxu0
  %v4520 = vadd.f32 0.0, %v4519
  %v4521 = vpop.f32.mrb[0].mxu0
  %4522 = vmatprep.mubr.bf16.mxu0 0
  %4523 = vmatmul.mubr.bf16.gmra.mrb[0].mxu0 %v4263
  %v4524 = vpop.f32.mrb[0].mxu0
  %v4525 = vadd.f32 0.0, %v4524
  %v4526 = vpop.f32.mrb[0].mxu0
  %v4527 = vpop.f32.mrb[0].mxu0
  %v4528 = vadd.f32 0.0, %v4527
  %v4529 = vpop.f32.mrb[0].mxu0
  %4530 = vmatprep.mubr.bf16.mxu0 0
  %4531 = vmatmul.mubr.bf16.gmra.mrb[0].mxu0 %v4266
  %v4532 = vpop.f32.mrb[0].mxu0
  %v4533 = vadd.f32 0.0, %v4532
  %v4534 = vpop.f32.mrb[0].mxu0
  %v4535 = vpop.f32.mrb[0].mxu0
  %v4536 = vadd.f32 0.0, %v4535
  %v4537 = vpop.f32.mrb[0].mxu0
  %4538 = vmatprep.mubr.bf16.mxu0 0
  %4539 = vmatmul.mubr.bf16.gmra.mrb[0].mxu0 %v4269
  %v4540 = vpop.f32.mrb[0].mxu0
  %v4541 = vadd.f32 0.0, %v4540
  %v4542 = vpop.f32.mrb[0].mxu0
  %v4543 = vpop.f32.mrb[0].mxu0
  %v4544 = vadd.f32 0.0, %v4543
  %v4545 = vpop.f32.mrb[0].mxu0
  %4546 = vmatprep.mubr.bf16.mxu0 0
  %4547 = vmatmul.mubr.bf16.gmra.mrb[0].mxu0 %v4272
  %v4548 = vpop.f32.mrb[0].mxu0
  %v4549 = vadd.f32 0.0, %v4548
  %v4550 = vpop.f32.mrb[0].mxu0
  %v4551 = vpop.f32.mrb[0].mxu0
  %v4552 = vadd.f32 0.0, %v4551
  %v4553 = vpop.f32.mrb[0].mxu0
  %4554 = vmatprep.mubr.bf16.mxu0 0
  %4555 = vmatmul.mubr.bf16.gmra.mrb[0].mxu0 %v4275
  %v4556 = vpop.f32.mrb[0].mxu0
  %v4557 = vadd.f32 0.0, %v4556
  %v4558 = vpop.f32.mrb[0].mxu0
  %v4559 = vpop.f32.mrb[0].mxu0
  %v4560 = vadd.f32 0.0, %v4559
  %v4561 = vpop.f32.mrb[0].mxu0
  %4562 = vmatprep.mubr.bf16.mxu0 0
  %4563 = vmatmul.mubr.bf16.gmra.mrb[0].mxu0 %v4278
  %v4564 = vpop.f32.mrb[0].mxu0
  %v4565 = vadd.f32 0.0, %v4564
  %v4566 = vpop.f32.mrb[0].mxu0
  %v4567 = vpop.f32.mrb[0].mxu0
  %v4568 = vadd.f32 0.0, %v4567
  %v4569 = vpop.f32.mrb[0].mxu0
  %4570 = vmatprep.mubr.bf16.mxu0 0
  %4571 = vmatmul.mubr.bf16.gmra.mrb[0].mxu0 %v4281
  %v4572 = vpop.f32.mrb[0].mxu0
  %v4573 = vadd.f32 0.0, %v4572
  %v4574 = vpop.f32.mrb[0].mxu0
  %v4575 = vpop.f32.mrb[0].mxu0
  %v4576 = vadd.f32 0.0, %v4575
  %v4577 = vpop.f32.mrb[0].mxu0
  %4578 = vmatprep.mubr.bf16.mxu0 0
  %4579 = vmatmul.mubr.bf16.gmra.mrb[0].mxu0 %v4284
  %v4580 = vpop.f32.mrb[0].mxu0
  %v4581 = vadd.f32 0.0, %v4580
  %v4582 = vpop.f32.mrb[0].mxu0
  %v4583 = vpop.f32.mrb[0].mxu0
  %v4584 = vadd.f32 0.0, %v4583
  %v4585 = vpop.f32.mrb[0].mxu0
  %4586 = vmatprep.mubr.bf16.mxu0 0
  %4587 = vmatmul.mubr.bf16.gmra.mrb[0].mxu0 %v4287
  %v4588 = vpop.f32.mrb[0].mxu0
  %v4589 = vadd.f32 0.0, %v4588
  %v4590 = vpop.f32.mrb[0].mxu0
  %v4591 = vpop.f32.mrb[0].mxu0
  %v4592 = vadd.f32 0.0, %v4591
  %v4593 = vpop.f32.mrb[0].mxu0
  %4594 = vmatprep.mubr.bf16.mxu0 0
  %4595 = vmatmul.mubr.bf16.gmra.mrb[0].mxu0 %v4290
  %v4596 = vpop.f32.mrb[0].mxu0
  %v4597 = vadd.f32 0.0, %v4596
  %v4598 = vpop.f32.mrb[0].mxu0
  %v4599 = vpop.f32.mrb[0].mxu0
  %v4600 = vadd.f32 0.0, %v4599
  %v4601 = vpop.f32.mrb[0].mxu0
  %4602 = vmatprep.mubr.bf16.mxu0 0
  %4603 = vmatmul.mubr.bf16.gmra.mrb[0].mxu0 %v4293
  %v4604 = vpop.f32.mrb[0].mxu0
  %v4605 = vadd.f32 0.0, %v4604
  %v4606 = vpop.f32.mrb[0].mxu0
  %v4607 = vpop.f32.mrb[0].mxu0
  %v4608 = vadd.f32 0.0, %v4607
  %v4609 = vpop.f32.mrb[0].mxu0
  %4610 = vmatprep.mubr.bf16.mxu0 0
  %4611 = vmatmul.mubr.bf16.gmra.mrb[0].mxu0 %v4296
  %v4612 = vpop.f32.mrb[0].mxu0
  %v4613 = vadd.f32 0.0, %v4612
  %v4614 = vpop.f32.mrb[0].mxu0
  %v4615 = vpop.f32.mrb[0].mxu0
  %v4616 = vadd.f32 0.0, %v4615
  %v4617 = vpop.f32.mrb[0].mxu0
  %4618 = vdwg.mxu0
  %v4619 = vld [vmem:[%s31] sm:$0xff]
  %v4620 = vld [vmem:[%s31 + $0x8] sm:$0xff]
  %v4621 = vld [vmem:[%s31 + $0x10] sm:$0xff]
  %v4622 = vld [vmem:[%s31 + $0x18] sm:$0xff]
  %v4623 = vld [vmem:[%s31 + $0x20] sm:$0xff]
  %v4624 = vld [vmem:[%s31 + $0x28] sm:$0xff]
  %v4625 = vld [vmem:[%s31 + $0x30] sm:$0xff]
  %v4626 = vld [vmem:[%s31 + $0x38] sm:$0xff]
  %4627 = vrot.lane.b32.xlu0 %v4333, 64
  %v4628 = vpop.permute.xlu0 %4627
  %v4629 = vsel %vm1473, %v4628, %v4333
  %4630 = vrot.lane.b32.xlu0 %v4336, 64
  %v4631 = vpop.permute.xlu0 %4630
  %v4632 = vsel %vm1473, %v4631, %v4336
  %4633 = vrot.lane.b32.xlu0 %v4341, 64
  %v4634 = vpop.permute.xlu0 %4633
  %v4635 = vsel %vm1473, %v4634, %v4341
  %4636 = vrot.lane.b32.xlu0 %v4344, 64
  %v4637 = vpop.permute.xlu0 %4636
  %v4638 = vsel %vm1473, %v4637, %v4344
  %4639 = vrot.lane.b32.xlu0 %v4349, 64
  %v4640 = vpop.permute.xlu0 %4639
  %v4641 = vsel %vm1473, %v4640, %v4349
  %4642 = vrot.lane.b32.xlu0 %v4352, 64
  %v4643 = vpop.permute.xlu0 %4642
  %v4644 = vsel %vm1473, %v4643, %v4352
  %4645 = vrot.lane.b32.xlu0 %v4357, 64
  %v4646 = vpop.permute.xlu0 %4645
  %v4647 = vsel %vm1473, %v4646, %v4357
  %4648 = vrot.lane.b32.xlu0 %v4360, 64
  %v4649 = vpop.permute.xlu0 %4648
  %v4650 = vsel %vm1473, %v4649, %v4360
  %4651 = vrot.lane.b32.xlu0 %v4629, 64
  %v4652 = vpop.permute.xlu0 %4651
  %4653 = vrot.lane.b32.xlu0 %v4632, 64
  %v4654 = vpop.permute.xlu0 %4653
  %4655 = vrot.lane.b32.xlu0 %v4635, 64
  %v4656 = vpop.permute.xlu0 %4655
  %4657 = vrot.lane.b32.xlu0 %v4638, 64
  %v4658 = vpop.permute.xlu0 %4657
  %4659 = vrot.lane.b32.xlu0 %v4641, 64
  %v4660 = vpop.permute.xlu0 %4659
  %4661 = vrot.lane.b32.xlu0 %v4644, 64
  %v4662 = vpop.permute.xlu0 %4661
  %4663 = vrot.lane.b32.xlu0 %v4647, 64
  %v4664 = vpop.permute.xlu0 %4663
  %4665 = vrot.lane.b32.xlu0 %v4650, 64
  %v4666 = vpop.permute.xlu0 %4665
  %v4667 = vsel %vm1473, %v4652, %v4333
  %v4668 = vsel %vm1473, %v4654, %v4336
  %v4669 = vsel %vm1473, %v4656, %v4341
  %v4670 = vsel %vm1473, %v4658, %v4344
  %v4671 = vsel %vm1473, %v4660, %v4349
  %v4672 = vsel %vm1473, %v4662, %v4352
  %v4673 = vsel %vm1473, %v4664, %v4357
  %v4674 = vsel %vm1473, %v4666, %v4360
  %v4675 = vmul.f32 %v4667, %v1528
  %v4676 = vmul.f32 %v4668, %v1528
  %v4677 = vmul.f32 %v4669, %v1528
  %v4678 = vmul.f32 %v4670, %v1528
  %v4679 = vmul.f32 %v4671, %v1528
  %v4680 = vmul.f32 %v4672, %v1528
  %v4681 = vmul.f32 %v4673, %v1528
  %v4682 = vmul.f32 %v4674, %v1528
  %4684 = vset.pattern.permute.xlu0 0
  %4685 = vperm.xlu0 %4684, %v4619
  %v4686 = vpop.permute.xlu0 %4685
  %4689 = vset.pattern.permute.xlu0 0
  %4690 = vperm.xlu0 %4689, %v4620
  %v4691 = vpop.permute.xlu0 %4690
  %4694 = vset.pattern.permute.xlu0 0
  %4695 = vperm.xlu0 %4694, %v4621
  %v4696 = vpop.permute.xlu0 %4695
  %4699 = vset.pattern.permute.xlu0 0
  %4700 = vperm.xlu0 %4699, %v4622
  %v4701 = vpop.permute.xlu0 %4700
  %4704 = vset.pattern.permute.xlu0 0
  %4705 = vperm.xlu0 %4704, %v4623
  %v4706 = vpop.permute.xlu0 %4705
  %4709 = vset.pattern.permute.xlu0 0
  %4710 = vperm.xlu0 %4709, %v4624
  %v4711 = vpop.permute.xlu0 %4710
  %4714 = vset.pattern.permute.xlu0 0
  %4715 = vperm.xlu0 %4714, %v4625
  %v4716 = vpop.permute.xlu0 %4715
  %4719 = vset.pattern.permute.xlu0 0
  %4720 = vperm.xlu0 %4719, %v4626
  %v4721 = vpop.permute.xlu0 %4720
  %v4723 = vadd.f32 %v4686, %v4675
  %v4724 = vadd.f32 %v4691, %v4676
  %v4725 = vadd.f32 %v4696, %v4677
  %v4726 = vadd.f32 %v4701, %v4678
  %v4727 = vadd.f32 %v4706, %v4679
  %v4728 = vadd.f32 %v4711, %v4680
  %v4729 = vadd.f32 %v4716, %v4681
  %v4730 = vadd.f32 %v4721, %v4682
  %4731 = vrot.lane.b32.xlu0 %v4365, 64
  %v4732 = vpop.permute.xlu0 %4731
  %v4733 = vsel %vm1473, %v4732, %v4365
  %4734 = vrot.lane.b32.xlu0 %v4368, 64
  %v4735 = vpop.permute.xlu0 %4734
  %v4736 = vsel %vm1473, %v4735, %v4368
  %4737 = vrot.lane.b32.xlu0 %v4373, 64
  %v4738 = vpop.permute.xlu0 %4737
  %v4739 = vsel %vm1473, %v4738, %v4373
  %4740 = vrot.lane.b32.xlu0 %v4376, 64
  %v4741 = vpop.permute.xlu0 %4740
  %v4742 = vsel %vm1473, %v4741, %v4376
  %4743 = vrot.lane.b32.xlu0 %v4381, 64
  %v4744 = vpop.permute.xlu0 %4743
  %v4745 = vsel %vm1473, %v4744, %v4381
  %4746 = vrot.lane.b32.xlu0 %v4384, 64
  %v4747 = vpop.permute.xlu0 %4746
  %v4748 = vsel %vm1473, %v4747, %v4384
  %4749 = vrot.lane.b32.xlu0 %v4389, 64
  %v4750 = vpop.permute.xlu0 %4749
  %v4751 = vsel %vm1473, %v4750, %v4389
  %4752 = vrot.lane.b32.xlu0 %v4392, 64
  %v4753 = vpop.permute.xlu0 %4752
  %v4754 = vsel %vm1473, %v4753, %v4392
  %4755 = vrot.lane.b32.xlu0 %v4733, 64
  %v4756 = vpop.permute.xlu0 %4755
  %4757 = vrot.lane.b32.xlu0 %v4736, 64
  %v4758 = vpop.permute.xlu0 %4757
  %4759 = vrot.lane.b32.xlu0 %v4739, 64
  %v4760 = vpop.permute.xlu0 %4759
  %4761 = vrot.lane.b32.xlu0 %v4742, 64
  %v4762 = vpop.permute.xlu0 %4761
  %4763 = vrot.lane.b32.xlu0 %v4745, 64
  %v4764 = vpop.permute.xlu0 %4763
  %4765 = vrot.lane.b32.xlu0 %v4748, 64
  %v4766 = vpop.permute.xlu0 %4765
  %4767 = vrot.lane.b32.xlu0 %v4751, 64
  %v4768 = vpop.permute.xlu0 %4767
  %4769 = vrot.lane.b32.xlu0 %v4754, 64
  %v4770 = vpop.permute.xlu0 %4769
  %v4771 = vsel %vm1473, %v4756, %v4365
  %v4772 = vsel %vm1473, %v4758, %v4368
  %v4773 = vsel %vm1473, %v4760, %v4373
  %v4774 = vsel %vm1473, %v4762, %v4376
  %v4775 = vsel %vm1473, %v4764, %v4381
  %v4776 = vsel %vm1473, %v4766, %v4384
  %v4777 = vsel %vm1473, %v4768, %v4389
  %v4778 = vsel %vm1473, %v4770, %v4392
  %v4779 = vmul.f32 %v4771, %v1640
  %v4780 = vmul.f32 %v4772, %v1640
  %v4781 = vmul.f32 %v4773, %v1640
  %v4782 = vmul.f32 %v4774, %v1640
  %v4783 = vmul.f32 %v4775, %v1640
  %v4784 = vmul.f32 %v4776, %v1640
  %v4785 = vmul.f32 %v4777, %v1640
  %v4786 = vmul.f32 %v4778, %v1640
  %4795 = vrot.lane.b32.xlu0 %v4779, 127
  %v4796 = vpop.permute.xlu0 %4795
  %4797 = vrot.lane.b32.xlu0 %v4780, 127
  %v4798 = vpop.permute.xlu0 %4797
  %4799 = vrot.lane.b32.xlu0 %v4781, 127
  %v4800 = vpop.permute.xlu0 %4799
  %4801 = vrot.lane.b32.xlu0 %v4782, 127
  %v4802 = vpop.permute.xlu0 %4801
  %4803 = vrot.lane.b32.xlu0 %v4783, 127
  %v4804 = vpop.permute.xlu0 %4803
  %4805 = vrot.lane.b32.xlu0 %v4784, 127
  %v4806 = vpop.permute.xlu0 %4805
  %4807 = vrot.lane.b32.xlu0 %v4785, 127
  %v4808 = vpop.permute.xlu0 %4807
  %4809 = vrot.lane.b32.xlu0 %v4786, 127
  %v4810 = vpop.permute.xlu0 %4809
  %v4819 = vadd.f32 %v4723, %v4796
  %v4820 = vadd.f32 %v4724, %v4798
  %v4821 = vadd.f32 %v4725, %v4800
  %v4822 = vadd.f32 %v4726, %v4802
  %v4823 = vadd.f32 %v4727, %v4804
  %v4824 = vadd.f32 %v4728, %v4806
  %v4825 = vadd.f32 %v4729, %v4808
  %v4826 = vadd.f32 %v4730, %v4810
  %4827 = vrot.lane.b32.xlu0 %v4397, 64
  %v4828 = vpop.permute.xlu0 %4827
  %v4829 = vsel %vm1473, %v4828, %v4397
  %4830 = vrot.lane.b32.xlu0 %v4400, 64
  %v4831 = vpop.permute.xlu0 %4830
  %v4832 = vsel %vm1473, %v4831, %v4400
  %4833 = vrot.lane.b32.xlu0 %v4405, 64
  %v4834 = vpop.permute.xlu0 %4833
  %v4835 = vsel %vm1473, %v4834, %v4405
  %4836 = vrot.lane.b32.xlu0 %v4408, 64
  %v4837 = vpop.permute.xlu0 %4836
  %v4838 = vsel %vm1473, %v4837, %v4408
  %4839 = vrot.lane.b32.xlu0 %v4413, 64
  %v4840 = vpop.permute.xlu0 %4839
  %v4841 = vsel %vm1473, %v4840, %v4413
  %4842 = vrot.lane.b32.xlu0 %v4416, 64
  %v4843 = vpop.permute.xlu0 %4842
  %v4844 = vsel %vm1473, %v4843, %v4416
  %4845 = vrot.lane.b32.xlu0 %v4421, 64
  %v4846 = vpop.permute.xlu0 %4845
  %v4847 = vsel %vm1473, %v4846, %v4421
  %4848 = vrot.lane.b32.xlu0 %v4424, 64
  %v4849 = vpop.permute.xlu0 %4848
  %v4850 = vsel %vm1473, %v4849, %v4424
  %4851 = vrot.lane.b32.xlu0 %v4829, 64
  %v4852 = vpop.permute.xlu0 %4851
  %4853 = vrot.lane.b32.xlu0 %v4832, 64
  %v4854 = vpop.permute.xlu0 %4853
  %4855 = vrot.lane.b32.xlu0 %v4835, 64
  %v4856 = vpop.permute.xlu0 %4855
  %4857 = vrot.lane.b32.xlu0 %v4838, 64
  %v4858 = vpop.permute.xlu0 %4857
  %4859 = vrot.lane.b32.xlu0 %v4841, 64
  %v4860 = vpop.permute.xlu0 %4859
  %4861 = vrot.lane.b32.xlu0 %v4844, 64
  %v4862 = vpop.permute.xlu0 %4861
  %4863 = vrot.lane.b32.xlu0 %v4847, 64
  %v4864 = vpop.permute.xlu0 %4863
  %4865 = vrot.lane.b32.xlu0 %v4850, 64
  %v4866 = vpop.permute.xlu0 %4865
  %v4867 = vsel %vm1473, %v4852, %v4397
  %v4868 = vsel %vm1473, %v4854, %v4400
  %v4869 = vsel %vm1473, %v4856, %v4405
  %v4870 = vsel %vm1473, %v4858, %v4408
  %v4871 = vsel %vm1473, %v4860, %v4413
  %v4872 = vsel %vm1473, %v4862, %v4416
  %v4873 = vsel %vm1473, %v4864, %v4421
  %v4874 = vsel %vm1473, %v4866, %v4424
  %v4875 = vmul.f32 %v4867, %v1744
  %v4876 = vmul.f32 %v4868, %v1744
  %v4877 = vmul.f32 %v4869, %v1744
  %v4878 = vmul.f32 %v4870, %v1744
  %v4879 = vmul.f32 %v4871, %v1744
  %v4880 = vmul.f32 %v4872, %v1744
  %v4881 = vmul.f32 %v4873, %v1744
  %v4882 = vmul.f32 %v4874, %v1744
  %4891 = vrot.lane.b32.xlu0 %v4875, 126
  %v4892 = vpop.permute.xlu0 %4891
  %4893 = vrot.lane.b32.xlu0 %v4876, 126
  %v4894 = vpop.permute.xlu0 %4893
  %4895 = vrot.lane.b32.xlu0 %v4877, 126
  %v4896 = vpop.permute.xlu0 %4895
  %4897 = vrot.lane.b32.xlu0 %v4878, 126
  %v4898 = vpop.permute.xlu0 %4897
  %4899 = vrot.lane.b32.xlu0 %v4879, 126
  %v4900 = vpop.permute.xlu0 %4899
  %4901 = vrot.lane.b32.xlu0 %v4880, 126
  %v4902 = vpop.permute.xlu0 %4901
  %4903 = vrot.lane.b32.xlu0 %v4881, 126
  %v4904 = vpop.permute.xlu0 %4903
  %4905 = vrot.lane.b32.xlu0 %v4882, 126
  %v4906 = vpop.permute.xlu0 %4905
  %v4915 = vadd.f32 %v4819, %v4892
  %v4916 = vadd.f32 %v4820, %v4894
  %v4917 = vadd.f32 %v4821, %v4896
  %v4918 = vadd.f32 %v4822, %v4898
  %v4919 = vadd.f32 %v4823, %v4900
  %v4920 = vadd.f32 %v4824, %v4902
  %v4921 = vadd.f32 %v4825, %v4904
  %v4922 = vadd.f32 %v4826, %v4906
  %4923 = vrot.lane.b32.xlu0 %v4429, 64
  %v4924 = vpop.permute.xlu0 %4923
  %v4925 = vsel %vm1473, %v4924, %v4429
  %4926 = vrot.lane.b32.xlu0 %v4432, 64
  %v4927 = vpop.permute.xlu0 %4926
  %v4928 = vsel %vm1473, %v4927, %v4432
  %4929 = vrot.lane.b32.xlu0 %v4437, 64
  %v4930 = vpop.permute.xlu0 %4929
  %v4931 = vsel %vm1473, %v4930, %v4437
  %4932 = vrot.lane.b32.xlu0 %v4440, 64
  %v4933 = vpop.permute.xlu0 %4932
  %v4934 = vsel %vm1473, %v4933, %v4440
  %4935 = vrot.lane.b32.xlu0 %v4445, 64
  %v4936 = vpop.permute.xlu0 %4935
  %v4937 = vsel %vm1473, %v4936, %v4445
  %4938 = vrot.lane.b32.xlu0 %v4448, 64
  %v4939 = vpop.permute.xlu0 %4938
  %v4940 = vsel %vm1473, %v4939, %v4448
  %4941 = vrot.lane.b32.xlu0 %v4453, 64
  %v4942 = vpop.permute.xlu0 %4941
  %v4943 = vsel %vm1473, %v4942, %v4453
  %4944 = vrot.lane.b32.xlu0 %v4456, 64
  %v4945 = vpop.permute.xlu0 %4944
  %v4946 = vsel %vm1473, %v4945, %v4456
  %4947 = vrot.lane.b32.xlu0 %v4925, 64
  %v4948 = vpop.permute.xlu0 %4947
  %4949 = vrot.lane.b32.xlu0 %v4928, 64
  %v4950 = vpop.permute.xlu0 %4949
  %4951 = vrot.lane.b32.xlu0 %v4931, 64
  %v4952 = vpop.permute.xlu0 %4951
  %4953 = vrot.lane.b32.xlu0 %v4934, 64
  %v4954 = vpop.permute.xlu0 %4953
  %4955 = vrot.lane.b32.xlu0 %v4937, 64
  %v4956 = vpop.permute.xlu0 %4955
  %4957 = vrot.lane.b32.xlu0 %v4940, 64
  %v4958 = vpop.permute.xlu0 %4957
  %4959 = vrot.lane.b32.xlu0 %v4943, 64
  %v4960 = vpop.permute.xlu0 %4959
  %4961 = vrot.lane.b32.xlu0 %v4946, 64
  %v4962 = vpop.permute.xlu0 %4961
  %v4963 = vsel %vm1473, %v4948, %v4429
  %v4964 = vsel %vm1473, %v4950, %v4432
  %v4965 = vsel %vm1473, %v4952, %v4437
  %v4966 = vsel %vm1473, %v4954, %v4440
  %v4967 = vsel %vm1473, %v4956, %v4445
  %v4968 = vsel %vm1473, %v4958, %v4448
  %v4969 = vsel %vm1473, %v4960, %v4453
  %v4970 = vsel %vm1473, %v4962, %v4456
  %v4971 = vmul.f32 %v4963, %v1848
  %v4972 = vmul.f32 %v4964, %v1848
  %v4973 = vmul.f32 %v4965, %v1848
  %v4974 = vmul.f32 %v4966, %v1848
  %v4975 = vmul.f32 %v4967, %v1848
  %v4976 = vmul.f32 %v4968, %v1848
  %v4977 = vmul.f32 %v4969, %v1848
  %v4978 = vmul.f32 %v4970, %v1848
  %4987 = vrot.lane.b32.xlu0 %v4971, 120
  %v4988 = vpop.permute.xlu0 %4987
  %4989 = vrot.lane.b32.xlu0 %v4972, 120
  %v4990 = vpop.permute.xlu0 %4989
  %4991 = vrot.lane.b32.xlu0 %v4973, 120
  %v4992 = vpop.permute.xlu0 %4991
  %4993 = vrot.lane.b32.xlu0 %v4974, 120
  %v4994 = vpop.permute.xlu0 %4993
  %4995 = vrot.lane.b32.xlu0 %v4975, 120
  %v4996 = vpop.permute.xlu0 %4995
  %4997 = vrot.lane.b32.xlu0 %v4976, 120
  %v4998 = vpop.permute.xlu0 %4997
  %4999 = vrot.lane.b32.xlu0 %v4977, 120
  %v5000 = vpop.permute.xlu0 %4999
  %5001 = vrot.lane.b32.xlu0 %v4978, 120
  %v5002 = vpop.permute.xlu0 %5001
  %v5011 = vadd.f32 %v4915, %v4988
  %v5012 = vadd.f32 %v4916, %v4990
  %v5013 = vadd.f32 %v4917, %v4992
  %v5014 = vadd.f32 %v4918, %v4994
  %v5015 = vadd.f32 %v4919, %v4996
  %v5016 = vadd.f32 %v4920, %v4998
  %v5017 = vadd.f32 %v4921, %v5000
  %v5018 = vadd.f32 %v4922, %v5002
  %v5019 = vmul.f32 %v4461, %v1902
  %v5020 = vmul.f32 %v4464, %v1902
  %v5021 = vmul.f32 %v4469, %v1902
  %v5022 = vmul.f32 %v4472, %v1902
  %v5023 = vmul.f32 %v4477, %v1902
  %v5024 = vmul.f32 %v4480, %v1902
  %v5025 = vmul.f32 %v4485, %v1902
  %v5026 = vmul.f32 %v4488, %v1902
  %5035 = vrot.lane.b32.xlu0 %v5019, 55
  %v5036 = vpop.permute.xlu0 %5035
  %5037 = vrot.lane.b32.xlu0 %v5020, 55
  %v5038 = vpop.permute.xlu0 %5037
  %5039 = vrot.lane.b32.xlu0 %v5021, 55
  %v5040 = vpop.permute.xlu0 %5039
  %5041 = vrot.lane.b32.xlu0 %v5022, 55
  %v5042 = vpop.permute.xlu0 %5041
  %5043 = vrot.lane.b32.xlu0 %v5023, 55
  %v5044 = vpop.permute.xlu0 %5043
  %5045 = vrot.lane.b32.xlu0 %v5024, 55
  %v5046 = vpop.permute.xlu0 %5045
  %5047 = vrot.lane.b32.xlu0 %v5025, 55
  %v5048 = vpop.permute.xlu0 %5047
  %5049 = vrot.lane.b32.xlu0 %v5026, 55
  %v5050 = vpop.permute.xlu0 %5049
  %v5059 = vadd.f32 %v5011, %v5036
  %v5060 = vadd.f32 %v5012, %v5038
  %v5061 = vadd.f32 %v5013, %v5040
  %v5062 = vadd.f32 %v5014, %v5042
  %v5063 = vadd.f32 %v5015, %v5044
  %v5064 = vadd.f32 %v5016, %v5046
  %v5065 = vadd.f32 %v5017, %v5048
  %v5066 = vadd.f32 %v5018, %v5050
  %5067 = vrot.lane.b32.xlu0 %v4493, 64
  %v5068 = vpop.permute.xlu0 %5067
  %v5069 = vsel %vm1473, %v5068, %v4493
  %5070 = vrot.lane.b32.xlu0 %v4496, 64
  %v5071 = vpop.permute.xlu0 %5070
  %v5072 = vsel %vm1473, %v5071, %v4496
  %5073 = vrot.lane.b32.xlu0 %v4501, 64
  %v5074 = vpop.permute.xlu0 %5073
  %v5075 = vsel %vm1473, %v5074, %v4501
  %5076 = vrot.lane.b32.xlu0 %v4504, 64
  %v5077 = vpop.permute.xlu0 %5076
  %v5078 = vsel %vm1473, %v5077, %v4504
  %5079 = vrot.lane.b32.xlu0 %v4509, 64
  %v5080 = vpop.permute.xlu0 %5079
  %v5081 = vsel %vm1473, %v5080, %v4509
  %5082 = vrot.lane.b32.xlu0 %v4512, 64
  %v5083 = vpop.permute.xlu0 %5082
  %v5084 = vsel %vm1473, %v5083, %v4512
  %5085 = vrot.lane.b32.xlu0 %v4517, 64
  %v5086 = vpop.permute.xlu0 %5085
  %v5087 = vsel %vm1473, %v5086, %v4517
  %5088 = vrot.lane.b32.xlu0 %v4520, 64
  %v5089 = vpop.permute.xlu0 %5088
  %v5090 = vsel %vm1473, %v5089, %v4520
  %5091 = vrot.lane.b32.xlu0 %v5069, 64
  %v5092 = vpop.permute.xlu0 %5091
  %5093 = vrot.lane.b32.xlu0 %v5072, 64
  %v5094 = vpop.permute.xlu0 %5093
  %5095 = vrot.lane.b32.xlu0 %v5075, 64
  %v5096 = vpop.permute.xlu0 %5095
  %5097 = vrot.lane.b32.xlu0 %v5078, 64
  %v5098 = vpop.permute.xlu0 %5097
  %5099 = vrot.lane.b32.xlu0 %v5081, 64
  %v5100 = vpop.permute.xlu0 %5099
  %5101 = vrot.lane.b32.xlu0 %v5084, 64
  %v5102 = vpop.permute.xlu0 %5101
  %5103 = vrot.lane.b32.xlu0 %v5087, 64
  %v5104 = vpop.permute.xlu0 %5103
  %5105 = vrot.lane.b32.xlu0 %v5090, 64
  %v5106 = vpop.permute.xlu0 %5105
  %v5107 = vsel %vm1473, %v5092, %v4493
  %v5108 = vsel %vm1473, %v5094, %v4496
  %v5109 = vsel %vm1473, %v5096, %v4501
  %v5110 = vsel %vm1473, %v5098, %v4504
  %v5111 = vsel %vm1473, %v5100, %v4509
  %v5112 = vsel %vm1473, %v5102, %v4512
  %v5113 = vsel %vm1473, %v5104, %v4517
  %v5114 = vsel %vm1473, %v5106, %v4520
  %v5115 = vmul.f32 %v5107, %v2006
  %v5116 = vmul.f32 %v5108, %v2006
  %v5117 = vmul.f32 %v5109, %v2006
  %v5118 = vmul.f32 %v5110, %v2006
  %v5119 = vmul.f32 %v5111, %v2006
  %v5120 = vmul.f32 %v5112, %v2006
  %v5121 = vmul.f32 %v5113, %v2006
  %v5122 = vmul.f32 %v5114, %v2006
  %5131 = vrot.lane.b32.xlu0 %v5115, 54
  %v5132 = vpop.permute.xlu0 %5131
  %5133 = vrot.lane.b32.xlu0 %v5116, 54
  %v5134 = vpop.permute.xlu0 %5133
  %5135 = vrot.lane.b32.xlu0 %v5117, 54
  %v5136 = vpop.permute.xlu0 %5135
  %5137 = vrot.lane.b32.xlu0 %v5118, 54
  %v5138 = vpop.permute.xlu0 %5137
  %5139 = vrot.lane.b32.xlu0 %v5119, 54
  %v5140 = vpop.permute.xlu0 %5139
  %5141 = vrot.lane.b32.xlu0 %v5120, 54
  %v5142 = vpop.permute.xlu0 %5141
  %5143 = vrot.lane.b32.xlu0 %v5121, 54
  %v5144 = vpop.permute.xlu0 %5143
  %5145 = vrot.lane.b32.xlu0 %v5122, 54
  %v5146 = vpop.permute.xlu0 %5145
  %v5155 = vadd.f32 %v5059, %v5132
  %v5156 = vadd.f32 %v5060, %v5134
  %v5157 = vadd.f32 %v5061, %v5136
  %v5158 = vadd.f32 %v5062, %v5138
  %v5159 = vadd.f32 %v5063, %v5140
  %v5160 = vadd.f32 %v5064, %v5142
  %v5161 = vadd.f32 %v5065, %v5144
  %v5162 = vadd.f32 %v5066, %v5146
  %5163 = vrot.lane.b32.xlu0 %v4525, 64
  %v5164 = vpop.permute.xlu0 %5163
  %v5165 = vsel %vm1473, %v5164, %v4525
  %5166 = vrot.lane.b32.xlu0 %v4528, 64
  %v5167 = vpop.permute.xlu0 %5166
  %v5168 = vsel %vm1473, %v5167, %v4528
  %5169 = vrot.lane.b32.xlu0 %v4533, 64
  %v5170 = vpop.permute.xlu0 %5169
  %v5171 = vsel %vm1473, %v5170, %v4533
  %5172 = vrot.lane.b32.xlu0 %v4536, 64
  %v5173 = vpop.permute.xlu0 %5172
  %v5174 = vsel %vm1473, %v5173, %v4536
  %5175 = vrot.lane.b32.xlu0 %v4541, 64
  %v5176 = vpop.permute.xlu0 %5175
  %v5177 = vsel %vm1473, %v5176, %v4541
  %5178 = vrot.lane.b32.xlu0 %v4544, 64
  %v5179 = vpop.permute.xlu0 %5178
  %v5180 = vsel %vm1473, %v5179, %v4544
  %5181 = vrot.lane.b32.xlu0 %v4549, 64
  %v5182 = vpop.permute.xlu0 %5181
  %v5183 = vsel %vm1473, %v5182, %v4549
  %5184 = vrot.lane.b32.xlu0 %v4552, 64
  %v5185 = vpop.permute.xlu0 %5184
  %v5186 = vsel %vm1473, %v5185, %v4552
  %5187 = vrot.lane.b32.xlu0 %v5165, 64
  %v5188 = vpop.permute.xlu0 %5187
  %5189 = vrot.lane.b32.xlu0 %v5168, 64
  %v5190 = vpop.permute.xlu0 %5189
  %5191 = vrot.lane.b32.xlu0 %v5171, 64
  %v5192 = vpop.permute.xlu0 %5191
  %5193 = vrot.lane.b32.xlu0 %v5174, 64
  %v5194 = vpop.permute.xlu0 %5193
  %5195 = vrot.lane.b32.xlu0 %v5177, 64
  %v5196 = vpop.permute.xlu0 %5195
  %5197 = vrot.lane.b32.xlu0 %v5180, 64
  %v5198 = vpop.permute.xlu0 %5197
  %5199 = vrot.lane.b32.xlu0 %v5183, 64
  %v5200 = vpop.permute.xlu0 %5199
  %5201 = vrot.lane.b32.xlu0 %v5186, 64
  %v5202 = vpop.permute.xlu0 %5201
  %v5203 = vsel %vm1473, %v5188, %v4525
  %v5204 = vsel %vm1473, %v5190, %v4528
  %v5205 = vsel %vm1473, %v5192, %v4533
  %v5206 = vsel %vm1473, %v5194, %v4536
  %v5207 = vsel %vm1473, %v5196, %v4541
  %v5208 = vsel %vm1473, %v5198, %v4544
  %v5209 = vsel %vm1473, %v5200, %v4549
  %v5210 = vsel %vm1473, %v5202, %v4552
  %v5211 = vmul.f32 %v5203, %v2110
  %v5212 = vmul.f32 %v5204, %v2110
  %v5213 = vmul.f32 %v5205, %v2110
  %v5214 = vmul.f32 %v5206, %v2110
  %v5215 = vmul.f32 %v5207, %v2110
  %v5216 = vmul.f32 %v5208, %v2110
  %v5217 = vmul.f32 %v5209, %v2110
  %v5218 = vmul.f32 %v5210, %v2110
  %5227 = vrot.lane.b32.xlu0 %v5211, 48
  %v5228 = vpop.permute.xlu0 %5227
  %5229 = vrot.lane.b32.xlu0 %v5212, 48
  %v5230 = vpop.permute.xlu0 %5229
  %5231 = vrot.lane.b32.xlu0 %v5213, 48
  %v5232 = vpop.permute.xlu0 %5231
  %5233 = vrot.lane.b32.xlu0 %v5214, 48
  %v5234 = vpop.permute.xlu0 %5233
  %5235 = vrot.lane.b32.xlu0 %v5215, 48
  %v5236 = vpop.permute.xlu0 %5235
  %5237 = vrot.lane.b32.xlu0 %v5216, 48
  %v5238 = vpop.permute.xlu0 %5237
  %5239 = vrot.lane.b32.xlu0 %v5217, 48
  %v5240 = vpop.permute.xlu0 %5239
  %5241 = vrot.lane.b32.xlu0 %v5218, 48
  %v5242 = vpop.permute.xlu0 %5241
  %v5251 = vadd.f32 %v5155, %v5228
  %v5252 = vadd.f32 %v5156, %v5230
  %v5253 = vadd.f32 %v5157, %v5232
  %v5254 = vadd.f32 %v5158, %v5234
  %v5255 = vadd.f32 %v5159, %v5236
  %v5256 = vadd.f32 %v5160, %v5238
  %v5257 = vadd.f32 %v5161, %v5240
  %v5258 = vadd.f32 %v5162, %v5242
  %5259 = vrot.lane.b32.xlu0 %v4557, 64
  %v5260 = vpop.permute.xlu0 %5259
  %v5261 = vsel %vm1473, %v5260, %v4557
  %5262 = vrot.lane.b32.xlu0 %v4560, 64
  %v5263 = vpop.permute.xlu0 %5262
  %v5264 = vsel %vm1473, %v5263, %v4560
  %5265 = vrot.lane.b32.xlu0 %v4565, 64
  %v5266 = vpop.permute.xlu0 %5265
  %v5267 = vsel %vm1473, %v5266, %v4565
  %5268 = vrot.lane.b32.xlu0 %v4568, 64
  %v5269 = vpop.permute.xlu0 %5268
  %v5270 = vsel %vm1473, %v5269, %v4568
  %5271 = vrot.lane.b32.xlu0 %v4573, 64
  %v5272 = vpop.permute.xlu0 %5271
  %v5273 = vsel %vm1473, %v5272, %v4573
  %5274 = vrot.lane.b32.xlu0 %v4576, 64
  %v5275 = vpop.permute.xlu0 %5274
  %v5276 = vsel %vm1473, %v5275, %v4576
  %5277 = vrot.lane.b32.xlu0 %v4581, 64
  %v5278 = vpop.permute.xlu0 %5277
  %v5279 = vsel %vm1473, %v5278, %v4581
  %5280 = vrot.lane.b32.xlu0 %v4584, 64
  %v5281 = vpop.permute.xlu0 %5280
  %v5282 = vsel %vm1473, %v5281, %v4584
  %5283 = vrot.lane.b32.xlu0 %v5261, 64
  %v5284 = vpop.permute.xlu0 %5283
  %5285 = vrot.lane.b32.xlu0 %v5264, 64
  %v5286 = vpop.permute.xlu0 %5285
  %5287 = vrot.lane.b32.xlu0 %v5267, 64
  %v5288 = vpop.permute.xlu0 %5287
  %5289 = vrot.lane.b32.xlu0 %v5270, 64
  %v5290 = vpop.permute.xlu0 %5289
  %5291 = vrot.lane.b32.xlu0 %v5273, 64
  %v5292 = vpop.permute.xlu0 %5291
  %5293 = vrot.lane.b32.xlu0 %v5276, 64
  %v5294 = vpop.permute.xlu0 %5293
  %5295 = vrot.lane.b32.xlu0 %v5279, 64
  %v5296 = vpop.permute.xlu0 %5295
  %5297 = vrot.lane.b32.xlu0 %v5282, 64
  %v5298 = vpop.permute.xlu0 %5297
  %v5299 = vsel %vm1473, %v5284, %v4557
  %v5300 = vsel %vm1473, %v5286, %v4560
  %v5301 = vsel %vm1473, %v5288, %v4565
  %v5302 = vsel %vm1473, %v5290, %v4568
  %v5303 = vsel %vm1473, %v5292, %v4573
  %v5304 = vsel %vm1473, %v5294, %v4576
  %v5305 = vsel %vm1473, %v5296, %v4581
  %v5306 = vsel %vm1473, %v5298, %v4584
  %v5307 = vmul.f32 %v5299, %v2214
  %v5308 = vmul.f32 %v5300, %v2214
  %v5309 = vmul.f32 %v5301, %v2214
  %v5310 = vmul.f32 %v5302, %v2214
  %v5311 = vmul.f32 %v5303, %v2214
  %v5312 = vmul.f32 %v5304, %v2214
  %v5313 = vmul.f32 %v5305, %v2214
  %v5314 = vmul.f32 %v5306, %v2214
  %5323 = vrot.lane.b32.xlu0 %v5307, 47
  %v5324 = vpop.permute.xlu0 %5323
  %5325 = vrot.lane.b32.xlu0 %v5308, 47
  %v5326 = vpop.permute.xlu0 %5325
  %5327 = vrot.lane.b32.xlu0 %v5309, 47
  %v5328 = vpop.permute.xlu0 %5327
  %5329 = vrot.lane.b32.xlu0 %v5310, 47
  %v5330 = vpop.permute.xlu0 %5329
  %5331 = vrot.lane.b32.xlu0 %v5311, 47
  %v5332 = vpop.permute.xlu0 %5331
  %5333 = vrot.lane.b32.xlu0 %v5312, 47
  %v5334 = vpop.permute.xlu0 %5333
  %5335 = vrot.lane.b32.xlu0 %v5313, 47
  %v5336 = vpop.permute.xlu0 %5335
  %5337 = vrot.lane.b32.xlu0 %v5314, 47
  %v5338 = vpop.permute.xlu0 %5337
  %v5347 = vadd.f32 %v5251, %v5324
  %v5348 = vadd.f32 %v5252, %v5326
  %v5349 = vadd.f32 %v5253, %v5328
  %v5350 = vadd.f32 %v5254, %v5330
  %v5351 = vadd.f32 %v5255, %v5332
  %v5352 = vadd.f32 %v5256, %v5334
  %v5353 = vadd.f32 %v5257, %v5336
  %v5354 = vadd.f32 %v5258, %v5338
  %5355 = vrot.lane.b32.xlu0 %v4589, 64
  %v5356 = vpop.permute.xlu0 %5355
  %v5357 = vsel %vm1473, %v5356, %v4589
  %5358 = vrot.lane.b32.xlu0 %v4592, 64
  %v5359 = vpop.permute.xlu0 %5358
  %v5360 = vsel %vm1473, %v5359, %v4592
  %5361 = vrot.lane.b32.xlu0 %v4597, 64
  %v5362 = vpop.permute.xlu0 %5361
  %v5363 = vsel %vm1473, %v5362, %v4597
  %5364 = vrot.lane.b32.xlu0 %v4600, 64
  %v5365 = vpop.permute.xlu0 %5364
  %v5366 = vsel %vm1473, %v5365, %v4600
  %5367 = vrot.lane.b32.xlu0 %v4605, 64
  %v5368 = vpop.permute.xlu0 %5367
  %v5369 = vsel %vm1473, %v5368, %v4605
  %5370 = vrot.lane.b32.xlu0 %v4608, 64
  %v5371 = vpop.permute.xlu0 %5370
  %v5372 = vsel %vm1473, %v5371, %v4608
  %5373 = vrot.lane.b32.xlu0 %v4613, 64
  %v5374 = vpop.permute.xlu0 %5373
  %v5375 = vsel %vm1473, %v5374, %v4613
  %5376 = vrot.lane.b32.xlu0 %v4616, 64
  %v5377 = vpop.permute.xlu0 %5376
  %v5378 = vsel %vm1473, %v5377, %v4616
  %5379 = vrot.lane.b32.xlu0 %v5357, 64
  %v5380 = vpop.permute.xlu0 %5379
  %5381 = vrot.lane.b32.xlu0 %v5360, 64
  %v5382 = vpop.permute.xlu0 %5381
  %5383 = vrot.lane.b32.xlu0 %v5363, 64
  %v5384 = vpop.permute.xlu0 %5383
  %5385 = vrot.lane.b32.xlu0 %v5366, 64
  %v5386 = vpop.permute.xlu0 %5385
  %5387 = vrot.lane.b32.xlu0 %v5369, 64
  %v5388 = vpop.permute.xlu0 %5387
  %5389 = vrot.lane.b32.xlu0 %v5372, 64
  %v5390 = vpop.permute.xlu0 %5389
  %5391 = vrot.lane.b32.xlu0 %v5375, 64
  %v5392 = vpop.permute.xlu0 %5391
  %5393 = vrot.lane.b32.xlu0 %v5378, 64
  %v5394 = vpop.permute.xlu0 %5393
  %v5395 = vsel %vm1473, %v5380, %v4589
  %v5396 = vsel %vm1473, %v5382, %v4592
  %v5397 = vsel %vm1473, %v5384, %v4597
  %v5398 = vsel %vm1473, %v5386, %v4600
  %v5399 = vsel %vm1473, %v5388, %v4605
  %v5400 = vsel %vm1473, %v5390, %v4608
  %v5401 = vsel %vm1473, %v5392, %v4613
  %v5402 = vsel %vm1473, %v5394, %v4616
  %v5403 = vmul.f32 %v5395, %v2318
  %v5404 = vmul.f32 %v5396, %v2318
  %v5405 = vmul.f32 %v5397, %v2318
  %v5406 = vmul.f32 %v5398, %v2318
  %v5407 = vmul.f32 %v5399, %v2318
  %v5408 = vmul.f32 %v5400, %v2318
  %v5409 = vmul.f32 %v5401, %v2318
  %v5410 = vmul.f32 %v5402, %v2318
  %5419 = vrot.lane.b32.xlu0 %v5403, 46
  %v5420 = vpop.permute.xlu0 %5419
  %5421 = vrot.lane.b32.xlu0 %v5404, 46
  %v5422 = vpop.permute.xlu0 %5421
  %5423 = vrot.lane.b32.xlu0 %v5405, 46
  %v5424 = vpop.permute.xlu0 %5423
  %5425 = vrot.lane.b32.xlu0 %v5406, 46
  %v5426 = vpop.permute.xlu0 %5425
  %5427 = vrot.lane.b32.xlu0 %v5407, 46
  %v5428 = vpop.permute.xlu0 %5427
  %5429 = vrot.lane.b32.xlu0 %v5408, 46
  %v5430 = vpop.permute.xlu0 %5429
  %5431 = vrot.lane.b32.xlu0 %v5409, 46
  %v5432 = vpop.permute.xlu0 %5431
  %5433 = vrot.lane.b32.xlu0 %v5410, 46
  %v5434 = vpop.permute.xlu0 %5433
  %v5443 = vadd.f32 %v5347, %v5420
  %v5444 = vadd.f32 %v5348, %v5422
  %v5445 = vadd.f32 %v5349, %v5424
  %v5446 = vadd.f32 %v5350, %v5426
  %v5447 = vadd.f32 %v5351, %v5428
  %v5448 = vadd.f32 %v5352, %v5430
  %v5449 = vadd.f32 %v5353, %v5432
  %v5450 = vadd.f32 %v5354, %v5434
  %v5451 = vadd.f32 %v2360, %v5443
  %v5452 = vadd.f32 %v2361, %v5444
  %v5453 = vadd.f32 %v2362, %v5445
  %v5454 = vadd.f32 %v2363, %v5446
  %v5455 = vadd.f32 %v2364, %v5447
  %v5456 = vadd.f32 %v2365, %v5448
  %v5457 = vadd.f32 %v2366, %v5449
  %v5458 = vadd.f32 %v2367, %v5450
  %v5459 = vmax.f32 %v5451, 0.0
  %v5460 = vmax.f32 %v5452, 0.0
  %v5461 = vmax.f32 %v5453, 0.0
  %v5462 = vmax.f32 %v5454, 0.0
  %v5463 = vmax.f32 %v5455, 0.0
  %v5464 = vmax.f32 %v5456, 0.0
  %v5465 = vmax.f32 %v5457, 0.0
  %v5466 = vmax.f32 %v5458, 0.0
  %v5467 = vld [vmem:[%s33] sm:$0xf]
  %v5468 = vld [vmem:[%s33 + $0x4] sm:$0xf]
  %v5469 = vld [vmem:[%s33 + $0x8] sm:$0xf]
  %v5470 = vld [vmem:[%s33 + $0xc] sm:$0xf]
  %v5471 = vld [vmem:[%s33 + $0x10] sm:$0xf]
  %v5472 = vld [vmem:[%s33 + $0x14] sm:$0xf]
  %v5473 = vld [vmem:[%s33 + $0x18] sm:$0xf]
  %v5474 = vld [vmem:[%s33 + $0x1c] sm:$0xf]
  %v5475 = vld [vmem:[%s33 + $0x20] sm:$0xf]
  %v5476 = vld [vmem:[%s33 + $0x24] sm:$0xf]
  %v5477 = vld [vmem:[%s33 + $0x28] sm:$0xf]
  %v5478 = vld [vmem:[%s33 + $0x2c] sm:$0xf]
  %v5479 = vld [vmem:[%s33 + $0x30] sm:$0xf]
  %v5480 = vld [vmem:[%s33 + $0x34] sm:$0xf]
  %v5481 = vld [vmem:[%s33 + $0x38] sm:$0xf]
  %v5482 = vld [vmem:[%s33 + $0x3c] sm:$0xf]
  %v5483 = vld [vmem:[%s33 + $0x40] sm:$0xf]
  %v5484 = vld [vmem:[%s33 + $0x44] sm:$0xf]
  %v5485 = vld [vmem:[%s33 + $0x48] sm:$0xf]
  %v5486 = vld [vmem:[%s33 + $0x4c] sm:$0xf]
  %v5487 = vld [vmem:[%s33 + $0x50] sm:$0xf]
  %v5488 = vld [vmem:[%s33 + $0x54] sm:$0xf]
  %v5489 = vld [vmem:[%s33 + $0x58] sm:$0xf]
  %v5490 = vld [vmem:[%s33 + $0x5c] sm:$0xf]
  %v5491 = vld [vmem:[%s33 + $0x60] sm:$0xf]
  %v5492 = vld [vmem:[%s33 + $0x64] sm:$0xf]
  %v5493 = vld [vmem:[%s33 + $0x68] sm:$0xf]
  %v5494 = vld [vmem:[%s33 + $0x6c] sm:$0xf]
  %v5495 = vld [vmem:[%s33 + $0x70] sm:$0xf]
  %v5496 = vld [vmem:[%s33 + $0x74] sm:$0xf]
  %v5497 = vld [vmem:[%s33 + $0x78] sm:$0xf]
  %v5498 = vld [vmem:[%s33 + $0x7c] sm:$0xf]
  %v5499 = vld [vmem:[%s33 + $0x80] sm:$0xf]
  %v5500 = vld [vmem:[%s33 + $0x84] sm:$0xf]
  %v5501 = vld [vmem:[%s33 + $0x88] sm:$0xf]
  %v5502 = vld [vmem:[%s33 + $0x8c] sm:$0xf]
  %v5503 = vld [vmem:[%s33 + $0x90] sm:$0xf]
  %v5504 = vld [vmem:[%s33 + $0x94] sm:$0xf]
  %v5505 = vld [vmem:[%s33 + $0x98] sm:$0xf]
  %v5506 = vld [vmem:[%s33 + $0x9c] sm:$0xf]
  %v5507 = vld [vmem:[%s33 + $0xa0] sm:$0xf]
  %v5508 = vld [vmem:[%s33 + $0xa4] sm:$0xf]
  %v5509 = vld [vmem:[%s33 + $0xa8] sm:$0xf]
  %v5510 = vld [vmem:[%s33 + $0xac] sm:$0xf]
  %v5511 = vld [vmem:[%s33 + $0xb0] sm:$0xf]
  %v5512 = vld [vmem:[%s33 + $0xb4] sm:$0xf]
  %v5513 = vld [vmem:[%s33 + $0xb8] sm:$0xf]
  %v5514 = vld [vmem:[%s33 + $0xbc] sm:$0xf]
  %v5515 = vld [vmem:[%s33 + $0xc0] sm:$0xf]
  %v5516 = vld [vmem:[%s33 + $0xc4] sm:$0xf]
  %v5517 = vld [vmem:[%s33 + $0xc8] sm:$0xf]
  %v5518 = vld [vmem:[%s33 + $0xcc] sm:$0xf]
  %v5519 = vld [vmem:[%s33 + $0xd0] sm:$0xf]
  %v5520 = vld [vmem:[%s33 + $0xd4] sm:$0xf]
  %v5521 = vld [vmem:[%s33 + $0xd8] sm:$0xf]
  %v5522 = vld [vmem:[%s33 + $0xdc] sm:$0xf]
  %v5523 = vld [vmem:[%s33 + $0xe0] sm:$0xf]
  %v5524 = vld [vmem:[%s33 + $0xe4] sm:$0xf]
  %v5525 = vld [vmem:[%s33 + $0xe8] sm:$0xf]
  %v5526 = vld [vmem:[%s33 + $0xec] sm:$0xf]
  %v5527 = vld [vmem:[%s33 + $0xf0] sm:$0xf]
  %v5528 = vld [vmem:[%s33 + $0xf4] sm:$0xf]
  %v5529 = vld [vmem:[%s33 + $0xf8] sm:$0xf]
  %v5530 = vld [vmem:[%s33 + $0xfc] sm:$0xf]
  %v5531 = vld [vmem:[%s33 + $0x100] sm:$0xf]
  %v5532 = vld [vmem:[%s33 + $0x104] sm:$0xf]
  %v5533 = vld [vmem:[%s33 + $0x108] sm:$0xf]
  %v5534 = vld [vmem:[%s33 + $0x10c] sm:$0xf]
  %v5535 = vld [vmem:[%s33 + $0x110] sm:$0xf]
  %v5536 = vld [vmem:[%s33 + $0x114] sm:$0xf]
  %v5537 = vld [vmem:[%s33 + $0x118] sm:$0xf]
  %v5538 = vld [vmem:[%s33 + $0x11c] sm:$0xf]
  %v5539 = vpack.c.bf16 %v5460, %v5459
  %v5540 = vpack.c.bf16 %v5462, %v5461
  %v5541 = vpack.c.bf16 %v5464, %v5463
  %v5542 = vpack.c.bf16 %v5466, %v5465
  %v5615 = vunpack.c.l.b16 %v5467
  %v5616 = vunpack.c.l.b16 %v5468
  %v5617 = vunpack.c.l.b16 %v5469
  %v5618 = vunpack.c.l.b16 %v5470
  %v5619 = vunpack.c.l.b16 %v5471
  %v5620 = vunpack.c.l.b16 %v5472
  %v5621 = vunpack.c.l.b16 %v5473
  %v5622 = vunpack.c.l.b16 %v5474
  %v5623 = vunpack.c.l.b16 %v5475
  %v5624 = vunpack.c.l.b16 %v5476
  %v5625 = vunpack.c.l.b16 %v5477
  %v5626 = vunpack.c.l.b16 %v5478
  %v5627 = vunpack.c.l.b16 %v5479
  %v5628 = vunpack.c.l.b16 %v5480
  %v5629 = vunpack.c.l.b16 %v5481
  %v5630 = vunpack.c.l.b16 %v5482
  %v5631 = vunpack.c.l.b16 %v5483
  %v5632 = vunpack.c.l.b16 %v5484
  %v5633 = vunpack.c.l.b16 %v5485
  %v5634 = vunpack.c.l.b16 %v5486
  %v5635 = vunpack.c.l.b16 %v5487
  %v5636 = vunpack.c.l.b16 %v5488
  %v5637 = vunpack.c.l.b16 %v5489
  %v5638 = vunpack.c.l.b16 %v5490
  %v5639 = vunpack.c.l.b16 %v5491
  %v5640 = vunpack.c.l.b16 %v5492
  %v5641 = vunpack.c.l.b16 %v5493
  %v5642 = vunpack.c.l.b16 %v5494
  %v5643 = vunpack.c.l.b16 %v5495
  %v5644 = vunpack.c.l.b16 %v5496
  %v5645 = vunpack.c.l.b16 %v5497
  %v5646 = vunpack.c.l.b16 %v5498
  %v5647 = vunpack.c.l.b16 %v5499
  %v5648 = vunpack.c.l.b16 %v5500
  %v5649 = vunpack.c.l.b16 %v5501
  %v5650 = vunpack.c.l.b16 %v5502
  %v5651 = vunpack.c.l.b16 %v5503
  %v5652 = vunpack.c.l.b16 %v5504
  %v5653 = vunpack.c.l.b16 %v5505
  %v5654 = vunpack.c.l.b16 %v5506
  %v5655 = vunpack.c.l.b16 %v5507
  %v5656 = vunpack.c.l.b16 %v5508
  %v5657 = vunpack.c.l.b16 %v5509
  %v5658 = vunpack.c.l.b16 %v5510
  %v5659 = vunpack.c.l.b16 %v5511
  %v5660 = vunpack.c.l.b16 %v5512
  %v5661 = vunpack.c.l.b16 %v5513
  %v5662 = vunpack.c.l.b16 %v5514
  %v5663 = vunpack.c.l.b16 %v5515
  %v5664 = vunpack.c.l.b16 %v5516
  %v5665 = vunpack.c.l.b16 %v5517
  %v5666 = vunpack.c.l.b16 %v5518
  %v5667 = vunpack.c.l.b16 %v5519
  %v5668 = vunpack.c.l.b16 %v5520
  %v5669 = vunpack.c.l.b16 %v5521
  %v5670 = vunpack.c.l.b16 %v5522
  %v5671 = vunpack.c.l.b16 %v5523
  %v5672 = vunpack.c.l.b16 %v5524
  %v5673 = vunpack.c.l.b16 %v5525
  %v5674 = vunpack.c.l.b16 %v5526
  %v5675 = vunpack.c.l.b16 %v5527
  %v5676 = vunpack.c.l.b16 %v5528
  %v5677 = vunpack.c.l.b16 %v5529
  %v5678 = vunpack.c.l.b16 %v5530
  %v5679 = vunpack.c.l.b16 %v5531
  %v5680 = vunpack.c.l.b16 %v5532
  %v5681 = vunpack.c.l.b16 %v5533
  %v5682 = vunpack.c.l.b16 %v5534
  %v5683 = vunpack.c.l.b16 %v5535
  %v5684 = vunpack.c.l.b16 %v5536
  %v5685 = vunpack.c.l.b16 %v5537
  %v5686 = vunpack.c.l.b16 %v5538
  %v5687 = vpack.c.b16 %v5616, %v5615
  %v5688 = vpack.c.b16 %v5618, %v5617
  %v5689 = vpack.c.b16 %v5620, %v5619
  %v5690 = vpack.c.b16 %v5622, %v5621
  %v5691 = vpack.c.b16 %v5624, %v5623
  %v5692 = vpack.c.b16 %v5626, %v5625
  %v5693 = vpack.c.b16 %v5628, %v5627
  %v5694 = vpack.c.b16 %v5630, %v5629
  %v5695 = vpack.c.b16 %v5632, %v5631
  %v5696 = vpack.c.b16 %v5634, %v5633
  %v5697 = vpack.c.b16 %v5636, %v5635
  %v5698 = vpack.c.b16 %v5638, %v5637
  %v5699 = vpack.c.b16 %v5640, %v5639
  %v5700 = vpack.c.b16 %v5642, %v5641
  %v5701 = vpack.c.b16 %v5644, %v5643
  %v5702 = vpack.c.b16 %v5646, %v5645
  %v5703 = vpack.c.b16 %v5648, %v5647
  %v5704 = vpack.c.b16 %v5650, %v5649
  %v5705 = vpack.c.b16 %v5652, %v5651
  %v5706 = vpack.c.b16 %v5654, %v5653
  %v5707 = vpack.c.b16 %v5656, %v5655
  %v5708 = vpack.c.b16 %v5658, %v5657
  %v5709 = vpack.c.b16 %v5660, %v5659
  %v5710 = vpack.c.b16 %v5662, %v5661
  %v5711 = vpack.c.b16 %v5664, %v5663
  %v5712 = vpack.c.b16 %v5666, %v5665
  %v5713 = vpack.c.b16 %v5668, %v5667
  %v5714 = vpack.c.b16 %v5670, %v5669
  %v5715 = vpack.c.b16 %v5672, %v5671
  %v5716 = vpack.c.b16 %v5674, %v5673
  %v5717 = vpack.c.b16 %v5676, %v5675
  %v5718 = vpack.c.b16 %v5678, %v5677
  %v5719 = vpack.c.b16 %v5680, %v5679
  %v5720 = vpack.c.b16 %v5682, %v5681
  %v5721 = vpack.c.b16 %v5684, %v5683
  %v5722 = vpack.c.b16 %v5686, %v5685
  %5727 = vrot.lane.b32.xlu0 %v5539, 73
  %v5728 = vpop.permute.xlu0 %5727
  %5729 = vrot.lane.b32.xlu0 %v5540, 73
  %v5730 = vpop.permute.xlu0 %5729
  %5731 = vrot.lane.b32.xlu0 %v5541, 73
  %v5732 = vpop.permute.xlu0 %5731
  %5733 = vrot.lane.b32.xlu0 %v5542, 73
  %v5734 = vpop.permute.xlu0 %5733
  %v5740 = vsel %vm2648, %v5687, 0
  %v5743 = vsel %vm2648, %v5688, 0
  %v5746 = vsel %vm2648, %v5689, 0
  %v5749 = vsel %vm2648, %v5690, 0
  %v5752 = vsel %vm2648, %v5691, 0
  %v5755 = vsel %vm2648, %v5692, 0
  %v5758 = vsel %vm2648, %v5693, 0
  %v5761 = vsel %vm2648, %v5694, 0
  %v5764 = vsel %vm2648, %v5695, 0
  %v5767 = vsel %vm2648, %v5696, 0
  %v5770 = vsel %vm2648, %v5697, 0
  %v5773 = vsel %vm2648, %v5698, 0
  %v5776 = vsel %vm2648, %v5699, 0
  %v5779 = vsel %vm2648, %v5700, 0
  %v5782 = vsel %vm2648, %v5701, 0
  %v5785 = vsel %vm2648, %v5702, 0
  %v5788 = vsel %vm2648, %v5703, 0
  %v5791 = vsel %vm2648, %v5704, 0
  %v5794 = vsel %vm2648, %v5705, 0
  %v5797 = vsel %vm2648, %v5706, 0
  %v5800 = vsel %vm2648, %v5707, 0
  %v5803 = vsel %vm2648, %v5708, 0
  %v5806 = vsel %vm2648, %v5709, 0
  %v5809 = vsel %vm2648, %v5710, 0
  %v5812 = vsel %vm2648, %v5711, 0
  %v5815 = vsel %vm2648, %v5712, 0
  %v5818 = vsel %vm2648, %v5713, 0
  %v5821 = vsel %vm2648, %v5714, 0
  %v5824 = vsel %vm2648, %v5715, 0
  %v5827 = vsel %vm2648, %v5716, 0
  %v5830 = vsel %vm2648, %v5717, 0
  %v5833 = vsel %vm2648, %v5718, 0
  %v5836 = vsel %vm2648, %v5719, 0
  %v5839 = vsel %vm2648, %v5720, 0
  %v5842 = vsel %vm2648, %v5721, 0
  %v5845 = vsel %vm2648, %v5722, 0
  %5847 = vmatprep.subr.bf16.mxu0 0
  %5848 = vmatpush1.bf16.msra.mxu0 %v5728
  %5849 = vmatprep.subr.bf16.mxu0 0
  %5850 = vmatpush1.bf16.msra.mxu0 %v5730
  %5851 = vmatprep.subr.bf16.mxu0 0
  %5852 = vmatpush1.bf16.msra.mxu0 %v5732
  %5853 = vmatprep.subr.bf16.mxu0 0
  %5854 = vmatpush1.bf16.msra.mxu0 %v5734
  %5855 = vmatprep.subr.bf16.mxu0 0
  %5856 = vmatpush1.bf16.msra.mxu0 0
  %5857 = vmatprep.subr.bf16.mxu0 0
  %5858 = vmatpush1.bf16.msra.mxu0 0
  %5859 = vmatprep.subr.bf16.mxu0 0
  %5860 = vmatpush1.bf16.msra.mxu0 0
  %5861 = vmatprep.subr.bf16.mxu0 0
  %5862 = vmatpush1.bf16.msra.mxu0 0
  %5863 = vmatprep.subr.bf16.mxu0 0
  %5864 = vmatpush1.bf16.msra.mxu0 0
  %5865 = vmatprep.subr.bf16.mxu0 0
  %5866 = vmatpush1.bf16.msra.mxu0 0
  %5867 = vmatprep.subr.bf16.mxu0 0
  %5868 = vmatpush1.bf16.msra.mxu0 0
  %5869 = vmatprep.subr.bf16.mxu0 0
  %5870 = vmatpush1.bf16.msra.mxu0 0
  %5871 = vmatprep.subr.bf16.mxu0 0
  %5872 = vmatpush1.bf16.msra.mxu0 0
  %5873 = vmatprep.subr.bf16.mxu0 0
  %5874 = vmatpush1.bf16.msra.mxu0 0
  %5875 = vmatprep.subr.bf16.mxu0 0
  %5876 = vmatpush1.bf16.msra.mxu0 0
  %5877 = vmatprep.subr.bf16.mxu0 0
  %5878 = vmatpush1.bf16.msra.mxu0 0
  %5879 = vmatprep.mubr.bf16.mxu0 0
  %5880 = vmatmul.mubr.bf16.gmra.mrb[0].mxu0 %v5740
  %v5881 = vpop.f32.mrb[0].mxu0
  %v5882 = vadd.f32 0.0, %v5881
  %v5883 = vpop.f32.mrb[0].mxu0
  %v5884 = vpop.f32.mrb[0].mxu0
  %v5885 = vadd.f32 0.0, %v5884
  %v5886 = vpop.f32.mrb[0].mxu0
  %5887 = vmatprep.mubr.bf16.mxu0 0
  %5888 = vmatmul.mubr.bf16.gmra.mrb[0].mxu0 %v5743
  %v5889 = vpop.f32.mrb[0].mxu0
  %v5890 = vadd.f32 0.0, %v5889
  %v5891 = vpop.f32.mrb[0].mxu0
  %v5892 = vpop.f32.mrb[0].mxu0
  %v5893 = vadd.f32 0.0, %v5892
  %v5894 = vpop.f32.mrb[0].mxu0
  %5895 = vmatprep.mubr.bf16.mxu0 0
  %5896 = vmatmul.mubr.bf16.gmra.mrb[0].mxu0 %v5746
  %v5897 = vpop.f32.mrb[0].mxu0
  %v5898 = vadd.f32 0.0, %v5897
  %v5899 = vpop.f32.mrb[0].mxu0
  %v5900 = vpop.f32.mrb[0].mxu0
  %v5901 = vadd.f32 0.0, %v5900
  %v5902 = vpop.f32.mrb[0].mxu0
  %5903 = vmatprep.mubr.bf16.mxu0 0
  %5904 = vmatmul.mubr.bf16.gmra.mrb[0].mxu0 %v5749
  %v5905 = vpop.f32.mrb[0].mxu0
  %v5906 = vadd.f32 0.0, %v5905
  %v5907 = vpop.f32.mrb[0].mxu0
  %v5908 = vpop.f32.mrb[0].mxu0
  %v5909 = vadd.f32 0.0, %v5908
  %v5910 = vpop.f32.mrb[0].mxu0
  %5911 = vmatprep.mubr.bf16.mxu0 0
  %5912 = vmatmul.mubr.bf16.gmra.mrb[0].mxu0 %v5752
  %v5913 = vpop.f32.mrb[0].mxu0
  %v5914 = vadd.f32 0.0, %v5913
  %v5915 = vpop.f32.mrb[0].mxu0
  %v5916 = vpop.f32.mrb[0].mxu0
  %v5917 = vadd.f32 0.0, %v5916
  %v5918 = vpop.f32.mrb[0].mxu0
  %5919 = vmatprep.mubr.bf16.mxu0 0
  %5920 = vmatmul.mubr.bf16.gmra.mrb[0].mxu0 %v5755
  %v5921 = vpop.f32.mrb[0].mxu0
  %v5922 = vadd.f32 0.0, %v5921
  %v5923 = vpop.f32.mrb[0].mxu0
  %v5924 = vpop.f32.mrb[0].mxu0
  %v5925 = vadd.f32 0.0, %v5924
  %v5926 = vpop.f32.mrb[0].mxu0
  %5927 = vmatprep.mubr.bf16.mxu0 0
  %5928 = vmatmul.mubr.bf16.gmra.mrb[0].mxu0 %v5758
  %v5929 = vpop.f32.mrb[0].mxu0
  %v5930 = vadd.f32 0.0, %v5929
  %v5931 = vpop.f32.mrb[0].mxu0
  %v5932 = vpop.f32.mrb[0].mxu0
  %v5933 = vadd.f32 0.0, %v5932
  %v5934 = vpop.f32.mrb[0].mxu0
  %5935 = vmatprep.mubr.bf16.mxu0 0
  %5936 = vmatmul.mubr.bf16.gmra.mrb[0].mxu0 %v5761
  %v5937 = vpop.f32.mrb[0].mxu0
  %v5938 = vadd.f32 0.0, %v5937
  %v5939 = vpop.f32.mrb[0].mxu0
  %v5940 = vpop.f32.mrb[0].mxu0
  %v5941 = vadd.f32 0.0, %v5940
  %v5942 = vpop.f32.mrb[0].mxu0
  %5943 = vmatprep.mubr.bf16.mxu0 0
  %5944 = vmatmul.mubr.bf16.gmra.mrb[0].mxu0 %v5764
  %v5945 = vpop.f32.mrb[0].mxu0
  %v5946 = vadd.f32 0.0, %v5945
  %v5947 = vpop.f32.mrb[0].mxu0
  %v5948 = vpop.f32.mrb[0].mxu0
  %v5949 = vadd.f32 0.0, %v5948
  %v5950 = vpop.f32.mrb[0].mxu0
  %5951 = vmatprep.mubr.bf16.mxu0 0
  %5952 = vmatmul.mubr.bf16.gmra.mrb[0].mxu0 %v5767
  %v5953 = vpop.f32.mrb[0].mxu0
  %v5954 = vadd.f32 0.0, %v5953
  %v5955 = vpop.f32.mrb[0].mxu0
  %v5956 = vpop.f32.mrb[0].mxu0
  %v5957 = vadd.f32 0.0, %v5956
  %v5958 = vpop.f32.mrb[0].mxu0
  %5959 = vmatprep.mubr.bf16.mxu0 0
  %5960 = vmatmul.mubr.bf16.gmra.mrb[0].mxu0 %v5770
  %v5961 = vpop.f32.mrb[0].mxu0
  %v5962 = vadd.f32 0.0, %v5961
  %v5963 = vpop.f32.mrb[0].mxu0
  %v5964 = vpop.f32.mrb[0].mxu0
  %v5965 = vadd.f32 0.0, %v5964
  %v5966 = vpop.f32.mrb[0].mxu0
  %5967 = vmatprep.mubr.bf16.mxu0 0
  %5968 = vmatmul.mubr.bf16.gmra.mrb[0].mxu0 %v5773
  %v5969 = vpop.f32.mrb[0].mxu0
  %v5970 = vadd.f32 0.0, %v5969
  %v5971 = vpop.f32.mrb[0].mxu0
  %v5972 = vpop.f32.mrb[0].mxu0
  %v5973 = vadd.f32 0.0, %v5972
  %v5974 = vpop.f32.mrb[0].mxu0
  %5975 = vmatprep.mubr.bf16.mxu0 0
  %5976 = vmatmul.mubr.bf16.gmra.mrb[0].mxu0 %v5776
  %v5977 = vpop.f32.mrb[0].mxu0
  %v5978 = vadd.f32 0.0, %v5977
  %v5979 = vpop.f32.mrb[0].mxu0
  %v5980 = vpop.f32.mrb[0].mxu0
  %v5981 = vadd.f32 0.0, %v5980
  %v5982 = vpop.f32.mrb[0].mxu0
  %5983 = vmatprep.mubr.bf16.mxu0 0
  %5984 = vmatmul.mubr.bf16.gmra.mrb[0].mxu0 %v5779
  %v5985 = vpop.f32.mrb[0].mxu0
  %v5986 = vadd.f32 0.0, %v5985
  %v5987 = vpop.f32.mrb[0].mxu0
  %v5988 = vpop.f32.mrb[0].mxu0
  %v5989 = vadd.f32 0.0, %v5988
  %v5990 = vpop.f32.mrb[0].mxu0
  %5991 = vmatprep.mubr.bf16.mxu0 0
  %5992 = vmatmul.mubr.bf16.gmra.mrb[0].mxu0 %v5782
  %v5993 = vpop.f32.mrb[0].mxu0
  %v5994 = vadd.f32 0.0, %v5993
  %v5995 = vpop.f32.mrb[0].mxu0
  %v5996 = vpop.f32.mrb[0].mxu0
  %v5997 = vadd.f32 0.0, %v5996
  %v5998 = vpop.f32.mrb[0].mxu0
  %5999 = vmatprep.mubr.bf16.mxu0 0
  %6000 = vmatmul.mubr.bf16.gmra.mrb[0].mxu0 %v5785
  %v6001 = vpop.f32.mrb[0].mxu0
  %v6002 = vadd.f32 0.0, %v6001
  %v6003 = vpop.f32.mrb[0].mxu0
  %v6004 = vpop.f32.mrb[0].mxu0
  %v6005 = vadd.f32 0.0, %v6004
  %v6006 = vpop.f32.mrb[0].mxu0
  %6007 = vmatprep.mubr.bf16.mxu0 0
  %6008 = vmatmul.mubr.bf16.gmra.mrb[0].mxu0 %v5788
  %v6009 = vpop.f32.mrb[0].mxu0
  %v6010 = vadd.f32 0.0, %v6009
  %v6011 = vpop.f32.mrb[0].mxu0
  %v6012 = vpop.f32.mrb[0].mxu0
  %v6013 = vadd.f32 0.0, %v6012
  %v6014 = vpop.f32.mrb[0].mxu0
  %6015 = vmatprep.mubr.bf16.mxu0 0
  %6016 = vmatmul.mubr.bf16.gmra.mrb[0].mxu0 %v5791
  %v6017 = vpop.f32.mrb[0].mxu0
  %v6018 = vadd.f32 0.0, %v6017
  %v6019 = vpop.f32.mrb[0].mxu0
  %v6020 = vpop.f32.mrb[0].mxu0
  %v6021 = vadd.f32 0.0, %v6020
  %v6022 = vpop.f32.mrb[0].mxu0
  %6023 = vmatprep.mubr.bf16.mxu0 0
  %6024 = vmatmul.mubr.bf16.gmra.mrb[0].mxu0 %v5794
  %v6025 = vpop.f32.mrb[0].mxu0
  %v6026 = vadd.f32 0.0, %v6025
  %v6027 = vpop.f32.mrb[0].mxu0
  %v6028 = vpop.f32.mrb[0].mxu0
  %v6029 = vadd.f32 0.0, %v6028
  %v6030 = vpop.f32.mrb[0].mxu0
  %6031 = vmatprep.mubr.bf16.mxu0 0
  %6032 = vmatmul.mubr.bf16.gmra.mrb[0].mxu0 %v5797
  %v6033 = vpop.f32.mrb[0].mxu0
  %v6034 = vadd.f32 0.0, %v6033
  %v6035 = vpop.f32.mrb[0].mxu0
  %v6036 = vpop.f32.mrb[0].mxu0
  %v6037 = vadd.f32 0.0, %v6036
  %v6038 = vpop.f32.mrb[0].mxu0
  %6039 = vmatprep.mubr.bf16.mxu0 0
  %6040 = vmatmul.mubr.bf16.gmra.mrb[0].mxu0 %v5800
  %v6041 = vpop.f32.mrb[0].mxu0
  %v6042 = vadd.f32 0.0, %v6041
  %v6043 = vpop.f32.mrb[0].mxu0
  %v6044 = vpop.f32.mrb[0].mxu0
  %v6045 = vadd.f32 0.0, %v6044
  %v6046 = vpop.f32.mrb[0].mxu0
  %6047 = vmatprep.mubr.bf16.mxu0 0
  %6048 = vmatmul.mubr.bf16.gmra.mrb[0].mxu0 %v5803
  %v6049 = vpop.f32.mrb[0].mxu0
  %v6050 = vadd.f32 0.0, %v6049
  %v6051 = vpop.f32.mrb[0].mxu0
  %v6052 = vpop.f32.mrb[0].mxu0
  %v6053 = vadd.f32 0.0, %v6052
  %v6054 = vpop.f32.mrb[0].mxu0
  %6055 = vmatprep.mubr.bf16.mxu0 0
  %6056 = vmatmul.mubr.bf16.gmra.mrb[0].mxu0 %v5806
  %v6057 = vpop.f32.mrb[0].mxu0
  %v6058 = vadd.f32 0.0, %v6057
  %v6059 = vpop.f32.mrb[0].mxu0
  %v6060 = vpop.f32.mrb[0].mxu0
  %v6061 = vadd.f32 0.0, %v6060
  %v6062 = vpop.f32.mrb[0].mxu0
  %6063 = vmatprep.mubr.bf16.mxu0 0
  %6064 = vmatmul.mubr.bf16.gmra.mrb[0].mxu0 %v5809
  %v6065 = vpop.f32.mrb[0].mxu0
  %v6066 = vadd.f32 0.0, %v6065
  %v6067 = vpop.f32.mrb[0].mxu0
  %v6068 = vpop.f32.mrb[0].mxu0
  %v6069 = vadd.f32 0.0, %v6068
  %v6070 = vpop.f32.mrb[0].mxu0
  %6071 = vmatprep.mubr.bf16.mxu0 0
  %6072 = vmatmul.mubr.bf16.gmra.mrb[0].mxu0 %v5812
  %v6073 = vpop.f32.mrb[0].mxu0
  %v6074 = vadd.f32 0.0, %v6073
  %v6075 = vpop.f32.mrb[0].mxu0
  %v6076 = vpop.f32.mrb[0].mxu0
  %v6077 = vadd.f32 0.0, %v6076
  %v6078 = vpop.f32.mrb[0].mxu0
  %6079 = vmatprep.mubr.bf16.mxu0 0
  %6080 = vmatmul.mubr.bf16.gmra.mrb[0].mxu0 %v5815
  %v6081 = vpop.f32.mrb[0].mxu0
  %v6082 = vadd.f32 0.0, %v6081
  %v6083 = vpop.f32.mrb[0].mxu0
  %v6084 = vpop.f32.mrb[0].mxu0
  %v6085 = vadd.f32 0.0, %v6084
  %v6086 = vpop.f32.mrb[0].mxu0
  %6087 = vmatprep.mubr.bf16.mxu0 0
  %6088 = vmatmul.mubr.bf16.gmra.mrb[0].mxu0 %v5818
  %v6089 = vpop.f32.mrb[0].mxu0
  %v6090 = vadd.f32 0.0, %v6089
  %v6091 = vpop.f32.mrb[0].mxu0
  %v6092 = vpop.f32.mrb[0].mxu0
  %v6093 = vadd.f32 0.0, %v6092
  %v6094 = vpop.f32.mrb[0].mxu0
  %6095 = vmatprep.mubr.bf16.mxu0 0
  %6096 = vmatmul.mubr.bf16.gmra.mrb[0].mxu0 %v5821
  %v6097 = vpop.f32.mrb[0].mxu0
  %v6098 = vadd.f32 0.0, %v6097
  %v6099 = vpop.f32.mrb[0].mxu0
  %v6100 = vpop.f32.mrb[0].mxu0
  %v6101 = vadd.f32 0.0, %v6100
  %v6102 = vpop.f32.mrb[0].mxu0
  %6103 = vmatprep.mubr.bf16.mxu0 0
  %6104 = vmatmul.mubr.bf16.gmra.mrb[0].mxu0 %v5824
  %v6105 = vpop.f32.mrb[0].mxu0
  %v6106 = vadd.f32 0.0, %v6105
  %v6107 = vpop.f32.mrb[0].mxu0
  %v6108 = vpop.f32.mrb[0].mxu0
  %v6109 = vadd.f32 0.0, %v6108
  %v6110 = vpop.f32.mrb[0].mxu0
  %6111 = vmatprep.mubr.bf16.mxu0 0
  %6112 = vmatmul.mubr.bf16.gmra.mrb[0].mxu0 %v5827
  %v6113 = vpop.f32.mrb[0].mxu0
  %v6114 = vadd.f32 0.0, %v6113
  %v6115 = vpop.f32.mrb[0].mxu0
  %v6116 = vpop.f32.mrb[0].mxu0
  %v6117 = vadd.f32 0.0, %v6116
  %v6118 = vpop.f32.mrb[0].mxu0
  %6119 = vmatprep.mubr.bf16.mxu0 0
  %6120 = vmatmul.mubr.bf16.gmra.mrb[0].mxu0 %v5830
  %v6121 = vpop.f32.mrb[0].mxu0
  %v6122 = vadd.f32 0.0, %v6121
  %v6123 = vpop.f32.mrb[0].mxu0
  %v6124 = vpop.f32.mrb[0].mxu0
  %v6125 = vadd.f32 0.0, %v6124
  %v6126 = vpop.f32.mrb[0].mxu0
  %6127 = vmatprep.mubr.bf16.mxu0 0
  %6128 = vmatmul.mubr.bf16.gmra.mrb[0].mxu0 %v5833
  %v6129 = vpop.f32.mrb[0].mxu0
  %v6130 = vadd.f32 0.0, %v6129
  %v6131 = vpop.f32.mrb[0].mxu0
  %v6132 = vpop.f32.mrb[0].mxu0
  %v6133 = vadd.f32 0.0, %v6132
  %v6134 = vpop.f32.mrb[0].mxu0
  %6135 = vmatprep.mubr.bf16.mxu0 0
  %6136 = vmatmul.mubr.bf16.gmra.mrb[0].mxu0 %v5836
  %v6137 = vpop.f32.mrb[0].mxu0
  %v6138 = vadd.f32 0.0, %v6137
  %v6139 = vpop.f32.mrb[0].mxu0
  %v6140 = vpop.f32.mrb[0].mxu0
  %v6141 = vadd.f32 0.0, %v6140
  %v6142 = vpop.f32.mrb[0].mxu0
  %6143 = vmatprep.mubr.bf16.mxu0 0
  %6144 = vmatmul.mubr.bf16.gmra.mrb[0].mxu0 %v5839
  %v6145 = vpop.f32.mrb[0].mxu0
  %v6146 = vadd.f32 0.0, %v6145
  %v6147 = vpop.f32.mrb[0].mxu0
  %v6148 = vpop.f32.mrb[0].mxu0
  %v6149 = vadd.f32 0.0, %v6148
  %v6150 = vpop.f32.mrb[0].mxu0
  %6151 = vmatprep.mubr.bf16.mxu0 0
  %6152 = vmatmul.mubr.bf16.gmra.mrb[0].mxu0 %v5842
  %v6153 = vpop.f32.mrb[0].mxu0
  %v6154 = vadd.f32 0.0, %v6153
  %v6155 = vpop.f32.mrb[0].mxu0
  %v6156 = vpop.f32.mrb[0].mxu0
  %v6157 = vadd.f32 0.0, %v6156
  %v6158 = vpop.f32.mrb[0].mxu0
  %6159 = vmatprep.mubr.bf16.mxu0 0
  %6160 = vmatmul.mubr.bf16.gmra.mrb[0].mxu0 %v5845
  %v6161 = vpop.f32.mrb[0].mxu0
  %v6162 = vadd.f32 0.0, %v6161
  %v6163 = vpop.f32.mrb[0].mxu0
  %v6164 = vpop.f32.mrb[0].mxu0
  %v6165 = vadd.f32 0.0, %v6164
  %v6166 = vpop.f32.mrb[0].mxu0
  %6167 = vdwg.mxu0
  %v6168 = vld [vmem:[%s35] sm:$0xff]
  %v6169 = vld [vmem:[%s35 + $0x8] sm:$0xff]
  %v6170 = vld [vmem:[%s35 + $0x10] sm:$0xff]
  %v6171 = vld [vmem:[%s35 + $0x18] sm:$0xff]
  %v6172 = vld [vmem:[%s35 + $0x20] sm:$0xff]
  %v6173 = vld [vmem:[%s35 + $0x28] sm:$0xff]
  %v6174 = vld [vmem:[%s35 + $0x30] sm:$0xff]
  %v6175 = vld [vmem:[%s35 + $0x38] sm:$0xff]
  %6176 = vrot.lane.b32.xlu0 %v5882, 64
  %v6177 = vpop.permute.xlu0 %6176
  %v6178 = vsel %vm1473, %v6177, %v5882
  %6179 = vrot.lane.b32.xlu0 %v5885, 64
  %v6180 = vpop.permute.xlu0 %6179
  %v6181 = vsel %vm1473, %v6180, %v5885
  %6182 = vrot.lane.b32.xlu0 %v5890, 64
  %v6183 = vpop.permute.xlu0 %6182
  %v6184 = vsel %vm1473, %v6183, %v5890
  %6185 = vrot.lane.b32.xlu0 %v5893, 64
  %v6186 = vpop.permute.xlu0 %6185
  %v6187 = vsel %vm1473, %v6186, %v5893
  %6188 = vrot.lane.b32.xlu0 %v5898, 64
  %v6189 = vpop.permute.xlu0 %6188
  %v6190 = vsel %vm1473, %v6189, %v5898
  %6191 = vrot.lane.b32.xlu0 %v5901, 64
  %v6192 = vpop.permute.xlu0 %6191
  %v6193 = vsel %vm1473, %v6192, %v5901
  %6194 = vrot.lane.b32.xlu0 %v5906, 64
  %v6195 = vpop.permute.xlu0 %6194
  %v6196 = vsel %vm1473, %v6195, %v5906
  %6197 = vrot.lane.b32.xlu0 %v5909, 64
  %v6198 = vpop.permute.xlu0 %6197
  %v6199 = vsel %vm1473, %v6198, %v5909
  %6200 = vrot.lane.b32.xlu0 %v6178, 64
  %v6201 = vpop.permute.xlu0 %6200
  %6202 = vrot.lane.b32.xlu0 %v6181, 64
  %v6203 = vpop.permute.xlu0 %6202
  %6204 = vrot.lane.b32.xlu0 %v6184, 64
  %v6205 = vpop.permute.xlu0 %6204
  %6206 = vrot.lane.b32.xlu0 %v6187, 64
  %v6207 = vpop.permute.xlu0 %6206
  %6208 = vrot.lane.b32.xlu0 %v6190, 64
  %v6209 = vpop.permute.xlu0 %6208
  %6210 = vrot.lane.b32.xlu0 %v6193, 64
  %v6211 = vpop.permute.xlu0 %6210
  %6212 = vrot.lane.b32.xlu0 %v6196, 64
  %v6213 = vpop.permute.xlu0 %6212
  %6214 = vrot.lane.b32.xlu0 %v6199, 64
  %v6215 = vpop.permute.xlu0 %6214
  %v6216 = vsel %vm1473, %v6201, %v5882
  %v6217 = vsel %vm1473, %v6203, %v5885
  %v6218 = vsel %vm1473, %v6205, %v5890
  %v6219 = vsel %vm1473, %v6207, %v5893
  %v6220 = vsel %vm1473, %v6209, %v5898
  %v6221 = vsel %vm1473, %v6211, %v5901
  %v6222 = vsel %vm1473, %v6213, %v5906
  %v6223 = vsel %vm1473, %v6215, %v5909
  %v6224 = vmul.f32 %v6216, %v1528
  %v6225 = vmul.f32 %v6217, %v1528
  %v6226 = vmul.f32 %v6218, %v1528
  %v6227 = vmul.f32 %v6219, %v1528
  %v6228 = vmul.f32 %v6220, %v1528
  %v6229 = vmul.f32 %v6221, %v1528
  %v6230 = vmul.f32 %v6222, %v1528
  %v6231 = vmul.f32 %v6223, %v1528
  %6233 = vset.pattern.permute.xlu0 0
  %6234 = vperm.xlu0 %6233, %v6168
  %v6235 = vpop.permute.xlu0 %6234
  %6238 = vset.pattern.permute.xlu0 0
  %6239 = vperm.xlu0 %6238, %v6169
  %v6240 = vpop.permute.xlu0 %6239
  %6243 = vset.pattern.permute.xlu0 0
  %6244 = vperm.xlu0 %6243, %v6170
  %v6245 = vpop.permute.xlu0 %6244
  %6248 = vset.pattern.permute.xlu0 0
  %6249 = vperm.xlu0 %6248, %v6171
  %v6250 = vpop.permute.xlu0 %6249
  %6253 = vset.pattern.permute.xlu0 0
  %6254 = vperm.xlu0 %6253, %v6172
  %v6255 = vpop.permute.xlu0 %6254
  %6258 = vset.pattern.permute.xlu0 0
  %6259 = vperm.xlu0 %6258, %v6173
  %v6260 = vpop.permute.xlu0 %6259
  %6263 = vset.pattern.permute.xlu0 0
  %6264 = vperm.xlu0 %6263, %v6174
  %v6265 = vpop.permute.xlu0 %6264
  %6268 = vset.pattern.permute.xlu0 0
  %6269 = vperm.xlu0 %6268, %v6175
  %v6270 = vpop.permute.xlu0 %6269
  %v6272 = vadd.f32 %v6235, %v6224
  %v6273 = vadd.f32 %v6240, %v6225
  %v6274 = vadd.f32 %v6245, %v6226
  %v6275 = vadd.f32 %v6250, %v6227
  %v6276 = vadd.f32 %v6255, %v6228
  %v6277 = vadd.f32 %v6260, %v6229
  %v6278 = vadd.f32 %v6265, %v6230
  %v6279 = vadd.f32 %v6270, %v6231
  %6280 = vrot.lane.b32.xlu0 %v5914, 64
  %v6281 = vpop.permute.xlu0 %6280
  %v6282 = vsel %vm1473, %v6281, %v5914
  %6283 = vrot.lane.b32.xlu0 %v5917, 64
  %v6284 = vpop.permute.xlu0 %6283
  %v6285 = vsel %vm1473, %v6284, %v5917
  %6286 = vrot.lane.b32.xlu0 %v5922, 64
  %v6287 = vpop.permute.xlu0 %6286
  %v6288 = vsel %vm1473, %v6287, %v5922
  %6289 = vrot.lane.b32.xlu0 %v5925, 64
  %v6290 = vpop.permute.xlu0 %6289
  %v6291 = vsel %vm1473, %v6290, %v5925
  %6292 = vrot.lane.b32.xlu0 %v5930, 64
  %v6293 = vpop.permute.xlu0 %6292
  %v6294 = vsel %vm1473, %v6293, %v5930
  %6295 = vrot.lane.b32.xlu0 %v5933, 64
  %v6296 = vpop.permute.xlu0 %6295
  %v6297 = vsel %vm1473, %v6296, %v5933
  %6298 = vrot.lane.b32.xlu0 %v5938, 64
  %v6299 = vpop.permute.xlu0 %6298
  %v6300 = vsel %vm1473, %v6299, %v5938
  %6301 = vrot.lane.b32.xlu0 %v5941, 64
  %v6302 = vpop.permute.xlu0 %6301
  %v6303 = vsel %vm1473, %v6302, %v5941
  %6304 = vrot.lane.b32.xlu0 %v6282, 64
  %v6305 = vpop.permute.xlu0 %6304
  %6306 = vrot.lane.b32.xlu0 %v6285, 64
  %v6307 = vpop.permute.xlu0 %6306
  %6308 = vrot.lane.b32.xlu0 %v6288, 64
  %v6309 = vpop.permute.xlu0 %6308
  %6310 = vrot.lane.b32.xlu0 %v6291, 64
  %v6311 = vpop.permute.xlu0 %6310
  %6312 = vrot.lane.b32.xlu0 %v6294, 64
  %v6313 = vpop.permute.xlu0 %6312
  %6314 = vrot.lane.b32.xlu0 %v6297, 64
  %v6315 = vpop.permute.xlu0 %6314
  %6316 = vrot.lane.b32.xlu0 %v6300, 64
  %v6317 = vpop.permute.xlu0 %6316
  %6318 = vrot.lane.b32.xlu0 %v6303, 64
  %v6319 = vpop.permute.xlu0 %6318
  %v6320 = vsel %vm1473, %v6305, %v5914
  %v6321 = vsel %vm1473, %v6307, %v5917
  %v6322 = vsel %vm1473, %v6309, %v5922
  %v6323 = vsel %vm1473, %v6311, %v5925
  %v6324 = vsel %vm1473, %v6313, %v5930
  %v6325 = vsel %vm1473, %v6315, %v5933
  %v6326 = vsel %vm1473, %v6317, %v5938
  %v6327 = vsel %vm1473, %v6319, %v5941
  %v6328 = vmul.f32 %v6320, %v1640
  %v6329 = vmul.f32 %v6321, %v1640
  %v6330 = vmul.f32 %v6322, %v1640
  %v6331 = vmul.f32 %v6323, %v1640
  %v6332 = vmul.f32 %v6324, %v1640
  %v6333 = vmul.f32 %v6325, %v1640
  %v6334 = vmul.f32 %v6326, %v1640
  %v6335 = vmul.f32 %v6327, %v1640
  %6344 = vrot.lane.b32.xlu0 %v6328, 127
  %v6345 = vpop.permute.xlu0 %6344
  %6346 = vrot.lane.b32.xlu0 %v6329, 127
  %v6347 = vpop.permute.xlu0 %6346
  %6348 = vrot.lane.b32.xlu0 %v6330, 127
  %v6349 = vpop.permute.xlu0 %6348
  %6350 = vrot.lane.b32.xlu0 %v6331, 127
  %v6351 = vpop.permute.xlu0 %6350
  %6352 = vrot.lane.b32.xlu0 %v6332, 127
  %v6353 = vpop.permute.xlu0 %6352
  %6354 = vrot.lane.b32.xlu0 %v6333, 127
  %v6355 = vpop.permute.xlu0 %6354
  %6356 = vrot.lane.b32.xlu0 %v6334, 127
  %v6357 = vpop.permute.xlu0 %6356
  %6358 = vrot.lane.b32.xlu0 %v6335, 127
  %v6359 = vpop.permute.xlu0 %6358
  %v6368 = vadd.f32 %v6272, %v6345
  %v6369 = vadd.f32 %v6273, %v6347
  %v6370 = vadd.f32 %v6274, %v6349
  %v6371 = vadd.f32 %v6275, %v6351
  %v6372 = vadd.f32 %v6276, %v6353
  %v6373 = vadd.f32 %v6277, %v6355
  %v6374 = vadd.f32 %v6278, %v6357
  %v6375 = vadd.f32 %v6279, %v6359
  %6376 = vrot.lane.b32.xlu0 %v5946, 64
  %v6377 = vpop.permute.xlu0 %6376
  %v6378 = vsel %vm1473, %v6377, %v5946
  %6379 = vrot.lane.b32.xlu0 %v5949, 64
  %v6380 = vpop.permute.xlu0 %6379
  %v6381 = vsel %vm1473, %v6380, %v5949
  %6382 = vrot.lane.b32.xlu0 %v5954, 64
  %v6383 = vpop.permute.xlu0 %6382
  %v6384 = vsel %vm1473, %v6383, %v5954
  %6385 = vrot.lane.b32.xlu0 %v5957, 64
  %v6386 = vpop.permute.xlu0 %6385
  %v6387 = vsel %vm1473, %v6386, %v5957
  %6388 = vrot.lane.b32.xlu0 %v5962, 64
  %v6389 = vpop.permute.xlu0 %6388
  %v6390 = vsel %vm1473, %v6389, %v5962
  %6391 = vrot.lane.b32.xlu0 %v5965, 64
  %v6392 = vpop.permute.xlu0 %6391
  %v6393 = vsel %vm1473, %v6392, %v5965
  %6394 = vrot.lane.b32.xlu0 %v5970, 64
  %v6395 = vpop.permute.xlu0 %6394
  %v6396 = vsel %vm1473, %v6395, %v5970
  %6397 = vrot.lane.b32.xlu0 %v5973, 64
  %v6398 = vpop.permute.xlu0 %6397
  %v6399 = vsel %vm1473, %v6398, %v5973
  %6400 = vrot.lane.b32.xlu0 %v6378, 64
  %v6401 = vpop.permute.xlu0 %6400
  %6402 = vrot.lane.b32.xlu0 %v6381, 64
  %v6403 = vpop.permute.xlu0 %6402
  %6404 = vrot.lane.b32.xlu0 %v6384, 64
  %v6405 = vpop.permute.xlu0 %6404
  %6406 = vrot.lane.b32.xlu0 %v6387, 64
  %v6407 = vpop.permute.xlu0 %6406
  %6408 = vrot.lane.b32.xlu0 %v6390, 64
  %v6409 = vpop.permute.xlu0 %6408
  %6410 = vrot.lane.b32.xlu0 %v6393, 64
  %v6411 = vpop.permute.xlu0 %6410
  %6412 = vrot.lane.b32.xlu0 %v6396, 64
  %v6413 = vpop.permute.xlu0 %6412
  %6414 = vrot.lane.b32.xlu0 %v6399, 64
  %v6415 = vpop.permute.xlu0 %6414
  %v6416 = vsel %vm1473, %v6401, %v5946
  %v6417 = vsel %vm1473, %v6403, %v5949
  %v6418 = vsel %vm1473, %v6405, %v5954
  %v6419 = vsel %vm1473, %v6407, %v5957
  %v6420 = vsel %vm1473, %v6409, %v5962
  %v6421 = vsel %vm1473, %v6411, %v5965
  %v6422 = vsel %vm1473, %v6413, %v5970
  %v6423 = vsel %vm1473, %v6415, %v5973
  %v6424 = vmul.f32 %v6416, %v1744
  %v6425 = vmul.f32 %v6417, %v1744
  %v6426 = vmul.f32 %v6418, %v1744
  %v6427 = vmul.f32 %v6419, %v1744
  %v6428 = vmul.f32 %v6420, %v1744
  %v6429 = vmul.f32 %v6421, %v1744
  %v6430 = vmul.f32 %v6422, %v1744
  %v6431 = vmul.f32 %v6423, %v1744
  %6440 = vrot.lane.b32.xlu0 %v6424, 126
  %v6441 = vpop.permute.xlu0 %6440
  %6442 = vrot.lane.b32.xlu0 %v6425, 126
  %v6443 = vpop.permute.xlu0 %6442
  %6444 = vrot.lane.b32.xlu0 %v6426, 126
  %v6445 = vpop.permute.xlu0 %6444
  %6446 = vrot.lane.b32.xlu0 %v6427, 126
  %v6447 = vpop.permute.xlu0 %6446
  %6448 = vrot.lane.b32.xlu0 %v6428, 126
  %v6449 = vpop.permute.xlu0 %6448
  %6450 = vrot.lane.b32.xlu0 %v6429, 126
  %v6451 = vpop.permute.xlu0 %6450
  %6452 = vrot.lane.b32.xlu0 %v6430, 126
  %v6453 = vpop.permute.xlu0 %6452
  %6454 = vrot.lane.b32.xlu0 %v6431, 126
  %v6455 = vpop.permute.xlu0 %6454
  %v6464 = vadd.f32 %v6368, %v6441
  %v6465 = vadd.f32 %v6369, %v6443
  %v6466 = vadd.f32 %v6370, %v6445
  %v6467 = vadd.f32 %v6371, %v6447
  %v6468 = vadd.f32 %v6372, %v6449
  %v6469 = vadd.f32 %v6373, %v6451
  %v6470 = vadd.f32 %v6374, %v6453
  %v6471 = vadd.f32 %v6375, %v6455
  %6472 = vrot.lane.b32.xlu0 %v5978, 64
  %v6473 = vpop.permute.xlu0 %6472
  %v6474 = vsel %vm1473, %v6473, %v5978
  %6475 = vrot.lane.b32.xlu0 %v5981, 64
  %v6476 = vpop.permute.xlu0 %6475
  %v6477 = vsel %vm1473, %v6476, %v5981
  %6478 = vrot.lane.b32.xlu0 %v5986, 64
  %v6479 = vpop.permute.xlu0 %6478
  %v6480 = vsel %vm1473, %v6479, %v5986
  %6481 = vrot.lane.b32.xlu0 %v5989, 64
  %v6482 = vpop.permute.xlu0 %6481
  %v6483 = vsel %vm1473, %v6482, %v5989
  %6484 = vrot.lane.b32.xlu0 %v5994, 64
  %v6485 = vpop.permute.xlu0 %6484
  %v6486 = vsel %vm1473, %v6485, %v5994
  %6487 = vrot.lane.b32.xlu0 %v5997, 64
  %v6488 = vpop.permute.xlu0 %6487
  %v6489 = vsel %vm1473, %v6488, %v5997
  %6490 = vrot.lane.b32.xlu0 %v6002, 64
  %v6491 = vpop.permute.xlu0 %6490
  %v6492 = vsel %vm1473, %v6491, %v6002
  %6493 = vrot.lane.b32.xlu0 %v6005, 64
  %v6494 = vpop.permute.xlu0 %6493
  %v6495 = vsel %vm1473, %v6494, %v6005
  %6496 = vrot.lane.b32.xlu0 %v6474, 64
  %v6497 = vpop.permute.xlu0 %6496
  %6498 = vrot.lane.b32.xlu0 %v6477, 64
  %v6499 = vpop.permute.xlu0 %6498
  %6500 = vrot.lane.b32.xlu0 %v6480, 64
  %v6501 = vpop.permute.xlu0 %6500
  %6502 = vrot.lane.b32.xlu0 %v6483, 64
  %v6503 = vpop.permute.xlu0 %6502
  %6504 = vrot.lane.b32.xlu0 %v6486, 64
  %v6505 = vpop.permute.xlu0 %6504
  %6506 = vrot.lane.b32.xlu0 %v6489, 64
  %v6507 = vpop.permute.xlu0 %6506
  %6508 = vrot.lane.b32.xlu0 %v6492, 64
  %v6509 = vpop.permute.xlu0 %6508
  %6510 = vrot.lane.b32.xlu0 %v6495, 64
  %v6511 = vpop.permute.xlu0 %6510
  %v6512 = vsel %vm1473, %v6497, %v5978
  %v6513 = vsel %vm1473, %v6499, %v5981
  %v6514 = vsel %vm1473, %v6501, %v5986
  %v6515 = vsel %vm1473, %v6503, %v5989
  %v6516 = vsel %vm1473, %v6505, %v5994
  %v6517 = vsel %vm1473, %v6507, %v5997
  %v6518 = vsel %vm1473, %v6509, %v6002
  %v6519 = vsel %vm1473, %v6511, %v6005
  %v6520 = vmul.f32 %v6512, %v1848
  %v6521 = vmul.f32 %v6513, %v1848
  %v6522 = vmul.f32 %v6514, %v1848
  %v6523 = vmul.f32 %v6515, %v1848
  %v6524 = vmul.f32 %v6516, %v1848
  %v6525 = vmul.f32 %v6517, %v1848
  %v6526 = vmul.f32 %v6518, %v1848
  %v6527 = vmul.f32 %v6519, %v1848
  %6536 = vrot.lane.b32.xlu0 %v6520, 120
  %v6537 = vpop.permute.xlu0 %6536
  %6538 = vrot.lane.b32.xlu0 %v6521, 120
  %v6539 = vpop.permute.xlu0 %6538
  %6540 = vrot.lane.b32.xlu0 %v6522, 120
  %v6541 = vpop.permute.xlu0 %6540
  %6542 = vrot.lane.b32.xlu0 %v6523, 120
  %v6543 = vpop.permute.xlu0 %6542
  %6544 = vrot.lane.b32.xlu0 %v6524, 120
  %v6545 = vpop.permute.xlu0 %6544
  %6546 = vrot.lane.b32.xlu0 %v6525, 120
  %v6547 = vpop.permute.xlu0 %6546
  %6548 = vrot.lane.b32.xlu0 %v6526, 120
  %v6549 = vpop.permute.xlu0 %6548
  %6550 = vrot.lane.b32.xlu0 %v6527, 120
  %v6551 = vpop.permute.xlu0 %6550
  %v6560 = vadd.f32 %v6464, %v6537
  %v6561 = vadd.f32 %v6465, %v6539
  %v6562 = vadd.f32 %v6466, %v6541
  %v6563 = vadd.f32 %v6467, %v6543
  %v6564 = vadd.f32 %v6468, %v6545
  %v6565 = vadd.f32 %v6469, %v6547
  %v6566 = vadd.f32 %v6470, %v6549
  %v6567 = vadd.f32 %v6471, %v6551
  %v6568 = vmul.f32 %v6010, %v1902
  %v6569 = vmul.f32 %v6013, %v1902
  %v6570 = vmul.f32 %v6018, %v1902
  %v6571 = vmul.f32 %v6021, %v1902
  %v6572 = vmul.f32 %v6026, %v1902
  %v6573 = vmul.f32 %v6029, %v1902
  %v6574 = vmul.f32 %v6034, %v1902
  %v6575 = vmul.f32 %v6037, %v1902
  %6584 = vrot.lane.b32.xlu0 %v6568, 55
  %v6585 = vpop.permute.xlu0 %6584
  %6586 = vrot.lane.b32.xlu0 %v6569, 55
  %v6587 = vpop.permute.xlu0 %6586
  %6588 = vrot.lane.b32.xlu0 %v6570, 55
  %v6589 = vpop.permute.xlu0 %6588
  %6590 = vrot.lane.b32.xlu0 %v6571, 55
  %v6591 = vpop.permute.xlu0 %6590
  %6592 = vrot.lane.b32.xlu0 %v6572, 55
  %v6593 = vpop.permute.xlu0 %6592
  %6594 = vrot.lane.b32.xlu0 %v6573, 55
  %v6595 = vpop.permute.xlu0 %6594
  %6596 = vrot.lane.b32.xlu0 %v6574, 55
  %v6597 = vpop.permute.xlu0 %6596
  %6598 = vrot.lane.b32.xlu0 %v6575, 55
  %v6599 = vpop.permute.xlu0 %6598
  %v6608 = vadd.f32 %v6560, %v6585
  %v6609 = vadd.f32 %v6561, %v6587
  %v6610 = vadd.f32 %v6562, %v6589
  %v6611 = vadd.f32 %v6563, %v6591
  %v6612 = vadd.f32 %v6564, %v6593
  %v6613 = vadd.f32 %v6565, %v6595
  %v6614 = vadd.f32 %v6566, %v6597
  %v6615 = vadd.f32 %v6567, %v6599
  %6616 = vrot.lane.b32.xlu0 %v6042, 64
  %v6617 = vpop.permute.xlu0 %6616
  %v6618 = vsel %vm1473, %v6617, %v6042
  %6619 = vrot.lane.b32.xlu0 %v6045, 64
  %v6620 = vpop.permute.xlu0 %6619
  %v6621 = vsel %vm1473, %v6620, %v6045
  %6622 = vrot.lane.b32.xlu0 %v6050, 64
  %v6623 = vpop.permute.xlu0 %6622
  %v6624 = vsel %vm1473, %v6623, %v6050
  %6625 = vrot.lane.b32.xlu0 %v6053, 64
  %v6626 = vpop.permute.xlu0 %6625
  %v6627 = vsel %vm1473, %v6626, %v6053
  %6628 = vrot.lane.b32.xlu0 %v6058, 64
  %v6629 = vpop.permute.xlu0 %6628
  %v6630 = vsel %vm1473, %v6629, %v6058
  %6631 = vrot.lane.b32.xlu0 %v6061, 64
  %v6632 = vpop.permute.xlu0 %6631
  %v6633 = vsel %vm1473, %v6632, %v6061
  %6634 = vrot.lane.b32.xlu0 %v6066, 64
  %v6635 = vpop.permute.xlu0 %6634
  %v6636 = vsel %vm1473, %v6635, %v6066
  %6637 = vrot.lane.b32.xlu0 %v6069, 64
  %v6638 = vpop.permute.xlu0 %6637
  %v6639 = vsel %vm1473, %v6638, %v6069
  %6640 = vrot.lane.b32.xlu0 %v6618, 64
  %v6641 = vpop.permute.xlu0 %6640
  %6642 = vrot.lane.b32.xlu0 %v6621, 64
  %v6643 = vpop.permute.xlu0 %6642
  %6644 = vrot.lane.b32.xlu0 %v6624, 64
  %v6645 = vpop.permute.xlu0 %6644
  %6646 = vrot.lane.b32.xlu0 %v6627, 64
  %v6647 = vpop.permute.xlu0 %6646
  %6648 = vrot.lane.b32.xlu0 %v6630, 64
  %v6649 = vpop.permute.xlu0 %6648
  %6650 = vrot.lane.b32.xlu0 %v6633, 64
  %v6651 = vpop.permute.xlu0 %6650
  %6652 = vrot.lane.b32.xlu0 %v6636, 64
  %v6653 = vpop.permute.xlu0 %6652
  %6654 = vrot.lane.b32.xlu0 %v6639, 64
  %v6655 = vpop.permute.xlu0 %6654
  %v6656 = vsel %vm1473, %v6641, %v6042
  %v6657 = vsel %vm1473, %v6643, %v6045
  %v6658 = vsel %vm1473, %v6645, %v6050
  %v6659 = vsel %vm1473, %v6647, %v6053
  %v6660 = vsel %vm1473, %v6649, %v6058
  %v6661 = vsel %vm1473, %v6651, %v6061
  %v6662 = vsel %vm1473, %v6653, %v6066
  %v6663 = vsel %vm1473, %v6655, %v6069
  %v6664 = vmul.f32 %v6656, %v2006
  %v6665 = vmul.f32 %v6657, %v2006
  %v6666 = vmul.f32 %v6658, %v2006
  %v6667 = vmul.f32 %v6659, %v2006
  %v6668 = vmul.f32 %v6660, %v2006
  %v6669 = vmul.f32 %v6661, %v2006
  %v6670 = vmul.f32 %v6662, %v2006
  %v6671 = vmul.f32 %v6663, %v2006
  %6680 = vrot.lane.b32.xlu0 %v6664, 54
  %v6681 = vpop.permute.xlu0 %6680
  %6682 = vrot.lane.b32.xlu0 %v6665, 54
  %v6683 = vpop.permute.xlu0 %6682
  %6684 = vrot.lane.b32.xlu0 %v6666, 54
  %v6685 = vpop.permute.xlu0 %6684
  %6686 = vrot.lane.b32.xlu0 %v6667, 54
  %v6687 = vpop.permute.xlu0 %6686
  %6688 = vrot.lane.b32.xlu0 %v6668, 54
  %v6689 = vpop.permute.xlu0 %6688
  %6690 = vrot.lane.b32.xlu0 %v6669, 54
  %v6691 = vpop.permute.xlu0 %6690
  %6692 = vrot.lane.b32.xlu0 %v6670, 54
  %v6693 = vpop.permute.xlu0 %6692
  %6694 = vrot.lane.b32.xlu0 %v6671, 54
  %v6695 = vpop.permute.xlu0 %6694
  %v6704 = vadd.f32 %v6608, %v6681
  %v6705 = vadd.f32 %v6609, %v6683
  %v6706 = vadd.f32 %v6610, %v6685
  %v6707 = vadd.f32 %v6611, %v6687
  %v6708 = vadd.f32 %v6612, %v6689
  %v6709 = vadd.f32 %v6613, %v6691
  %v6710 = vadd.f32 %v6614, %v6693
  %v6711 = vadd.f32 %v6615, %v6695
  %6712 = vrot.lane.b32.xlu0 %v6074, 64
  %v6713 = vpop.permute.xlu0 %6712
  %v6714 = vsel %vm1473, %v6713, %v6074
  %6715 = vrot.lane.b32.xlu0 %v6077, 64
  %v6716 = vpop.permute.xlu0 %6715
  %v6717 = vsel %vm1473, %v6716, %v6077
  %6718 = vrot.lane.b32.xlu0 %v6082, 64
  %v6719 = vpop.permute.xlu0 %6718
  %v6720 = vsel %vm1473, %v6719, %v6082
  %6721 = vrot.lane.b32.xlu0 %v6085, 64
  %v6722 = vpop.permute.xlu0 %6721
  %v6723 = vsel %vm1473, %v6722, %v6085
  %6724 = vrot.lane.b32.xlu0 %v6090, 64
  %v6725 = vpop.permute.xlu0 %6724
  %v6726 = vsel %vm1473, %v6725, %v6090
  %6727 = vrot.lane.b32.xlu0 %v6093, 64
  %v6728 = vpop.permute.xlu0 %6727
  %v6729 = vsel %vm1473, %v6728, %v6093
  %6730 = vrot.lane.b32.xlu0 %v6098, 64
  %v6731 = vpop.permute.xlu0 %6730
  %v6732 = vsel %vm1473, %v6731, %v6098
  %6733 = vrot.lane.b32.xlu0 %v6101, 64
  %v6734 = vpop.permute.xlu0 %6733
  %v6735 = vsel %vm1473, %v6734, %v6101
  %6736 = vrot.lane.b32.xlu0 %v6714, 64
  %v6737 = vpop.permute.xlu0 %6736
  %6738 = vrot.lane.b32.xlu0 %v6717, 64
  %v6739 = vpop.permute.xlu0 %6738
  %6740 = vrot.lane.b32.xlu0 %v6720, 64
  %v6741 = vpop.permute.xlu0 %6740
  %6742 = vrot.lane.b32.xlu0 %v6723, 64
  %v6743 = vpop.permute.xlu0 %6742
  %6744 = vrot.lane.b32.xlu0 %v6726, 64
  %v6745 = vpop.permute.xlu0 %6744
  %6746 = vrot.lane.b32.xlu0 %v6729, 64
  %v6747 = vpop.permute.xlu0 %6746
  %6748 = vrot.lane.b32.xlu0 %v6732, 64
  %v6749 = vpop.permute.xlu0 %6748
  %6750 = vrot.lane.b32.xlu0 %v6735, 64
  %v6751 = vpop.permute.xlu0 %6750
  %v6752 = vsel %vm1473, %v6737, %v6074
  %v6753 = vsel %vm1473, %v6739, %v6077
  %v6754 = vsel %vm1473, %v6741, %v6082
  %v6755 = vsel %vm1473, %v6743, %v6085
  %v6756 = vsel %vm1473, %v6745, %v6090
  %v6757 = vsel %vm1473, %v6747, %v6093
  %v6758 = vsel %vm1473, %v6749, %v6098
  %v6759 = vsel %vm1473, %v6751, %v6101
  %v6760 = vmul.f32 %v6752, %v2110
  %v6761 = vmul.f32 %v6753, %v2110
  %v6762 = vmul.f32 %v6754, %v2110
  %v6763 = vmul.f32 %v6755, %v2110
  %v6764 = vmul.f32 %v6756, %v2110
  %v6765 = vmul.f32 %v6757, %v2110
  %v6766 = vmul.f32 %v6758, %v2110
  %v6767 = vmul.f32 %v6759, %v2110
  %6776 = vrot.lane.b32.xlu0 %v6760, 48
  %v6777 = vpop.permute.xlu0 %6776
  %6778 = vrot.lane.b32.xlu0 %v6761, 48
  %v6779 = vpop.permute.xlu0 %6778
  %6780 = vrot.lane.b32.xlu0 %v6762, 48
  %v6781 = vpop.permute.xlu0 %6780
  %6782 = vrot.lane.b32.xlu0 %v6763, 48
  %v6783 = vpop.permute.xlu0 %6782
  %6784 = vrot.lane.b32.xlu0 %v6764, 48
  %v6785 = vpop.permute.xlu0 %6784
  %6786 = vrot.lane.b32.xlu0 %v6765, 48
  %v6787 = vpop.permute.xlu0 %6786
  %6788 = vrot.lane.b32.xlu0 %v6766, 48
  %v6789 = vpop.permute.xlu0 %6788
  %6790 = vrot.lane.b32.xlu0 %v6767, 48
  %v6791 = vpop.permute.xlu0 %6790
  %v6800 = vadd.f32 %v6704, %v6777
  %v6801 = vadd.f32 %v6705, %v6779
  %v6802 = vadd.f32 %v6706, %v6781
  %v6803 = vadd.f32 %v6707, %v6783
  %v6804 = vadd.f32 %v6708, %v6785
  %v6805 = vadd.f32 %v6709, %v6787
  %v6806 = vadd.f32 %v6710, %v6789
  %v6807 = vadd.f32 %v6711, %v6791
  %6808 = vrot.lane.b32.xlu0 %v6106, 64
  %v6809 = vpop.permute.xlu0 %6808
  %v6810 = vsel %vm1473, %v6809, %v6106
  %6811 = vrot.lane.b32.xlu0 %v6109, 64
  %v6812 = vpop.permute.xlu0 %6811
  %v6813 = vsel %vm1473, %v6812, %v6109
  %6814 = vrot.lane.b32.xlu0 %v6114, 64
  %v6815 = vpop.permute.xlu0 %6814
  %v6816 = vsel %vm1473, %v6815, %v6114
  %6817 = vrot.lane.b32.xlu0 %v6117, 64
  %v6818 = vpop.permute.xlu0 %6817
  %v6819 = vsel %vm1473, %v6818, %v6117
  %6820 = vrot.lane.b32.xlu0 %v6122, 64
  %v6821 = vpop.permute.xlu0 %6820
  %v6822 = vsel %vm1473, %v6821, %v6122
  %6823 = vrot.lane.b32.xlu0 %v6125, 64
  %v6824 = vpop.permute.xlu0 %6823
  %v6825 = vsel %vm1473, %v6824, %v6125
  %6826 = vrot.lane.b32.xlu0 %v6130, 64
  %v6827 = vpop.permute.xlu0 %6826
  %v6828 = vsel %vm1473, %v6827, %v6130
  %6829 = vrot.lane.b32.xlu0 %v6133, 64
  %v6830 = vpop.permute.xlu0 %6829
  %v6831 = vsel %vm1473, %v6830, %v6133
  %6832 = vrot.lane.b32.xlu0 %v6810, 64
  %v6833 = vpop.permute.xlu0 %6832
  %6834 = vrot.lane.b32.xlu0 %v6813, 64
  %v6835 = vpop.permute.xlu0 %6834
  %6836 = vrot.lane.b32.xlu0 %v6816, 64
  %v6837 = vpop.permute.xlu0 %6836
  %6838 = vrot.lane.b32.xlu0 %v6819, 64
  %v6839 = vpop.permute.xlu0 %6838
  %6840 = vrot.lane.b32.xlu0 %v6822, 64
  %v6841 = vpop.permute.xlu0 %6840
  %6842 = vrot.lane.b32.xlu0 %v6825, 64
  %v6843 = vpop.permute.xlu0 %6842
  %6844 = vrot.lane.b32.xlu0 %v6828, 64
  %v6845 = vpop.permute.xlu0 %6844
  %6846 = vrot.lane.b32.xlu0 %v6831, 64
  %v6847 = vpop.permute.xlu0 %6846
  %v6848 = vsel %vm1473, %v6833, %v6106
  %v6849 = vsel %vm1473, %v6835, %v6109
  %v6850 = vsel %vm1473, %v6837, %v6114
  %v6851 = vsel %vm1473, %v6839, %v6117
  %v6852 = vsel %vm1473, %v6841, %v6122
  %v6853 = vsel %vm1473, %v6843, %v6125
  %v6854 = vsel %vm1473, %v6845, %v6130
  %v6855 = vsel %vm1473, %v6847, %v6133
  %v6856 = vmul.f32 %v6848, %v2214
  %v6857 = vmul.f32 %v6849, %v2214
  %v6858 = vmul.f32 %v6850, %v2214
  %v6859 = vmul.f32 %v6851, %v2214
  %v6860 = vmul.f32 %v6852, %v2214
  %v6861 = vmul.f32 %v6853, %v2214
  %v6862 = vmul.f32 %v6854, %v2214
  %v6863 = vmul.f32 %v6855, %v2214
  %6872 = vrot.lane.b32.xlu0 %v6856, 47
  %v6873 = vpop.permute.xlu0 %6872
  %6874 = vrot.lane.b32.xlu0 %v6857, 47
  %v6875 = vpop.permute.xlu0 %6874
  %6876 = vrot.lane.b32.xlu0 %v6858, 47
  %v6877 = vpop.permute.xlu0 %6876
  %6878 = vrot.lane.b32.xlu0 %v6859, 47
  %v6879 = vpop.permute.xlu0 %6878
  %6880 = vrot.lane.b32.xlu0 %v6860, 47
  %v6881 = vpop.permute.xlu0 %6880
  %6882 = vrot.lane.b32.xlu0 %v6861, 47
  %v6883 = vpop.permute.xlu0 %6882
  %6884 = vrot.lane.b32.xlu0 %v6862, 47
  %v6885 = vpop.permute.xlu0 %6884
  %6886 = vrot.lane.b32.xlu0 %v6863, 47
  %v6887 = vpop.permute.xlu0 %6886
  %v6896 = vadd.f32 %v6800, %v6873
  %v6897 = vadd.f32 %v6801, %v6875
  %v6898 = vadd.f32 %v6802, %v6877
  %v6899 = vadd.f32 %v6803, %v6879
  %v6900 = vadd.f32 %v6804, %v6881
  %v6901 = vadd.f32 %v6805, %v6883
  %v6902 = vadd.f32 %v6806, %v6885
  %v6903 = vadd.f32 %v6807, %v6887
  %6904 = vrot.lane.b32.xlu0 %v6138, 64
  %v6905 = vpop.permute.xlu0 %6904
  %v6906 = vsel %vm1473, %v6905, %v6138
  %6907 = vrot.lane.b32.xlu0 %v6141, 64
  %v6908 = vpop.permute.xlu0 %6907
  %v6909 = vsel %vm1473, %v6908, %v6141
  %6910 = vrot.lane.b32.xlu0 %v6146, 64
  %v6911 = vpop.permute.xlu0 %6910
  %v6912 = vsel %vm1473, %v6911, %v6146
  %6913 = vrot.lane.b32.xlu0 %v6149, 64
  %v6914 = vpop.permute.xlu0 %6913
  %v6915 = vsel %vm1473, %v6914, %v6149
  %6916 = vrot.lane.b32.xlu0 %v6154, 64
  %v6917 = vpop.permute.xlu0 %6916
  %v6918 = vsel %vm1473, %v6917, %v6154
  %6919 = vrot.lane.b32.xlu0 %v6157, 64
  %v6920 = vpop.permute.xlu0 %6919
  %v6921 = vsel %vm1473, %v6920, %v6157
  %6922 = vrot.lane.b32.xlu0 %v6162, 64
  %v6923 = vpop.permute.xlu0 %6922
  %v6924 = vsel %vm1473, %v6923, %v6162
  %6925 = vrot.lane.b32.xlu0 %v6165, 64
  %v6926 = vpop.permute.xlu0 %6925
  %v6927 = vsel %vm1473, %v6926, %v6165
  %6928 = vrot.lane.b32.xlu0 %v6906, 64
  %v6929 = vpop.permute.xlu0 %6928
  %6930 = vrot.lane.b32.xlu0 %v6909, 64
  %v6931 = vpop.permute.xlu0 %6930
  %6932 = vrot.lane.b32.xlu0 %v6912, 64
  %v6933 = vpop.permute.xlu0 %6932
  %6934 = vrot.lane.b32.xlu0 %v6915, 64
  %v6935 = vpop.permute.xlu0 %6934
  %6936 = vrot.lane.b32.xlu0 %v6918, 64
  %v6937 = vpop.permute.xlu0 %6936
  %6938 = vrot.lane.b32.xlu0 %v6921, 64
  %v6939 = vpop.permute.xlu0 %6938
  %6940 = vrot.lane.b32.xlu0 %v6924, 64
  %v6941 = vpop.permute.xlu0 %6940
  %6942 = vrot.lane.b32.xlu0 %v6927, 64
  %v6943 = vpop.permute.xlu0 %6942
  %v6944 = vsel %vm1473, %v6929, %v6138
  %v6945 = vsel %vm1473, %v6931, %v6141
  %v6946 = vsel %vm1473, %v6933, %v6146
  %v6947 = vsel %vm1473, %v6935, %v6149
  %v6948 = vsel %vm1473, %v6937, %v6154
  %v6949 = vsel %vm1473, %v6939, %v6157
  %v6950 = vsel %vm1473, %v6941, %v6162
  %v6951 = vsel %vm1473, %v6943, %v6165
  %v6952 = vmul.f32 %v6944, %v2318
  %v6953 = vmul.f32 %v6945, %v2318
  %v6954 = vmul.f32 %v6946, %v2318
  %v6955 = vmul.f32 %v6947, %v2318
  %v6956 = vmul.f32 %v6948, %v2318
  %v6957 = vmul.f32 %v6949, %v2318
  %v6958 = vmul.f32 %v6950, %v2318
  %v6959 = vmul.f32 %v6951, %v2318
  %6968 = vrot.lane.b32.xlu0 %v6952, 46
  %v6969 = vpop.permute.xlu0 %6968
  %6970 = vrot.lane.b32.xlu0 %v6953, 46
  %v6971 = vpop.permute.xlu0 %6970
  %6972 = vrot.lane.b32.xlu0 %v6954, 46
  %v6973 = vpop.permute.xlu0 %6972
  %6974 = vrot.lane.b32.xlu0 %v6955, 46
  %v6975 = vpop.permute.xlu0 %6974
  %6976 = vrot.lane.b32.xlu0 %v6956, 46
  %v6977 = vpop.permute.xlu0 %6976
  %6978 = vrot.lane.b32.xlu0 %v6957, 46
  %v6979 = vpop.permute.xlu0 %6978
  %6980 = vrot.lane.b32.xlu0 %v6958, 46
  %v6981 = vpop.permute.xlu0 %6980
  %6982 = vrot.lane.b32.xlu0 %v6959, 46
  %v6983 = vpop.permute.xlu0 %6982
  %v6992 = vadd.f32 %v6896, %v6969
  %v6993 = vadd.f32 %v6897, %v6971
  %v6994 = vadd.f32 %v6898, %v6973
  %v6995 = vadd.f32 %v6899, %v6975
  %v6996 = vadd.f32 %v6900, %v6977
  %v6997 = vadd.f32 %v6901, %v6979
  %v6998 = vadd.f32 %v6902, %v6981
  %v6999 = vadd.f32 %v6903, %v6983
  %7001 = vrot.lane.b32.xlu0 %v768, 55
  %v7002 = vpop.permute.xlu0 %7001
  %v7004 = vadd.f32 %v6992, %v7002
  %v7005 = vmax.f32 %v7004, 0.0
  %v7006 = vld [vmem:[%s37] sm:$0xf]
  %v7007 = vld [vmem:[%s37 + $0x4] sm:$0xf]
  %v7008 = vld [vmem:[%s37 + $0x8] sm:$0xf]
  %v7009 = vld [vmem:[%s37 + $0xc] sm:$0xf]
  %v7010 = vld [vmem:[%s37 + $0x10] sm:$0xf]
  %v7011 = vld [vmem:[%s37 + $0x14] sm:$0xf]
  %v7012 = vld [vmem:[%s37 + $0x18] sm:$0xf]
  %v7013 = vld [vmem:[%s37 + $0x1c] sm:$0xf]
  %v7014 = vpack.c.bf16 %v7005, %v7005
  %7015 = vrot.lane.b32.xlu0 %v768, 119
  %v7016 = vpop.permute.xlu0 %7015
  %v7018 = vadd.f32 %v6993, %v7016
  %v7019 = vmax.f32 %v7018, 0.0
  %s7020 = scalar_lea.vmem %s37, 32
  %v7021 = vld [vmem:[%s7020] sm:$0xf]
  %v7022 = vld [vmem:[%s7020 + $0x4] sm:$0xf]
  %v7023 = vld [vmem:[%s7020 + $0x8] sm:$0xf]
  %v7024 = vld [vmem:[%s7020 + $0xc] sm:$0xf]
  %v7025 = vld [vmem:[%s7020 + $0x10] sm:$0xf]
  %v7026 = vld [vmem:[%s7020 + $0x14] sm:$0xf]
  %v7027 = vld [vmem:[%s7020 + $0x18] sm:$0xf]
  %v7028 = vld [vmem:[%s7020 + $0x1c] sm:$0xf]
  %v7029 = vpack.c.bf16 %v7019, %v7019
  %7031 = vrot.lane.b32.xlu0 %v7029, 73
  %v7032 = vpop.permute.xlu0 %7031
  %v7041 = vunpack.c.l.b16 %v7021
  %v7042 = vunpack.c.l.b16 %v7022
  %v7043 = vunpack.c.l.b16 %v7023
  %v7044 = vunpack.c.l.b16 %v7024
  %v7045 = vunpack.c.l.b16 %v7025
  %v7046 = vunpack.c.l.b16 %v7026
  %v7047 = vunpack.c.l.b16 %v7027
  %v7048 = vunpack.c.l.b16 %v7028
  %v7049 = vpack.c.b16 %v7042, %v7041
  %v7050 = vpack.c.b16 %v7044, %v7043
  %v7051 = vpack.c.b16 %v7046, %v7045
  %v7052 = vpack.c.b16 %v7048, %v7047
  %v7058 = vsel %vm2648, %v7032, 0
  %7060 = vmatprep.subr.bf16.mxu0 0
  %7061 = vmatpush1.bf16.msra.mxu0 %v7049
  %7062 = vmatprep.subr.bf16.mxu0 0
  %7063 = vmatpush1.bf16.msra.mxu0 %v7050
  %7064 = vmatprep.subr.bf16.mxu0 0
  %7065 = vmatpush1.bf16.msra.mxu0 %v7051
  %7066 = vmatprep.subr.bf16.mxu0 0
  %7067 = vmatpush1.bf16.msra.mxu0 %v7052
  %7068 = vmatprep.subr.bf16.mxu0 0
  %7069 = vmatpush1.bf16.msra.mxu0 0
  %7070 = vmatprep.subr.bf16.mxu0 0
  %7071 = vmatpush1.bf16.msra.mxu0 0
  %7072 = vmatprep.subr.bf16.mxu0 0
  %7073 = vmatpush1.bf16.msra.mxu0 0
  %7074 = vmatprep.subr.bf16.mxu0 0
  %7075 = vmatpush1.bf16.msra.mxu0 0
  %7076 = vmatprep.subr.bf16.mxu0 0
  %7077 = vmatpush1.bf16.msra.mxu0 0
  %7078 = vmatprep.subr.bf16.mxu0 0
  %7079 = vmatpush1.bf16.msra.mxu0 0
  %7080 = vmatprep.subr.bf16.mxu0 0
  %7081 = vmatpush1.bf16.msra.mxu0 0
  %7082 = vmatprep.subr.bf16.mxu0 0
  %7083 = vmatpush1.bf16.msra.mxu0 0
  %7084 = vmatprep.subr.bf16.mxu0 0
  %7085 = vmatpush1.bf16.msra.mxu0 0
  %7086 = vmatprep.subr.bf16.mxu0 0
  %7087 = vmatpush1.bf16.msra.mxu0 0
  %7088 = vmatprep.subr.bf16.mxu0 0
  %7089 = vmatpush1.bf16.msra.mxu0 0
  %7090 = vmatprep.subr.bf16.mxu0 0
  %7091 = vmatpush1.bf16.msra.mxu0 0
  %7092 = vmatprep.mubr.bf16.mxu0 0
  %7093 = vmatmul.mubr.bf16.gmra.mrb[0].mxu0 %v7058
  %v7094 = vpop.f32.mrb[0].mxu0
  %v7095 = vadd.f32 0.0, %v7094
  %v7096 = vpop.f32.mrb[0].mxu0
  %v7097 = vpop.f32.mrb[0].mxu0
  %v7098 = vpop.f32.mrb[0].mxu0
  %7099 = vdwg.mxu0
  %7101 = vrot.lane.b32.xlu0 %v7014, 73
  %v7102 = vpop.permute.xlu0 %7101
  %v7111 = vunpack.c.l.b16 %v7006
  %v7112 = vunpack.c.l.b16 %v7007
  %v7113 = vunpack.c.l.b16 %v7008
  %v7114 = vunpack.c.l.b16 %v7009
  %v7115 = vunpack.c.l.b16 %v7010
  %v7116 = vunpack.c.l.b16 %v7011
  %v7117 = vunpack.c.l.b16 %v7012
  %v7118 = vunpack.c.l.b16 %v7013
  %v7119 = vpack.c.b16 %v7112, %v7111
  %v7120 = vpack.c.b16 %v7114, %v7113
  %v7121 = vpack.c.b16 %v7116, %v7115
  %v7122 = vpack.c.b16 %v7118, %v7117
  %v7128 = vsel %vm2648, %v7102, 0
  %7130 = vmatprep.subr.bf16.mxu0 0
  %7131 = vmatpush1.bf16.msra.mxu0 %v7119
  %7132 = vmatprep.subr.bf16.mxu0 0
  %7133 = vmatpush1.bf16.msra.mxu0 %v7120
  %7134 = vmatprep.subr.bf16.mxu0 0
  %7135 = vmatpush1.bf16.msra.mxu0 %v7121
  %7136 = vmatprep.subr.bf16.mxu0 0
  %7137 = vmatpush1.bf16.msra.mxu0 %v7122
  %7138 = vmatprep.subr.bf16.mxu0 0
  %7139 = vmatpush1.bf16.msra.mxu0 0
  %7140 = vmatprep.subr.bf16.mxu0 0
  %7141 = vmatpush1.bf16.msra.mxu0 0
  %7142 = vmatprep.subr.bf16.mxu0 0
  %7143 = vmatpush1.bf16.msra.mxu0 0
  %7144 = vmatprep.subr.bf16.mxu0 0
  %7145 = vmatpush1.bf16.msra.mxu0 0
  %7146 = vmatprep.subr.bf16.mxu0 0
  %7147 = vmatpush1.bf16.msra.mxu0 0
  %7148 = vmatprep.subr.bf16.mxu0 0
  %7149 = vmatpush1.bf16.msra.mxu0 0
  %7150 = vmatprep.subr.bf16.mxu0 0
  %7151 = vmatpush1.bf16.msra.mxu0 0
  %7152 = vmatprep.subr.bf16.mxu0 0
  %7153 = vmatpush1.bf16.msra.mxu0 0
  %7154 = vmatprep.subr.bf16.mxu0 0
  %7155 = vmatpush1.bf16.msra.mxu0 0
  %7156 = vmatprep.subr.bf16.mxu0 0
  %7157 = vmatpush1.bf16.msra.mxu0 0
  %7158 = vmatprep.subr.bf16.mxu0 0
  %7159 = vmatpush1.bf16.msra.mxu0 0
  %7160 = vmatprep.subr.bf16.mxu0 0
  %7161 = vmatpush1.bf16.msra.mxu0 0
  %7162 = vmatprep.mubr.bf16.mxu0 0
  %7163 = vmatmul.mubr.bf16.gmra.mrb[0].mxu0 %v7128
  %v7164 = vpop.f32.mrb[0].mxu0
  %v7165 = vadd.f32 %v7095, %v7164
  %v7166 = vpop.f32.mrb[0].mxu0
  %v7167 = vpop.f32.mrb[0].mxu0
  %v7168 = vpop.f32.mrb[0].mxu0
  %7169 = vdwg.mxu0
  %7171 = vrot.lane.b32.xlu0 %v769, 55
  %v7172 = vpop.permute.xlu0 %7171
  %v7174 = vadd.f32 %v6994, %v7172
  %v7175 = vmax.f32 %v7174, 0.0
  %s7176 = scalar_lea.vmem %s37, 64
  %v7177 = vld [vmem:[%s7176] sm:$0xf]
  %v7178 = vld [vmem:[%s7176 + $0x4] sm:$0xf]
  %v7179 = vld [vmem:[%s7176 + $0x8] sm:$0xf]
  %v7180 = vld [vmem:[%s7176 + $0xc] sm:$0xf]
  %v7181 = vld [vmem:[%s7176 + $0x10] sm:$0xf]
  %v7182 = vld [vmem:[%s7176 + $0x14] sm:$0xf]
  %v7183 = vld [vmem:[%s7176 + $0x18] sm:$0xf]
  %v7184 = vld [vmem:[%s7176 + $0x1c] sm:$0xf]
  %v7185 = vpack.c.bf16 %v7175, %v7175
  %7187 = vrot.lane.b32.xlu0 %v7185, 73
  %v7188 = vpop.permute.xlu0 %7187
  %v7197 = vunpack.c.l.b16 %v7177
  %v7198 = vunpack.c.l.b16 %v7178
  %v7199 = vunpack.c.l.b16 %v7179
  %v7200 = vunpack.c.l.b16 %v7180
  %v7201 = vunpack.c.l.b16 %v7181
  %v7202 = vunpack.c.l.b16 %v7182
  %v7203 = vunpack.c.l.b16 %v7183
  %v7204 = vunpack.c.l.b16 %v7184
  %v7205 = vpack.c.b16 %v7198, %v7197
  %v7206 = vpack.c.b16 %v7200, %v7199
  %v7207 = vpack.c.b16 %v7202, %v7201
  %v7208 = vpack.c.b16 %v7204, %v7203
  %v7214 = vsel %vm2648, %v7188, 0
  %7216 = vmatprep.subr.bf16.mxu0 0
  %7217 = vmatpush1.bf16.msra.mxu0 %v7205
  %7218 = vmatprep.subr.bf16.mxu0 0
  %7219 = vmatpush1.bf16.msra.mxu0 %v7206
  %7220 = vmatprep.subr.bf16.mxu0 0
  %7221 = vmatpush1.bf16.msra.mxu0 %v7207
  %7222 = vmatprep.subr.bf16.mxu0 0
  %7223 = vmatpush1.bf16.msra.mxu0 %v7208
  %7224 = vmatprep.subr.bf16.mxu0 0
  %7225 = vmatpush1.bf16.msra.mxu0 0
  %7226 = vmatprep.subr.bf16.mxu0 0
  %7227 = vmatpush1.bf16.msra.mxu0 0
  %7228 = vmatprep.subr.bf16.mxu0 0
  %7229 = vmatpush1.bf16.msra.mxu0 0
  %7230 = vmatprep.subr.bf16.mxu0 0
  %7231 = vmatpush1.bf16.msra.mxu0 0
  %7232 = vmatprep.subr.bf16.mxu0 0
  %7233 = vmatpush1.bf16.msra.mxu0 0
  %7234 = vmatprep.subr.bf16.mxu0 0
  %7235 = vmatpush1.bf16.msra.mxu0 0
  %7236 = vmatprep.subr.bf16.mxu0 0
  %7237 = vmatpush1.bf16.msra.mxu0 0
  %7238 = vmatprep.subr.bf16.mxu0 0
  %7239 = vmatpush1.bf16.msra.mxu0 0
  %7240 = vmatprep.subr.bf16.mxu0 0
  %7241 = vmatpush1.bf16.msra.mxu0 0
  %7242 = vmatprep.subr.bf16.mxu0 0
  %7243 = vmatpush1.bf16.msra.mxu0 0
  %7244 = vmatprep.subr.bf16.mxu0 0
  %7245 = vmatpush1.bf16.msra.mxu0 0
  %7246 = vmatprep.subr.bf16.mxu0 0
  %7247 = vmatpush1.bf16.msra.mxu0 0
  %7248 = vmatprep.mubr.bf16.mxu0 0
  %7249 = vmatmul.mubr.bf16.gmra.mrb[0].mxu0 %v7214
  %v7250 = vpop.f32.mrb[0].mxu0
  %v7251 = vadd.f32 0.0, %v7250
  %v7252 = vpop.f32.mrb[0].mxu0
  %v7253 = vpop.f32.mrb[0].mxu0
  %v7254 = vpop.f32.mrb[0].mxu0
  %7255 = vdwg.mxu0
  %v7256 = vadd.f32 %v7165, %v7251
  %7257 = vrot.lane.b32.xlu0 %v769, 119
  %v7258 = vpop.permute.xlu0 %7257
  %v7260 = vadd.f32 %v6995, %v7258
  %v7261 = vmax.f32 %v7260, 0.0
  %s7262 = scalar_lea.vmem %s37, 96
  %v7263 = vld [vmem:[%s7262] sm:$0xf]
  %v7264 = vld [vmem:[%s7262 + $0x4] sm:$0xf]
  %v7265 = vld [vmem:[%s7262 + $0x8] sm:$0xf]
  %v7266 = vld [vmem:[%s7262 + $0xc] sm:$0xf]
  %v7267 = vld [vmem:[%s7262 + $0x10] sm:$0xf]
  %v7268 = vld [vmem:[%s7262 + $0x14] sm:$0xf]
  %v7269 = vld [vmem:[%s7262 + $0x18] sm:$0xf]
  %v7270 = vld [vmem:[%s7262 + $0x1c] sm:$0xf]
  %v7271 = vpack.c.bf16 %v7261, %v7261
  %7273 = vrot.lane.b32.xlu0 %v7271, 73
  %v7274 = vpop.permute.xlu0 %7273
  %v7283 = vunpack.c.l.b16 %v7263
  %v7284 = vunpack.c.l.b16 %v7264
  %v7285 = vunpack.c.l.b16 %v7265
  %v7286 = vunpack.c.l.b16 %v7266
  %v7287 = vunpack.c.l.b16 %v7267
  %v7288 = vunpack.c.l.b16 %v7268
  %v7289 = vunpack.c.l.b16 %v7269
  %v7290 = vunpack.c.l.b16 %v7270
  %v7291 = vpack.c.b16 %v7284, %v7283
  %v7292 = vpack.c.b16 %v7286, %v7285
  %v7293 = vpack.c.b16 %v7288, %v7287
  %v7294 = vpack.c.b16 %v7290, %v7289
  %v7300 = vsel %vm2648, %v7274, 0
  %7302 = vmatprep.subr.bf16.mxu0 0
  %7303 = vmatpush1.bf16.msra.mxu0 %v7291
  %7304 = vmatprep.subr.bf16.mxu0 0
  %7305 = vmatpush1.bf16.msra.mxu0 %v7292
  %7306 = vmatprep.subr.bf16.mxu0 0
  %7307 = vmatpush1.bf16.msra.mxu0 %v7293
  %7308 = vmatprep.subr.bf16.mxu0 0
  %7309 = vmatpush1.bf16.msra.mxu0 %v7294
  %7310 = vmatprep.subr.bf16.mxu0 0
  %7311 = vmatpush1.bf16.msra.mxu0 0
  %7312 = vmatprep.subr.bf16.mxu0 0
  %7313 = vmatpush1.bf16.msra.mxu0 0
  %7314 = vmatprep.subr.bf16.mxu0 0
  %7315 = vmatpush1.bf16.msra.mxu0 0
  %7316 = vmatprep.subr.bf16.mxu0 0
  %7317 = vmatpush1.bf16.msra.mxu0 0
  %7318 = vmatprep.subr.bf16.mxu0 0
  %7319 = vmatpush1.bf16.msra.mxu0 0
  %7320 = vmatprep.subr.bf16.mxu0 0
  %7321 = vmatpush1.bf16.msra.mxu0 0
  %7322 = vmatprep.subr.bf16.mxu0 0
  %7323 = vmatpush1.bf16.msra.mxu0 0
  %7324 = vmatprep.subr.bf16.mxu0 0
  %7325 = vmatpush1.bf16.msra.mxu0 0
  %7326 = vmatprep.subr.bf16.mxu0 0
  %7327 = vmatpush1.bf16.msra.mxu0 0
  %7328 = vmatprep.subr.bf16.mxu0 0
  %7329 = vmatpush1.bf16.msra.mxu0 0
  %7330 = vmatprep.subr.bf16.mxu0 0
  %7331 = vmatpush1.bf16.msra.mxu0 0
  %7332 = vmatprep.subr.bf16.mxu0 0
  %7333 = vmatpush1.bf16.msra.mxu0 0
  %7334 = vmatprep.mubr.bf16.mxu0 0
  %7335 = vmatmul.mubr.bf16.gmra.mrb[0].mxu0 %v7300
  %v7336 = vpop.f32.mrb[0].mxu0
  %v7337 = vadd.f32 0.0, %v7336
  %v7338 = vpop.f32.mrb[0].mxu0
  %v7339 = vpop.f32.mrb[0].mxu0
  %v7340 = vpop.f32.mrb[0].mxu0
  %7341 = vdwg.mxu0
  %v7342 = vadd.f32 %v7256, %v7337
  %7344 = vrot.lane.b32.xlu0 %v770, 55
  %v7345 = vpop.permute.xlu0 %7344
  %v7347 = vadd.f32 %v6996, %v7345
  %v7348 = vmax.f32 %v7347, 0.0
  %s7349 = scalar_lea.vmem %s37, 128
  %v7350 = vld [vmem:[%s7349] sm:$0xf]
  %v7351 = vld [vmem:[%s7349 + $0x4] sm:$0xf]
  %v7352 = vld [vmem:[%s7349 + $0x8] sm:$0xf]
  %v7353 = vld [vmem:[%s7349 + $0xc] sm:$0xf]
  %v7354 = vld [vmem:[%s7349 + $0x10] sm:$0xf]
  %v7355 = vld [vmem:[%s7349 + $0x14] sm:$0xf]
  %v7356 = vld [vmem:[%s7349 + $0x18] sm:$0xf]
  %v7357 = vld [vmem:[%s7349 + $0x1c] sm:$0xf]
  %v7358 = vpack.c.bf16 %v7348, %v7348
  %7360 = vrot.lane.b32.xlu0 %v7358, 73
  %v7361 = vpop.permute.xlu0 %7360
  %v7370 = vunpack.c.l.b16 %v7350
  %v7371 = vunpack.c.l.b16 %v7351
  %v7372 = vunpack.c.l.b16 %v7352
  %v7373 = vunpack.c.l.b16 %v7353
  %v7374 = vunpack.c.l.b16 %v7354
  %v7375 = vunpack.c.l.b16 %v7355
  %v7376 = vunpack.c.l.b16 %v7356
  %v7377 = vunpack.c.l.b16 %v7357
  %v7378 = vpack.c.b16 %v7371, %v7370
  %v7379 = vpack.c.b16 %v7373, %v7372
  %v7380 = vpack.c.b16 %v7375, %v7374
  %v7381 = vpack.c.b16 %v7377, %v7376
  %v7387 = vsel %vm2648, %v7361, 0
  %7389 = vmatprep.subr.bf16.mxu0 0
  %7390 = vmatpush1.bf16.msra.mxu0 %v7378
  %7391 = vmatprep.subr.bf16.mxu0 0
  %7392 = vmatpush1.bf16.msra.mxu0 %v7379
  %7393 = vmatprep.subr.bf16.mxu0 0
  %7394 = vmatpush1.bf16.msra.mxu0 %v7380
  %7395 = vmatprep.subr.bf16.mxu0 0
  %7396 = vmatpush1.bf16.msra.mxu0 %v7381
  %7397 = vmatprep.subr.bf16.mxu0 0
  %7398 = vmatpush1.bf16.msra.mxu0 0
  %7399 = vmatprep.subr.bf16.mxu0 0
  %7400 = vmatpush1.bf16.msra.mxu0 0
  %7401 = vmatprep.subr.bf16.mxu0 0
  %7402 = vmatpush1.bf16.msra.mxu0 0
  %7403 = vmatprep.subr.bf16.mxu0 0
  %7404 = vmatpush1.bf16.msra.mxu0 0
  %7405 = vmatprep.subr.bf16.mxu0 0
  %7406 = vmatpush1.bf16.msra.mxu0 0
  %7407 = vmatprep.subr.bf16.mxu0 0
  %7408 = vmatpush1.bf16.msra.mxu0 0
  %7409 = vmatprep.subr.bf16.mxu0 0
  %7410 = vmatpush1.bf16.msra.mxu0 0
  %7411 = vmatprep.subr.bf16.mxu0 0
  %7412 = vmatpush1.bf16.msra.mxu0 0
  %7413 = vmatprep.subr.bf16.mxu0 0
  %7414 = vmatpush1.bf16.msra.mxu0 0
  %7415 = vmatprep.subr.bf16.mxu0 0
  %7416 = vmatpush1.bf16.msra.mxu0 0
  %7417 = vmatprep.subr.bf16.mxu0 0
  %7418 = vmatpush1.bf16.msra.mxu0 0
  %7419 = vmatprep.subr.bf16.mxu0 0
  %7420 = vmatpush1.bf16.msra.mxu0 0
  %7421 = vmatprep.mubr.bf16.mxu0 0
  %7422 = vmatmul.mubr.bf16.gmra.mrb[0].mxu0 %v7387
  %v7423 = vpop.f32.mrb[0].mxu0
  %v7424 = vadd.f32 0.0, %v7423
  %v7425 = vpop.f32.mrb[0].mxu0
  %v7426 = vpop.f32.mrb[0].mxu0
  %v7427 = vpop.f32.mrb[0].mxu0
  %7428 = vdwg.mxu0
  %v7429 = vadd.f32 %v7342, %v7424
  %7430 = vrot.lane.b32.xlu0 %v770, 119
  %v7431 = vpop.permute.xlu0 %7430
  %v7433 = vadd.f32 %v6997, %v7431
  %v7434 = vmax.f32 %v7433, 0.0
  %s7435 = scalar_lea.vmem %s37, 160
  %v7436 = vld [vmem:[%s7435] sm:$0xf]
  %v7437 = vld [vmem:[%s7435 + $0x4] sm:$0xf]
  %v7438 = vld [vmem:[%s7435 + $0x8] sm:$0xf]
  %v7439 = vld [vmem:[%s7435 + $0xc] sm:$0xf]
  %v7440 = vld [vmem:[%s7435 + $0x10] sm:$0xf]
  %v7441 = vld [vmem:[%s7435 + $0x14] sm:$0xf]
  %v7442 = vld [vmem:[%s7435 + $0x18] sm:$0xf]
  %v7443 = vld [vmem:[%s7435 + $0x1c] sm:$0xf]
  %v7444 = vpack.c.bf16 %v7434, %v7434
  %7446 = vrot.lane.b32.xlu0 %v7444, 73
  %v7447 = vpop.permute.xlu0 %7446
  %v7456 = vunpack.c.l.b16 %v7436
  %v7457 = vunpack.c.l.b16 %v7437
  %v7458 = vunpack.c.l.b16 %v7438
  %v7459 = vunpack.c.l.b16 %v7439
  %v7460 = vunpack.c.l.b16 %v7440
  %v7461 = vunpack.c.l.b16 %v7441
  %v7462 = vunpack.c.l.b16 %v7442
  %v7463 = vunpack.c.l.b16 %v7443
  %v7464 = vpack.c.b16 %v7457, %v7456
  %v7465 = vpack.c.b16 %v7459, %v7458
  %v7466 = vpack.c.b16 %v7461, %v7460
  %v7467 = vpack.c.b16 %v7463, %v7462
  %v7473 = vsel %vm2648, %v7447, 0
  %7475 = vmatprep.subr.bf16.mxu0 0
  %7476 = vmatpush1.bf16.msra.mxu0 %v7464
  %7477 = vmatprep.subr.bf16.mxu0 0
  %7478 = vmatpush1.bf16.msra.mxu0 %v7465
  %7479 = vmatprep.subr.bf16.mxu0 0
  %7480 = vmatpush1.bf16.msra.mxu0 %v7466
  %7481 = vmatprep.subr.bf16.mxu0 0
  %7482 = vmatpush1.bf16.msra.mxu0 %v7467
  %7483 = vmatprep.subr.bf16.mxu0 0
  %7484 = vmatpush1.bf16.msra.mxu0 0
  %7485 = vmatprep.subr.bf16.mxu0 0
  %7486 = vmatpush1.bf16.msra.mxu0 0
  %7487 = vmatprep.subr.bf16.mxu0 0
  %7488 = vmatpush1.bf16.msra.mxu0 0
  %7489 = vmatprep.subr.bf16.mxu0 0
  %7490 = vmatpush1.bf16.msra.mxu0 0
  %7491 = vmatprep.subr.bf16.mxu0 0
  %7492 = vmatpush1.bf16.msra.mxu0 0
  %7493 = vmatprep.subr.bf16.mxu0 0
  %7494 = vmatpush1.bf16.msra.mxu0 0
  %7495 = vmatprep.subr.bf16.mxu0 0
  %7496 = vmatpush1.bf16.msra.mxu0 0
  %7497 = vmatprep.subr.bf16.mxu0 0
  %7498 = vmatpush1.bf16.msra.mxu0 0
  %7499 = vmatprep.subr.bf16.mxu0 0
  %7500 = vmatpush1.bf16.msra.mxu0 0
  %7501 = vmatprep.subr.bf16.mxu0 0
  %7502 = vmatpush1.bf16.msra.mxu0 0
  %7503 = vmatprep.subr.bf16.mxu0 0
  %7504 = vmatpush1.bf16.msra.mxu0 0
  %7505 = vmatprep.subr.bf16.mxu0 0
  %7506 = vmatpush1.bf16.msra.mxu0 0
  %7507 = vmatprep.mubr.bf16.mxu0 0
  %7508 = vmatmul.mubr.bf16.gmra.mrb[0].mxu0 %v7473
  %v7509 = vpop.f32.mrb[0].mxu0
  %v7510 = vadd.f32 0.0, %v7509
  %v7511 = vpop.f32.mrb[0].mxu0
  %v7512 = vpop.f32.mrb[0].mxu0
  %v7513 = vpop.f32.mrb[0].mxu0
  %7514 = vdwg.mxu0
  %v7515 = vadd.f32 %v7429, %v7510
  %7517 = vrot.lane.b32.xlu0 %v771, 55
  %v7518 = vpop.permute.xlu0 %7517
  %v7520 = vadd.f32 %v6998, %v7518
  %v7521 = vmax.f32 %v7520, 0.0
  %s7522 = scalar_lea.vmem %s37, 192
  %v7523 = vld [vmem:[%s7522] sm:$0xf]
  %v7524 = vld [vmem:[%s7522 + $0x4] sm:$0xf]
  %v7525 = vld [vmem:[%s7522 + $0x8] sm:$0xf]
  %v7526 = vld [vmem:[%s7522 + $0xc] sm:$0xf]
  %v7527 = vld [vmem:[%s7522 + $0x10] sm:$0xf]
  %v7528 = vld [vmem:[%s7522 + $0x14] sm:$0xf]
  %v7529 = vld [vmem:[%s7522 + $0x18] sm:$0xf]
  %v7530 = vld [vmem:[%s7522 + $0x1c] sm:$0xf]
  %v7531 = vpack.c.bf16 %v7521, %v7521
  %7533 = vrot.lane.b32.xlu0 %v7531, 73
  %v7534 = vpop.permute.xlu0 %7533
  %v7543 = vunpack.c.l.b16 %v7523
  %v7544 = vunpack.c.l.b16 %v7524
  %v7545 = vunpack.c.l.b16 %v7525
  %v7546 = vunpack.c.l.b16 %v7526
  %v7547 = vunpack.c.l.b16 %v7527
  %v7548 = vunpack.c.l.b16 %v7528
  %v7549 = vunpack.c.l.b16 %v7529
  %v7550 = vunpack.c.l.b16 %v7530
  %v7551 = vpack.c.b16 %v7544, %v7543
  %v7552 = vpack.c.b16 %v7546, %v7545
  %v7553 = vpack.c.b16 %v7548, %v7547
  %v7554 = vpack.c.b16 %v7550, %v7549
  %v7560 = vsel %vm2648, %v7534, 0
  %7562 = vmatprep.subr.bf16.mxu0 0
  %7563 = vmatpush1.bf16.msra.mxu0 %v7551
  %7564 = vmatprep.subr.bf16.mxu0 0
  %7565 = vmatpush1.bf16.msra.mxu0 %v7552
  %7566 = vmatprep.subr.bf16.mxu0 0
  %7567 = vmatpush1.bf16.msra.mxu0 %v7553
  %7568 = vmatprep.subr.bf16.mxu0 0
  %7569 = vmatpush1.bf16.msra.mxu0 %v7554
  %7570 = vmatprep.subr.bf16.mxu0 0
  %7571 = vmatpush1.bf16.msra.mxu0 0
  %7572 = vmatprep.subr.bf16.mxu0 0
  %7573 = vmatpush1.bf16.msra.mxu0 0
  %7574 = vmatprep.subr.bf16.mxu0 0
  %7575 = vmatpush1.bf16.msra.mxu0 0
  %7576 = vmatprep.subr.bf16.mxu0 0
  %7577 = vmatpush1.bf16.msra.mxu0 0
  %7578 = vmatprep.subr.bf16.mxu0 0
  %7579 = vmatpush1.bf16.msra.mxu0 0
  %7580 = vmatprep.subr.bf16.mxu0 0
  %7581 = vmatpush1.bf16.msra.mxu0 0
  %7582 = vmatprep.subr.bf16.mxu0 0
  %7583 = vmatpush1.bf16.msra.mxu0 0
  %7584 = vmatprep.subr.bf16.mxu0 0
  %7585 = vmatpush1.bf16.msra.mxu0 0
  %7586 = vmatprep.subr.bf16.mxu0 0
  %7587 = vmatpush1.bf16.msra.mxu0 0
  %7588 = vmatprep.subr.bf16.mxu0 0
  %7589 = vmatpush1.bf16.msra.mxu0 0
  %7590 = vmatprep.subr.bf16.mxu0 0
  %7591 = vmatpush1.bf16.msra.mxu0 0
  %7592 = vmatprep.subr.bf16.mxu0 0
  %7593 = vmatpush1.bf16.msra.mxu0 0
  %7594 = vmatprep.mubr.bf16.mxu0 0
  %7595 = vmatmul.mubr.bf16.gmra.mrb[0].mxu0 %v7560
  %v7596 = vpop.f32.mrb[0].mxu0
  %v7597 = vadd.f32 0.0, %v7596
  %v7598 = vpop.f32.mrb[0].mxu0
  %v7599 = vpop.f32.mrb[0].mxu0
  %v7600 = vpop.f32.mrb[0].mxu0
  %7601 = vdwg.mxu0
  %v7602 = vadd.f32 %v7515, %v7597
  %7603 = vrot.lane.b32.xlu0 %v771, 119
  %v7604 = vpop.permute.xlu0 %7603
  %v7606 = vadd.f32 %v6999, %v7604
  %v7607 = vmax.f32 %v7606, 0.0
  %s7608 = scalar_lea.vmem %s37, 224
  %v7609 = vld [vmem:[%s7608] sm:$0xf]
  %v7610 = vld [vmem:[%s7608 + $0x4] sm:$0xf]
  %v7611 = vld [vmem:[%s7608 + $0x8] sm:$0xf]
  %v7612 = vld [vmem:[%s7608 + $0xc] sm:$0xf]
  %v7613 = vld [vmem:[%s7608 + $0x10] sm:$0xf]
  %v7614 = vld [vmem:[%s7608 + $0x14] sm:$0xf]
  %v7615 = vld [vmem:[%s7608 + $0x18] sm:$0xf]
  %v7616 = vld [vmem:[%s7608 + $0x1c] sm:$0xf]
  %v7617 = vpack.c.bf16 %v7607, %v7607
  %7619 = vrot.lane.b32.xlu0 %v7617, 73
  %v7620 = vpop.permute.xlu0 %7619
  %v7629 = vunpack.c.l.b16 %v7609
  %v7630 = vunpack.c.l.b16 %v7610
  %v7631 = vunpack.c.l.b16 %v7611
  %v7632 = vunpack.c.l.b16 %v7612
  %v7633 = vunpack.c.l.b16 %v7613
  %v7634 = vunpack.c.l.b16 %v7614
  %v7635 = vunpack.c.l.b16 %v7615
  %v7636 = vunpack.c.l.b16 %v7616
  %v7637 = vpack.c.b16 %v7630, %v7629
  %v7638 = vpack.c.b16 %v7632, %v7631
  %v7639 = vpack.c.b16 %v7634, %v7633
  %v7640 = vpack.c.b16 %v7636, %v7635
  %v7646 = vsel %vm2648, %v7620, 0
  %7648 = vmatprep.subr.bf16.mxu0 0
  %7649 = vmatpush1.bf16.msra.mxu0 %v7637
  %7650 = vmatprep.subr.bf16.mxu0 0
  %7651 = vmatpush1.bf16.msra.mxu0 %v7638
  %7652 = vmatprep.subr.bf16.mxu0 0
  %7653 = vmatpush1.bf16.msra.mxu0 %v7639
  %7654 = vmatprep.subr.bf16.mxu0 0
  %7655 = vmatpush1.bf16.msra.mxu0 %v7640
  %7656 = vmatprep.subr.bf16.mxu0 0
  %7657 = vmatpush1.bf16.msra.mxu0 0
  %7658 = vmatprep.subr.bf16.mxu0 0
  %7659 = vmatpush1.bf16.msra.mxu0 0
  %7660 = vmatprep.subr.bf16.mxu0 0
  %7661 = vmatpush1.bf16.msra.mxu0 0
  %7662 = vmatprep.subr.bf16.mxu0 0
  %7663 = vmatpush1.bf16.msra.mxu0 0
  %7664 = vmatprep.subr.bf16.mxu0 0
  %7665 = vmatpush1.bf16.msra.mxu0 0
  %7666 = vmatprep.subr.bf16.mxu0 0
  %7667 = vmatpush1.bf16.msra.mxu0 0
  %7668 = vmatprep.subr.bf16.mxu0 0
  %7669 = vmatpush1.bf16.msra.mxu0 0
  %7670 = vmatprep.subr.bf16.mxu0 0
  %7671 = vmatpush1.bf16.msra.mxu0 0
  %7672 = vmatprep.subr.bf16.mxu0 0
  %7673 = vmatpush1.bf16.msra.mxu0 0
  %7674 = vmatprep.subr.bf16.mxu0 0
  %7675 = vmatpush1.bf16.msra.mxu0 0
  %7676 = vmatprep.subr.bf16.mxu0 0
  %7677 = vmatpush1.bf16.msra.mxu0 0
  %7678 = vmatprep.subr.bf16.mxu0 0
  %7679 = vmatpush1.bf16.msra.mxu0 0
  %7680 = vmatprep.mubr.bf16.mxu0 0
  %7681 = vmatmul.mubr.bf16.gmra.mrb[0].mxu0 %v7646
  %v7682 = vpop.f32.mrb[0].mxu0
  %v7683 = vadd.f32 0.0, %v7682
  %v7684 = vpop.f32.mrb[0].mxu0
  %v7685 = vpop.f32.mrb[0].mxu0
  %v7686 = vpop.f32.mrb[0].mxu0
  %7687 = vdwg.mxu0
  %v7688 = vadd.f32 %v7602, %v7683
  %v7689 = vld [vmem:[%s39] sm:$0xff]
  %7691 = vset.pattern.permute.xlu0 0
  %7692 = vperm.xlu0 %7691, %v7689
  %v7693 = vpop.permute.xlu0 %7692
  %v7695 = vmul.f32 %v7693, %v7688
  %s7696 = scalar_lea.vmem %s39, 8
  %v7697 = vld [vmem:[%s7696] sm:$0xff]
  %7699 = vset.pattern.permute.xlu0 0
  %7700 = vperm.xlu0 %7699, %v7697
  %v7701 = vpop.permute.xlu0 %7700
  %v7703 = vmul.f32 %v7701, %v7688
  %7705 = vrot.lane.b32.xlu0 %v7703, 96
  %v7706 = vpop.permute.xlu0 %7705
  %v7708 = vadd.f32 %v7695, %v7706
  %s7709 = scalar_lea.vmem %s39, 16
  %v7710 = vld [vmem:[%s7709] sm:$0xff]
  %7712 = vset.pattern.permute.xlu0 0
  %7713 = vperm.xlu0 %7712, %v7710
  %v7714 = vpop.permute.xlu0 %7713
  %v7716 = vmul.f32 %v7714, %v7688
  %7718 = vrot.lane.b32.xlu0 %v7716, 64
  %v7719 = vpop.permute.xlu0 %7718
  %v7721 = vadd.f32 %v7708, %v7719
  %s7722 = scalar_lea.vmem %s39, 24
  %v7723 = vld [vmem:[%s7722] sm:$0xff]
  %7725 = vset.pattern.permute.xlu0 0
  %7726 = vperm.xlu0 %7725, %v7723
  %v7727 = vpop.permute.xlu0 %7726
  %v7729 = vmul.f32 %v7727, %v7688
  %7731 = vrot.lane.b32.xlu0 %v7729, 32
  %v7732 = vpop.permute.xlu0 %7731
  %v7734 = vadd.f32 %v7721, %v7732
  %v7735 = vld [vmem:[%s43] sm:$0xff]
  %v7736 = vld [vmem:[%s43 + $0x8] sm:$0x3]
  %v7737 = vld [vmem:[%s41] sm:$0xff]
  %v7738 = vld [vmem:[%s41 + $0x8] sm:$0x3]
  %v7739 = vpack.c.bf16 %v7738, %v7737
  %v7740 = vpack.c.bf16 %v7734, %v7734
  %v7742 = vsel %vm214, %v7739, 0
  %v7745 = vsel %vm218, %v7740, 0
  %7747 = vmatprep.subr.bf16.mxu0 0
  %7748 = vmatpush1.bf16.msra.mxu0 %v7745
  %7749 = vmatprep.subr.bf16.mxu0 0
  %7750 = vmatpush1.bf16.msra.mxu0 0
  %7751 = vmatprep.subr.bf16.mxu0 0
  %7752 = vmatpush1.bf16.msra.mxu0 0
  %7753 = vmatprep.subr.bf16.mxu0 0
  %7754 = vmatpush1.bf16.msra.mxu0 0
  %7755 = vmatprep.subr.bf16.mxu0 0
  %7756 = vmatpush1.bf16.msra.mxu0 0
  %7757 = vmatprep.subr.bf16.mxu0 0
  %7758 = vmatpush1.bf16.msra.mxu0 0
  %7759 = vmatprep.subr.bf16.mxu0 0
  %7760 = vmatpush1.bf16.msra.mxu0 0
  %7761 = vmatprep.subr.bf16.mxu0 0
  %7762 = vmatpush1.bf16.msra.mxu0 0
  %7763 = vmatprep.subr.bf16.mxu0 0
  %7764 = vmatpush1.bf16.msra.mxu0 0
  %7765 = vmatprep.subr.bf16.mxu0 0
  %7766 = vmatpush1.bf16.msra.mxu0 0
  %7767 = vmatprep.subr.bf16.mxu0 0
  %7768 = vmatpush1.bf16.msra.mxu0 0
  %7769 = vmatprep.subr.bf16.mxu0 0
  %7770 = vmatpush1.bf16.msra.mxu0 0
  %7771 = vmatprep.subr.bf16.mxu0 0
  %7772 = vmatpush1.bf16.msra.mxu0 0
  %7773 = vmatprep.subr.bf16.mxu0 0
  %7774 = vmatpush1.bf16.msra.mxu0 0
  %7775 = vmatprep.subr.bf16.mxu0 0
  %7776 = vmatpush1.bf16.msra.mxu0 0
  %7777 = vmatprep.subr.bf16.mxu0 0
  %7778 = vmatpush1.bf16.msra.mxu0 0
  %7779 = vmatprep.mubr.bf16.mxu0 0
  %7780 = vmatmul.mubr.bf16.gmra.mrb[0].mxu0 %v7742
  %v7781 = vpop.f32.mrb[0].mxu0
  %v7782 = vadd.f32 0.0, %v7781
  %v7783 = vpop.f32.mrb[0].mxu0
  %v7784 = vpop.f32.mrb[0].mxu0
  %v7785 = vadd.f32 0.0, %v7784
  %v7786 = vpop.f32.mrb[0].mxu0
  %7787 = vdwg.mxu0
  %v7788 = vadd.f32 %v7735, %v7782
  %v7789 = vadd.f32 %v7736, %v7785
  %v7790 = vld [vmem:[%s45] sm:$0xff]
  %v7791 = vld [vmem:[%s45 + $0x8] sm:$0x3]
  %v7792 = vld [vmem:[%s47] sm:$0xf]
  %v7793 = vld [vmem:[%s47 + $0x4] sm:$0xf]
  %v7794 = vld [vmem:[%s47 + $0x8] sm:$0xf]
  %v7795 = vld [vmem:[%s47 + $0xc] sm:$0xf]
  %v7796 = vpack.c.bf16 %v7789, %v7788
  %v7797 = vld [vmem:[%s49] sm:$0x1]
  %v7799 = vlaneseq
  %v7800 = vshrl.u32 %v7799, 7
  %v7801 = vsub.s32 0, %v7800
  %v7802 = vrot.slane %v7797, %v7801
  %v7808 = vunpack.c.l.b16 %v7792
  %v7809 = vunpack.c.l.b16 %v7793
  %v7810 = vunpack.c.l.b16 %v7794
  %v7811 = vunpack.c.l.b16 %v7795
  %v7812 = vpack.c.b16 %v7809, %v7808
  %v7813 = vpack.c.b16 %v7811, %v7810
  %vm7816 = vcmask 261120
  %v7818 = vsel %vm7816, %v7796, 0
  %7820 = vmatprep.subr.bf16.mxu0 0
  %7821 = vmatpush1.bf16.msra.mxu0 %v7812
  %7822 = vmatprep.subr.bf16.mxu0 0
  %7823 = vmatpush1.bf16.msra.mxu0 %v7813
  %7824 = vmatprep.subr.bf16.mxu0 0
  %7825 = vmatpush1.bf16.msra.mxu0 0
  %7826 = vmatprep.subr.bf16.mxu0 0
  %7827 = vmatpush1.bf16.msra.mxu0 0
  %7828 = vmatprep.subr.bf16.mxu0 0
  %7829 = vmatpush1.bf16.msra.mxu0 0
  %7830 = vmatprep.subr.bf16.mxu0 0
  %7831 = vmatpush1.bf16.msra.mxu0 0
  %7832 = vmatprep.subr.bf16.mxu0 0
  %7833 = vmatpush1.bf16.msra.mxu0 0
  %7834 = vmatprep.subr.bf16.mxu0 0
  %7835 = vmatpush1.bf16.msra.mxu0 0
  %7836 = vmatprep.subr.bf16.mxu0 0
  %7837 = vmatpush1.bf16.msra.mxu0 0
  %7838 = vmatprep.subr.bf16.mxu0 0
  %7839 = vmatpush1.bf16.msra.mxu0 0
  %7840 = vmatprep.subr.bf16.mxu0 0
  %7841 = vmatpush1.bf16.msra.mxu0 0
  %7842 = vmatprep.subr.bf16.mxu0 0
  %7843 = vmatpush1.bf16.msra.mxu0 0
  %7844 = vmatprep.subr.bf16.mxu0 0
  %7845 = vmatpush1.bf16.msra.mxu0 0
  %7846 = vmatprep.subr.bf16.mxu0 0
  %7847 = vmatpush1.bf16.msra.mxu0 0
  %7848 = vmatprep.subr.bf16.mxu0 0
  %7849 = vmatpush1.bf16.msra.mxu0 0
  %7850 = vmatprep.subr.bf16.mxu0 0
  %7851 = vmatpush1.bf16.msra.mxu0 0
  %7852 = vmatprep.mubr.bf16.mxu0 0
  %7853 = vmatmul.mubr.bf16.gmra.mrb[0].mxu0 %v7818
  %v7854 = vpop.f32.mrb[0].mxu0
  %v7855 = vadd.f32 %v7802, %v7854
  %v7856 = vpop.f32.mrb[0].mxu0
  %v7857 = vpop.f32.mrb[0].mxu0
  %v7858 = vadd.f32 %v7802, %v7857
  %v7859 = vpop.f32.mrb[0].mxu0
  %7860 = vdwg.mxu0
  %v7861 = vpack.c.bf16 %v7858, %v7855
  %7863 = vrot.lane.b32.xlu0 %v7861, 96
  %v7864 = vpop.permute.xlu0 %7863
  %v7866 = vsel %vm214, %v7861, 0
  %v7869 = vsel %vm214, %v7864, 0
  %7871 = vmatprep.subr.bf16.mxu0 0
  %7872 = vmatpush1.bf16.xpose.msra.mxu0 %v7869
  %7873 = vmatprep.subr.bf16.mxu0 0
  %7874 = vmatpush1.bf16.xpose.msra.mxu0 0
  %7875 = vmatprep.subr.bf16.mxu0 0
  %7876 = vmatpush1.bf16.xpose.msra.mxu0 0
  %7877 = vmatprep.subr.bf16.mxu0 0
  %7878 = vmatpush1.bf16.xpose.msra.mxu0 0
  %7879 = vmatprep.subr.bf16.mxu0 0
  %7880 = vmatpush1.bf16.xpose.msra.mxu0 0
  %7881 = vmatprep.subr.bf16.mxu0 0
  %7882 = vmatpush1.bf16.xpose.msra.mxu0 0
  %7883 = vmatprep.subr.bf16.mxu0 0
  %7884 = vmatpush1.bf16.xpose.msra.mxu0 0
  %7885 = vmatprep.subr.bf16.mxu0 0
  %7886 = vmatpush1.bf16.xpose.msra.mxu0 0
  %7887 = vmatprep.subr.bf16.mxu0 0
  %7888 = vmatpush1.bf16.xpose.msra.mxu0 0
  %7889 = vmatprep.subr.bf16.mxu0 0
  %7890 = vmatpush1.bf16.xpose.msra.mxu0 0
  %7891 = vmatprep.subr.bf16.mxu0 0
  %7892 = vmatpush1.bf16.xpose.msra.mxu0 0
  %7893 = vmatprep.subr.bf16.mxu0 0
  %7894 = vmatpush1.bf16.xpose.msra.mxu0 0
  %7895 = vmatprep.subr.bf16.mxu0 0
  %7896 = vmatpush1.bf16.xpose.msra.mxu0 0
  %7897 = vmatprep.subr.bf16.mxu0 0
  %7898 = vmatpush1.bf16.xpose.msra.mxu0 0
  %7899 = vmatprep.subr.bf16.mxu0 0
  %7900 = vmatpush1.bf16.xpose.msra.mxu0 0
  %7901 = vmatprep.subr.bf16.mxu0 0
  %7902 = vmatpush1.bf16.xpose.msra.mxu0 0
  %7903 = vmatprep.mubr.bf16.mxu0 0
  %7904 = vmatmul.mubr.bf16.gmra.mrb[0].mxu0 %v7866
  %v7905 = vpop.f32.mrb[0].mxu0
  %v7906 = vadd.f32 0.0, %v7905
  %v7907 = vpop.f32.mrb[0].mxu0
  %v7908 = vpop.f32.mrb[0].mxu0
  %v7909 = vadd.f32 0.0, %v7908
  %v7910 = vpop.f32.mrb[0].mxu0
  %7911 = vdwg.mxu0
  %v7912 = vmul.f32 %v7906, 0.35355338
  %v7913 = vmul.f32 %v7909, 0.35355338
  %v7914 = vadd.f32 %v7912, %v7790
  %v7915 = vadd.f32 %v7913, %v7791
  %vm7916 = vcmask 80896
  %v7917 = vsel %vm7916, %v7914, -inf
  %7918 = vmax.xlane.f32.xlu0 %v7917
  %v7919 = vpop.xlane.xlu0 %7918
  %vm7920 = vcmask 74752
  %v7921 = vsel %vm7920, %v7915, -inf
  %7922 = vmax.xlane.f32.xlu0 %v7921
  %v7923 = vpop.xlane.xlu0 %7922
  %v7924 = vsub.f32 %v7914, %v7919
  %v7925 = vsub.f32 %v7915, %v7923
  %v7926 = vmul.f32 %v7924, 1.442695
  %v7927 = vpow.pop %v7926
  %v7928 = vmul.f32 %v7925, 1.442695
  %v7929 = vpow.pop %v7928
  %v7930 = vsel %vm7916, %v7927, 0.0
  %7931 = vadd.xlane.f32.xlu0 %v7930
  %v7932 = vpop.xlane.xlu0 %7931
  %v7933 = vsel %vm7920, %v7929, 0.0
  %7934 = vadd.xlane.f32.xlu0 %v7933
  %v7935 = vpop.xlane.xlu0 %7934
  %v7936 = vrcp.pop %v7932
  %v7937 = vmul.f32 %v7927, %v7936
  %v7938 = vrcp.pop %v7935
  %v7939 = vmul.f32 %v7929, %v7938
  %v7940 = vpack.c.bf16 %v7939, %v7937
  %7941 = vrot.lane.b32.xlu0 %v7861, 64
  %v7942 = vpop.permute.xlu0 %7941
  %v7944 = vsel %vm7916, %v7940, 0
  %vm7946 = vcmask 1044480
  %v7948 = vsel %vm7946, %v7942, 0
  %7950 = vmatprep.subr.bf16.mxu0 0
  %7951 = vmatpush1.bf16.msra.mxu0 %v7948
  %7952 = vmatprep.subr.bf16.mxu0 0
  %7953 = vmatpush1.bf16.msra.mxu0 0
  %7954 = vmatprep.subr.bf16.mxu0 0
  %7955 = vmatpush1.bf16.msra.mxu0 0
  %7956 = vmatprep.subr.bf16.mxu0 0
  %7957 = vmatpush1.bf16.msra.mxu0 0
  %7958 = vmatprep.subr.bf16.mxu0 0
  %7959 = vmatpush1.bf16.msra.mxu0 0
  %7960 = vmatprep.subr.bf16.mxu0 0
  %7961 = vmatpush1.bf16.msra.mxu0 0
  %7962 = vmatprep.subr.bf16.mxu0 0
  %7963 = vmatpush1.bf16.msra.mxu0 0
  %7964 = vmatprep.subr.bf16.mxu0 0
  %7965 = vmatpush1.bf16.msra.mxu0 0
  %7966 = vmatprep.subr.bf16.mxu0 0
  %7967 = vmatpush1.bf16.msra.mxu0 0
  %7968 = vmatprep.subr.bf16.mxu0 0
  %7969 = vmatpush1.bf16.msra.mxu0 0
  %7970 = vmatprep.subr.bf16.mxu0 0
  %7971 = vmatpush1.bf16.msra.mxu0 0
  %7972 = vmatprep.subr.bf16.mxu0 0
  %7973 = vmatpush1.bf16.msra.mxu0 0
  %7974 = vmatprep.subr.bf16.mxu0 0
  %7975 = vmatpush1.bf16.msra.mxu0 0
  %7976 = vmatprep.subr.bf16.mxu0 0
  %7977 = vmatpush1.bf16.msra.mxu0 0
  %7978 = vmatprep.subr.bf16.mxu0 0
  %7979 = vmatpush1.bf16.msra.mxu0 0
  %7980 = vmatprep.subr.bf16.mxu0 0
  %7981 = vmatpush1.bf16.msra.mxu0 0
  %7982 = vmatprep.mubr.bf16.mxu0 0
  %7983 = vmatmul.mubr.bf16.gmra.mrb[0].mxu0 %v7944
  %v7984 = vpop.f32.mrb[0].mxu0
  %v7985 = vadd.f32 0.0, %v7984
  %v7986 = vpop.f32.mrb[0].mxu0
  %v7987 = vpop.f32.mrb[0].mxu0
  %v7988 = vadd.f32 0.0, %v7987
  %v7989 = vpop.f32.mrb[0].mxu0
  %7990 = vdwg.mxu0
  %7991 = vrot.lane.b32.xlu0 %v7861, 120
  %v7992 = vpop.permute.xlu0 %7991
  %7993 = vrot.lane.b32.xlu0 %v7861, 88
  %v7994 = vpop.permute.xlu0 %7993
  %v7996 = vsel %vm214, %v7992, 0
  %v7999 = vsel %vm214, %v7994, 0
  %8001 = vmatprep.subr.bf16.mxu0 0
  %8002 = vmatpush1.bf16.xpose.msra.mxu0 %v7999
  %8003 = vmatprep.subr.bf16.mxu0 0
  %8004 = vmatpush1.bf16.xpose.msra.mxu0 0
  %8005 = vmatprep.subr.bf16.mxu0 0
  %8006 = vmatpush1.bf16.xpose.msra.mxu0 0
  %8007 = vmatprep.subr.bf16.mxu0 0
  %8008 = vmatpush1.bf16.xpose.msra.mxu0 0
  %8009 = vmatprep.subr.bf16.mxu0 0
  %8010 = vmatpush1.bf16.xpose.msra.mxu0 0
  %8011 = vmatprep.subr.bf16.mxu0 0
  %8012 = vmatpush1.bf16.xpose.msra.mxu0 0
  %8013 = vmatprep.subr.bf16.mxu0 0
  %8014 = vmatpush1.bf16.xpose.msra.mxu0 0
  %8015 = vmatprep.subr.bf16.mxu0 0
  %8016 = vmatpush1.bf16.xpose.msra.mxu0 0
  %8017 = vmatprep.subr.bf16.mxu0 0
  %8018 = vmatpush1.bf16.xpose.msra.mxu0 0
  %8019 = vmatprep.subr.bf16.mxu0 0
  %8020 = vmatpush1.bf16.xpose.msra.mxu0 0
  %8021 = vmatprep.subr.bf16.mxu0 0
  %8022 = vmatpush1.bf16.xpose.msra.mxu0 0
  %8023 = vmatprep.subr.bf16.mxu0 0
  %8024 = vmatpush1.bf16.xpose.msra.mxu0 0
  %8025 = vmatprep.subr.bf16.mxu0 0
  %8026 = vmatpush1.bf16.xpose.msra.mxu0 0
  %8027 = vmatprep.subr.bf16.mxu0 0
  %8028 = vmatpush1.bf16.xpose.msra.mxu0 0
  %8029 = vmatprep.subr.bf16.mxu0 0
  %8030 = vmatpush1.bf16.xpose.msra.mxu0 0
  %8031 = vmatprep.subr.bf16.mxu0 0
  %8032 = vmatpush1.bf16.xpose.msra.mxu0 0
  %8033 = vmatprep.mubr.bf16.mxu0 0
  %8034 = vmatmul.mubr.bf16.gmra.mrb[0].mxu0 %v7996
  %v8035 = vpop.f32.mrb[0].mxu0
  %v8036 = vadd.f32 0.0, %v8035
  %v8037 = vpop.f32.mrb[0].mxu0
  %v8038 = vpop.f32.mrb[0].mxu0
  %v8039 = vadd.f32 0.0, %v8038
  %v8040 = vpop.f32.mrb[0].mxu0
  %8041 = vdwg.mxu0
  %v8042 = vmul.f32 %v8036, 0.35355338
  %v8043 = vmul.f32 %v8039, 0.35355338
  %v8044 = vadd.f32 %v8042, %v7790
  %v8045 = vadd.f32 %v8043, %v7791
  %v8046 = vsel %vm7916, %v8044, -inf
  %8047 = vmax.xlane.f32.xlu0 %v8046
  %v8048 = vpop.xlane.xlu0 %8047
  %v8049 = vsel %vm7920, %v8045, -inf
  %8050 = vmax.xlane.f32.xlu0 %v8049
  %v8051 = vpop.xlane.xlu0 %8050
  %v8052 = vsub.f32 %v8044, %v8048
  %v8053 = vsub.f32 %v8045, %v8051
  %v8054 = vmul.f32 %v8052, 1.442695
  %v8055 = vpow.pop %v8054
  %v8056 = vmul.f32 %v8053, 1.442695
  %v8057 = vpow.pop %v8056
  %v8058 = vsel %vm7916, %v8055, 0.0
  %8059 = vadd.xlane.f32.xlu0 %v8058
  %v8060 = vpop.xlane.xlu0 %8059
  %v8061 = vsel %vm7920, %v8057, 0.0
  %8062 = vadd.xlane.f32.xlu0 %v8061
  %v8063 = vpop.xlane.xlu0 %8062
  %v8064 = vrcp.pop %v8060
  %v8065 = vmul.f32 %v8055, %v8064
  %v8066 = vrcp.pop %v8063
  %v8067 = vmul.f32 %v8057, %v8066
  %v8068 = vpack.c.bf16 %v8067, %v8065
  %8069 = vrot.lane.b32.xlu0 %v7861, 56
  %v8070 = vpop.permute.xlu0 %8069
  %v8072 = vsel %vm7916, %v8068, 0
  %v8075 = vsel %vm7946, %v8070, 0
  %8077 = vmatprep.subr.bf16.mxu0 0
  %8078 = vmatpush1.bf16.msra.mxu0 %v8075
  %8079 = vmatprep.subr.bf16.mxu0 0
  %8080 = vmatpush1.bf16.msra.mxu0 0
  %8081 = vmatprep.subr.bf16.mxu0 0
  %8082 = vmatpush1.bf16.msra.mxu0 0
  %8083 = vmatprep.subr.bf16.mxu0 0
  %8084 = vmatpush1.bf16.msra.mxu0 0
  %8085 = vmatprep.subr.bf16.mxu0 0
  %8086 = vmatpush1.bf16.msra.mxu0 0
  %8087 = vmatprep.subr.bf16.mxu0 0
  %8088 = vmatpush1.bf16.msra.mxu0 0
  %8089 = vmatprep.subr.bf16.mxu0 0
  %8090 = vmatpush1.bf16.msra.mxu0 0
  %8091 = vmatprep.subr.bf16.mxu0 0
  %8092 = vmatpush1.bf16.msra.mxu0 0
  %8093 = vmatprep.subr.bf16.mxu0 0
  %8094 = vmatpush1.bf16.msra.mxu0 0
  %8095 = vmatprep.subr.bf16.mxu0 0
  %8096 = vmatpush1.bf16.msra.mxu0 0
  %8097 = vmatprep.subr.bf16.mxu0 0
  %8098 = vmatpush1.bf16.msra.mxu0 0
  %8099 = vmatprep.subr.bf16.mxu0 0
  %8100 = vmatpush1.bf16.msra.mxu0 0
  %8101 = vmatprep.subr.bf16.mxu0 0
  %8102 = vmatpush1.bf16.msra.mxu0 0
  %8103 = vmatprep.subr.bf16.mxu0 0
  %8104 = vmatpush1.bf16.msra.mxu0 0
  %8105 = vmatprep.subr.bf16.mxu0 0
  %8106 = vmatpush1.bf16.msra.mxu0 0
  %8107 = vmatprep.subr.bf16.mxu0 0
  %8108 = vmatpush1.bf16.msra.mxu0 0
  %8109 = vmatprep.mubr.bf16.mxu0 0
  %8110 = vmatmul.mubr.bf16.gmra.mrb[0].mxu0 %v8072
  %v8111 = vpop.f32.mrb[0].mxu0
  %v8112 = vadd.f32 0.0, %v8111
  %v8113 = vpop.f32.mrb[0].mxu0
  %v8114 = vpop.f32.mrb[0].mxu0
  %v8115 = vadd.f32 0.0, %v8114
  %v8116 = vpop.f32.mrb[0].mxu0
  %8117 = vdwg.mxu0
  %8118 = vrot.lane.b32.xlu0 %v7861, 112
  %v8119 = vpop.permute.xlu0 %8118
  %8120 = vrot.lane.b32.xlu0 %v7861, 80
  %v8121 = vpop.permute.xlu0 %8120
  %v8123 = vsel %vm214, %v8119, 0
  %v8126 = vsel %vm214, %v8121, 0
  %8128 = vmatprep.subr.bf16.mxu0 0
  %8129 = vmatpush1.bf16.xpose.msra.mxu0 %v8126
  %8130 = vmatprep.subr.bf16.mxu0 0
  %8131 = vmatpush1.bf16.xpose.msra.mxu0 0
  %8132 = vmatprep.subr.bf16.mxu0 0
  %8133 = vmatpush1.bf16.xpose.msra.mxu0 0
  %8134 = vmatprep.subr.bf16.mxu0 0
  %8135 = vmatpush1.bf16.xpose.msra.mxu0 0
  %8136 = vmatprep.subr.bf16.mxu0 0
  %8137 = vmatpush1.bf16.xpose.msra.mxu0 0
  %8138 = vmatprep.subr.bf16.mxu0 0
  %8139 = vmatpush1.bf16.xpose.msra.mxu0 0
  %8140 = vmatprep.subr.bf16.mxu0 0
  %8141 = vmatpush1.bf16.xpose.msra.mxu0 0
  %8142 = vmatprep.subr.bf16.mxu0 0
  %8143 = vmatpush1.bf16.xpose.msra.mxu0 0
  %8144 = vmatprep.subr.bf16.mxu0 0
  %8145 = vmatpush1.bf16.xpose.msra.mxu0 0
  %8146 = vmatprep.subr.bf16.mxu0 0
  %8147 = vmatpush1.bf16.xpose.msra.mxu0 0
  %8148 = vmatprep.subr.bf16.mxu0 0
  %8149 = vmatpush1.bf16.xpose.msra.mxu0 0
  %8150 = vmatprep.subr.bf16.mxu0 0
  %8151 = vmatpush1.bf16.xpose.msra.mxu0 0
  %8152 = vmatprep.subr.bf16.mxu0 0
  %8153 = vmatpush1.bf16.xpose.msra.mxu0 0
  %8154 = vmatprep.subr.bf16.mxu0 0
  %8155 = vmatpush1.bf16.xpose.msra.mxu0 0
  %8156 = vmatprep.subr.bf16.mxu0 0
  %8157 = vmatpush1.bf16.xpose.msra.mxu0 0
  %8158 = vmatprep.subr.bf16.mxu0 0
  %8159 = vmatpush1.bf16.xpose.msra.mxu0 0
  %8160 = vmatprep.mubr.bf16.mxu0 0
  %8161 = vmatmul.mubr.bf16.gmra.mrb[0].mxu0 %v8123
  %v8162 = vpop.f32.mrb[0].mxu0
  %v8163 = vadd.f32 0.0, %v8162
  %v8164 = vpop.f32.mrb[0].mxu0
  %v8165 = vpop.f32.mrb[0].mxu0
  %v8166 = vadd.f32 0.0, %v8165
  %v8167 = vpop.f32.mrb[0].mxu0
  %8168 = vdwg.mxu0
  %v8169 = vmul.f32 %v8163, 0.35355338
  %v8170 = vmul.f32 %v8166, 0.35355338
  %v8171 = vadd.f32 %v8169, %v7790
  %v8172 = vadd.f32 %v8170, %v7791
  %v8173 = vsel %vm7916, %v8171, -inf
  %8174 = vmax.xlane.f32.xlu0 %v8173
  %v8175 = vpop.xlane.xlu0 %8174
  %v8176 = vsel %vm7920, %v8172, -inf
  %8177 = vmax.xlane.f32.xlu0 %v8176
  %v8178 = vpop.xlane.xlu0 %8177
  %v8179 = vsub.f32 %v8171, %v8175
  %v8180 = vsub.f32 %v8172, %v8178
  %v8181 = vmul.f32 %v8179, 1.442695
  %v8182 = vpow.pop %v8181
  %v8183 = vmul.f32 %v8180, 1.442695
  %v8184 = vpow.pop %v8183
  %v8185 = vsel %vm7916, %v8182, 0.0
  %8186 = vadd.xlane.f32.xlu0 %v8185
  %v8187 = vpop.xlane.xlu0 %8186
  %v8188 = vsel %vm7920, %v8184, 0.0
  %8189 = vadd.xlane.f32.xlu0 %v8188
  %v8190 = vpop.xlane.xlu0 %8189
  %v8191 = vrcp.pop %v8187
  %v8192 = vmul.f32 %v8182, %v8191
  %v8193 = vrcp.pop %v8190
  %v8194 = vmul.f32 %v8184, %v8193
  %v8195 = vpack.c.bf16 %v8194, %v8192
  %8196 = vrot.lane.b32.xlu0 %v7861, 48
  %v8197 = vpop.permute.xlu0 %8196
  %v8199 = vsel %vm7916, %v8195, 0
  %v8202 = vsel %vm7946, %v8197, 0
  %8204 = vmatprep.subr.bf16.mxu0 0
  %8205 = vmatpush1.bf16.msra.mxu0 %v8202
  %8206 = vmatprep.subr.bf16.mxu0 0
  %8207 = vmatpush1.bf16.msra.mxu0 0
  %8208 = vmatprep.subr.bf16.mxu0 0
  %8209 = vmatpush1.bf16.msra.mxu0 0
  %8210 = vmatprep.subr.bf16.mxu0 0
  %8211 = vmatpush1.bf16.msra.mxu0 0
  %8212 = vmatprep.subr.bf16.mxu0 0
  %8213 = vmatpush1.bf16.msra.mxu0 0
  %8214 = vmatprep.subr.bf16.mxu0 0
  %8215 = vmatpush1.bf16.msra.mxu0 0
  %8216 = vmatprep.subr.bf16.mxu0 0
  %8217 = vmatpush1.bf16.msra.mxu0 0
  %8218 = vmatprep.subr.bf16.mxu0 0
  %8219 = vmatpush1.bf16.msra.mxu0 0
  %8220 = vmatprep.subr.bf16.mxu0 0
  %8221 = vmatpush1.bf16.msra.mxu0 0
  %8222 = vmatprep.subr.bf16.mxu0 0
  %8223 = vmatpush1.bf16.msra.mxu0 0
  %8224 = vmatprep.subr.bf16.mxu0 0
  %8225 = vmatpush1.bf16.msra.mxu0 0
  %8226 = vmatprep.subr.bf16.mxu0 0
  %8227 = vmatpush1.bf16.msra.mxu0 0
  %8228 = vmatprep.subr.bf16.mxu0 0
  %8229 = vmatpush1.bf16.msra.mxu0 0
  %8230 = vmatprep.subr.bf16.mxu0 0
  %8231 = vmatpush1.bf16.msra.mxu0 0
  %8232 = vmatprep.subr.bf16.mxu0 0
  %8233 = vmatpush1.bf16.msra.mxu0 0
  %8234 = vmatprep.subr.bf16.mxu0 0
  %8235 = vmatpush1.bf16.msra.mxu0 0
  %8236 = vmatprep.mubr.bf16.mxu0 0
  %8237 = vmatmul.mubr.bf16.gmra.mrb[0].mxu0 %v8199
  %v8238 = vpop.f32.mrb[0].mxu0
  %v8239 = vadd.f32 0.0, %v8238
  %v8240 = vpop.f32.mrb[0].mxu0
  %v8241 = vpop.f32.mrb[0].mxu0
  %v8242 = vadd.f32 0.0, %v8241
  %v8243 = vpop.f32.mrb[0].mxu0
  %8244 = vdwg.mxu0
  %8245 = vrot.lane.b32.xlu0 %v7861, 104
  %v8246 = vpop.permute.xlu0 %8245
  %8247 = vrot.lane.b32.xlu0 %v7861, 72
  %v8248 = vpop.permute.xlu0 %8247
  %v8250 = vsel %vm214, %v8246, 0
  %v8253 = vsel %vm214, %v8248, 0
  %8255 = vmatprep.subr.bf16.mxu0 0
  %8256 = vmatpush1.bf16.xpose.msra.mxu0 %v8253
  %8257 = vmatprep.subr.bf16.mxu0 0
  %8258 = vmatpush1.bf16.xpose.msra.mxu0 0
  %8259 = vmatprep.subr.bf16.mxu0 0
  %8260 = vmatpush1.bf16.xpose.msra.mxu0 0
  %8261 = vmatprep.subr.bf16.mxu0 0
  %8262 = vmatpush1.bf16.xpose.msra.mxu0 0
  %8263 = vmatprep.subr.bf16.mxu0 0
  %8264 = vmatpush1.bf16.xpose.msra.mxu0 0
  %8265 = vmatprep.subr.bf16.mxu0 0
  %8266 = vmatpush1.bf16.xpose.msra.mxu0 0
  %8267 = vmatprep.subr.bf16.mxu0 0
  %8268 = vmatpush1.bf16.xpose.msra.mxu0 0
  %8269 = vmatprep.subr.bf16.mxu0 0
  %8270 = vmatpush1.bf16.xpose.msra.mxu0 0
  %8271 = vmatprep.subr.bf16.mxu0 0
  %8272 = vmatpush1.bf16.xpose.msra.mxu0 0
  %8273 = vmatprep.subr.bf16.mxu0 0
  %8274 = vmatpush1.bf16.xpose.msra.mxu0 0
  %8275 = vmatprep.subr.bf16.mxu0 0
  %8276 = vmatpush1.bf16.xpose.msra.mxu0 0
  %8277 = vmatprep.subr.bf16.mxu0 0
  %8278 = vmatpush1.bf16.xpose.msra.mxu0 0
  %8279 = vmatprep.subr.bf16.mxu0 0
  %8280 = vmatpush1.bf16.xpose.msra.mxu0 0
  %8281 = vmatprep.subr.bf16.mxu0 0
  %8282 = vmatpush1.bf16.xpose.msra.mxu0 0
  %8283 = vmatprep.subr.bf16.mxu0 0
  %8284 = vmatpush1.bf16.xpose.msra.mxu0 0
  %8285 = vmatprep.subr.bf16.mxu0 0
  %8286 = vmatpush1.bf16.xpose.msra.mxu0 0
  %8287 = vmatprep.mubr.bf16.mxu0 0
  %8288 = vmatmul.mubr.bf16.gmra.mrb[0].mxu0 %v8250
  %v8289 = vpop.f32.mrb[0].mxu0
  %v8290 = vadd.f32 0.0, %v8289
  %v8291 = vpop.f32.mrb[0].mxu0
  %v8292 = vpop.f32.mrb[0].mxu0
  %v8293 = vadd.f32 0.0, %v8292
  %v8294 = vpop.f32.mrb[0].mxu0
  %8295 = vdwg.mxu0
  %v8296 = vmul.f32 %v8290, 0.35355338
  %v8297 = vmul.f32 %v8293, 0.35355338
  %v8298 = vadd.f32 %v8296, %v7790
  %v8299 = vadd.f32 %v8297, %v7791
  %v8300 = vsel %vm7916, %v8298, -inf
  %8301 = vmax.xlane.f32.xlu0 %v8300
  %v8302 = vpop.xlane.xlu0 %8301
  %v8303 = vsel %vm7920, %v8299, -inf
  %8304 = vmax.xlane.f32.xlu0 %v8303
  %v8305 = vpop.xlane.xlu0 %8304
  %v8306 = vsub.f32 %v8298, %v8302
  %v8307 = vsub.f32 %v8299, %v8305
  %v8308 = vmul.f32 %v8306, 1.442695
  %v8309 = vpow.pop %v8308
  %v8310 = vmul.f32 %v8307, 1.442695
  %v8311 = vpow.pop %v8310
  %v8312 = vsel %vm7916, %v8309, 0.0
  %8313 = vadd.xlane.f32.xlu0 %v8312
  %v8314 = vpop.xlane.xlu0 %8313
  %v8315 = vsel %vm7920, %v8311, 0.0
  %8316 = vadd.xlane.f32.xlu0 %v8315
  %v8317 = vpop.xlane.xlu0 %8316
  %v8318 = vrcp.pop %v8314
  %v8319 = vmul.f32 %v8309, %v8318
  %v8320 = vrcp.pop %v8317
  %v8321 = vmul.f32 %v8311, %v8320
  %v8322 = vpack.c.bf16 %v8321, %v8319
  %8323 = vrot.lane.b32.xlu0 %v7861, 40
  %v8324 = vpop.permute.xlu0 %8323
  %v8326 = vsel %vm7916, %v8322, 0
  %v8329 = vsel %vm7946, %v8324, 0
  %8331 = vmatprep.subr.bf16.mxu0 0
  %8332 = vmatpush1.bf16.msra.mxu0 %v8329
  %8333 = vmatprep.subr.bf16.mxu0 0
  %8334 = vmatpush1.bf16.msra.mxu0 0
  %8335 = vmatprep.subr.bf16.mxu0 0
  %8336 = vmatpush1.bf16.msra.mxu0 0
  %8337 = vmatprep.subr.bf16.mxu0 0
  %8338 = vmatpush1.bf16.msra.mxu0 0
  %8339 = vmatprep.subr.bf16.mxu0 0
  %8340 = vmatpush1.bf16.msra.mxu0 0
  %8341 = vmatprep.subr.bf16.mxu0 0
  %8342 = vmatpush1.bf16.msra.mxu0 0
  %8343 = vmatprep.subr.bf16.mxu0 0
  %8344 = vmatpush1.bf16.msra.mxu0 0
  %8345 = vmatprep.subr.bf16.mxu0 0
  %8346 = vmatpush1.bf16.msra.mxu0 0
  %8347 = vmatprep.subr.bf16.mxu0 0
  %8348 = vmatpush1.bf16.msra.mxu0 0
  %8349 = vmatprep.subr.bf16.mxu0 0
  %8350 = vmatpush1.bf16.msra.mxu0 0
  %8351 = vmatprep.subr.bf16.mxu0 0
  %8352 = vmatpush1.bf16.msra.mxu0 0
  %8353 = vmatprep.subr.bf16.mxu0 0
  %8354 = vmatpush1.bf16.msra.mxu0 0
  %8355 = vmatprep.subr.bf16.mxu0 0
  %8356 = vmatpush1.bf16.msra.mxu0 0
  %8357 = vmatprep.subr.bf16.mxu0 0
  %8358 = vmatpush1.bf16.msra.mxu0 0
  %8359 = vmatprep.subr.bf16.mxu0 0
  %8360 = vmatpush1.bf16.msra.mxu0 0
  %8361 = vmatprep.subr.bf16.mxu0 0
  %8362 = vmatpush1.bf16.msra.mxu0 0
  %8363 = vmatprep.mubr.bf16.mxu0 0
  %8364 = vmatmul.mubr.bf16.gmra.mrb[0].mxu0 %v8326
  %v8365 = vpop.f32.mrb[0].mxu0
  %v8366 = vadd.f32 0.0, %v8365
  %v8367 = vpop.f32.mrb[0].mxu0
  %v8368 = vpop.f32.mrb[0].mxu0
  %v8369 = vadd.f32 0.0, %v8368
  %v8370 = vpop.f32.mrb[0].mxu0
  %8371 = vdwg.mxu0
  %8374 = vrot.lane.b32.xlu0 %v8112, 8
  %v8375 = vpop.permute.xlu0 %8374
  %8376 = vrot.lane.b32.xlu0 %v8115, 8
  %v8377 = vpop.permute.xlu0 %8376
  %8382 = vrot.lane.b32.xlu0 %v8239, 16
  %v8383 = vpop.permute.xlu0 %8382
  %8384 = vrot.lane.b32.xlu0 %v8242, 16
  %v8385 = vpop.permute.xlu0 %8384
  %8390 = vrot.lane.b32.xlu0 %v8366, 24
  %v8391 = vpop.permute.xlu0 %8390
  %8392 = vrot.lane.b32.xlu0 %v8369, 24
  %v8393 = vpop.permute.xlu0 %8392
  %v8396 = vsel %vm214, %v7985, %v8375
  %v8397 = vsel %vm214, %v7988, %v8377
  %v8398 = vsel %vm283, %v8396, %v8383
  %v8399 = vsel %vm283, %v8397, %v8385
  %vm8400 = vcmask 195584
  %v8401 = vsel %vm8400, %v8398, %v8391
  %v8402 = vsel %vm8400, %v8399, %v8393
  %v8403 = vld [vmem:[%s51] sm:$0xf]
  %v8404 = vld [vmem:[%s51 + $0x4] sm:$0xf]
  %v8405 = vld [vmem:[%s51 + $0x8] sm:$0xf]
  %v8406 = vld [vmem:[%s51 + $0xc] sm:$0xf]
  %v8407 = vpack.c.bf16 %v8402, %v8401
  %v8408 = vld [vmem:[%s53] sm:$0x1]
  %v8410 = vlaneseq
  %v8411 = vshrl.u32 %v8410, 7
  %v8412 = vsub.s32 0, %v8411
  %v8413 = vrot.slane %v8408, %v8412
  %v8419 = vunpack.c.l.b16 %v8403
  %v8420 = vunpack.c.l.b16 %v8404
  %v8421 = vunpack.c.l.b16 %v8405
  %v8422 = vunpack.c.l.b16 %v8406
  %v8423 = vpack.c.b16 %v8420, %v8419
  %v8424 = vpack.c.b16 %v8422, %v8421
  %v8428 = vsel %vm7816, %v8407, 0
  %8430 = vmatprep.subr.bf16.mxu0 0
  %8431 = vmatpush1.bf16.msra.mxu0 %v8423
  %8432 = vmatprep.subr.bf16.mxu0 0
  %8433 = vmatpush1.bf16.msra.mxu0 %v8424
  %8434 = vmatprep.subr.bf16.mxu0 0
  %8435 = vmatpush1.bf16.msra.mxu0 0
  %8436 = vmatprep.subr.bf16.mxu0 0
  %8437 = vmatpush1.bf16.msra.mxu0 0
  %8438 = vmatprep.subr.bf16.mxu0 0
  %8439 = vmatpush1.bf16.msra.mxu0 0
  %8440 = vmatprep.subr.bf16.mxu0 0
  %8441 = vmatpush1.bf16.msra.mxu0 0
  %8442 = vmatprep.subr.bf16.mxu0 0
  %8443 = vmatpush1.bf16.msra.mxu0 0
  %8444 = vmatprep.subr.bf16.mxu0 0
  %8445 = vmatpush1.bf16.msra.mxu0 0
  %8446 = vmatprep.subr.bf16.mxu0 0
  %8447 = vmatpush1.bf16.msra.mxu0 0
  %8448 = vmatprep.subr.bf16.mxu0 0
  %8449 = vmatpush1.bf16.msra.mxu0 0
  %8450 = vmatprep.subr.bf16.mxu0 0
  %8451 = vmatpush1.bf16.msra.mxu0 0
  %8452 = vmatprep.subr.bf16.mxu0 0
  %8453 = vmatpush1.bf16.msra.mxu0 0
  %8454 = vmatprep.subr.bf16.mxu0 0
  %8455 = vmatpush1.bf16.msra.mxu0 0
  %8456 = vmatprep.subr.bf16.mxu0 0
  %8457 = vmatpush1.bf16.msra.mxu0 0
  %8458 = vmatprep.subr.bf16.mxu0 0
  %8459 = vmatpush1.bf16.msra.mxu0 0
  %8460 = vmatprep.subr.bf16.mxu0 0
  %8461 = vmatpush1.bf16.msra.mxu0 0
  %8462 = vmatprep.mubr.bf16.mxu0 0
  %8463 = vmatmul.mubr.bf16.gmra.mrb[0].mxu0 %v8428
  %v8464 = vpop.f32.mrb[0].mxu0
  %v8465 = vadd.f32 %v8413, %v8464
  %v8466 = vpop.f32.mrb[0].mxu0
  %v8467 = vpop.f32.mrb[0].mxu0
  %v8468 = vadd.f32 %v8413, %v8467
  %v8469 = vpop.f32.mrb[0].mxu0
  %8470 = vdwg.mxu0
  %v8471 = vadd.f32 %v7788, %v8465
  %v8472 = vadd.f32 %v7789, %v8468
  %v8473 = vld [vmem:[%s55] sm:$0x1]
  %v8474 = vld [vmem:[%s57] sm:$0x1]
  %v8475 = vsel %vm7816, %v8471, 0.0
  %8476 = vadd.xlane.f32.xlu0 %v8475
  %v8477 = vpop.xlane.xlu0 %8476
  %vm8478 = vcmask 254976
  %v8479 = vsel %vm8478, %v8472, 0.0
  %8480 = vadd.xlane.f32.xlu0 %v8479
  %v8481 = vpop.xlane.xlu0 %8480
  %v8482 = vrcp.pop 32.0
  %v8483 = vmul.f32 %v8477, %v8482
  %v8484 = vmul.f32 %v8481, %v8482
  %v8485 = vsub.f32 %v8471, %v8483
  %v8486 = vsub.f32 %v8472, %v8484
  %v8487 = vmul.f32 %v8485, %v8485
  %v8488 = vmul.f32 %v8486, %v8486
  %v8489 = vsel %vm7816, %v8487, 0.0
  %8490 = vadd.xlane.f32.xlu0 %v8489
  %v8491 = vpop.xlane.xlu0 %8490
  %v8492 = vsel %vm8478, %v8488, 0.0
  %8493 = vadd.xlane.f32.xlu0 %v8492
  %v8494 = vpop.xlane.xlu0 %8493
  %v8495 = vmul.f32 %v8491, %v8482
  %v8496 = vmul.f32 %v8494, %v8482
  %v8497 = vadd.f32 %v8495, 1e-05
  %v8498 = vadd.f32 %v8496, 1e-05
  %v8499 = vrsqrt.pop %v8497
  %v8500 = vrsqrt.pop %v8498
  %v8501 = vmul.f32 %v8485, %v8499
  %v8502 = vmul.f32 %v8486, %v8500
  %v8504 = vlaneseq
  %v8505 = vshrl.u32 %v8504, 7
  %v8506 = vsub.s32 0, %v8505
  %v8507 = vrot.slane %v8473, %v8506
  %v8509 = vmul.f32 %v8501, %v8507
  %v8510 = vmul.f32 %v8502, %v8507
  %v8512 = vlaneseq
  %v8513 = vshrl.u32 %v8512, 7
  %v8514 = vsub.s32 0, %v8513
  %v8515 = vrot.slane %v8474, %v8514
  %v8517 = vadd.f32 %v8509, %v8515
  %v8518 = vadd.f32 %v8510, %v8515
  %v8519 = vld [vmem:[%s59] sm:$0xf]
  %v8520 = vld [vmem:[%s59 + $0x4] sm:$0xf]
  %v8521 = vld [vmem:[%s59 + $0x8] sm:$0xf]
  %v8522 = vld [vmem:[%s59 + $0xc] sm:$0xf]
  %v8523 = vpack.c.bf16 %v8518, %v8517
  %v8524 = vld [vmem:[%s61] sm:$0x1]
  %v8526 = vlaneseq
  %v8527 = vshrl.u32 %v8526, 7
  %v8528 = vsub.s32 0, %v8527
  %v8529 = vrot.slane %v8524, %v8528
  %v8535 = vunpack.c.l.b16 %v8519
  %v8536 = vunpack.c.l.b16 %v8520
  %v8537 = vunpack.c.l.b16 %v8521
  %v8538 = vunpack.c.l.b16 %v8522
  %v8539 = vpack.c.b16 %v8536, %v8535
  %v8540 = vpack.c.b16 %v8538, %v8537
  %v8544 = vsel %vm7816, %v8523, 0
  %8546 = vmatprep.subr.bf16.mxu0 0
  %8547 = vmatpush1.bf16.msra.mxu0 %v8539
  %8548 = vmatprep.subr.bf16.mxu0 0
  %8549 = vmatpush1.bf16.msra.mxu0 %v8540
  %8550 = vmatprep.subr.bf16.mxu0 0
  %8551 = vmatpush1.bf16.msra.mxu0 0
  %8552 = vmatprep.subr.bf16.mxu0 0
  %8553 = vmatpush1.bf16.msra.mxu0 0
  %8554 = vmatprep.subr.bf16.mxu0 0
  %8555 = vmatpush1.bf16.msra.mxu0 0
  %8556 = vmatprep.subr.bf16.mxu0 0
  %8557 = vmatpush1.bf16.msra.mxu0 0
  %8558 = vmatprep.subr.bf16.mxu0 0
  %8559 = vmatpush1.bf16.msra.mxu0 0
  %8560 = vmatprep.subr.bf16.mxu0 0
  %8561 = vmatpush1.bf16.msra.mxu0 0
  %8562 = vmatprep.subr.bf16.mxu0 0
  %8563 = vmatpush1.bf16.msra.mxu0 0
  %8564 = vmatprep.subr.bf16.mxu0 0
  %8565 = vmatpush1.bf16.msra.mxu0 0
  %8566 = vmatprep.subr.bf16.mxu0 0
  %8567 = vmatpush1.bf16.msra.mxu0 0
  %8568 = vmatprep.subr.bf16.mxu0 0
  %8569 = vmatpush1.bf16.msra.mxu0 0
  %8570 = vmatprep.subr.bf16.mxu0 0
  %8571 = vmatpush1.bf16.msra.mxu0 0
  %8572 = vmatprep.subr.bf16.mxu0 0
  %8573 = vmatpush1.bf16.msra.mxu0 0
  %8574 = vmatprep.subr.bf16.mxu0 0
  %8575 = vmatpush1.bf16.msra.mxu0 0
  %8576 = vmatprep.subr.bf16.mxu0 0
  %8577 = vmatpush1.bf16.msra.mxu0 0
  %8578 = vmatprep.mubr.bf16.mxu0 0
  %8579 = vmatmul.mubr.bf16.gmra.mrb[0].mxu0 %v8544
  %v8580 = vpop.f32.mrb[0].mxu0
  %v8581 = vadd.f32 %v8529, %v8580
  %v8582 = vpop.f32.mrb[0].mxu0
  %v8583 = vpop.f32.mrb[0].mxu0
  %v8584 = vadd.f32 %v8529, %v8583
  %v8585 = vpop.f32.mrb[0].mxu0
  %8586 = vdwg.mxu0
  %v8587 = vmax.f32 %v8581, 0.0
  %v8588 = vmax.f32 %v8584, 0.0
  %v8589 = vld [vmem:[%s63] sm:$0xf]
  %v8590 = vld [vmem:[%s63 + $0x4] sm:$0xf]
  %v8591 = vld [vmem:[%s63 + $0x8] sm:$0xf]
  %v8592 = vld [vmem:[%s63 + $0xc] sm:$0xf]
  %v8593 = vld [vmem:[%s63 + $0x10] sm:$0xf]
  %v8594 = vld [vmem:[%s63 + $0x14] sm:$0xf]
  %v8595 = vld [vmem:[%s63 + $0x18] sm:$0xf]
  %v8596 = vld [vmem:[%s63 + $0x1c] sm:$0xf]
  %v8597 = vpack.c.bf16 %v8588, %v8587
  %v8598 = vld [vmem:[%s65] sm:$0x1]
  %v8600 = vlaneseq
  %v8601 = vshrl.u32 %v8600, 7
  %v8602 = vsub.s32 0, %v8601
  %v8603 = vrot.slane %v8598, %v8602
  %v8613 = vunpack.c.l.b16 %v8589
  %v8614 = vunpack.c.l.b16 %v8590
  %v8615 = vunpack.c.l.b16 %v8591
  %v8616 = vunpack.c.l.b16 %v8592
  %v8617 = vunpack.c.l.b16 %v8593
  %v8618 = vunpack.c.l.b16 %v8594
  %v8619 = vunpack.c.l.b16 %v8595
  %v8620 = vunpack.c.l.b16 %v8596
  %v8621 = vpack.c.b16 %v8614, %v8613
  %v8622 = vpack.c.b16 %v8616, %v8615
  %v8623 = vpack.c.b16 %v8618, %v8617
  %v8624 = vpack.c.b16 %v8620, %v8619
  %v8630 = vsel %vm2648, %v8597, 0
  %8632 = vmatprep.subr.bf16.mxu0 0
  %8633 = vmatpush1.bf16.msra.mxu0 %v8621
  %8634 = vmatprep.subr.bf16.mxu0 0
  %8635 = vmatpush1.bf16.msra.mxu0 %v8622
  %8636 = vmatprep.subr.bf16.mxu0 0
  %8637 = vmatpush1.bf16.msra.mxu0 %v8623
  %8638 = vmatprep.subr.bf16.mxu0 0
  %8639 = vmatpush1.bf16.msra.mxu0 %v8624
  %8640 = vmatprep.subr.bf16.mxu0 0
  %8641 = vmatpush1.bf16.msra.mxu0 0
  %8642 = vmatprep.subr.bf16.mxu0 0
  %8643 = vmatpush1.bf16.msra.mxu0 0
  %8644 = vmatprep.subr.bf16.mxu0 0
  %8645 = vmatpush1.bf16.msra.mxu0 0
  %8646 = vmatprep.subr.bf16.mxu0 0
  %8647 = vmatpush1.bf16.msra.mxu0 0
  %8648 = vmatprep.subr.bf16.mxu0 0
  %8649 = vmatpush1.bf16.msra.mxu0 0
  %8650 = vmatprep.subr.bf16.mxu0 0
  %8651 = vmatpush1.bf16.msra.mxu0 0
  %8652 = vmatprep.subr.bf16.mxu0 0
  %8653 = vmatpush1.bf16.msra.mxu0 0
  %8654 = vmatprep.subr.bf16.mxu0 0
  %8655 = vmatpush1.bf16.msra.mxu0 0
  %8656 = vmatprep.subr.bf16.mxu0 0
  %8657 = vmatpush1.bf16.msra.mxu0 0
  %8658 = vmatprep.subr.bf16.mxu0 0
  %8659 = vmatpush1.bf16.msra.mxu0 0
  %8660 = vmatprep.subr.bf16.mxu0 0
  %8661 = vmatpush1.bf16.msra.mxu0 0
  %8662 = vmatprep.subr.bf16.mxu0 0
  %8663 = vmatpush1.bf16.msra.mxu0 0
  %8664 = vmatprep.mubr.bf16.mxu0 0
  %8665 = vmatmul.mubr.bf16.gmra.mrb[0].mxu0 %v8630
  %v8666 = vpop.f32.mrb[0].mxu0
  %v8667 = vadd.f32 %v8603, %v8666
  %v8668 = vpop.f32.mrb[0].mxu0
  %v8669 = vpop.f32.mrb[0].mxu0
  %v8670 = vadd.f32 %v8603, %v8669
  %v8671 = vpop.f32.mrb[0].mxu0
  %8672 = vdwg.mxu0
  %v8673 = vadd.f32 %v8517, %v8667
  %v8674 = vadd.f32 %v8518, %v8670
  %v8675 = vld [vmem:[%s67] sm:$0x1]
  %v8676 = vld [vmem:[%s69] sm:$0x1]
  %v8677 = vsel %vm7816, %v8673, 0.0
  %8678 = vadd.xlane.f32.xlu0 %v8677
  %v8679 = vpop.xlane.xlu0 %8678
  %v8680 = vsel %vm8478, %v8674, 0.0
  %8681 = vadd.xlane.f32.xlu0 %v8680
  %v8682 = vpop.xlane.xlu0 %8681
  %v8683 = vmul.f32 %v8679, %v8482
  %v8684 = vmul.f32 %v8682, %v8482
  %v8685 = vsub.f32 %v8673, %v8683
  %v8686 = vsub.f32 %v8674, %v8684
  %v8687 = vmul.f32 %v8685, %v8685
  %v8688 = vmul.f32 %v8686, %v8686
  %v8689 = vsel %vm7816, %v8687, 0.0
  %8690 = vadd.xlane.f32.xlu0 %v8689
  %v8691 = vpop.xlane.xlu0 %8690
  %v8692 = vsel %vm8478, %v8688, 0.0
  %8693 = vadd.xlane.f32.xlu0 %v8692
  %v8694 = vpop.xlane.xlu0 %8693
  %v8695 = vmul.f32 %v8691, %v8482
  %v8696 = vmul.f32 %v8694, %v8482
  %v8697 = vadd.f32 %v8695, 1e-05
  %v8698 = vadd.f32 %v8696, 1e-05
  %v8699 = vrsqrt.pop %v8697
  %v8700 = vrsqrt.pop %v8698
  %v8701 = vmul.f32 %v8685, %v8699
  %v8702 = vmul.f32 %v8686, %v8700
  %v8704 = vlaneseq
  %v8705 = vshrl.u32 %v8704, 7
  %v8706 = vsub.s32 0, %v8705
  %v8707 = vrot.slane %v8675, %v8706
  %v8709 = vmul.f32 %v8701, %v8707
  %v8710 = vmul.f32 %v8702, %v8707
  %v8712 = vlaneseq
  %v8713 = vshrl.u32 %v8712, 7
  %v8714 = vsub.s32 0, %v8713
  %v8715 = vrot.slane %v8676, %v8714
  %v8717 = vadd.f32 %v8709, %v8715
  %v8718 = vadd.f32 %v8710, %v8715
  %s8719 = scalar_lea.vmem %s47, 16
  %v8720 = vld [vmem:[%s8719] sm:$0xf]
  %v8721 = vld [vmem:[%s8719 + $0x4] sm:$0xf]
  %v8722 = vld [vmem:[%s8719 + $0x8] sm:$0xf]
  %v8723 = vld [vmem:[%s8719 + $0xc] sm:$0xf]
  %v8724 = vpack.c.bf16 %v8718, %v8717
  %s8725 = scalar_lea.vmem %s49, 1
  %v8726 = vld [vmem:[%s8725] sm:$0x1]
  %v8728 = vlaneseq
  %v8729 = vshrl.u32 %v8728, 7
  %v8730 = vsub.s32 0, %v8729
  %v8731 = vrot.slane %v8726, %v8730
  %v8737 = vunpack.c.l.b16 %v8720
  %v8738 = vunpack.c.l.b16 %v8721
  %v8739 = vunpack.c.l.b16 %v8722
  %v8740 = vunpack.c.l.b16 %v8723
  %v8741 = vpack.c.b16 %v8738, %v8737
  %v8742 = vpack.c.b16 %v8740, %v8739
  %v8746 = vsel %vm7816, %v8724, 0
  %8748 = vmatprep.subr.bf16.mxu0 0
  %8749 = vmatpush1.bf16.msra.mxu0 %v8741
  %8750 = vmatprep.subr.bf16.mxu0 0
  %8751 = vmatpush1.bf16.msra.mxu0 %v8742
  %8752 = vmatprep.subr.bf16.mxu0 0
  %8753 = vmatpush1.bf16.msra.mxu0 0
  %8754 = vmatprep.subr.bf16.mxu0 0
  %8755 = vmatpush1.bf16.msra.mxu0 0
  %8756 = vmatprep.subr.bf16.mxu0 0
  %8757 = vmatpush1.bf16.msra.mxu0 0
  %8758 = vmatprep.subr.bf16.mxu0 0
  %8759 = vmatpush1.bf16.msra.mxu0 0
  %8760 = vmatprep.subr.bf16.mxu0 0
  %8761 = vmatpush1.bf16.msra.mxu0 0
  %8762 = vmatprep.subr.bf16.mxu0 0
  %8763 = vmatpush1.bf16.msra.mxu0 0
  %8764 = vmatprep.subr.bf16.mxu0 0
  %8765 = vmatpush1.bf16.msra.mxu0 0
  %8766 = vmatprep.subr.bf16.mxu0 0
  %8767 = vmatpush1.bf16.msra.mxu0 0
  %8768 = vmatprep.subr.bf16.mxu0 0
  %8769 = vmatpush1.bf16.msra.mxu0 0
  %8770 = vmatprep.subr.bf16.mxu0 0
  %8771 = vmatpush1.bf16.msra.mxu0 0
  %8772 = vmatprep.subr.bf16.mxu0 0
  %8773 = vmatpush1.bf16.msra.mxu0 0
  %8774 = vmatprep.subr.bf16.mxu0 0
  %8775 = vmatpush1.bf16.msra.mxu0 0
  %8776 = vmatprep.subr.bf16.mxu0 0
  %8777 = vmatpush1.bf16.msra.mxu0 0
  %8778 = vmatprep.subr.bf16.mxu0 0
  %8779 = vmatpush1.bf16.msra.mxu0 0
  %8780 = vmatprep.mubr.bf16.mxu0 0
  %8781 = vmatmul.mubr.bf16.gmra.mrb[0].mxu0 %v8746
  %v8782 = vpop.f32.mrb[0].mxu0
  %v8783 = vadd.f32 %v8731, %v8782
  %v8784 = vpop.f32.mrb[0].mxu0
  %v8785 = vpop.f32.mrb[0].mxu0
  %v8786 = vadd.f32 %v8731, %v8785
  %v8787 = vpop.f32.mrb[0].mxu0
  %8788 = vdwg.mxu0
  %v8789 = vpack.c.bf16 %v8786, %v8783
  %8791 = vrot.lane.b32.xlu0 %v8789, 96
  %v8792 = vpop.permute.xlu0 %8791
  %v8794 = vsel %vm214, %v8789, 0
  %v8797 = vsel %vm214, %v8792, 0
  %8799 = vmatprep.subr.bf16.mxu0 0
  %8800 = vmatpush1.bf16.xpose.msra.mxu0 %v8797
  %8801 = vmatprep.subr.bf16.mxu0 0
  %8802 = vmatpush1.bf16.xpose.msra.mxu0 0
  %8803 = vmatprep.subr.bf16.mxu0 0
  %8804 = vmatpush1.bf16.xpose.msra.mxu0 0
  %8805 = vmatprep.subr.bf16.mxu0 0
  %8806 = vmatpush1.bf16.xpose.msra.mxu0 0
  %8807 = vmatprep.subr.bf16.mxu0 0
  %8808 = vmatpush1.bf16.xpose.msra.mxu0 0
  %8809 = vmatprep.subr.bf16.mxu0 0
  %8810 = vmatpush1.bf16.xpose.msra.mxu0 0
  %8811 = vmatprep.subr.bf16.mxu0 0
  %8812 = vmatpush1.bf16.xpose.msra.mxu0 0
  %8813 = vmatprep.subr.bf16.mxu0 0
  %8814 = vmatpush1.bf16.xpose.msra.mxu0 0
  %8815 = vmatprep.subr.bf16.mxu0 0
  %8816 = vmatpush1.bf16.xpose.msra.mxu0 0
  %8817 = vmatprep.subr.bf16.mxu0 0
  %8818 = vmatpush1.bf16.xpose.msra.mxu0 0
  %8819 = vmatprep.subr.bf16.mxu0 0
  %8820 = vmatpush1.bf16.xpose.msra.mxu0 0
  %8821 = vmatprep.subr.bf16.mxu0 0
  %8822 = vmatpush1.bf16.xpose.msra.mxu0 0
  %8823 = vmatprep.subr.bf16.mxu0 0
  %8824 = vmatpush1.bf16.xpose.msra.mxu0 0
  %8825 = vmatprep.subr.bf16.mxu0 0
  %8826 = vmatpush1.bf16.xpose.msra.mxu0 0
  %8827 = vmatprep.subr.bf16.mxu0 0
  %8828 = vmatpush1.bf16.xpose.msra.mxu0 0
  %8829 = vmatprep.subr.bf16.mxu0 0
  %8830 = vmatpush1.bf16.xpose.msra.mxu0 0
  %8831 = vmatprep.mubr.bf16.mxu0 0
  %8832 = vmatmul.mubr.bf16.gmra.mrb[0].mxu0 %v8794
  %v8833 = vpop.f32.mrb[0].mxu0
  %v8834 = vadd.f32 0.0, %v8833
  %v8835 = vpop.f32.mrb[0].mxu0
  %v8836 = vpop.f32.mrb[0].mxu0
  %v8837 = vadd.f32 0.0, %v8836
  %v8838 = vpop.f32.mrb[0].mxu0
  %8839 = vdwg.mxu0
  %v8840 = vmul.f32 %v8834, 0.35355338
  %v8841 = vmul.f32 %v8837, 0.35355338
  %v8842 = vadd.f32 %v8840, %v7790
  %v8843 = vadd.f32 %v8841, %v7791
  %v8844 = vsel %vm7916, %v8842, -inf
  %8845 = vmax.xlane.f32.xlu0 %v8844
  %v8846 = vpop.xlane.xlu0 %8845
  %v8847 = vsel %vm7920, %v8843, -inf
  %8848 = vmax.xlane.f32.xlu0 %v8847
  %v8849 = vpop.xlane.xlu0 %8848
  %v8850 = vsub.f32 %v8842, %v8846
  %v8851 = vsub.f32 %v8843, %v8849
  %v8852 = vmul.f32 %v8850, 1.442695
  %v8853 = vpow.pop %v8852
  %v8854 = vmul.f32 %v8851, 1.442695
  %v8855 = vpow.pop %v8854
  %v8856 = vsel %vm7916, %v8853, 0.0
  %8857 = vadd.xlane.f32.xlu0 %v8856
  %v8858 = vpop.xlane.xlu0 %8857
  %v8859 = vsel %vm7920, %v8855, 0.0
  %8860 = vadd.xlane.f32.xlu0 %v8859
  %v8861 = vpop.xlane.xlu0 %8860
  %v8862 = vrcp.pop %v8858
  %v8863 = vmul.f32 %v8853, %v8862
  %v8864 = vrcp.pop %v8861
  %v8865 = vmul.f32 %v8855, %v8864
  %v8866 = vpack.c.bf16 %v8865, %v8863
  %8867 = vrot.lane.b32.xlu0 %v8789, 64
  %v8868 = vpop.permute.xlu0 %8867
  %v8870 = vsel %vm7916, %v8866, 0
  %v8873 = vsel %vm7946, %v8868, 0
  %8875 = vmatprep.subr.bf16.mxu0 0
  %8876 = vmatpush1.bf16.msra.mxu0 %v8873
  %8877 = vmatprep.subr.bf16.mxu0 0
  %8878 = vmatpush1.bf16.msra.mxu0 0
  %8879 = vmatprep.subr.bf16.mxu0 0
  %8880 = vmatpush1.bf16.msra.mxu0 0
  %8881 = vmatprep.subr.bf16.mxu0 0
  %8882 = vmatpush1.bf16.msra.mxu0 0
  %8883 = vmatprep.subr.bf16.mxu0 0
  %8884 = vmatpush1.bf16.msra.mxu0 0
  %8885 = vmatprep.subr.bf16.mxu0 0
  %8886 = vmatpush1.bf16.msra.mxu0 0
  %8887 = vmatprep.subr.bf16.mxu0 0
  %8888 = vmatpush1.bf16.msra.mxu0 0
  %8889 = vmatprep.subr.bf16.mxu0 0
  %8890 = vmatpush1.bf16.msra.mxu0 0
  %8891 = vmatprep.subr.bf16.mxu0 0
  %8892 = vmatpush1.bf16.msra.mxu0 0
  %8893 = vmatprep.subr.bf16.mxu0 0
  %8894 = vmatpush1.bf16.msra.mxu0 0
  %8895 = vmatprep.subr.bf16.mxu0 0
  %8896 = vmatpush1.bf16.msra.mxu0 0
  %8897 = vmatprep.subr.bf16.mxu0 0
  %8898 = vmatpush1.bf16.msra.mxu0 0
  %8899 = vmatprep.subr.bf16.mxu0 0
  %8900 = vmatpush1.bf16.msra.mxu0 0
  %8901 = vmatprep.subr.bf16.mxu0 0
  %8902 = vmatpush1.bf16.msra.mxu0 0
  %8903 = vmatprep.subr.bf16.mxu0 0
  %8904 = vmatpush1.bf16.msra.mxu0 0
  %8905 = vmatprep.subr.bf16.mxu0 0
  %8906 = vmatpush1.bf16.msra.mxu0 0
  %8907 = vmatprep.mubr.bf16.mxu0 0
  %8908 = vmatmul.mubr.bf16.gmra.mrb[0].mxu0 %v8870
  %v8909 = vpop.f32.mrb[0].mxu0
  %v8910 = vadd.f32 0.0, %v8909
  %v8911 = vpop.f32.mrb[0].mxu0
  %v8912 = vpop.f32.mrb[0].mxu0
  %v8913 = vadd.f32 0.0, %v8912
  %v8914 = vpop.f32.mrb[0].mxu0
  %8915 = vdwg.mxu0
  %8916 = vrot.lane.b32.xlu0 %v8789, 120
  %v8917 = vpop.permute.xlu0 %8916
  %8918 = vrot.lane.b32.xlu0 %v8789, 88
  %v8919 = vpop.permute.xlu0 %8918
  %v8921 = vsel %vm214, %v8917, 0
  %v8924 = vsel %vm214, %v8919, 0
  %8926 = vmatprep.subr.bf16.mxu0 0
  %8927 = vmatpush1.bf16.xpose.msra.mxu0 %v8924
  %8928 = vmatprep.subr.bf16.mxu0 0
  %8929 = vmatpush1.bf16.xpose.msra.mxu0 0
  %8930 = vmatprep.subr.bf16.mxu0 0
  %8931 = vmatpush1.bf16.xpose.msra.mxu0 0
  %8932 = vmatprep.subr.bf16.mxu0 0
  %8933 = vmatpush1.bf16.xpose.msra.mxu0 0
  %8934 = vmatprep.subr.bf16.mxu0 0
  %8935 = vmatpush1.bf16.xpose.msra.mxu0 0
  %8936 = vmatprep.subr.bf16.mxu0 0
  %8937 = vmatpush1.bf16.xpose.msra.mxu0 0
  %8938 = vmatprep.subr.bf16.mxu0 0
  %8939 = vmatpush1.bf16.xpose.msra.mxu0 0
  %8940 = vmatprep.subr.bf16.mxu0 0
  %8941 = vmatpush1.bf16.xpose.msra.mxu0 0
  %8942 = vmatprep.subr.bf16.mxu0 0
  %8943 = vmatpush1.bf16.xpose.msra.mxu0 0
  %8944 = vmatprep.subr.bf16.mxu0 0
  %8945 = vmatpush1.bf16.xpose.msra.mxu0 0
  %8946 = vmatprep.subr.bf16.mxu0 0
  %8947 = vmatpush1.bf16.xpose.msra.mxu0 0
  %8948 = vmatprep.subr.bf16.mxu0 0
  %8949 = vmatpush1.bf16.xpose.msra.mxu0 0
  %8950 = vmatprep.subr.bf16.mxu0 0
  %8951 = vmatpush1.bf16.xpose.msra.mxu0 0
  %8952 = vmatprep.subr.bf16.mxu0 0
  %8953 = vmatpush1.bf16.xpose.msra.mxu0 0
  %8954 = vmatprep.subr.bf16.mxu0 0
  %8955 = vmatpush1.bf16.xpose.msra.mxu0 0
  %8956 = vmatprep.subr.bf16.mxu0 0
  %8957 = vmatpush1.bf16.xpose.msra.mxu0 0
  %8958 = vmatprep.mubr.bf16.mxu0 0
  %8959 = vmatmul.mubr.bf16.gmra.mrb[0].mxu0 %v8921
  %v8960 = vpop.f32.mrb[0].mxu0
  %v8961 = vadd.f32 0.0, %v8960
  %v8962 = vpop.f32.mrb[0].mxu0
  %v8963 = vpop.f32.mrb[0].mxu0
  %v8964 = vadd.f32 0.0, %v8963
  %v8965 = vpop.f32.mrb[0].mxu0
  %8966 = vdwg.mxu0
  %v8967 = vmul.f32 %v8961, 0.35355338
  %v8968 = vmul.f32 %v8964, 0.35355338
  %v8969 = vadd.f32 %v8967, %v7790
  %v8970 = vadd.f32 %v8968, %v7791
  %v8971 = vsel %vm7916, %v8969, -inf
  %8972 = vmax.xlane.f32.xlu0 %v8971
  %v8973 = vpop.xlane.xlu0 %8972
  %v8974 = vsel %vm7920, %v8970, -inf
  %8975 = vmax.xlane.f32.xlu0 %v8974
  %v8976 = vpop.xlane.xlu0 %8975
  %v8977 = vsub.f32 %v8969, %v8973
  %v8978 = vsub.f32 %v8970, %v8976
  %v8979 = vmul.f32 %v8977, 1.442695
  %v8980 = vpow.pop %v8979
  %v8981 = vmul.f32 %v8978, 1.442695
  %v8982 = vpow.pop %v8981
  %v8983 = vsel %vm7916, %v8980, 0.0
  %8984 = vadd.xlane.f32.xlu0 %v8983
  %v8985 = vpop.xlane.xlu0 %8984
  %v8986 = vsel %vm7920, %v8982, 0.0
  %8987 = vadd.xlane.f32.xlu0 %v8986
  %v8988 = vpop.xlane.xlu0 %8987
  %v8989 = vrcp.pop %v8985
  %v8990 = vmul.f32 %v8980, %v8989
  %v8991 = vrcp.pop %v8988
  %v8992 = vmul.f32 %v8982, %v8991
  %v8993 = vpack.c.bf16 %v8992, %v8990
  %8994 = vrot.lane.b32.xlu0 %v8789, 56
  %v8995 = vpop.permute.xlu0 %8994
  %v8997 = vsel %vm7916, %v8993, 0
  %v9000 = vsel %vm7946, %v8995, 0
  %9002 = vmatprep.subr.bf16.mxu0 0
  %9003 = vmatpush1.bf16.msra.mxu0 %v9000
  %9004 = vmatprep.subr.bf16.mxu0 0
  %9005 = vmatpush1.bf16.msra.mxu0 0
  %9006 = vmatprep.subr.bf16.mxu0 0
  %9007 = vmatpush1.bf16.msra.mxu0 0
  %9008 = vmatprep.subr.bf16.mxu0 0
  %9009 = vmatpush1.bf16.msra.mxu0 0
  %9010 = vmatprep.subr.bf16.mxu0 0
  %9011 = vmatpush1.bf16.msra.mxu0 0
  %9012 = vmatprep.subr.bf16.mxu0 0
  %9013 = vmatpush1.bf16.msra.mxu0 0
  %9014 = vmatprep.subr.bf16.mxu0 0
  %9015 = vmatpush1.bf16.msra.mxu0 0
  %9016 = vmatprep.subr.bf16.mxu0 0
  %9017 = vmatpush1.bf16.msra.mxu0 0
  %9018 = vmatprep.subr.bf16.mxu0 0
  %9019 = vmatpush1.bf16.msra.mxu0 0
  %9020 = vmatprep.subr.bf16.mxu0 0
  %9021 = vmatpush1.bf16.msra.mxu0 0
  %9022 = vmatprep.subr.bf16.mxu0 0
  %9023 = vmatpush1.bf16.msra.mxu0 0
  %9024 = vmatprep.subr.bf16.mxu0 0
  %9025 = vmatpush1.bf16.msra.mxu0 0
  %9026 = vmatprep.subr.bf16.mxu0 0
  %9027 = vmatpush1.bf16.msra.mxu0 0
  %9028 = vmatprep.subr.bf16.mxu0 0
  %9029 = vmatpush1.bf16.msra.mxu0 0
  %9030 = vmatprep.subr.bf16.mxu0 0
  %9031 = vmatpush1.bf16.msra.mxu0 0
  %9032 = vmatprep.subr.bf16.mxu0 0
  %9033 = vmatpush1.bf16.msra.mxu0 0
  %9034 = vmatprep.mubr.bf16.mxu0 0
  %9035 = vmatmul.mubr.bf16.gmra.mrb[0].mxu0 %v8997
  %v9036 = vpop.f32.mrb[0].mxu0
  %v9037 = vadd.f32 0.0, %v9036
  %v9038 = vpop.f32.mrb[0].mxu0
  %v9039 = vpop.f32.mrb[0].mxu0
  %v9040 = vadd.f32 0.0, %v9039
  %v9041 = vpop.f32.mrb[0].mxu0
  %9042 = vdwg.mxu0
  %9043 = vrot.lane.b32.xlu0 %v8789, 112
  %v9044 = vpop.permute.xlu0 %9043
  %9045 = vrot.lane.b32.xlu0 %v8789, 80
  %v9046 = vpop.permute.xlu0 %9045
  %v9048 = vsel %vm214, %v9044, 0
  %v9051 = vsel %vm214, %v9046, 0
  %9053 = vmatprep.subr.bf16.mxu0 0
  %9054 = vmatpush1.bf16.xpose.msra.mxu0 %v9051
  %9055 = vmatprep.subr.bf16.mxu0 0
  %9056 = vmatpush1.bf16.xpose.msra.mxu0 0
  %9057 = vmatprep.subr.bf16.mxu0 0
  %9058 = vmatpush1.bf16.xpose.msra.mxu0 0
  %9059 = vmatprep.subr.bf16.mxu0 0
  %9060 = vmatpush1.bf16.xpose.msra.mxu0 0
  %9061 = vmatprep.subr.bf16.mxu0 0
  %9062 = vmatpush1.bf16.xpose.msra.mxu0 0
  %9063 = vmatprep.subr.bf16.mxu0 0
  %9064 = vmatpush1.bf16.xpose.msra.mxu0 0
  %9065 = vmatprep.subr.bf16.mxu0 0
  %9066 = vmatpush1.bf16.xpose.msra.mxu0 0
  %9067 = vmatprep.subr.bf16.mxu0 0
  %9068 = vmatpush1.bf16.xpose.msra.mxu0 0
  %9069 = vmatprep.subr.bf16.mxu0 0
  %9070 = vmatpush1.bf16.xpose.msra.mxu0 0
  %9071 = vmatprep.subr.bf16.mxu0 0
  %9072 = vmatpush1.bf16.xpose.msra.mxu0 0
  %9073 = vmatprep.subr.bf16.mxu0 0
  %9074 = vmatpush1.bf16.xpose.msra.mxu0 0
  %9075 = vmatprep.subr.bf16.mxu0 0
  %9076 = vmatpush1.bf16.xpose.msra.mxu0 0
  %9077 = vmatprep.subr.bf16.mxu0 0
  %9078 = vmatpush1.bf16.xpose.msra.mxu0 0
  %9079 = vmatprep.subr.bf16.mxu0 0
  %9080 = vmatpush1.bf16.xpose.msra.mxu0 0
  %9081 = vmatprep.subr.bf16.mxu0 0
  %9082 = vmatpush1.bf16.xpose.msra.mxu0 0
  %9083 = vmatprep.subr.bf16.mxu0 0
  %9084 = vmatpush1.bf16.xpose.msra.mxu0 0
  %9085 = vmatprep.mubr.bf16.mxu0 0
  %9086 = vmatmul.mubr.bf16.gmra.mrb[0].mxu0 %v9048
  %v9087 = vpop.f32.mrb[0].mxu0
  %v9088 = vadd.f32 0.0, %v9087
  %v9089 = vpop.f32.mrb[0].mxu0
  %v9090 = vpop.f32.mrb[0].mxu0
  %v9091 = vadd.f32 0.0, %v9090
  %v9092 = vpop.f32.mrb[0].mxu0
  %9093 = vdwg.mxu0
  %v9094 = vmul.f32 %v9088, 0.35355338
  %v9095 = vmul.f32 %v9091, 0.35355338
  %v9096 = vadd.f32 %v9094, %v7790
  %v9097 = vadd.f32 %v9095, %v7791
  %v9098 = vsel %vm7916, %v9096, -inf
  %9099 = vmax.xlane.f32.xlu0 %v9098
  %v9100 = vpop.xlane.xlu0 %9099
  %v9101 = vsel %vm7920, %v9097, -inf
  %9102 = vmax.xlane.f32.xlu0 %v9101
  %v9103 = vpop.xlane.xlu0 %9102
  %v9104 = vsub.f32 %v9096, %v9100
  %v9105 = vsub.f32 %v9097, %v9103
  %v9106 = vmul.f32 %v9104, 1.442695
  %v9107 = vpow.pop %v9106
  %v9108 = vmul.f32 %v9105, 1.442695
  %v9109 = vpow.pop %v9108
  %v9110 = vsel %vm7916, %v9107, 0.0
  %9111 = vadd.xlane.f32.xlu0 %v9110
  %v9112 = vpop.xlane.xlu0 %9111
  %v9113 = vsel %vm7920, %v9109, 0.0
  %9114 = vadd.xlane.f32.xlu0 %v9113
  %v9115 = vpop.xlane.xlu0 %9114
  %v9116 = vrcp.pop %v9112
  %v9117 = vmul.f32 %v9107, %v9116
  %v9118 = vrcp.pop %v9115
  %v9119 = vmul.f32 %v9109, %v9118
  %v9120 = vpack.c.bf16 %v9119, %v9117
  %9121 = vrot.lane.b32.xlu0 %v8789, 48
  %v9122 = vpop.permute.xlu0 %9121
  %v9124 = vsel %vm7916, %v9120, 0
  %v9127 = vsel %vm7946, %v9122, 0
  %9129 = vmatprep.subr.bf16.mxu0 0
  %9130 = vmatpush1.bf16.msra.mxu0 %v9127
  %9131 = vmatprep.subr.bf16.mxu0 0
  %9132 = vmatpush1.bf16.msra.mxu0 0
  %9133 = vmatprep.subr.bf16.mxu0 0
  %9134 = vmatpush1.bf16.msra.mxu0 0
  %9135 = vmatprep.subr.bf16.mxu0 0
  %9136 = vmatpush1.bf16.msra.mxu0 0
  %9137 = vmatprep.subr.bf16.mxu0 0
  %9138 = vmatpush1.bf16.msra.mxu0 0
  %9139 = vmatprep.subr.bf16.mxu0 0
  %9140 = vmatpush1.bf16.msra.mxu0 0
  %9141 = vmatprep.subr.bf16.mxu0 0
  %9142 = vmatpush1.bf16.msra.mxu0 0
  %9143 = vmatprep.subr.bf16.mxu0 0
  %9144 = vmatpush1.bf16.msra.mxu0 0
  %9145 = vmatprep.subr.bf16.mxu0 0
  %9146 = vmatpush1.bf16.msra.mxu0 0
  %9147 = vmatprep.subr.bf16.mxu0 0
  %9148 = vmatpush1.bf16.msra.mxu0 0
  %9149 = vmatprep.subr.bf16.mxu0 0
  %9150 = vmatpush1.bf16.msra.mxu0 0
  %9151 = vmatprep.subr.bf16.mxu0 0
  %9152 = vmatpush1.bf16.msra.mxu0 0
  %9153 = vmatprep.subr.bf16.mxu0 0
  %9154 = vmatpush1.bf16.msra.mxu0 0
  %9155 = vmatprep.subr.bf16.mxu0 0
  %9156 = vmatpush1.bf16.msra.mxu0 0
  %9157 = vmatprep.subr.bf16.mxu0 0
  %9158 = vmatpush1.bf16.msra.mxu0 0
  %9159 = vmatprep.subr.bf16.mxu0 0
  %9160 = vmatpush1.bf16.msra.mxu0 0
  %9161 = vmatprep.mubr.bf16.mxu0 0
  %9162 = vmatmul.mubr.bf16.gmra.mrb[0].mxu0 %v9124
  %v9163 = vpop.f32.mrb[0].mxu0
  %v9164 = vadd.f32 0.0, %v9163
  %v9165 = vpop.f32.mrb[0].mxu0
  %v9166 = vpop.f32.mrb[0].mxu0
  %v9167 = vadd.f32 0.0, %v9166
  %v9168 = vpop.f32.mrb[0].mxu0
  %9169 = vdwg.mxu0
  %9170 = vrot.lane.b32.xlu0 %v8789, 104
  %v9171 = vpop.permute.xlu0 %9170
  %9172 = vrot.lane.b32.xlu0 %v8789, 72
  %v9173 = vpop.permute.xlu0 %9172
  %v9175 = vsel %vm214, %v9171, 0
  %v9178 = vsel %vm214, %v9173, 0
  %9180 = vmatprep.subr.bf16.mxu0 0
  %9181 = vmatpush1.bf16.xpose.msra.mxu0 %v9178
  %9182 = vmatprep.subr.bf16.mxu0 0
  %9183 = vmatpush1.bf16.xpose.msra.mxu0 0
  %9184 = vmatprep.subr.bf16.mxu0 0
  %9185 = vmatpush1.bf16.xpose.msra.mxu0 0
  %9186 = vmatprep.subr.bf16.mxu0 0
  %9187 = vmatpush1.bf16.xpose.msra.mxu0 0
  %9188 = vmatprep.subr.bf16.mxu0 0
  %9189 = vmatpush1.bf16.xpose.msra.mxu0 0
  %9190 = vmatprep.subr.bf16.mxu0 0
  %9191 = vmatpush1.bf16.xpose.msra.mxu0 0
  %9192 = vmatprep.subr.bf16.mxu0 0
  %9193 = vmatpush1.bf16.xpose.msra.mxu0 0
  %9194 = vmatprep.subr.bf16.mxu0 0
  %9195 = vmatpush1.bf16.xpose.msra.mxu0 0
  %9196 = vmatprep.subr.bf16.mxu0 0
  %9197 = vmatpush1.bf16.xpose.msra.mxu0 0
  %9198 = vmatprep.subr.bf16.mxu0 0
  %9199 = vmatpush1.bf16.xpose.msra.mxu0 0
  %9200 = vmatprep.subr.bf16.mxu0 0
  %9201 = vmatpush1.bf16.xpose.msra.mxu0 0
  %9202 = vmatprep.subr.bf16.mxu0 0
  %9203 = vmatpush1.bf16.xpose.msra.mxu0 0
  %9204 = vmatprep.subr.bf16.mxu0 0
  %9205 = vmatpush1.bf16.xpose.msra.mxu0 0
  %9206 = vmatprep.subr.bf16.mxu0 0
  %9207 = vmatpush1.bf16.xpose.msra.mxu0 0
  %9208 = vmatprep.subr.bf16.mxu0 0
  %9209 = vmatpush1.bf16.xpose.msra.mxu0 0
  %9210 = vmatprep.subr.bf16.mxu0 0
  %9211 = vmatpush1.bf16.xpose.msra.mxu0 0
  %9212 = vmatprep.mubr.bf16.mxu0 0
  %9213 = vmatmul.mubr.bf16.gmra.mrb[0].mxu0 %v9175
  %v9214 = vpop.f32.mrb[0].mxu0
  %v9215 = vadd.f32 0.0, %v9214
  %v9216 = vpop.f32.mrb[0].mxu0
  %v9217 = vpop.f32.mrb[0].mxu0
  %v9218 = vadd.f32 0.0, %v9217
  %v9219 = vpop.f32.mrb[0].mxu0
  %9220 = vdwg.mxu0
  %v9221 = vmul.f32 %v9215, 0.35355338
  %v9222 = vmul.f32 %v9218, 0.35355338
  %v9223 = vadd.f32 %v9221, %v7790
  %v9224 = vadd.f32 %v9222, %v7791
  %v9225 = vsel %vm7916, %v9223, -inf
  %9226 = vmax.xlane.f32.xlu0 %v9225
  %v9227 = vpop.xlane.xlu0 %9226
  %v9228 = vsel %vm7920, %v9224, -inf
  %9229 = vmax.xlane.f32.xlu0 %v9228
  %v9230 = vpop.xlane.xlu0 %9229
  %v9231 = vsub.f32 %v9223, %v9227
  %v9232 = vsub.f32 %v9224, %v9230
  %v9233 = vmul.f32 %v9231, 1.442695
  %v9234 = vpow.pop %v9233
  %v9235 = vmul.f32 %v9232, 1.442695
  %v9236 = vpow.pop %v9235
  %v9237 = vsel %vm7916, %v9234, 0.0
  %9238 = vadd.xlane.f32.xlu0 %v9237
  %v9239 = vpop.xlane.xlu0 %9238
  %v9240 = vsel %vm7920, %v9236, 0.0
  %9241 = vadd.xlane.f32.xlu0 %v9240
  %v9242 = vpop.xlane.xlu0 %9241
  %v9243 = vrcp.pop %v9239
  %v9244 = vmul.f32 %v9234, %v9243
  %v9245 = vrcp.pop %v9242
  %v9246 = vmul.f32 %v9236, %v9245
  %v9247 = vpack.c.bf16 %v9246, %v9244
  %9248 = vrot.lane.b32.xlu0 %v8789, 40
  %v9249 = vpop.permute.xlu0 %9248
  %v9251 = vsel %vm7916, %v9247, 0
  %v9254 = vsel %vm7946, %v9249, 0
  %9256 = vmatprep.subr.bf16.mxu0 0
  %9257 = vmatpush1.bf16.msra.mxu0 %v9254
  %9258 = vmatprep.subr.bf16.mxu0 0
  %9259 = vmatpush1.bf16.msra.mxu0 0
  %9260 = vmatprep.subr.bf16.mxu0 0
  %9261 = vmatpush1.bf16.msra.mxu0 0
  %9262 = vmatprep.subr.bf16.mxu0 0
  %9263 = vmatpush1.bf16.msra.mxu0 0
  %9264 = vmatprep.subr.bf16.mxu0 0
  %9265 = vmatpush1.bf16.msra.mxu0 0
  %9266 = vmatprep.subr.bf16.mxu0 0
  %9267 = vmatpush1.bf16.msra.mxu0 0
  %9268 = vmatprep.subr.bf16.mxu0 0
  %9269 = vmatpush1.bf16.msra.mxu0 0
  %9270 = vmatprep.subr.bf16.mxu0 0
  %9271 = vmatpush1.bf16.msra.mxu0 0
  %9272 = vmatprep.subr.bf16.mxu0 0
  %9273 = vmatpush1.bf16.msra.mxu0 0
  %9274 = vmatprep.subr.bf16.mxu0 0
  %9275 = vmatpush1.bf16.msra.mxu0 0
  %9276 = vmatprep.subr.bf16.mxu0 0
  %9277 = vmatpush1.bf16.msra.mxu0 0
  %9278 = vmatprep.subr.bf16.mxu0 0
  %9279 = vmatpush1.bf16.msra.mxu0 0
  %9280 = vmatprep.subr.bf16.mxu0 0
  %9281 = vmatpush1.bf16.msra.mxu0 0
  %9282 = vmatprep.subr.bf16.mxu0 0
  %9283 = vmatpush1.bf16.msra.mxu0 0
  %9284 = vmatprep.subr.bf16.mxu0 0
  %9285 = vmatpush1.bf16.msra.mxu0 0
  %9286 = vmatprep.subr.bf16.mxu0 0
  %9287 = vmatpush1.bf16.msra.mxu0 0
  %9288 = vmatprep.mubr.bf16.mxu0 0
  %9289 = vmatmul.mubr.bf16.gmra.mrb[0].mxu0 %v9251
  %v9290 = vpop.f32.mrb[0].mxu0
  %v9291 = vadd.f32 0.0, %v9290
  %v9292 = vpop.f32.mrb[0].mxu0
  %v9293 = vpop.f32.mrb[0].mxu0
  %v9294 = vadd.f32 0.0, %v9293
  %v9295 = vpop.f32.mrb[0].mxu0
  %9296 = vdwg.mxu0
  %9299 = vrot.lane.b32.xlu0 %v9037, 8
  %v9300 = vpop.permute.xlu0 %9299
  %9301 = vrot.lane.b32.xlu0 %v9040, 8
  %v9302 = vpop.permute.xlu0 %9301
  %9307 = vrot.lane.b32.xlu0 %v9164, 16
  %v9308 = vpop.permute.xlu0 %9307
  %9309 = vrot.lane.b32.xlu0 %v9167, 16
  %v9310 = vpop.permute.xlu0 %9309
  %9315 = vrot.lane.b32.xlu0 %v9291, 24
  %v9316 = vpop.permute.xlu0 %9315
  %9317 = vrot.lane.b32.xlu0 %v9294, 24
  %v9318 = vpop.permute.xlu0 %9317
  %v9321 = vsel %vm214, %v8910, %v9300
  %v9322 = vsel %vm214, %v8913, %v9302
  %v9323 = vsel %vm283, %v9321, %v9308
  %v9324 = vsel %vm283, %v9322, %v9310
  %v9325 = vsel %vm8400, %v9323, %v9316
  %v9326 = vsel %vm8400, %v9324, %v9318
  %s9327 = scalar_lea.vmem %s51, 16
  %v9328 = vld [vmem:[%s9327] sm:$0xf]
  %v9329 = vld [vmem:[%s9327 + $0x4] sm:$0xf]
  %v9330 = vld [vmem:[%s9327 + $0x8] sm:$0xf]
  %v9331 = vld [vmem:[%s9327 + $0xc] sm:$0xf]
  %v9332 = vpack.c.bf16 %v9326, %v9325
  %s9333 = scalar_lea.vmem %s53, 1
  %v9334 = vld [vmem:[%s9333] sm:$0x1]
  %v9336 = vlaneseq
  %v9337 = vshrl.u32 %v9336, 7
  %v9338 = vsub.s32 0, %v9337
  %v9339 = vrot.slane %v9334, %v9338
  %v9345 = vunpack.c.l.b16 %v9328
  %v9346 = vunpack.c.l.b16 %v9329
  %v9347 = vunpack.c.l.b16 %v9330
  %v9348 = vunpack.c.l.b16 %v9331
  %v9349 = vpack.c.b16 %v9346, %v9345
  %v9350 = vpack.c.b16 %v9348, %v9347
  %v9354 = vsel %vm7816, %v9332, 0
  %9356 = vmatprep.subr.bf16.mxu0 0
  %9357 = vmatpush1.bf16.msra.mxu0 %v9349
  %9358 = vmatprep.subr.bf16.mxu0 0
  %9359 = vmatpush1.bf16.msra.mxu0 %v9350
  %9360 = vmatprep.subr.bf16.mxu0 0
  %9361 = vmatpush1.bf16.msra.mxu0 0
  %9362 = vmatprep.subr.bf16.mxu0 0
  %9363 = vmatpush1.bf16.msra.mxu0 0
  %9364 = vmatprep.subr.bf16.mxu0 0
  %9365 = vmatpush1.bf16.msra.mxu0 0
  %9366 = vmatprep.subr.bf16.mxu0 0
  %9367 = vmatpush1.bf16.msra.mxu0 0
  %9368 = vmatprep.subr.bf16.mxu0 0
  %9369 = vmatpush1.bf16.msra.mxu0 0
  %9370 = vmatprep.subr.bf16.mxu0 0
  %9371 = vmatpush1.bf16.msra.mxu0 0
  %9372 = vmatprep.subr.bf16.mxu0 0
  %9373 = vmatpush1.bf16.msra.mxu0 0
  %9374 = vmatprep.subr.bf16.mxu0 0
  %9375 = vmatpush1.bf16.msra.mxu0 0
  %9376 = vmatprep.subr.bf16.mxu0 0
  %9377 = vmatpush1.bf16.msra.mxu0 0
  %9378 = vmatprep.subr.bf16.mxu0 0
  %9379 = vmatpush1.bf16.msra.mxu0 0
  %9380 = vmatprep.subr.bf16.mxu0 0
  %9381 = vmatpush1.bf16.msra.mxu0 0
  %9382 = vmatprep.subr.bf16.mxu0 0
  %9383 = vmatpush1.bf16.msra.mxu0 0
  %9384 = vmatprep.subr.bf16.mxu0 0
  %9385 = vmatpush1.bf16.msra.mxu0 0
  %9386 = vmatprep.subr.bf16.mxu0 0
  %9387 = vmatpush1.bf16.msra.mxu0 0
  %9388 = vmatprep.mubr.bf16.mxu0 0
  %9389 = vmatmul.mubr.bf16.gmra.mrb[0].mxu0 %v9354
  %v9390 = vpop.f32.mrb[0].mxu0
  %v9391 = vadd.f32 %v9339, %v9390
  %v9392 = vpop.f32.mrb[0].mxu0
  %v9393 = vpop.f32.mrb[0].mxu0
  %v9394 = vadd.f32 %v9339, %v9393
  %v9395 = vpop.f32.mrb[0].mxu0
  %9396 = vdwg.mxu0
  %v9397 = vadd.f32 %v8717, %v9391
  %v9398 = vadd.f32 %v8718, %v9394
  %s9399 = scalar_lea.vmem %s55, 1
  %v9400 = vld [vmem:[%s9399] sm:$0x1]
  %s9401 = scalar_lea.vmem %s57, 1
  %v9402 = vld [vmem:[%s9401] sm:$0x1]
  %v9403 = vsel %vm7816, %v9397, 0.0
  %9404 = vadd.xlane.f32.xlu0 %v9403
  %v9405 = vpop.xlane.xlu0 %9404
  %v9406 = vsel %vm8478, %v9398, 0.0
  %9407 = vadd.xlane.f32.xlu0 %v9406
  %v9408 = vpop.xlane.xlu0 %9407
  %v9409 = vmul.f32 %v9405, %v8482
  %v9410 = vmul.f32 %v9408, %v8482
  %v9411 = vsub.f32 %v9397, %v9409
  %v9412 = vsub.f32 %v9398, %v9410
  %v9413 = vmul.f32 %v9411, %v9411
  %v9414 = vmul.f32 %v9412, %v9412
  %v9415 = vsel %vm7816, %v9413, 0.0
  %9416 = vadd.xlane.f32.xlu0 %v9415
  %v9417 = vpop.xlane.xlu0 %9416
  %v9418 = vsel %vm8478, %v9414, 0.0
  %9419 = vadd.xlane.f32.xlu0 %v9418
  %v9420 = vpop.xlane.xlu0 %9419
  %v9421 = vmul.f32 %v9417, %v8482
  %v9422 = vmul.f32 %v9420, %v8482
  %v9423 = vadd.f32 %v9421, 1e-05
  %v9424 = vadd.f32 %v9422, 1e-05
  %v9425 = vrsqrt.pop %v9423
  %v9426 = vrsqrt.pop %v9424
  %v9427 = vmul.f32 %v9411, %v9425
  %v9428 = vmul.f32 %v9412, %v9426
  %v9430 = vlaneseq
  %v9431 = vshrl.u32 %v9430, 7
  %v9432 = vsub.s32 0, %v9431
  %v9433 = vrot.slane %v9400, %v9432
  %v9435 = vmul.f32 %v9427, %v9433
  %v9436 = vmul.f32 %v9428, %v9433
  %v9438 = vlaneseq
  %v9439 = vshrl.u32 %v9438, 7
  %v9440 = vsub.s32 0, %v9439
  %v9441 = vrot.slane %v9402, %v9440
  %v9443 = vadd.f32 %v9435, %v9441
  %v9444 = vadd.f32 %v9436, %v9441
  %s9445 = scalar_lea.vmem %s59, 16
  %v9446 = vld [vmem:[%s9445] sm:$0xf]
  %v9447 = vld [vmem:[%s9445 + $0x4] sm:$0xf]
  %v9448 = vld [vmem:[%s9445 + $0x8] sm:$0xf]
  %v9449 = vld [vmem:[%s9445 + $0xc] sm:$0xf]
  %v9450 = vpack.c.bf16 %v9444, %v9443
  %s9451 = scalar_lea.vmem %s61, 1
  %v9452 = vld [vmem:[%s9451] sm:$0x1]
  %v9454 = vlaneseq
  %v9455 = vshrl.u32 %v9454, 7
  %v9456 = vsub.s32 0, %v9455
  %v9457 = vrot.slane %v9452, %v9456
  %v9463 = vunpack.c.l.b16 %v9446
  %v9464 = vunpack.c.l.b16 %v9447
  %v9465 = vunpack.c.l.b16 %v9448
  %v9466 = vunpack.c.l.b16 %v9449
  %v9467 = vpack.c.b16 %v9464, %v9463
  %v9468 = vpack.c.b16 %v9466, %v9465
  %v9472 = vsel %vm7816, %v9450, 0
  %9474 = vmatprep.subr.bf16.mxu0 0
  %9475 = vmatpush1.bf16.msra.mxu0 %v9467
  %9476 = vmatprep.subr.bf16.mxu0 0
  %9477 = vmatpush1.bf16.msra.mxu0 %v9468
  %9478 = vmatprep.subr.bf16.mxu0 0
  %9479 = vmatpush1.bf16.msra.mxu0 0
  %9480 = vmatprep.subr.bf16.mxu0 0
  %9481 = vmatpush1.bf16.msra.mxu0 0
  %9482 = vmatprep.subr.bf16.mxu0 0
  %9483 = vmatpush1.bf16.msra.mxu0 0
  %9484 = vmatprep.subr.bf16.mxu0 0
  %9485 = vmatpush1.bf16.msra.mxu0 0
  %9486 = vmatprep.subr.bf16.mxu0 0
  %9487 = vmatpush1.bf16.msra.mxu0 0
  %9488 = vmatprep.subr.bf16.mxu0 0
  %9489 = vmatpush1.bf16.msra.mxu0 0
  %9490 = vmatprep.subr.bf16.mxu0 0
  %9491 = vmatpush1.bf16.msra.mxu0 0
  %9492 = vmatprep.subr.bf16.mxu0 0
  %9493 = vmatpush1.bf16.msra.mxu0 0
  %9494 = vmatprep.subr.bf16.mxu0 0
  %9495 = vmatpush1.bf16.msra.mxu0 0
  %9496 = vmatprep.subr.bf16.mxu0 0
  %9497 = vmatpush1.bf16.msra.mxu0 0
  %9498 = vmatprep.subr.bf16.mxu0 0
  %9499 = vmatpush1.bf16.msra.mxu0 0
  %9500 = vmatprep.subr.bf16.mxu0 0
  %9501 = vmatpush1.bf16.msra.mxu0 0
  %9502 = vmatprep.subr.bf16.mxu0 0
  %9503 = vmatpush1.bf16.msra.mxu0 0
  %9504 = vmatprep.subr.bf16.mxu0 0
  %9505 = vmatpush1.bf16.msra.mxu0 0
  %9506 = vmatprep.mubr.bf16.mxu0 0
  %9507 = vmatmul.mubr.bf16.gmra.mrb[0].mxu0 %v9472
  %v9508 = vpop.f32.mrb[0].mxu0
  %v9509 = vadd.f32 %v9457, %v9508
  %v9510 = vpop.f32.mrb[0].mxu0
  %v9511 = vpop.f32.mrb[0].mxu0
  %v9512 = vadd.f32 %v9457, %v9511
  %v9513 = vpop.f32.mrb[0].mxu0
  %9514 = vdwg.mxu0
  %v9515 = vmax.f32 %v9509, 0.0
  %v9516 = vmax.f32 %v9512, 0.0
  %s9517 = scalar_lea.vmem %s63, 32
  %v9518 = vld [vmem:[%s9517] sm:$0xf]
  %v9519 = vld [vmem:[%s9517 + $0x4] sm:$0xf]
  %v9520 = vld [vmem:[%s9517 + $0x8] sm:$0xf]
  %v9521 = vld [vmem:[%s9517 + $0xc] sm:$0xf]
  %v9522 = vld [vmem:[%s9517 + $0x10] sm:$0xf]
  %v9523 = vld [vmem:[%s9517 + $0x14] sm:$0xf]
  %v9524 = vld [vmem:[%s9517 + $0x18] sm:$0xf]
  %v9525 = vld [vmem:[%s9517 + $0x1c] sm:$0xf]
  %v9526 = vpack.c.bf16 %v9516, %v9515
  %s9527 = scalar_lea.vmem %s65, 1
  %v9528 = vld [vmem:[%s9527] sm:$0x1]
  %v9530 = vlaneseq
  %v9531 = vshrl.u32 %v9530, 7
  %v9532 = vsub.s32 0, %v9531
  %v9533 = vrot.slane %v9528, %v9532
  %v9543 = vunpack.c.l.b16 %v9518
  %v9544 = vunpack.c.l.b16 %v9519
  %v9545 = vunpack.c.l.b16 %v9520
  %v9546 = vunpack.c.l.b16 %v9521
  %v9547 = vunpack.c.l.b16 %v9522
  %v9548 = vunpack.c.l.b16 %v9523
  %v9549 = vunpack.c.l.b16 %v9524
  %v9550 = vunpack.c.l.b16 %v9525
  %v9551 = vpack.c.b16 %v9544, %v9543
  %v9552 = vpack.c.b16 %v9546, %v9545
  %v9553 = vpack.c.b16 %v9548, %v9547
  %v9554 = vpack.c.b16 %v9550, %v9549
  %v9560 = vsel %vm2648, %v9526, 0
  %9562 = vmatprep.subr.bf16.mxu0 0
  %9563 = vmatpush1.bf16.msra.mxu0 %v9551
  %9564 = vmatprep.subr.bf16.mxu0 0
  %9565 = vmatpush1.bf16.msra.mxu0 %v9552
  %9566 = vmatprep.subr.bf16.mxu0 0
  %9567 = vmatpush1.bf16.msra.mxu0 %v9553
  %9568 = vmatprep.subr.bf16.mxu0 0
  %9569 = vmatpush1.bf16.msra.mxu0 %v9554
  %9570 = vmatprep.subr.bf16.mxu0 0
  %9571 = vmatpush1.bf16.msra.mxu0 0
  %9572 = vmatprep.subr.bf16.mxu0 0
  %9573 = vmatpush1.bf16.msra.mxu0 0
  %9574 = vmatprep.subr.bf16.mxu0 0
  %9575 = vmatpush1.bf16.msra.mxu0 0
  %9576 = vmatprep.subr.bf16.mxu0 0
  %9577 = vmatpush1.bf16.msra.mxu0 0
  %9578 = vmatprep.subr.bf16.mxu0 0
  %9579 = vmatpush1.bf16.msra.mxu0 0
  %9580 = vmatprep.subr.bf16.mxu0 0
  %9581 = vmatpush1.bf16.msra.mxu0 0
  %9582 = vmatprep.subr.bf16.mxu0 0
  %9583 = vmatpush1.bf16.msra.mxu0 0
  %9584 = vmatprep.subr.bf16.mxu0 0
  %9585 = vmatpush1.bf16.msra.mxu0 0
  %9586 = vmatprep.subr.bf16.mxu0 0
  %9587 = vmatpush1.bf16.msra.mxu0 0
  %9588 = vmatprep.subr.bf16.mxu0 0
  %9589 = vmatpush1.bf16.msra.mxu0 0
  %9590 = vmatprep.subr.bf16.mxu0 0
  %9591 = vmatpush1.bf16.msra.mxu0 0
  %9592 = vmatprep.subr.bf16.mxu0 0
  %9593 = vmatpush1.bf16.msra.mxu0 0
  %9594 = vmatprep.mubr.bf16.mxu0 0
  %9595 = vmatmul.mubr.bf16.gmra.mrb[0].mxu0 %v9560
  %v9596 = vpop.f32.mrb[0].mxu0
  %v9597 = vadd.f32 %v9533, %v9596
  %v9598 = vpop.f32.mrb[0].mxu0
  %v9599 = vpop.f32.mrb[0].mxu0
  %v9600 = vadd.f32 %v9533, %v9599
  %v9601 = vpop.f32.mrb[0].mxu0
  %9602 = vdwg.mxu0
  %v9603 = vadd.f32 %v9443, %v9597
  %v9604 = vadd.f32 %v9444, %v9600
  %s9605 = scalar_lea.vmem %s67, 1
  %v9606 = vld [vmem:[%s9605] sm:$0x1]
  %s9607 = scalar_lea.vmem %s69, 1
  %v9608 = vld [vmem:[%s9607] sm:$0x1]
  %v9609 = vsel %vm7816, %v9603, 0.0
  %9610 = vadd.xlane.f32.xlu0 %v9609
  %v9611 = vpop.xlane.xlu0 %9610
  %v9612 = vsel %vm8478, %v9604, 0.0
  %9613 = vadd.xlane.f32.xlu0 %v9612
  %v9614 = vpop.xlane.xlu0 %9613
  %v9615 = vmul.f32 %v9611, %v8482
  %v9616 = vmul.f32 %v9614, %v8482
  %v9617 = vsub.f32 %v9603, %v9615
  %v9618 = vsub.f32 %v9604, %v9616
  %v9619 = vmul.f32 %v9617, %v9617
  %v9620 = vmul.f32 %v9618, %v9618
  %v9621 = vsel %vm7816, %v9619, 0.0
  %9622 = vadd.xlane.f32.xlu0 %v9621
  %v9623 = vpop.xlane.xlu0 %9622
  %v9624 = vsel %vm8478, %v9620, 0.0
  %9625 = vadd.xlane.f32.xlu0 %v9624
  %v9626 = vpop.xlane.xlu0 %9625
  %v9627 = vmul.f32 %v9623, %v8482
  %v9628 = vmul.f32 %v9626, %v8482
  %v9629 = vadd.f32 %v9627, 1e-05
  %v9630 = vadd.f32 %v9628, 1e-05
  %v9631 = vrsqrt.pop %v9629
  %v9632 = vrsqrt.pop %v9630
  %v9633 = vmul.f32 %v9617, %v9631
  %v9634 = vmul.f32 %v9618, %v9632
  %v9636 = vlaneseq
  %v9637 = vshrl.u32 %v9636, 7
  %v9638 = vsub.s32 0, %v9637
  %v9639 = vrot.slane %v9606, %v9638
  %v9641 = vmul.f32 %v9633, %v9639
  %v9642 = vmul.f32 %v9634, %v9639
  %v9644 = vlaneseq
  %v9645 = vshrl.u32 %v9644, 7
  %v9646 = vsub.s32 0, %v9645
  %v9647 = vrot.slane %v9608, %v9646
  %v9649 = vadd.f32 %v9641, %v9647
  %v9650 = vadd.f32 %v9642, %v9647
  %v9651 = vld [vmem:[%s71] sm:$0xff]
  %v9652 = vld [vmem:[%s71 + $0x8] sm:$0xff]
  %v9653 = vld [vmem:[%s71 + $0x10] sm:$0xf]
  %v9654 = vld [vmem:[%s71 + $0x14] sm:$0xff]
  %v9655 = vld [vmem:[%s71 + $0x1c] sm:$0xff]
  %v9656 = vld [vmem:[%s71 + $0x24] sm:$0xf]
  %v9657 = vld [vmem:[%s71 + $0x28] sm:$0xff]
  %v9658 = vld [vmem:[%s71 + $0x30] sm:$0xff]
  %v9659 = vld [vmem:[%s71 + $0x38] sm:$0xf]
  %v9660 = vld [vmem:[%s71 + $0x3c] sm:$0xff]
  %v9661 = vld [vmem:[%s71 + $0x44] sm:$0xff]
  %v9662 = vld [vmem:[%s71 + $0x4c] sm:$0xf]
  %v9663 = vpack.c.bf16 %v9650, %v9649
  %v9676 = vunpack.c.l.b16 %v9651
  %v9677 = vunpack.c.h.b16 %v9651
  %v9678 = vunpack.c.l.b16 %v9652
  %v9679 = vunpack.c.h.b16 %v9652
  %v9680 = vunpack.c.l.b16 %v9653
  %v9681 = vunpack.c.l.b16 %v9654
  %v9682 = vunpack.c.h.b16 %v9654
  %v9683 = vunpack.c.l.b16 %v9655
  %v9684 = vunpack.c.h.b16 %v9655
  %v9685 = vunpack.c.l.b16 %v9656
  %v9686 = vunpack.c.l.b16 %v9657
  %v9687 = vunpack.c.h.b16 %v9657
  %v9688 = vunpack.c.l.b16 %v9658
  %v9689 = vunpack.c.h.b16 %v9658
  %v9690 = vunpack.c.l.b16 %v9659
  %v9691 = vunpack.c.l.b16 %v9660
  %v9692 = vunpack.c.h.b16 %v9660
  %v9693 = vunpack.c.l.b16 %v9661
  %v9694 = vunpack.c.h.b16 %v9661
  %v9695 = vunpack.c.l.b16 %v9662
  %v9696 = vpack.c.b16 %v9681, %v9676
  %v9697 = vpack.c.b16 %v9682, %v9677
  %v9698 = vpack.c.b16 %v9683, %v9678
  %v9699 = vpack.c.b16 %v9684, %v9679
  %v9700 = vpack.c.b16 %v9685, %v9680
  %v9701 = vpack.c.b16 %v9691, %v9686
  %v9702 = vpack.c.b16 %v9692, %v9687
  %v9703 = vpack.c.b16 %v9693, %v9688
  %v9704 = vpack.c.b16 %v9694, %v9689
  %v9705 = vpack.c.b16 %v9695, %v9690
  %v9717 = vsel %vm7816, %v9663, 0
  %9719 = vmatprep.subr.bf16.mxu0 %v9697
  %9720 = vmatpush1.bf16.msra.mxu0 %v9696
  %9721 = vmatprep.subr.bf16.mxu0 %v9702
  %9722 = vmatpush1.bf16.msra.mxu0 %v9701
  %9723 = vmatprep.subr.bf16.mxu0 0
  %9724 = vmatpush1.bf16.msra.mxu0 0
  %9725 = vmatprep.subr.bf16.mxu0 0
  %9726 = vmatpush1.bf16.msra.mxu0 0
  %9727 = vmatprep.subr.bf16.mxu0 0
  %9728 = vmatpush1.bf16.msra.mxu0 0
  %9729 = vmatprep.subr.bf16.mxu0 0
  %9730 = vmatpush1.bf16.msra.mxu0 0
  %9731 = vmatprep.subr.bf16.mxu0 0
  %9732 = vmatpush1.bf16.msra.mxu0 0
  %9733 = vmatprep.subr.bf16.mxu0 0
  %9734 = vmatpush1.bf16.msra.mxu0 0
  %9735 = vmatprep.subr.bf16.mxu0 0
  %9736 = vmatpush1.bf16.msra.mxu0 0
  %9737 = vmatprep.subr.bf16.mxu0 0
  %9738 = vmatpush1.bf16.msra.mxu0 0
  %9739 = vmatprep.subr.bf16.mxu0 0
  %9740 = vmatpush1.bf16.msra.mxu0 0
  %9741 = vmatprep.subr.bf16.mxu0 0
  %9742 = vmatpush1.bf16.msra.mxu0 0
  %9743 = vmatprep.subr.bf16.mxu0 0
  %9744 = vmatpush1.bf16.msra.mxu0 0
  %9745 = vmatprep.subr.bf16.mxu0 0
  %9746 = vmatpush1.bf16.msra.mxu0 0
  %9747 = vmatprep.subr.bf16.mxu0 0
  %9748 = vmatpush1.bf16.msra.mxu0 0
  %9749 = vmatprep.subr.bf16.mxu0 0
  %9750 = vmatpush1.bf16.msra.mxu0 0
  %9751 = vmatprep.mubr.bf16.mxu0 0
  %9752 = vmatmul.mubr.bf16.gmra.mrb[0].mxu0 %v9717
  %v9753 = vpop.f32.mrb[0].mxu0
  %v9754 = vadd.f32 0.0, %v9753
  %v9755 = vpop.f32.mrb[0].mxu0
  %v9756 = vadd.f32 0.0, %v9755
  %v9757 = vpop.f32.mrb[0].mxu0
  %v9758 = vadd.f32 0.0, %v9757
  %v9759 = vpop.f32.mrb[0].mxu0
  %v9760 = vadd.f32 0.0, %v9759
  %9761 = vdwg.mxu0
  %9762 = vmatprep.subr.bf16.mxu0 %v9699
  %9763 = vmatpush1.bf16.msra.mxu0 %v9698
  %9764 = vmatprep.subr.bf16.mxu0 %v9704
  %9765 = vmatpush1.bf16.msra.mxu0 %v9703
  %9766 = vmatprep.subr.bf16.mxu0 0
  %9767 = vmatpush1.bf16.msra.mxu0 0
  %9768 = vmatprep.subr.bf16.mxu0 0
  %9769 = vmatpush1.bf16.msra.mxu0 0
  %9770 = vmatprep.subr.bf16.mxu0 0
  %9771 = vmatpush1.bf16.msra.mxu0 0
  %9772 = vmatprep.subr.bf16.mxu0 0
  %9773 = vmatpush1.bf16.msra.mxu0 0
  %9774 = vmatprep.subr.bf16.mxu0 0
  %9775 = vmatpush1.bf16.msra.mxu0 0
  %9776 = vmatprep.subr.bf16.mxu0 0
  %9777 = vmatpush1.bf16.msra.mxu0 0
  %9778 = vmatprep.subr.bf16.mxu0 0
  %9779 = vmatpush1.bf16.msra.mxu0 0
  %9780 = vmatprep.subr.bf16.mxu0 0
  %9781 = vmatpush1.bf16.msra.mxu0 0
  %9782 = vmatprep.subr.bf16.mxu0 0
  %9783 = vmatpush1.bf16.msra.mxu0 0
  %9784 = vmatprep.subr.bf16.mxu0 0
  %9785 = vmatpush1.bf16.msra.mxu0 0
  %9786 = vmatprep.subr.bf16.mxu0 0
  %9787 = vmatpush1.bf16.msra.mxu0 0
  %9788 = vmatprep.subr.bf16.mxu0 0
  %9789 = vmatpush1.bf16.msra.mxu0 0
  %9790 = vmatprep.subr.bf16.mxu0 0
  %9791 = vmatpush1.bf16.msra.mxu0 0
  %9792 = vmatprep.subr.bf16.mxu0 0
  %9793 = vmatpush1.bf16.msra.mxu0 0
  %9794 = vmatprep.mubr.bf16.mxu0 0
  %9795 = vmatmul.mubr.bf16.gmra.mrb[0].mxu0 %v9717
  %v9796 = vpop.f32.mrb[0].mxu0
  %v9797 = vadd.f32 0.0, %v9796
  %v9798 = vpop.f32.mrb[0].mxu0
  %v9799 = vadd.f32 0.0, %v9798
  %v9800 = vpop.f32.mrb[0].mxu0
  %v9801 = vadd.f32 0.0, %v9800
  %v9802 = vpop.f32.mrb[0].mxu0
  %v9803 = vadd.f32 0.0, %v9802
  %9804 = vdwg.mxu0
  %9805 = vmatprep.subr.bf16.mxu0 0
  %9806 = vmatpush1.bf16.msra.mxu0 %v9700
  %9807 = vmatprep.subr.bf16.mxu0 0
  %9808 = vmatpush1.bf16.msra.mxu0 %v9705
  %9809 = vmatprep.subr.bf16.mxu0 0
  %9810 = vmatpush1.bf16.msra.mxu0 0
  %9811 = vmatprep.subr.bf16.mxu0 0
  %9812 = vmatpush1.bf16.msra.mxu0 0
  %9813 = vmatprep.subr.bf16.mxu0 0
  %9814 = vmatpush1.bf16.msra.mxu0 0
  %9815 = vmatprep.subr.bf16.mxu0 0
  %9816 = vmatpush1.bf16.msra.mxu0 0
  %9817 = vmatprep.subr.bf16.mxu0 0
  %9818 = vmatpush1.bf16.msra.mxu0 0
  %9819 = vmatprep.subr.bf16.mxu0 0
  %9820 = vmatpush1.bf16.msra.mxu0 0
  %9821 = vmatprep.subr.bf16.mxu0 0
  %9822 = vmatpush1.bf16.msra.mxu0 0
  %9823 = vmatprep.subr.bf16.mxu0 0
  %9824 = vmatpush1.bf16.msra.mxu0 0
  %9825 = vmatprep.subr.bf16.mxu0 0
  %9826 = vmatpush1.bf16.msra.mxu0 0
  %9827 = vmatprep.subr.bf16.mxu0 0
  %9828 = vmatpush1.bf16.msra.mxu0 0
  %9829 = vmatprep.subr.bf16.mxu0 0
  %9830 = vmatpush1.bf16.msra.mxu0 0
  %9831 = vmatprep.subr.bf16.mxu0 0
  %9832 = vmatpush1.bf16.msra.mxu0 0
  %9833 = vmatprep.subr.bf16.mxu0 0
  %9834 = vmatpush1.bf16.msra.mxu0 0
  %9835 = vmatprep.subr.bf16.mxu0 0
  %9836 = vmatpush1.bf16.msra.mxu0 0
  %9837 = vmatprep.mubr.bf16.mxu0 0
  %9838 = vmatmul.mubr.bf16.gmra.mrb[0].mxu0 %v9717
  %v9839 = vpop.f32.mrb[0].mxu0
  %v9840 = vadd.f32 0.0, %v9839
  %v9841 = vpop.f32.mrb[0].mxu0
  %v9842 = vpop.f32.mrb[0].mxu0
  %v9843 = vadd.f32 0.0, %v9842
  %v9844 = vpop.f32.mrb[0].mxu0
  %9845 = vdwg.mxu0
  %v9846 = vld [vmem:[%s73] sm:$0xff]
  %v9847 = vld [vmem:[%s73 + $0x8] sm:$0x3]
  %9849 = vset.pattern.permute.xlu0 0
  %9850 = vperm.xlu0 %9849, %v9846
  %v9851 = vpop.permute.xlu0 %9850
  %9854 = vset.pattern.permute.xlu0 0
  %9855 = vperm.xlu0 %9854, %v9847
  %v9856 = vpop.permute.xlu0 %9855
  %v9858 = vmul.f32 %v9851, %v9754
  %v9859 = vmul.f32 %v9856, %v9758
  %s9860 = scalar_lea.vmem %s73, 16
  %v9861 = vld [vmem:[%s9860] sm:$0xff]
  %v9862 = vld [vmem:[%s9860 + $0x8] sm:$0x3]
  %9864 = vset.pattern.permute.xlu0 0
  %9865 = vperm.xlu0 %9864, %v9861
  %v9866 = vpop.permute.xlu0 %9865
  %9869 = vset.pattern.permute.xlu0 0
  %9870 = vperm.xlu0 %9869, %v9862
  %v9871 = vpop.permute.xlu0 %9870
  %v9873 = vmul.f32 %v9866, %v9756
  %v9874 = vmul.f32 %v9871, %v9760
  %v9875 = vadd.f32 %v9858, %v9873
  %v9876 = vadd.f32 %v9859, %v9874
  %s9877 = scalar_lea.vmem %s73, 32
  %v9878 = vld [vmem:[%s9877] sm:$0xff]
  %v9879 = vld [vmem:[%s9877 + $0x8] sm:$0x3]
  %9881 = vset.pattern.permute.xlu0 0
  %9882 = vperm.xlu0 %9881, %v9878
  %v9883 = vpop.permute.xlu0 %9882
  %9886 = vset.pattern.permute.xlu0 0
  %9887 = vperm.xlu0 %9886, %v9879
  %v9888 = vpop.permute.xlu0 %9887
  %v9890 = vmul.f32 %v9883, %v9797
  %v9891 = vmul.f32 %v9888, %v9801
  %v9892 = vadd.f32 %v9875, %v9890
  %v9893 = vadd.f32 %v9876, %v9891
  %s9894 = scalar_lea.vmem %s73, 48
  %v9895 = vld [vmem:[%s9894] sm:$0xff]
  %v9896 = vld [vmem:[%s9894 + $0x8] sm:$0x3]
  %9898 = vset.pattern.permute.xlu0 0
  %9899 = vperm.xlu0 %9898, %v9895
  %v9900 = vpop.permute.xlu0 %9899
  %9903 = vset.pattern.permute.xlu0 0
  %9904 = vperm.xlu0 %9903, %v9896
  %v9905 = vpop.permute.xlu0 %9904
  %v9907 = vmul.f32 %v9900, %v9799
  %v9908 = vmul.f32 %v9905, %v9803
  %v9909 = vadd.f32 %v9892, %v9907
  %v9910 = vadd.f32 %v9893, %v9908
  %s9911 = scalar_lea.vmem %s73, 64
  %v9912 = vld [vmem:[%s9911] sm:$0xff]
  %v9913 = vld [vmem:[%s9911 + $0x8] sm:$0x3]
  %9915 = vset.pattern.permute.xlu0 0
  %9916 = vperm.xlu0 %9915, %v9912
  %v9917 = vpop.permute.xlu0 %9916
  %9920 = vset.pattern.permute.xlu0 0
  %9921 = vperm.xlu0 %9920, %v9913
  %v9922 = vpop.permute.xlu0 %9921
  %v9924 = vmul.f32 %v9917, %v9840
  %v9925 = vmul.f32 %v9922, %v9843
  %v9926 = vadd.f32 %v9909, %v9924
  %v9927 = vadd.f32 %v9910, %v9925
  %v9928 = vld [vmem:[%s75] sm:$0x3]
  %v9929 = vpack.c.bf16 %v9928, %v9928
  %v9930 = vpack.c.bf16 %v9927, %v9926
  %v9931 = vld [vmem:[%s77] sm:$0x1]
  %v9933 = vlaneseq
  %v9934 = vshrl.u32 %v9933, 7
  %v9935 = vsub.s32 0, %v9934
  %v9936 = vrot.slane %v9931, %v9935
  %v9939 = vsel %vm7916, %v9929, 0
  %v9942 = vsel %vm7946, %v9930, 0
  %9944 = vmatprep.subr.bf16.mxu0 0
  %9945 = vmatpush1.bf16.msra.mxu0 %v9942
  %9946 = vmatprep.subr.bf16.mxu0 0
  %9947 = vmatpush1.bf16.msra.mxu0 0
  %9948 = vmatprep.subr.bf16.mxu0 0
  %9949 = vmatpush1.bf16.msra.mxu0 0
  %9950 = vmatprep.subr.bf16.mxu0 0
  %9951 = vmatpush1.bf16.msra.mxu0 0
  %9952 = vmatprep.subr.bf16.mxu0 0
  %9953 = vmatpush1.bf16.msra.mxu0 0
  %9954 = vmatprep.subr.bf16.mxu0 0
  %9955 = vmatpush1.bf16.msra.mxu0 0
  %9956 = vmatprep.subr.bf16.mxu0 0
  %9957 = vmatpush1.bf16.msra.mxu0 0
  %9958 = vmatprep.subr.bf16.mxu0 0
  %9959 = vmatpush1.bf16.msra.mxu0 0
  %9960 = vmatprep.subr.bf16.mxu0 0
  %9961 = vmatpush1.bf16.msra.mxu0 0
  %9962 = vmatprep.subr.bf16.mxu0 0
  %9963 = vmatpush1.bf16.msra.mxu0 0
  %9964 = vmatprep.subr.bf16.mxu0 0
  %9965 = vmatpush1.bf16.msra.mxu0 0
  %9966 = vmatprep.subr.bf16.mxu0 0
  %9967 = vmatpush1.bf16.msra.mxu0 0
  %9968 = vmatprep.subr.bf16.mxu0 0
  %9969 = vmatpush1.bf16.msra.mxu0 0
  %9970 = vmatprep.subr.bf16.mxu0 0
  %9971 = vmatpush1.bf16.msra.mxu0 0
  %9972 = vmatprep.subr.bf16.mxu0 0
  %9973 = vmatpush1.bf16.msra.mxu0 0
  %9974 = vmatprep.subr.bf16.mxu0 0
  %9975 = vmatpush1.bf16.msra.mxu0 0
  %9976 = vmatprep.mubr.bf16.mxu0 0
  %9977 = vmatmul.mubr.bf16.gmra.mrb[0].mxu0 %v9939
  %v9978 = vpop.f32.mrb[0].mxu0
  %v9979 = vadd.f32 %v9936, %v9978
  %v9980 = vpop.f32.mrb[0].mxu0
  %v9981 = vpop.f32.mrb[0].mxu0
  %v9982 = vpop.f32.mrb[0].mxu0
  %9983 = vdwg.mxu0
  %v9984 = vld [vmem:[%s5] sm:$0x3]
  %v9985 = vld [vmem:[%s79] sm:$0xf]
  %v9986 = vld [vmem:[%s81] sm:$0x1]
  %v9987 = vld [vmem:[%s83] sm:$0xf]
  %v9988 = vld [vmem:[%s83 + $0x4] sm:$0xf]
  %v9989 = vld [vmem:[%s85] sm:$0x1]
  %v9990 = vld [vmem:[%s87] sm:$0xff]
  %v9991 = vld [vmem:[%s87 + $0x8] sm:$0xf]
  %v9992 = vld [vmem:[%s87 + $0xc] sm:$0xff]
  %v9993 = vld [vmem:[%s87 + $0x14] sm:$0xf]
  %v9994 = vld [vmem:[%s89] sm:$0x7]
  %v9995 = vpack.c.bf16 %v9984, %v9984
  %v9997 = vlaneseq
  %v9998 = vshrl.u32 %v9997, 7
  %v9999 = vsub.s32 0, %v9998
  %v10000 = vrot.slane %v9986, %v9999
  %v10003 = vsel %vm214, %v9995, 0
  %v10006 = vsel %vm218, %v9985, 0
  %10008 = vmatprep.subr.bf16.mxu0 0
  %10009 = vmatpush1.bf16.msra.mxu0 %v10006
  %10010 = vmatprep.subr.bf16.mxu0 0
  %10011 = vmatpush1.bf16.msra.mxu0 0
  %10012 = vmatprep.subr.bf16.mxu0 0
  %10013 = vmatpush1.bf16.msra.mxu0 0
  %10014 = vmatprep.subr.bf16.mxu0 0
  %10015 = vmatpush1.bf16.msra.mxu0 0
  %10016 = vmatprep.subr.bf16.mxu0 0
  %10017 = vmatpush1.bf16.msra.mxu0 0
  %10018 = vmatprep.subr.bf16.mxu0 0
  %10019 = vmatpush1.bf16.msra.mxu0 0
  %10020 = vmatprep.subr.bf16.mxu0 0
  %10021 = vmatpush1.bf16.msra.mxu0 0
  %10022 = vmatprep.subr.bf16.mxu0 0
  %10023 = vmatpush1.bf16.msra.mxu0 0
  %10024 = vmatprep.subr.bf16.mxu0 0
  %10025 = vmatpush1.bf16.msra.mxu0 0
  %10026 = vmatprep.subr.bf16.mxu0 0
  %10027 = vmatpush1.bf16.msra.mxu0 0
  %10028 = vmatprep.subr.bf16.mxu0 0
  %10029 = vmatpush1.bf16.msra.mxu0 0
  %10030 = vmatprep.subr.bf16.mxu0 0
  %10031 = vmatpush1.bf16.msra.mxu0 0
  %10032 = vmatprep.subr.bf16.mxu0 0
  %10033 = vmatpush1.bf16.msra.mxu0 0
  %10034 = vmatprep.subr.bf16.mxu0 0
  %10035 = vmatpush1.bf16.msra.mxu0 0
  %10036 = vmatprep.subr.bf16.mxu0 0
  %10037 = vmatpush1.bf16.msra.mxu0 0
  %10038 = vmatprep.subr.bf16.mxu0 0
  %10039 = vmatpush1.bf16.msra.mxu0 0
  %10040 = vmatprep.mubr.bf16.mxu0 0
  %10041 = vmatmul.mubr.bf16.gmra.mrb[0].mxu0 %v10003
  %v10042 = vpop.f32.mrb[0].mxu0
  %v10043 = vadd.f32 %v10000, %v10042
  %v10044 = vpop.f32.mrb[0].mxu0
  %v10045 = vpop.f32.mrb[0].mxu0
  %v10046 = vpop.f32.mrb[0].mxu0
  %10047 = vdwg.mxu0
  %v10048 = vmin.f32 %v10043, 0.0
  %v10049 = vmul.f32 %v10048, 1.442695
  %v10050 = vpow.pop %v10049
  %v10051 = vsub.f32 %v10050, 1.0
  %v10052 = vmul.f32 %v10051, 1.6732632
  %vm10053 = vcmp.gt.f32.partialorder %v10043, 0.0
  %v10054 = vsel %vm10053, %v10043, %v10052
  %v10055 = vmul.f32 %v10054, 1.050701
  %v10056 = vpack.c.bf16 %v10055, %v10055
  %v10058 = vlaneseq
  %v10059 = vshrl.u32 %v10058, 7
  %v10060 = vsub.s32 0, %v10059
  %v10061 = vrot.slane %v9989, %v10060
  %v10065 = vunpack.c.l.b16 %v9987
  %v10066 = vunpack.c.l.b16 %v9988
  %v10067 = vpack.c.b16 %v10066, %v10065
  %v10070 = vsel %vm283, %v10056, 0
  %10072 = vmatprep.subr.bf16.mxu0 0
  %10073 = vmatpush1.bf16.msra.mxu0 %v10067
  %10074 = vmatprep.subr.bf16.mxu0 0
  %10075 = vmatpush1.bf16.msra.mxu0 0
  %10076 = vmatprep.subr.bf16.mxu0 0
  %10077 = vmatpush1.bf16.msra.mxu0 0
  %10078 = vmatprep.subr.bf16.mxu0 0
  %10079 = vmatpush1.bf16.msra.mxu0 0
  %10080 = vmatprep.subr.bf16.mxu0 0
  %10081 = vmatpush1.bf16.msra.mxu0 0
  %10082 = vmatprep.subr.bf16.mxu0 0
  %10083 = vmatpush1.bf16.msra.mxu0 0
  %10084 = vmatprep.subr.bf16.mxu0 0
  %10085 = vmatpush1.bf16.msra.mxu0 0
  %10086 = vmatprep.subr.bf16.mxu0 0
  %10087 = vmatpush1.bf16.msra.mxu0 0
  %10088 = vmatprep.subr.bf16.mxu0 0
  %10089 = vmatpush1.bf16.msra.mxu0 0
  %10090 = vmatprep.subr.bf16.mxu0 0
  %10091 = vmatpush1.bf16.msra.mxu0 0
  %10092 = vmatprep.subr.bf16.mxu0 0
  %10093 = vmatpush1.bf16.msra.mxu0 0
  %10094 = vmatprep.subr.bf16.mxu0 0
  %10095 = vmatpush1.bf16.msra.mxu0 0
  %10096 = vmatprep.subr.bf16.mxu0 0
  %10097 = vmatpush1.bf16.msra.mxu0 0
  %10098 = vmatprep.subr.bf16.mxu0 0
  %10099 = vmatpush1.bf16.msra.mxu0 0
  %10100 = vmatprep.subr.bf16.mxu0 0
  %10101 = vmatpush1.bf16.msra.mxu0 0
  %10102 = vmatprep.subr.bf16.mxu0 0
  %10103 = vmatpush1.bf16.msra.mxu0 0
  %10104 = vmatprep.mubr.bf16.mxu0 0
  %10105 = vmatmul.mubr.bf16.gmra.mrb[0].mxu0 %v10070
  %v10106 = vpop.f32.mrb[0].mxu0
  %v10107 = vadd.f32 %v10061, %v10106
  %v10108 = vpop.f32.mrb[0].mxu0
  %v10109 = vpop.f32.mrb[0].mxu0
  %v10110 = vpop.f32.mrb[0].mxu0
  %10111 = vdwg.mxu0
  %vm10112 = vcmask 17408
  %v10113 = vsel %vm10112, %v10107, -inf
  %10114 = vmax.xlane.f32.xlu0 %v10113
  %v10115 = vpop.xlane.xlu0 %10114
  %v10116 = vsub.f32 %v10107, %v10115
  %v10117 = vmul.f32 %v10116, 1.442695
  %v10118 = vpow.pop %v10117
  %v10119 = vsel %vm10112, %v10118, 0.0
  %10120 = vadd.xlane.f32.xlu0 %v10119
  %v10121 = vpop.xlane.xlu0 %10120
  %v10122 = vrcp.pop %v10121
  %v10123 = vmul.f32 %v10118, %v10122
  %v10125 = vlaneseq
  %v10126 = vshrl.u32 %v10125, 7
  %v10127 = vsub.s32 0, %v10126
  %v10128 = vrot.slane %v9994, %v10127
  %v10129 = vlaneseq
  %v10130 = vshrl.u32 %v10129, 7
  %v10131 = vsub.s32 1, %v10130
  %v10132 = vrot.slane %v9994, %v10131
  %v10133 = vlaneseq
  %v10134 = vshrl.u32 %v10133, 7
  %v10135 = vsub.s32 2, %v10134
  %v10136 = vrot.slane %v9994, %v10135
  %v10144 = vunpack.c.l.b16 %v9990
  %v10145 = vunpack.c.h.b16 %v9990
  %v10146 = vunpack.c.l.b16 %v9991
  %v10147 = vunpack.c.l.b16 %v9992
  %v10148 = vunpack.c.h.b16 %v9992
  %v10149 = vunpack.c.l.b16 %v9993
  %v10150 = vpack.c.b16 %v10147, %v10144
  %v10151 = vpack.c.b16 %v10148, %v10145
  %v10152 = vpack.c.b16 %v10149, %v10146
  %10156 = vmatprep.subr.bf16.mxu0 %v10151
  %10157 = vmatpush1.bf16.msra.mxu0 %v10150
  %10158 = vmatprep.subr.bf16.mxu0 0
  %10159 = vmatpush1.bf16.msra.mxu0 0
  %10160 = vmatprep.subr.bf16.mxu0 0
  %10161 = vmatpush1.bf16.msra.mxu0 0
  %10162 = vmatprep.subr.bf16.mxu0 0
  %10163 = vmatpush1.bf16.msra.mxu0 0
  %10164 = vmatprep.subr.bf16.mxu0 0
  %10165 = vmatpush1.bf16.msra.mxu0 0
  %10166 = vmatprep.subr.bf16.mxu0 0
  %10167 = vmatpush1.bf16.msra.mxu0 0
  %10168 = vmatprep.subr.bf16.mxu0 0
  %10169 = vmatpush1.bf16.msra.mxu0 0
  %10170 = vmatprep.subr.bf16.mxu0 0
  %10171 = vmatpush1.bf16.msra.mxu0 0
  %10172 = vmatprep.subr.bf16.mxu0 0
  %10173 = vmatpush1.bf16.msra.mxu0 0
  %10174 = vmatprep.subr.bf16.mxu0 0
  %10175 = vmatpush1.bf16.msra.mxu0 0
  %10176 = vmatprep.subr.bf16.mxu0 0
  %10177 = vmatpush1.bf16.msra.mxu0 0
  %10178 = vmatprep.subr.bf16.mxu0 0
  %10179 = vmatpush1.bf16.msra.mxu0 0
  %10180 = vmatprep.subr.bf16.mxu0 0
  %10181 = vmatpush1.bf16.msra.mxu0 0
  %10182 = vmatprep.subr.bf16.mxu0 0
  %10183 = vmatpush1.bf16.msra.mxu0 0
  %10184 = vmatprep.subr.bf16.mxu0 0
  %10185 = vmatpush1.bf16.msra.mxu0 0
  %10186 = vmatprep.subr.bf16.mxu0 0
  %10187 = vmatpush1.bf16.msra.mxu0 0
  %10188 = vmatprep.mubr.bf16.mxu0 0
  %10189 = vmatmul.mubr.bf16.gmra.mrb[0].mxu0 %v10070
  %v10190 = vpop.f32.mrb[0].mxu0
  %v10191 = vadd.f32 %v10128, %v10190
  %v10192 = vpop.f32.mrb[0].mxu0
  %v10193 = vadd.f32 %v10132, %v10192
  %v10194 = vpop.f32.mrb[0].mxu0
  %v10195 = vpop.f32.mrb[0].mxu0
  %10196 = vdwg.mxu0
  %10197 = vmatprep.subr.bf16.mxu0 0
  %10198 = vmatpush1.bf16.msra.mxu0 %v10152
  %10199 = vmatprep.subr.bf16.mxu0 0
  %10200 = vmatpush1.bf16.msra.mxu0 0
  %10201 = vmatprep.subr.bf16.mxu0 0
  %10202 = vmatpush1.bf16.msra.mxu0 0
  %10203 = vmatprep.subr.bf16.mxu0 0
  %10204 = vmatpush1.bf16.msra.mxu0 0
  %10205 = vmatprep.subr.bf16.mxu0 0
  %10206 = vmatpush1.bf16.msra.mxu0 0
  %10207 = vmatprep.subr.bf16.mxu0 0
  %10208 = vmatpush1.bf16.msra.mxu0 0
  %10209 = vmatprep.subr.bf16.mxu0 0
  %10210 = vmatpush1.bf16.msra.mxu0 0
  %10211 = vmatprep.subr.bf16.mxu0 0
  %10212 = vmatpush1.bf16.msra.mxu0 0
  %10213 = vmatprep.subr.bf16.mxu0 0
  %10214 = vmatpush1.bf16.msra.mxu0 0
  %10215 = vmatprep.subr.bf16.mxu0 0
  %10216 = vmatpush1.bf16.msra.mxu0 0
  %10217 = vmatprep.subr.bf16.mxu0 0
  %10218 = vmatpush1.bf16.msra.mxu0 0
  %10219 = vmatprep.subr.bf16.mxu0 0
  %10220 = vmatpush1.bf16.msra.mxu0 0
  %10221 = vmatprep.subr.bf16.mxu0 0
  %10222 = vmatpush1.bf16.msra.mxu0 0
  %10223 = vmatprep.subr.bf16.mxu0 0
  %10224 = vmatpush1.bf16.msra.mxu0 0
  %10225 = vmatprep.subr.bf16.mxu0 0
  %10226 = vmatpush1.bf16.msra.mxu0 0
  %10227 = vmatprep.subr.bf16.mxu0 0
  %10228 = vmatpush1.bf16.msra.mxu0 0
  %10229 = vmatprep.mubr.bf16.mxu0 0
  %10230 = vmatmul.mubr.bf16.gmra.mrb[0].mxu0 %v10070
  %v10231 = vpop.f32.mrb[0].mxu0
  %v10232 = vadd.f32 %v10136, %v10231
  %v10233 = vpop.f32.mrb[0].mxu0
  %v10234 = vpop.f32.mrb[0].mxu0
  %v10235 = vpop.f32.mrb[0].mxu0
  %10236 = vdwg.mxu0
  %10238 = vset.pattern.permute.xlu0 0
  %10239 = vperm.xlu0 %10238, %v10123
  %v10240 = vpop.permute.xlu0 %10239
  %v10242 = vmul.f32 %v10240, %v10191
  %10243 = vset.pattern.permute.xlu0 1
  %10244 = vperm.xlu0 %10243, %v10123
  %v10245 = vpop.permute.xlu0 %10244
  %v10247 = vmul.f32 %v10245, %v10193
  %v10248 = vadd.f32 %v10242, %v10247
  %10249 = vset.pattern.permute.xlu0 2
  %10250 = vperm.xlu0 %10249, %v10123
  %v10251 = vpop.permute.xlu0 %10250
  %v10253 = vmul.f32 %v10251, %v10232
  %v10254 = vadd.f32 %v10248, %v10253
  %v10255 = vmin.f32 %v10254, 0.0
  %v10256 = vmul.f32 %v10255, 1.442695
  %v10257 = vpow.pop %v10256
  %v10258 = vsub.f32 %v10257, 1.0
  %v10259 = vmul.f32 %v10258, 1.6732632
  %vm10260 = vcmp.gt.f32.partialorder %v10254, 0.0
  %v10261 = vsel %vm10260, %v10254, %v10259
  %v10262 = vmul.f32 %v10261, 1.050701
  %v10263 = vadd.f32 %v9979, %v10262
  %v10264 = vtanh.pop %v10263
  %10265 = vst [vmem:[%s91] sm:$0x3] %v10264
  // Predicated region
  $region182: #{stgsp_forward.1} parent=0 // pred_check
    _
  $region183: #{stgsp_forward.1} parent=0 // pred_check_branch
    %10267 = sbr.rel (0) target = $region185
  $region184: #{stgsp_forward.1} parent=0 // pred_region
    _
  $region185: #{stgsp_forward.1} parent=0 // pred_fallthru
    _
  // Predicated region
  $region186: #{stgsp_forward.1} parent=0 // pred_check
    _
  $region187: #{stgsp_forward.1} parent=0 // pred_check_branch
    %10269 = sbr.rel (0) target = $region189
  $region188: #{stgsp_forward.1} parent=0 // pred_region
    _
  $region189: #{stgsp_forward.1} parent=0 // pred_fallthru
    _

</llo_original>
